<compile_context>
chip_gen: v6e
topology: v6e:2x2x1
jax: 0.10.0
libtpu: 0.0.40
codegen_flags: <defaults>
</compile_context>

<pallas_src>
import jax
import jax.numpy as jnp
from jax import lax
from jax.experimental import pallas as pl
from jax.experimental.pallas import tpu as pltpu

EPS = 1e-5


def _pad_into(pad_ref, x, N, H, W, C):
    """Write x (N,H,W,C) into pad_ref (N,H+2,W+2,C); zero only the 1-px halo."""
    pad_ref[:, 0:1, :, :] = jnp.zeros((N, 1, W + 2, C), jnp.float32)
    pad_ref[:, H + 1:H + 2, :, :] = jnp.zeros((N, 1, W + 2, C), jnp.float32)
    pad_ref[:, 1:H + 1, 0:1, :] = jnp.zeros((N, H, 1, C), jnp.float32)
    pad_ref[:, 1:H + 1, W + 1:W + 2, :] = jnp.zeros((N, H, 1, C), jnp.float32)
    pad_ref[:, 1:H + 1, 1:W + 1, :] = x


def _im2col_3x3(xp, N, H, W, C):
    """xp: (N,H+2,W+2,C) padded value -> (N*H*W, 9*C) im2col matrix (tap-major)."""
    taps = [xp[:, kh:kh + H, kw:kw + W, :] for kh in range(3) for kw in range(3)]
    cols = jnp.concatenate(taps, axis=-1)            # (N, H, W, 9*C)
    return cols.reshape(N * H * W, 9 * C)            # leading-dim collapse only


def _bn_scale_shift(z, g, be):
    """z: (R, C). Training-mode BN folded to per-channel y = z*a + c."""
    mean = jnp.mean(z, axis=0, keepdims=True)                       # (1, C)
    var = jnp.mean(jnp.square(z - mean), axis=0, keepdims=True)     # biased
    a = g * lax.rsqrt(var + EPS)
    c = be - mean * a
    return a, c


def conv_block_kernel(x_ref, w1_ref, g1_ref, be1_ref, w2_ref, g2_ref, be2_ref,
                      o_ref, pad1_scr, pad2_scr):
    N, H, W, Cin = x_ref.shape
    Cout = w1_ref.shape[-1]

    # ---- conv1 (single im2col MXU matmul) + BN1 + ReLU ----------------------
    _pad_into(pad1_scr, x_ref[...], N, H, W, Cin)
    cols1 = _im2col_3x3(pad1_scr[...], N, H, W, Cin)                 # (NHW, 9*Cin)
    z1 = lax.dot_general(cols1, w1_ref[...], (((1,), (0,)), ((), ())),
                         preferred_element_type=jnp.float32)         # (NHW, Cout)
    a1, c1 = _bn_scale_shift(z1, g1_ref[...], be1_ref[...])
    x1 = jnp.maximum(z1 * a1 + c1, 0.0)

    # ---- conv2 (single im2col MXU matmul) + BN2 + ReLU ----------------------
    _pad_into(pad2_scr, x1.reshape(N, H, W, Cout), N, H, W, Cout)
    cols2 = _im2col_3x3(pad2_scr[...], N, H, W, Cout)                # (NHW, 9*Cout)
    z2 = lax.dot_general(cols2, w2_ref[...], (((1,), (0,)), ((), ())),
                         preferred_element_type=jnp.float32)         # (NHW, Cout)
    a2, c2 = _bn_scale_shift(z2, g2_ref[...], be2_ref[...])

    # ---- lane-dense epilogue: (N*H*W, Cout) -> (N*H, W*Cout) ----------------
    # Last dim of the output block is W*Cout (= 128 here), so the final
    # scale/shift/ReLU and the output store run on full 128-lane vregs.
    z2_3d = z2.reshape(N * H, W, Cout)               # leading-dim split only
    z2_dense = jnp.concatenate([z2_3d[:, w, :] for w in range(W)], axis=-1)
    a2_dense = jnp.tile(a2, (1, W))                  # (1, W*Cout)
    c2_dense = jnp.tile(c2, (1, W))
    o_ref[...] = jnp.maximum(z2_dense * a2_dense + c2_dense, 0.0)


def conv_block_pallas(x_nchw, params):
    """x_nchw: (N, Cin, H, W) float32. Returns (N, Cout, H, W) float32."""
    w1, b1, g1, be1, w2, b2, g2, be2 = params
    del b1, b2  # conv biases cancel exactly under training-mode BatchNorm
    N, Cin, H, W = x_nchw.shape
    Cout = w1.shape[-1]

    # glue: NCHW -> NHWC (channels on lanes); pre-flatten HWIO weights for im2col
    x_nhwc = jnp.transpose(x_nchw, (0, 2, 3, 1)).astype(jnp.float32)
    w1f = w1.reshape(9 * Cin, Cout)    # tap-major, matches im2col column order
    w2f = w2.reshape(9 * Cout, Cout)

    flops = 2 * N * H * W * 9 * (Cin * Cout + Cout * Cout) + 8 * N * H * W * Cout
    bytes_accessed = 4 * (x_nhwc.size + w1f.size + w2f.size
                          + 4 * Cout + N * H * W * Cout)

    out2d = pl.pallas_call(
        conv_block_kernel,
        out_shape=jax.ShapeDtypeStruct((N * H, W * Cout), jnp.float32),
        in_specs=[pl.BlockSpec(memory_space=pltpu.MemorySpace.VMEM)] * 7,
        out_specs=pl.BlockSpec(memory_space=pltpu.MemorySpace.VMEM),
        scratch_shapes=[
            pltpu.VMEM((N, H + 2, W + 2, Cin), jnp.float32),   # padded conv1 in
            pltpu.VMEM((N, H + 2, W + 2, Cout), jnp.float32),  # padded conv2 in
        ],
        cost_estimate=pl.CostEstimate(flops=flops, transcendentals=2 * Cout,
                                      bytes_accessed=bytes_accessed),
    )(x_nhwc, w1f, g1, be1, w2f, g2, be2)

    out_nhwc = out2d.reshape(N, H, W, Cout)          # undo lane-dense packing
    return jnp.transpose(out_nhwc, (0, 3, 1, 2))     # back to NCHW


# ----------------------------- pure-JAX reference -----------------------------
def conv_block_ref(x_nchw, params):
    w1, b1, g1, be1, w2, b2, g2, be2 = params
    x = jnp.transpose(x_nchw, (0, 2, 3, 1)).astype(jnp.float32)

    def conv(x, w, b):
        y = lax.conv_general_dilated(
            x, w, window_strides=(1, 1), padding="SAME",
            dimension_numbers=("NHWC", "HWIO", "NHWC"))
        return y + b

    def bn_relu(x, g, be):
        mean = jnp.mean(x, axis=(0, 1, 2), keepdims=True)
        var = jnp.mean((x - mean) ** 2, axis=(0, 1, 2), keepdims=True)
        return jnp.maximum((x - mean) * lax.rsqrt(var + EPS) * g + be, 0.0)

    x = bn_relu(conv(x, w1, b1), g1, be1)
    x = bn_relu(conv(x, w2, b2), g2, be2)
    return jnp.transpose(x, (0, 3, 1, 2))


# ----------------------------------- main -------------------------------------
if __name__ == "__main__":
    N, Cin, Cout, H, W = 2, 4, 8, 16, 16
    key = jax.random.PRNGKey(0)
    k_x, k_w1, k_b1, k_w2, k_b2 = jax.random.split(key, 5)

    x = jax.random.normal(k_x, (N, Cin, H, W), jnp.float32)

    # deterministic parameter init (shapes match nn.Conv2d / nn.BatchNorm2d)
    w1 = jax.random.normal(k_w1, (3, 3, Cin, Cout), jnp.float32) * 0.1   # HWIO
    b1 = jax.random.normal(k_b1, (1, Cout), jnp.float32) * 0.1
    g1 = jnp.ones((1, Cout), jnp.float32)     # BatchNorm2d default weight
    be1 = jnp.zeros((1, Cout), jnp.float32)   # BatchNorm2d default bias
    w2 = jax.random.normal(k_w2, (3, 3, Cout, Cout), jnp.float32) * 0.1
    b2 = jax.random.normal(k_b2, (1, Cout), jnp.float32) * 0.1
    g2 = jnp.ones((1, Cout), jnp.float32)
    be2 = jnp.zeros((1, Cout), jnp.float32)

    params = (w1, b1, g1, be1, w2, b2, g2, be2)

    out = jax.block_until_ready(conv_block_pallas(x, params))
    ref = jax.block_until_ready(conv_block_ref(x, params))

    assert out.shape == (N, Cout, H, W), out.shape
    assert jnp.allclose(out, ref, rtol=1e-4, atol=1e-4), float(
        jnp.max(jnp.abs(out - ref)))

    print("KERNEL_OK")
</pallas_src>

<mosaic_0001>
module attributes {stable_mosaic.version = 11 : i64} {
  func.func @conv_block_kernel(%arg0: memref<2x16x16x4xf32, #tpu.memory_space<vmem>>, %arg1: memref<36x8xf32, #tpu.memory_space<vmem>>, %arg2: memref<1x8xf32, #tpu.memory_space<vmem>>, %arg3: memref<1x8xf32, #tpu.memory_space<vmem>>, %arg4: memref<72x8xf32, #tpu.memory_space<vmem>>, %arg5: memref<1x8xf32, #tpu.memory_space<vmem>>, %arg6: memref<1x8xf32, #tpu.memory_space<vmem>>, %arg7: memref<32x128xf32, #tpu.memory_space<vmem>>, %arg8: memref<2x18x18x4xf32, #tpu.memory_space<vmem>>, %arg9: memref<2x18x18x8xf32, #tpu.memory_space<vmem>>) attributes {dimension_semantics = [], scalar_prefetch = 0 : i64, scratch_operands = 2 : i64, tpu.core_type = #tpu.core_type<tc>} {
    %c0 = arith.constant 0 : index
    %c0_0 = arith.constant 0 : index
    %c0_1 = arith.constant 0 : index
    %c0_2 = arith.constant 0 : index
    %0 = vector.load %arg0[%c0, %c0_0, %c0_1, %c0_2] : memref<2x16x16x4xf32, #tpu.memory_space<vmem>>, vector<2x16x16x4xf32>
    %cst = arith.constant 0.000000e+00 : f32
    %1 = vector.broadcast %cst : f32 to vector<2x1x18x4xf32>
    %c0_3 = arith.constant 0 : index
    %c0_4 = arith.constant 0 : index
    %c0_5 = arith.constant 0 : index
    %c0_6 = arith.constant 0 : index
    %2 = vector.load %arg8[%c0_3, %c0_4, %c0_5, %c0_6] : memref<2x18x18x4xf32, #tpu.memory_space<vmem>>, vector<2x1x18x4xf32>
    tpu.vector_store %arg8[%c0_3, %c0_4, %c0_5, %c0_6], %1 {strides = array<i32>} : memref<2x18x18x4xf32, #tpu.memory_space<vmem>>, vector<2x1x18x4xf32>,
    %cst_7 = arith.constant 0.000000e+00 : f32
    %3 = vector.broadcast %cst_7 : f32 to vector<2x1x18x4xf32>
    %c0_8 = arith.constant 0 : index
    %c17 = arith.constant 17 : index
    %c0_9 = arith.constant 0 : index
    %c0_10 = arith.constant 0 : index
    %4 = vector.load %arg8[%c0_8, %c17, %c0_9, %c0_10] : memref<2x18x18x4xf32, #tpu.memory_space<vmem>>, vector<2x1x18x4xf32>
    tpu.vector_store %arg8[%c0_8, %c17, %c0_9, %c0_10], %3 {strides = array<i32>} : memref<2x18x18x4xf32, #tpu.memory_space<vmem>>, vector<2x1x18x4xf32>,
    %cst_11 = arith.constant 0.000000e+00 : f32
    %5 = vector.broadcast %cst_11 : f32 to vector<2x16x1x4xf32>
    %c0_12 = arith.constant 0 : index
    %c1 = arith.constant 1 : index
    %c0_13 = arith.constant 0 : index
    %c0_14 = arith.constant 0 : index
    %6 = vector.load %arg8[%c0_12, %c1, %c0_13, %c0_14] : memref<2x18x18x4xf32, #tpu.memory_space<vmem>>, vector<2x16x1x4xf32>
    tpu.vector_store %arg8[%c0_12, %c1, %c0_13, %c0_14], %5 {strides = array<i32>} : memref<2x18x18x4xf32, #tpu.memory_space<vmem>>, vector<2x16x1x4xf32>,
    %cst_15 = arith.constant 0.000000e+00 : f32
    %7 = vector.broadcast %cst_15 : f32 to vector<2x16x1x4xf32>
    %c0_16 = arith.constant 0 : index
    %c1_17 = arith.constant 1 : index
    %c17_18 = arith.constant 17 : index
    %c0_19 = arith.constant 0 : index
    %8 = vector.load %arg8[%c0_16, %c1_17, %c17_18, %c0_19] : memref<2x18x18x4xf32, #tpu.memory_space<vmem>>, vector<2x16x1x4xf32>
    tpu.vector_store %arg8[%c0_16, %c1_17, %c17_18, %c0_19], %7 {strides = array<i32>} : memref<2x18x18x4xf32, #tpu.memory_space<vmem>>, vector<2x16x1x4xf32>,
    %c0_20 = arith.constant 0 : index
    %c1_21 = arith.constant 1 : index
    %c1_22 = arith.constant 1 : index
    %c0_23 = arith.constant 0 : index
    %9 = vector.load %arg8[%c0_20, %c1_21, %c1_22, %c0_23] : memref<2x18x18x4xf32, #tpu.memory_space<vmem>>, vector<2x16x16x4xf32>
    tpu.vector_store %arg8[%c0_20, %c1_21, %c1_22, %c0_23], %0 {strides = array<i32>} : memref<2x18x18x4xf32, #tpu.memory_space<vmem>>, vector<2x16x16x4xf32>,
    %c0_24 = arith.constant 0 : index
    %c0_25 = arith.constant 0 : index
    %c0_26 = arith.constant 0 : index
    %c0_27 = arith.constant 0 : index
    %10 = vector.load %arg8[%c0_24, %c0_25, %c0_26, %c0_27] : memref<2x18x18x4xf32, #tpu.memory_space<vmem>>, vector<2x18x18x4xf32>
    %11 = vector.extract_strided_slice %10 {offsets = [0, 0, 0, 0], sizes = [2, 16, 16, 4], strides = [1, 1, 1, 1]} : vector<2x18x18x4xf32> to vector<2x16x16x4xf32>
    %12 = vector.extract_strided_slice %10 {offsets = [0, 0, 1, 0], sizes = [2, 16, 16, 4], strides = [1, 1, 1, 1]} : vector<2x18x18x4xf32> to vector<2x16x16x4xf32>
    %13 = vector.extract_strided_slice %10 {offsets = [0, 0, 2, 0], sizes = [2, 16, 16, 4], strides = [1, 1, 1, 1]} : vector<2x18x18x4xf32> to vector<2x16x16x4xf32>
    %14 = vector.extract_strided_slice %10 {offsets = [0, 1, 0, 0], sizes = [2, 16, 16, 4], strides = [1, 1, 1, 1]} : vector<2x18x18x4xf32> to vector<2x16x16x4xf32>
    %15 = vector.extract_strided_slice %10 {offsets = [0, 1, 1, 0], sizes = [2, 16, 16, 4], strides = [1, 1, 1, 1]} : vector<2x18x18x4xf32> to vector<2x16x16x4xf32>
    %16 = vector.extract_strided_slice %10 {offsets = [0, 1, 2, 0], sizes = [2, 16, 16, 4], strides = [1, 1, 1, 1]} : vector<2x18x18x4xf32> to vector<2x16x16x4xf32>
    %17 = vector.extract_strided_slice %10 {offsets = [0, 2, 0, 0], sizes = [2, 16, 16, 4], strides = [1, 1, 1, 1]} : vector<2x18x18x4xf32> to vector<2x16x16x4xf32>
    %18 = vector.extract_strided_slice %10 {offsets = [0, 2, 1, 0], sizes = [2, 16, 16, 4], strides = [1, 1, 1, 1]} : vector<2x18x18x4xf32> to vector<2x16x16x4xf32>
    %19 = vector.extract_strided_slice %10 {offsets = [0, 2, 2, 0], sizes = [2, 16, 16, 4], strides = [1, 1, 1, 1]} : vector<2x18x18x4xf32> to vector<2x16x16x4xf32>
    %20 = tpu.concatenate %11, %12, %13, %14, %15, %16, %17, %18, %19 in 3 : vector<2x16x16x4xf32>, vector<2x16x16x4xf32>, vector<2x16x16x4xf32>, vector<2x16x16x4xf32>, vector<2x16x16x4xf32>, vector<2x16x16x4xf32>, vector<2x16x16x4xf32>, vector<2x16x16x4xf32>, vector<2x16x16x4xf32> -> vector<2x16x16x36xf32>
    %21 = vector.shape_cast %20 : vector<2x16x16x36xf32> to vector<512x36xf32>
    %c0_28 = arith.constant 0 : index
    %c0_29 = arith.constant 0 : index
    %22 = vector.load %arg1[%c0_28, %c0_29] : memref<36x8xf32, #tpu.memory_space<vmem>>, vector<36x8xf32>
    %cst_30 = arith.constant dense<0.000000e+00> : vector<512x8xf32>
    %23 = tpu.matmul %21, %22, %cst_30 {dimension_numbers = #tpu.dot_dimension_numbers<[1], [0], [0], [1], [0, 0, 1, 1], [], []>} : vector<512x36xf32>, vector<36x8xf32>, vector<512x8xf32> -> vector<512x8xf32>
    %c0_31 = arith.constant 0 : index
    %c0_32 = arith.constant 0 : index
    %24 = vector.load %arg2[%c0_31, %c0_32] : memref<1x8xf32, #tpu.memory_space<vmem>>, vector<1x8xf32>
    %c0_33 = arith.constant 0 : index
    %c0_34 = arith.constant 0 : index
    %25 = vector.load %arg3[%c0_33, %c0_34] : memref<1x8xf32, #tpu.memory_space<vmem>>, vector<1x8xf32>
    %cst_35 = arith.constant dense<0.000000e+00> : vector<8xf32>
    %26 = vector.multi_reduction <add>, %23, %cst_35 [0] : vector<512x8xf32> to vector<8xf32>
    %27 = vector.shape_cast %26 : vector<8xf32> to vector<1x8xf32>
    %cst_36 = arith.constant 5.120000e+02 : f32
    %28 = vector.broadcast %cst_36 : f32 to vector<1x8xf32>
    %29 = arith.divf %27, %28 : vector<1x8xf32>
    %30 = vector.broadcast %29 : vector<1x8xf32> to vector<512x8xf32>
    %31 = arith.subf %23, %30 : vector<512x8xf32>
    %32 = arith.mulf %31, %31 : vector<512x8xf32>
    %cst_37 = arith.constant dense<0.000000e+00> : vector<8xf32>
    %33 = vector.multi_reduction <add>, %32, %cst_37 [0] : vector<512x8xf32> to vector<8xf32>
    %34 = vector.shape_cast %33 : vector<8xf32> to vector<1x8xf32>
    %cst_38 = arith.constant 5.120000e+02 : f32
    %35 = vector.broadcast %cst_38 : f32 to vector<1x8xf32>
    %36 = arith.divf %34, %35 : vector<1x8xf32>
    %cst_39 = arith.constant 9.99999974E-6 : f32
    %37 = vector.broadcast %cst_39 : f32 to vector<1x8xf32>
    %38 = arith.addf %36, %37 : vector<1x8xf32>
    %39 = math.rsqrt %38 : vector<1x8xf32>
    %40 = arith.mulf %24, %39 : vector<1x8xf32>
    %41 = arith.mulf %29, %40 : vector<1x8xf32>
    %42 = arith.subf %25, %41 : vector<1x8xf32>
    %43 = vector.broadcast %40 : vector<1x8xf32> to vector<512x8xf32>
    %44 = arith.mulf %23, %43 : vector<512x8xf32>
    %45 = vector.broadcast %42 : vector<1x8xf32> to vector<512x8xf32>
    %46 = arith.addf %44, %45 : vector<512x8xf32>
    %cst_40 = arith.constant 0.000000e+00 : f32
    %47 = vector.broadcast %cst_40 : f32 to vector<512x8xf32>
    %48 = arith.maximumf %46, %47 : vector<512x8xf32>
    %49 = vector.shape_cast %48 : vector<512x8xf32> to vector<2x16x16x8xf32>
    %cst_41 = arith.constant 0.000000e+00 : f32
    %50 = vector.broadcast %cst_41 : f32 to vector<2x1x18x8xf32>
    %c0_42 = arith.constant 0 : index
    %c0_43 = arith.constant 0 : index
    %c0_44 = arith.constant 0 : index
    %c0_45 = arith.constant 0 : index
    %51 = vector.load %arg9[%c0_42, %c0_43, %c0_44, %c0_45] : memref<2x18x18x8xf32, #tpu.memory_space<vmem>>, vector<2x1x18x8xf32>
    tpu.vector_store %arg9[%c0_42, %c0_43, %c0_44, %c0_45], %50 {strides = array<i32>} : memref<2x18x18x8xf32, #tpu.memory_space<vmem>>, vector<2x1x18x8xf32>,
    %cst_46 = arith.constant 0.000000e+00 : f32
    %52 = vector.broadcast %cst_46 : f32 to vector<2x1x18x8xf32>
    %c0_47 = arith.constant 0 : index
    %c17_48 = arith.constant 17 : index
    %c0_49 = arith.constant 0 : index
    %c0_50 = arith.constant 0 : index
    %53 = vector.load %arg9[%c0_47, %c17_48, %c0_49, %c0_50] : memref<2x18x18x8xf32, #tpu.memory_space<vmem>>, vector<2x1x18x8xf32>
    tpu.vector_store %arg9[%c0_47, %c17_48, %c0_49, %c0_50], %52 {strides = array<i32>} : memref<2x18x18x8xf32, #tpu.memory_space<vmem>>, vector<2x1x18x8xf32>,
    %cst_51 = arith.constant 0.000000e+00 : f32
    %54 = vector.broadcast %cst_51 : f32 to vector<2x16x1x8xf32>
    %c0_52 = arith.constant 0 : index
    %c1_53 = arith.constant 1 : index
    %c0_54 = arith.constant 0 : index
    %c0_55 = arith.constant 0 : index
    %55 = vector.load %arg9[%c0_52, %c1_53, %c0_54, %c0_55] : memref<2x18x18x8xf32, #tpu.memory_space<vmem>>, vector<2x16x1x8xf32>
    tpu.vector_store %arg9[%c0_52, %c1_53, %c0_54, %c0_55], %54 {strides = array<i32>} : memref<2x18x18x8xf32, #tpu.memory_space<vmem>>, vector<2x16x1x8xf32>,
    %cst_56 = arith.constant 0.000000e+00 : f32
    %56 = vector.broadcast %cst_56 : f32 to vector<2x16x1x8xf32>
    %c0_57 = arith.constant 0 : index
    %c1_58 = arith.constant 1 : index
    %c17_59 = arith.constant 17 : index
    %c0_60 = arith.constant 0 : index
    %57 = vector.load %arg9[%c0_57, %c1_58, %c17_59, %c0_60] : memref<2x18x18x8xf32, #tpu.memory_space<vmem>>, vector<2x16x1x8xf32>
    tpu.vector_store %arg9[%c0_57, %c1_58, %c17_59, %c0_60], %56 {strides = array<i32>} : memref<2x18x18x8xf32, #tpu.memory_space<vmem>>, vector<2x16x1x8xf32>,
    %c0_61 = arith.constant 0 : index
    %c1_62 = arith.constant 1 : index
    %c1_63 = arith.constant 1 : index
    %c0_64 = arith.constant 0 : index
    %58 = vector.load %arg9[%c0_61, %c1_62, %c1_63, %c0_64] : memref<2x18x18x8xf32, #tpu.memory_space<vmem>>, vector<2x16x16x8xf32>
    tpu.vector_store %arg9[%c0_61, %c1_62, %c1_63, %c0_64], %49 {strides = array<i32>} : memref<2x18x18x8xf32, #tpu.memory_space<vmem>>, vector<2x16x16x8xf32>,
    %c0_65 = arith.constant 0 : index
    %c0_66 = arith.constant 0 : index
    %c0_67 = arith.constant 0 : index
    %c0_68 = arith.constant 0 : index
    %59 = vector.load %arg9[%c0_65, %c0_66, %c0_67, %c0_68] : memref<2x18x18x8xf32, #tpu.memory_space<vmem>>, vector<2x18x18x8xf32>
    %60 = vector.extract_strided_slice %59 {offsets = [0, 0, 0, 0], sizes = [2, 16, 16, 8], strides = [1, 1, 1, 1]} : vector<2x18x18x8xf32> to vector<2x16x16x8xf32>
    %61 = vector.extract_strided_slice %59 {offsets = [0, 0, 1, 0], sizes = [2, 16, 16, 8], strides = [1, 1, 1, 1]} : vector<2x18x18x8xf32> to vector<2x16x16x8xf32>
    %62 = vector.extract_strided_slice %59 {offsets = [0, 0, 2, 0], sizes = [2, 16, 16, 8], strides = [1, 1, 1, 1]} : vector<2x18x18x8xf32> to vector<2x16x16x8xf32>
    %63 = vector.extract_strided_slice %59 {offsets = [0, 1, 0, 0], sizes = [2, 16, 16, 8], strides = [1, 1, 1, 1]} : vector<2x18x18x8xf32> to vector<2x16x16x8xf32>
    %64 = vector.extract_strided_slice %59 {offsets = [0, 1, 1, 0], sizes = [2, 16, 16, 8], strides = [1, 1, 1, 1]} : vector<2x18x18x8xf32> to vector<2x16x16x8xf32>
    %65 = vector.extract_strided_slice %59 {offsets = [0, 1, 2, 0], sizes = [2, 16, 16, 8], strides = [1, 1, 1, 1]} : vector<2x18x18x8xf32> to vector<2x16x16x8xf32>
    %66 = vector.extract_strided_slice %59 {offsets = [0, 2, 0, 0], sizes = [2, 16, 16, 8], strides = [1, 1, 1, 1]} : vector<2x18x18x8xf32> to vector<2x16x16x8xf32>
    %67 = vector.extract_strided_slice %59 {offsets = [0, 2, 1, 0], sizes = [2, 16, 16, 8], strides = [1, 1, 1, 1]} : vector<2x18x18x8xf32> to vector<2x16x16x8xf32>
    %68 = vector.extract_strided_slice %59 {offsets = [0, 2, 2, 0], sizes = [2, 16, 16, 8], strides = [1, 1, 1, 1]} : vector<2x18x18x8xf32> to vector<2x16x16x8xf32>
    %69 = tpu.concatenate %60, %61, %62, %63, %64, %65, %66, %67, %68 in 3 : vector<2x16x16x8xf32>, vector<2x16x16x8xf32>, vector<2x16x16x8xf32>, vector<2x16x16x8xf32>, vector<2x16x16x8xf32>, vector<2x16x16x8xf32>, vector<2x16x16x8xf32>, vector<2x16x16x8xf32>, vector<2x16x16x8xf32> -> vector<2x16x16x72xf32>
    %70 = vector.shape_cast %69 : vector<2x16x16x72xf32> to vector<512x72xf32>
    %c0_69 = arith.constant 0 : index
    %c0_70 = arith.constant 0 : index
    %71 = vector.load %arg4[%c0_69, %c0_70] : memref<72x8xf32, #tpu.memory_space<vmem>>, vector<72x8xf32>
    %cst_71 = arith.constant dense<0.000000e+00> : vector<512x8xf32>
    %72 = tpu.matmul %70, %71, %cst_71 {dimension_numbers = #tpu.dot_dimension_numbers<[1], [0], [0], [1], [0, 0, 1, 1], [], []>} : vector<512x72xf32>, vector<72x8xf32>, vector<512x8xf32> -> vector<512x8xf32>
    %c0_72 = arith.constant 0 : index
    %c0_73 = arith.constant 0 : index
    %73 = vector.load %arg5[%c0_72, %c0_73] : memref<1x8xf32, #tpu.memory_space<vmem>>, vector<1x8xf32>
    %c0_74 = arith.constant 0 : index
    %c0_75 = arith.constant 0 : index
    %74 = vector.load %arg6[%c0_74, %c0_75] : memref<1x8xf32, #tpu.memory_space<vmem>>, vector<1x8xf32>
    %cst_76 = arith.constant dense<0.000000e+00> : vector<8xf32>
    %75 = vector.multi_reduction <add>, %72, %cst_76 [0] : vector<512x8xf32> to vector<8xf32>
    %76 = vector.shape_cast %75 : vector<8xf32> to vector<1x8xf32>
    %cst_77 = arith.constant 5.120000e+02 : f32
    %77 = vector.broadcast %cst_77 : f32 to vector<1x8xf32>
    %78 = arith.divf %76, %77 : vector<1x8xf32>
    %79 = vector.broadcast %78 : vector<1x8xf32> to vector<512x8xf32>
    %80 = arith.subf %72, %79 : vector<512x8xf32>
    %81 = arith.mulf %80, %80 : vector<512x8xf32>
    %cst_78 = arith.constant dense<0.000000e+00> : vector<8xf32>
    %82 = vector.multi_reduction <add>, %81, %cst_78 [0] : vector<512x8xf32> to vector<8xf32>
    %83 = vector.shape_cast %82 : vector<8xf32> to vector<1x8xf32>
    %cst_79 = arith.constant 5.120000e+02 : f32
    %84 = vector.broadcast %cst_79 : f32 to vector<1x8xf32>
    %85 = arith.divf %83, %84 : vector<1x8xf32>
    %cst_80 = arith.constant 9.99999974E-6 : f32
    %86 = vector.broadcast %cst_80 : f32 to vector<1x8xf32>
    %87 = arith.addf %85, %86 : vector<1x8xf32>
    %88 = math.rsqrt %87 : vector<1x8xf32>
    %89 = arith.mulf %73, %88 : vector<1x8xf32>
    %90 = arith.mulf %78, %89 : vector<1x8xf32>
    %91 = arith.subf %74, %90 : vector<1x8xf32>
    %92 = vector.shape_cast %72 : vector<512x8xf32> to vector<32x16x8xf32>
    %93 = vector.extract_strided_slice %92 {offsets = [0, 0, 0], sizes = [32, 1, 8], strides = [1, 1, 1]} : vector<32x16x8xf32> to vector<32x1x8xf32>
    %94 = vector.shape_cast %93 : vector<32x1x8xf32> to vector<32x8xf32>
    %95 = vector.extract_strided_slice %92 {offsets = [0, 1, 0], sizes = [32, 1, 8], strides = [1, 1, 1]} : vector<32x16x8xf32> to vector<32x1x8xf32>
    %96 = vector.shape_cast %95 : vector<32x1x8xf32> to vector<32x8xf32>
    %97 = vector.extract_strided_slice %92 {offsets = [0, 2, 0], sizes = [32, 1, 8], strides = [1, 1, 1]} : vector<32x16x8xf32> to vector<32x1x8xf32>
    %98 = vector.shape_cast %97 : vector<32x1x8xf32> to vector<32x8xf32>
    %99 = vector.extract_strided_slice %92 {offsets = [0, 3, 0], sizes = [32, 1, 8], strides = [1, 1, 1]} : vector<32x16x8xf32> to vector<32x1x8xf32>
    %100 = vector.shape_cast %99 : vector<32x1x8xf32> to vector<32x8xf32>
    %101 = vector.extract_strided_slice %92 {offsets = [0, 4, 0], sizes = [32, 1, 8], strides = [1, 1, 1]} : vector<32x16x8xf32> to vector<32x1x8xf32>
    %102 = vector.shape_cast %101 : vector<32x1x8xf32> to vector<32x8xf32>
    %103 = vector.extract_strided_slice %92 {offsets = [0, 5, 0], sizes = [32, 1, 8], strides = [1, 1, 1]} : vector<32x16x8xf32> to vector<32x1x8xf32>
    %104 = vector.shape_cast %103 : vector<32x1x8xf32> to vector<32x8xf32>
    %105 = vector.extract_strided_slice %92 {offsets = [0, 6, 0], sizes = [32, 1, 8], strides = [1, 1, 1]} : vector<32x16x8xf32> to vector<32x1x8xf32>
    %106 = vector.shape_cast %105 : vector<32x1x8xf32> to vector<32x8xf32>
    %107 = vector.extract_strided_slice %92 {offsets = [0, 7, 0], sizes = [32, 1, 8], strides = [1, 1, 1]} : vector<32x16x8xf32> to vector<32x1x8xf32>
    %108 = vector.shape_cast %107 : vector<32x1x8xf32> to vector<32x8xf32>
    %109 = vector.extract_strided_slice %92 {offsets = [0, 8, 0], sizes = [32, 1, 8], strides = [1, 1, 1]} : vector<32x16x8xf32> to vector<32x1x8xf32>
    %110 = vector.shape_cast %109 : vector<32x1x8xf32> to vector<32x8xf32>
    %111 = vector.extract_strided_slice %92 {offsets = [0, 9, 0], sizes = [32, 1, 8], strides = [1, 1, 1]} : vector<32x16x8xf32> to vector<32x1x8xf32>
    %112 = vector.shape_cast %111 : vector<32x1x8xf32> to vector<32x8xf32>
    %113 = vector.extract_strided_slice %92 {offsets = [0, 10, 0], sizes = [32, 1, 8], strides = [1, 1, 1]} : vector<32x16x8xf32> to vector<32x1x8xf32>
    %114 = vector.shape_cast %113 : vector<32x1x8xf32> to vector<32x8xf32>
    %115 = vector.extract_strided_slice %92 {offsets = [0, 11, 0], sizes = [32, 1, 8], strides = [1, 1, 1]} : vector<32x16x8xf32> to vector<32x1x8xf32>
    %116 = vector.shape_cast %115 : vector<32x1x8xf32> to vector<32x8xf32>
    %117 = vector.extract_strided_slice %92 {offsets = [0, 12, 0], sizes = [32, 1, 8], strides = [1, 1, 1]} : vector<32x16x8xf32> to vector<32x1x8xf32>
    %118 = vector.shape_cast %117 : vector<32x1x8xf32> to vector<32x8xf32>
    %119 = vector.extract_strided_slice %92 {offsets = [0, 13, 0], sizes = [32, 1, 8], strides = [1, 1, 1]} : vector<32x16x8xf32> to vector<32x1x8xf32>
    %120 = vector.shape_cast %119 : vector<32x1x8xf32> to vector<32x8xf32>
    %121 = vector.extract_strided_slice %92 {offsets = [0, 14, 0], sizes = [32, 1, 8], strides = [1, 1, 1]} : vector<32x16x8xf32> to vector<32x1x8xf32>
    %122 = vector.shape_cast %121 : vector<32x1x8xf32> to vector<32x8xf32>
    %123 = vector.extract_strided_slice %92 {offsets = [0, 15, 0], sizes = [32, 1, 8], strides = [1, 1, 1]} : vector<32x16x8xf32> to vector<32x1x8xf32>
    %124 = vector.shape_cast %123 : vector<32x1x8xf32> to vector<32x8xf32>
    %125 = tpu.concatenate %94, %96, %98, %100, %102, %104, %106, %108, %110, %112, %114, %116, %118, %120, %122, %124 in 1 : vector<32x8xf32>, vector<32x8xf32>, vector<32x8xf32>, vector<32x8xf32>, vector<32x8xf32>, vector<32x8xf32>, vector<32x8xf32>, vector<32x8xf32>, vector<32x8xf32>, vector<32x8xf32>, vector<32x8xf32>, vector<32x8xf32>, vector<32x8xf32>, vector<32x8xf32>, vector<32x8xf32>, vector<32x8xf32> -> vector<32x128xf32>
    %126 = tpu.concatenate %89, %89, %89, %89, %89, %89, %89, %89, %89, %89, %89, %89, %89, %89, %89, %89 in 1 : vector<1x8xf32>, vector<1x8xf32>, vector<1x8xf32>, vector<1x8xf32>, vector<1x8xf32>, vector<1x8xf32>, vector<1x8xf32>, vector<1x8xf32>, vector<1x8xf32>, vector<1x8xf32>, vector<1x8xf32>, vector<1x8xf32>, vector<1x8xf32>, vector<1x8xf32>, vector<1x8xf32>, vector<1x8xf32> -> vector<1x128xf32>
    %127 = tpu.concatenate %91, %91, %91, %91, %91, %91, %91, %91, %91, %91, %91, %91, %91, %91, %91, %91 in 1 : vector<1x8xf32>, vector<1x8xf32>, vector<1x8xf32>, vector<1x8xf32>, vector<1x8xf32>, vector<1x8xf32>, vector<1x8xf32>, vector<1x8xf32>, vector<1x8xf32>, vector<1x8xf32>, vector<1x8xf32>, vector<1x8xf32>, vector<1x8xf32>, vector<1x8xf32>, vector<1x8xf32>, vector<1x8xf32> -> vector<1x128xf32>
    %128 = vector.broadcast %126 : vector<1x128xf32> to vector<32x128xf32>
    %129 = arith.mulf %125, %128 : vector<32x128xf32>
    %130 = vector.broadcast %127 : vector<1x128xf32> to vector<32x128xf32>
    %131 = arith.addf %129, %130 : vector<32x128xf32>
    %cst_81 = arith.constant 0.000000e+00 : f32
    %132 = vector.broadcast %cst_81 : f32 to vector<32x128xf32>
    %133 = arith.maximumf %131, %132 : vector<32x128xf32>
    %c0_82 = arith.constant 0 : index
    %c0_83 = arith.constant 0 : index
    %134 = vector.load %arg7[%c0_82, %c0_83] : memref<32x128xf32, #tpu.memory_space<vmem>>, vector<32x128xf32>
    tpu.vector_store %arg7[%c0_82, %c0_83], %133 {strides = array<i32>} : memref<32x128xf32, #tpu.memory_space<vmem>>, vector<32x128xf32>,
    return
  }
}

</mosaic_0001>

<llo_original>
// kernel: tpu_custom_call.1
$region0: #{tpu_custom_call.1}
  #allocation0 [shape = 'u32[]', space=smem, size = 0x4, offset = 0x4, fixed_abs, tag = 'smem constant byte address 0x4 - core index']
  #allocation1 [shape = 'u32[144,128]{1,0:T(1,128)}', space=vmem, size = 0x12000, scoped, tag = 'internal scratch']
  #allocation2 [shape = 'f32[2,18,18,4]{3,2,1,0:T(8,128)}', space=vmem, size = 0x6c000, scoped, tag = 'scratch operand']
  #allocation3 [shape = 'f32[2,18,18,8]{3,2,1,0:T(8,128)}', space=vmem, size = 0x6c000, scoped, tag = 'scratch operand']
  %s0 = inlined_call_operand.vmem [shape: f32[2,16,16,4], index: 0, kind: input, shape index: {}]
  %s1 = inlined_call_operand.vmem [shape: f32[36,8], index: 1, kind: input, shape index: {}]
  %s2 = inlined_call_operand.vmem [shape: f32[1,8], index: 2, kind: input, shape index: {}]
  %s3 = inlined_call_operand.vmem [shape: f32[1,8], index: 3, kind: input, shape index: {}]
  %s4 = inlined_call_operand.vmem [shape: f32[72,8], index: 4, kind: input, shape index: {}]
  %s5 = inlined_call_operand.vmem [shape: f32[1,8], index: 5, kind: input, shape index: {}]
  %s6 = inlined_call_operand.vmem [shape: f32[1,8], index: 6, kind: input, shape index: {}]
  %s7 = inlined_call_operand.hbm [shape: f32[32,128], index: 7, kind: output, shape index: {}]
  %s8 = sld [smem:[#allocation0]]
  $region38: #{tpu_custom_call.1} parent=0
    _
  %s10 = ssub.s32 1, %s8
  %s11 = scalar_select 0, %s10, %s8
  $region1: #{tpu_custom_call.1} parent=0
    #allocation4 [shape = 'u8[16384]{0}', space=vmem, size = 0x4000, scoped, tag = 'output window, operand 0, single buffered']
    #allocation5 [shape = 's32[1]{0}', space=sflag, size = 0x4, scoped, tag = 'scoped memory for tpu_custom_call.1']
    %12 = vsyncpa [#allocation5], 0
    // Predicated region
    $region2: #{tpu_custom_call.1} parent=1 // pred_check
      _
    $region3: #{tpu_custom_call.1} parent=1 // pred_check_branch
      %14 = sbr.rel (0) target = $region5
    $region4: #{tpu_custom_call.1} parent=1 // pred_region
      _
    $region5: #{tpu_custom_call.1} parent=1 // pred_fallthru
      _
    // Predicated region
    $region6: #{tpu_custom_call.1} parent=1 // pred_check
      _
    $region7: #{tpu_custom_call.1} parent=1 // pred_check_branch
      %16 = sbr.rel (0) target = $region9
    $region8: #{tpu_custom_call.1} parent=1 // pred_region
      _
    $region9: #{tpu_custom_call.1} parent=1 // pred_fallthru
      _
    // Predicated region
    $region10: #{tpu_custom_call.1} parent=1 // pred_check
      _
    $region11: #{tpu_custom_call.1} parent=1 // pred_check_branch
      %18 = sbr.rel (0) target = $region13
    $region12: #{tpu_custom_call.1} parent=1 // pred_region
      _
    $region13: #{tpu_custom_call.1} parent=1 // pred_fallthru
      _
    // Predicated region
    $region14: #{tpu_custom_call.1} parent=1 // pred_check
      _
    $region15: #{tpu_custom_call.1} parent=1 // pred_check_branch
      %20 = sbr.rel (0) target = $region17
    $region16: #{tpu_custom_call.1} parent=1 // pred_region
      _
    $region17: #{tpu_custom_call.1} parent=1 // pred_fallthru
      _
    // Predicated region
    $region18: #{tpu_custom_call.1} parent=1 // pred_check
      _
    $region19: #{tpu_custom_call.1} parent=1 // pred_check_branch
      %22 = sbr.rel (0) target = $region21
    $region20: #{tpu_custom_call.1} parent=1 // pred_region
      _
    $region21: #{tpu_custom_call.1} parent=1 // pred_fallthru
      _
    // Predicated region
    $region22: #{tpu_custom_call.1} parent=1 // pred_check
      _
    $region23: #{tpu_custom_call.1} parent=1 // pred_check_branch
      %24 = sbr.rel (0) target = $region25
    $region24: #{tpu_custom_call.1} parent=1 // pred_region
      _
    $region25: #{tpu_custom_call.1} parent=1 // pred_fallthru
      _
    // Predicated region
    $region26: #{tpu_custom_call.1} parent=1 // pred_check
      _
    $region27: #{tpu_custom_call.1} parent=1 // pred_check_branch
      %26 = sbr.rel (0) target = $region29
    $region28: #{tpu_custom_call.1} parent=1 // pred_region
      _
    $region29: #{tpu_custom_call.1} parent=1 // pred_fallthru
      _
    %v27 = vld [vmem:[%s0] sm:$0xff]
    %v28 = vld [vmem:[%s0 + $0x8] sm:$0xff]
    %v29 = vld [vmem:[%s0 + $0x10] sm:$0xff]
    %v30 = vld [vmem:[%s0 + $0x18] sm:$0xff]
    %v31 = vld [vmem:[%s0 + $0x20] sm:$0xff]
    %v32 = vld [vmem:[%s0 + $0x28] sm:$0xff]
    %v33 = vld [vmem:[%s0 + $0x30] sm:$0xff]
    %v34 = vld [vmem:[%s0 + $0x38] sm:$0xff]
    %v35 = vld [vmem:[%s0 + $0x40] sm:$0xff]
    %v36 = vld [vmem:[%s0 + $0x48] sm:$0xff]
    %v37 = vld [vmem:[%s0 + $0x50] sm:$0xff]
    %v38 = vld [vmem:[%s0 + $0x58] sm:$0xff]
    %v39 = vld [vmem:[%s0 + $0x60] sm:$0xff]
    %v40 = vld [vmem:[%s0 + $0x68] sm:$0xff]
    %v41 = vld [vmem:[%s0 + $0x70] sm:$0xff]
    %v42 = vld [vmem:[%s0 + $0x78] sm:$0xff]
    %v43 = vld [vmem:[%s0 + $0x80] sm:$0xff]
    %v44 = vld [vmem:[%s0 + $0x88] sm:$0xff]
    %v45 = vld [vmem:[%s0 + $0x90] sm:$0xff]
    %v46 = vld [vmem:[%s0 + $0x98] sm:$0xff]
    %v47 = vld [vmem:[%s0 + $0xa0] sm:$0xff]
    %v48 = vld [vmem:[%s0 + $0xa8] sm:$0xff]
    %v49 = vld [vmem:[%s0 + $0xb0] sm:$0xff]
    %v50 = vld [vmem:[%s0 + $0xb8] sm:$0xff]
    %v51 = vld [vmem:[%s0 + $0xc0] sm:$0xff]
    %v52 = vld [vmem:[%s0 + $0xc8] sm:$0xff]
    %v53 = vld [vmem:[%s0 + $0xd0] sm:$0xff]
    %v54 = vld [vmem:[%s0 + $0xd8] sm:$0xff]
    %v55 = vld [vmem:[%s0 + $0xe0] sm:$0xff]
    %v56 = vld [vmem:[%s0 + $0xe8] sm:$0xff]
    %v57 = vld [vmem:[%s0 + $0xf0] sm:$0xff]
    %v58 = vld [vmem:[%s0 + $0xf8] sm:$0xff]
    %v59 = vld [vmem:[%s0 + $0x100] sm:$0xff]
    %v60 = vld [vmem:[%s0 + $0x108] sm:$0xff]
    %v61 = vld [vmem:[%s0 + $0x110] sm:$0xff]
    %v62 = vld [vmem:[%s0 + $0x118] sm:$0xff]
    %v63 = vld [vmem:[%s0 + $0x120] sm:$0xff]
    %v64 = vld [vmem:[%s0 + $0x128] sm:$0xff]
    %v65 = vld [vmem:[%s0 + $0x130] sm:$0xff]
    %v66 = vld [vmem:[%s0 + $0x138] sm:$0xff]
    %v67 = vld [vmem:[%s0 + $0x140] sm:$0xff]
    %v68 = vld [vmem:[%s0 + $0x148] sm:$0xff]
    %v69 = vld [vmem:[%s0 + $0x150] sm:$0xff]
    %v70 = vld [vmem:[%s0 + $0x158] sm:$0xff]
    %v71 = vld [vmem:[%s0 + $0x160] sm:$0xff]
    %v72 = vld [vmem:[%s0 + $0x168] sm:$0xff]
    %v73 = vld [vmem:[%s0 + $0x170] sm:$0xff]
    %v74 = vld [vmem:[%s0 + $0x178] sm:$0xff]
    %v75 = vld [vmem:[%s0 + $0x180] sm:$0xff]
    %v76 = vld [vmem:[%s0 + $0x188] sm:$0xff]
    %v77 = vld [vmem:[%s0 + $0x190] sm:$0xff]
    %v78 = vld [vmem:[%s0 + $0x198] sm:$0xff]
    %v79 = vld [vmem:[%s0 + $0x1a0] sm:$0xff]
    %v80 = vld [vmem:[%s0 + $0x1a8] sm:$0xff]
    %v81 = vld [vmem:[%s0 + $0x1b0] sm:$0xff]
    %v82 = vld [vmem:[%s0 + $0x1b8] sm:$0xff]
    %v83 = vld [vmem:[%s0 + $0x1c0] sm:$0xff]
    %v84 = vld [vmem:[%s0 + $0x1c8] sm:$0xff]
    %v85 = vld [vmem:[%s0 + $0x1d0] sm:$0xff]
    %v86 = vld [vmem:[%s0 + $0x1d8] sm:$0xff]
    %v87 = vld [vmem:[%s0 + $0x1e0] sm:$0xff]
    %v88 = vld [vmem:[%s0 + $0x1e8] sm:$0xff]
    %v89 = vld [vmem:[%s0 + $0x1f0] sm:$0xff]
    %v90 = vld [vmem:[%s0 + $0x1f8] sm:$0xff]
    %vm91 = vcmask 31744
    %92 = vst.msk [vmem:[#allocation2] sm:$0xff] %vm91, 0.0
    %93 = vst.msk [vmem:[#allocation2 + $0x8] sm:$0xff] %vm91, 0.0
    %vm94 = vcmask 25600
    %95 = vst.msk [vmem:[#allocation2 + $0x10] sm:$0x3] %vm94, 0.0
    %96 = vst.msk [vmem:[#allocation2 + $0x1b0] sm:$0xff] %vm91, 0.0
    %97 = vst.msk [vmem:[#allocation2 + $0x1b8] sm:$0xff] %vm91, 0.0
    %98 = vst.msk [vmem:[#allocation2 + $0x1c0] sm:$0x3] %vm94, 0.0
    %s99 = scalar_lea.vmem [#allocation2], 408
    %100 = vst.msk [vmem:[%s99] sm:$0xff] %vm91, 0.0
    %101 = vst.msk [vmem:[%s99 + $0x8] sm:$0xff] %vm91, 0.0
    %102 = vst.msk [vmem:[%s99 + $0x10] sm:$0x3] %vm94, 0.0
    %103 = vst.msk [vmem:[%s99 + $0x1b0] sm:$0xff] %vm91, 0.0
    %104 = vst.msk [vmem:[%s99 + $0x1b8] sm:$0xff] %vm91, 0.0
    %105 = vst.msk [vmem:[%s99 + $0x1c0] sm:$0x3] %vm94, 0.0
    %s106 = scalar_lea.vmem [#allocation2], 24
    %vm107 = vcmask 24576
    %108 = vst.msk [vmem:[%s106] sm:$0x1] %vm107, 0.0
    %109 = vst.msk [vmem:[%s106 + $0x18] sm:$0x1] %vm107, 0.0
    %110 = vst.msk [vmem:[%s106 + $0x30] sm:$0x1] %vm107, 0.0
    %111 = vst.msk [vmem:[%s106 + $0x48] sm:$0x1] %vm107, 0.0
    %112 = vst.msk [vmem:[%s106 + $0x60] sm:$0x1] %vm107, 0.0
    %113 = vst.msk [vmem:[%s106 + $0x78] sm:$0x1] %vm107, 0.0
    %114 = vst.msk [vmem:[%s106 + $0x90] sm:$0x1] %vm107, 0.0
    %115 = vst.msk [vmem:[%s106 + $0xa8] sm:$0x1] %vm107, 0.0
    %116 = vst.msk [vmem:[%s106 + $0xc0] sm:$0x1] %vm107, 0.0
    %117 = vst.msk [vmem:[%s106 + $0xd8] sm:$0x1] %vm107, 0.0
    %118 = vst.msk [vmem:[%s106 + $0xf0] sm:$0x1] %vm107, 0.0
    %119 = vst.msk [vmem:[%s106 + $0x108] sm:$0x1] %vm107, 0.0
    %120 = vst.msk [vmem:[%s106 + $0x120] sm:$0x1] %vm107, 0.0
    %121 = vst.msk [vmem:[%s106 + $0x138] sm:$0x1] %vm107, 0.0
    %122 = vst.msk [vmem:[%s106 + $0x150] sm:$0x1] %vm107, 0.0
    %123 = vst.msk [vmem:[%s106 + $0x168] sm:$0x1] %vm107, 0.0
    %124 = vst.msk [vmem:[%s106 + $0x1b0] sm:$0x1] %vm107, 0.0
    %125 = vst.msk [vmem:[%s106 + $0x1c8] sm:$0x1] %vm107, 0.0
    %126 = vst.msk [vmem:[%s106 + $0x1e0] sm:$0x1] %vm107, 0.0
    %127 = vst.msk [vmem:[%s106 + $0x1f8] sm:$0x1] %vm107, 0.0
    %128 = vst.msk [vmem:[%s106 + $0x210] sm:$0x1] %vm107, 0.0
    %129 = vst.msk [vmem:[%s106 + $0x228] sm:$0x1] %vm107, 0.0
    %130 = vst.msk [vmem:[%s106 + $0x240] sm:$0x1] %vm107, 0.0
    %131 = vst.msk [vmem:[%s106 + $0x258] sm:$0x1] %vm107, 0.0
    %132 = vst.msk [vmem:[%s106 + $0x270] sm:$0x1] %vm107, 0.0
    %133 = vst.msk [vmem:[%s106 + $0x288] sm:$0x1] %vm107, 0.0
    %134 = vst.msk [vmem:[%s106 + $0x2a0] sm:$0x1] %vm107, 0.0
    %135 = vst.msk [vmem:[%s106 + $0x2b8] sm:$0x1] %vm107, 0.0
    %136 = vst.msk [vmem:[%s106 + $0x2d0] sm:$0x1] %vm107, 0.0
    %137 = vst.msk [vmem:[%s106 + $0x2e8] sm:$0x1] %vm107, 0.0
    %138 = vst.msk [vmem:[%s106 + $0x300] sm:$0x1] %vm107, 0.0
    %139 = vst.msk [vmem:[%s106 + $0x318] sm:$0x1] %vm107, 0.0
    %140 = vst.msk [vmem:[%s106 + $0x11] sm:$0x1] %vm107, 0.0
    %141 = vst.msk [vmem:[%s106 + $0x29] sm:$0x1] %vm107, 0.0
    %142 = vst.msk [vmem:[%s106 + $0x41] sm:$0x1] %vm107, 0.0
    %143 = vst.msk [vmem:[%s106 + $0x59] sm:$0x1] %vm107, 0.0
    %144 = vst.msk [vmem:[%s106 + $0x71] sm:$0x1] %vm107, 0.0
    %145 = vst.msk [vmem:[%s106 + $0x89] sm:$0x1] %vm107, 0.0
    %146 = vst.msk [vmem:[%s106 + $0xa1] sm:$0x1] %vm107, 0.0
    %147 = vst.msk [vmem:[%s106 + $0xb9] sm:$0x1] %vm107, 0.0
    %148 = vst.msk [vmem:[%s106 + $0xd1] sm:$0x1] %vm107, 0.0
    %149 = vst.msk [vmem:[%s106 + $0xe9] sm:$0x1] %vm107, 0.0
    %150 = vst.msk [vmem:[%s106 + $0x101] sm:$0x1] %vm107, 0.0
    %151 = vst.msk [vmem:[%s106 + $0x119] sm:$0x1] %vm107, 0.0
    %152 = vst.msk [vmem:[%s106 + $0x131] sm:$0x1] %vm107, 0.0
    %153 = vst.msk [vmem:[%s106 + $0x149] sm:$0x1] %vm107, 0.0
    %154 = vst.msk [vmem:[%s106 + $0x161] sm:$0x1] %vm107, 0.0
    %155 = vst.msk [vmem:[%s106 + $0x179] sm:$0x1] %vm107, 0.0
    %156 = vst.msk [vmem:[%s106 + $0x1c1] sm:$0x1] %vm107, 0.0
    %157 = vst.msk [vmem:[%s106 + $0x1d9] sm:$0x1] %vm107, 0.0
    %158 = vst.msk [vmem:[%s106 + $0x1f1] sm:$0x1] %vm107, 0.0
    %159 = vst.msk [vmem:[%s106 + $0x209] sm:$0x1] %vm107, 0.0
    %160 = vst.msk [vmem:[%s106 + $0x221] sm:$0x1] %vm107, 0.0
    %161 = vst.msk [vmem:[%s106 + $0x239] sm:$0x1] %vm107, 0.0
    %162 = vst.msk [vmem:[%s106 + $0x251] sm:$0x1] %vm107, 0.0
    %163 = vst.msk [vmem:[%s106 + $0x269] sm:$0x1] %vm107, 0.0
    %164 = vst.msk [vmem:[%s106 + $0x281] sm:$0x1] %vm107, 0.0
    %165 = vst.msk [vmem:[%s106 + $0x299] sm:$0x1] %vm107, 0.0
    %166 = vst.msk [vmem:[%s106 + $0x2b1] sm:$0x1] %vm107, 0.0
    %167 = vst.msk [vmem:[%s106 + $0x2c9] sm:$0x1] %vm107, 0.0
    %168 = vst.msk [vmem:[%s106 + $0x2e1] sm:$0x1] %vm107, 0.0
    %169 = vst.msk [vmem:[%s106 + $0x2f9] sm:$0x1] %vm107, 0.0
    %170 = vst.msk [vmem:[%s106 + $0x311] sm:$0x1] %vm107, 0.0
    %171 = vst.msk [vmem:[%s106 + $0x329] sm:$0x1] %vm107, 0.0
    %172 = vst.msk [vmem:[%s106 + $0x1] sm:$0xff] %vm91, %v27
    %173 = vst.msk [vmem:[%s106 + $0x9] sm:$0xff] %vm91, %v28
    %174 = vst.msk [vmem:[%s106 + $0x19] sm:$0xff] %vm91, %v29
    %175 = vst.msk [vmem:[%s106 + $0x21] sm:$0xff] %vm91, %v30
    %176 = vst.msk [vmem:[%s106 + $0x31] sm:$0xff] %vm91, %v31
    %177 = vst.msk [vmem:[%s106 + $0x39] sm:$0xff] %vm91, %v32
    %178 = vst.msk [vmem:[%s106 + $0x49] sm:$0xff] %vm91, %v33
    %179 = vst.msk [vmem:[%s106 + $0x51] sm:$0xff] %vm91, %v34
    %180 = vst.msk [vmem:[%s106 + $0x61] sm:$0xff] %vm91, %v35
    %181 = vst.msk [vmem:[%s106 + $0x69] sm:$0xff] %vm91, %v36
    %182 = vst.msk [vmem:[%s106 + $0x79] sm:$0xff] %vm91, %v37
    %183 = vst.msk [vmem:[%s106 + $0x81] sm:$0xff] %vm91, %v38
    %184 = vst.msk [vmem:[%s106 + $0x91] sm:$0xff] %vm91, %v39
    %185 = vst.msk [vmem:[%s106 + $0x99] sm:$0xff] %vm91, %v40
    %186 = vst.msk [vmem:[%s106 + $0xa9] sm:$0xff] %vm91, %v41
    %187 = vst.msk [vmem:[%s106 + $0xb1] sm:$0xff] %vm91, %v42
    %188 = vst.msk [vmem:[%s106 + $0xc1] sm:$0xff] %vm91, %v43
    %189 = vst.msk [vmem:[%s106 + $0xc9] sm:$0xff] %vm91, %v44
    %190 = vst.msk [vmem:[%s106 + $0xd9] sm:$0xff] %vm91, %v45
    %191 = vst.msk [vmem:[%s106 + $0xe1] sm:$0xff] %vm91, %v46
    %192 = vst.msk [vmem:[%s106 + $0xf1] sm:$0xff] %vm91, %v47
    %193 = vst.msk [vmem:[%s106 + $0xf9] sm:$0xff] %vm91, %v48
    %194 = vst.msk [vmem:[%s106 + $0x109] sm:$0xff] %vm91, %v49
    %195 = vst.msk [vmem:[%s106 + $0x111] sm:$0xff] %vm91, %v50
    %196 = vst.msk [vmem:[%s106 + $0x121] sm:$0xff] %vm91, %v51
    %197 = vst.msk [vmem:[%s106 + $0x129] sm:$0xff] %vm91, %v52
    %198 = vst.msk [vmem:[%s106 + $0x139] sm:$0xff] %vm91, %v53
    %199 = vst.msk [vmem:[%s106 + $0x141] sm:$0xff] %vm91, %v54
    %200 = vst.msk [vmem:[%s106 + $0x151] sm:$0xff] %vm91, %v55
    %201 = vst.msk [vmem:[%s106 + $0x159] sm:$0xff] %vm91, %v56
    %202 = vst.msk [vmem:[%s106 + $0x169] sm:$0xff] %vm91, %v57
    %203 = vst.msk [vmem:[%s106 + $0x171] sm:$0xff] %vm91, %v58
    %204 = vst.msk [vmem:[%s106 + $0x1b1] sm:$0xff] %vm91, %v59
    %205 = vst.msk [vmem:[%s106 + $0x1b9] sm:$0xff] %vm91, %v60
    %206 = vst.msk [vmem:[%s106 + $0x1c9] sm:$0xff] %vm91, %v61
    %207 = vst.msk [vmem:[%s106 + $0x1d1] sm:$0xff] %vm91, %v62
    %208 = vst.msk [vmem:[%s106 + $0x1e1] sm:$0xff] %vm91, %v63
    %209 = vst.msk [vmem:[%s106 + $0x1e9] sm:$0xff] %vm91, %v64
    %210 = vst.msk [vmem:[%s106 + $0x1f9] sm:$0xff] %vm91, %v65
    %211 = vst.msk [vmem:[%s106 + $0x201] sm:$0xff] %vm91, %v66
    %212 = vst.msk [vmem:[%s106 + $0x211] sm:$0xff] %vm91, %v67
    %213 = vst.msk [vmem:[%s106 + $0x219] sm:$0xff] %vm91, %v68
    %214 = vst.msk [vmem:[%s106 + $0x229] sm:$0xff] %vm91, %v69
    %215 = vst.msk [vmem:[%s106 + $0x231] sm:$0xff] %vm91, %v70
    %216 = vst.msk [vmem:[%s106 + $0x241] sm:$0xff] %vm91, %v71
    %217 = vst.msk [vmem:[%s106 + $0x249] sm:$0xff] %vm91, %v72
    %218 = vst.msk [vmem:[%s106 + $0x259] sm:$0xff] %vm91, %v73
    %219 = vst.msk [vmem:[%s106 + $0x261] sm:$0xff] %vm91, %v74
    %220 = vst.msk [vmem:[%s106 + $0x271] sm:$0xff] %vm91, %v75
    %221 = vst.msk [vmem:[%s106 + $0x279] sm:$0xff] %vm91, %v76
    %222 = vst.msk [vmem:[%s106 + $0x289] sm:$0xff] %vm91, %v77
    %223 = vst.msk [vmem:[%s106 + $0x291] sm:$0xff] %vm91, %v78
    %224 = vst.msk [vmem:[%s106 + $0x2a1] sm:$0xff] %vm91, %v79
    %225 = vst.msk [vmem:[%s106 + $0x2a9] sm:$0xff] %vm91, %v80
    %226 = vst.msk [vmem:[%s106 + $0x2b9] sm:$0xff] %vm91, %v81
    %227 = vst.msk [vmem:[%s106 + $0x2c1] sm:$0xff] %vm91, %v82
    %228 = vst.msk [vmem:[%s106 + $0x2d1] sm:$0xff] %vm91, %v83
    %229 = vst.msk [vmem:[%s106 + $0x2d9] sm:$0xff] %vm91, %v84
    %230 = vst.msk [vmem:[%s106 + $0x2e9] sm:$0xff] %vm91, %v85
    %231 = vst.msk [vmem:[%s106 + $0x2f1] sm:$0xff] %vm91, %v86
    %232 = vst.msk [vmem:[%s106 + $0x301] sm:$0xff] %vm91, %v87
    %233 = vst.msk [vmem:[%s106 + $0x309] sm:$0xff] %vm91, %v88
    %234 = vst.msk [vmem:[%s106 + $0x319] sm:$0xff] %vm91, %v89
    %235 = vst.msk [vmem:[%s106 + $0x321] sm:$0xff] %vm91, %v90
    %v236 = vld [vmem:[#allocation2] sm:$0xff]
    %v237 = vld [vmem:[#allocation2 + $0x8] sm:$0xff]
    %v238 = vld [vmem:[#allocation2 + $0x10] sm:$0x3]
    %v239 = vld [vmem:[#allocation2 + $0x18] sm:$0xff]
    %v240 = vld [vmem:[#allocation2 + $0x20] sm:$0xff]
    %v241 = vld [vmem:[#allocation2 + $0x28] sm:$0x3]
    %v242 = vld [vmem:[#allocation2 + $0x30] sm:$0xff]
    %v243 = vld [vmem:[#allocation2 + $0x38] sm:$0xff]
    %v244 = vld [vmem:[#allocation2 + $0x40] sm:$0x3]
    %v245 = vld [vmem:[#allocation2 + $0x48] sm:$0xff]
    %v246 = vld [vmem:[#allocation2 + $0x50] sm:$0xff]
    %v247 = vld [vmem:[#allocation2 + $0x58] sm:$0x3]
    %v248 = vld [vmem:[#allocation2 + $0x60] sm:$0xff]
    %v249 = vld [vmem:[#allocation2 + $0x68] sm:$0xff]
    %v250 = vld [vmem:[#allocation2 + $0x70] sm:$0x3]
    %v251 = vld [vmem:[#allocation2 + $0x78] sm:$0xff]
    %v252 = vld [vmem:[#allocation2 + $0x80] sm:$0xff]
    %v253 = vld [vmem:[#allocation2 + $0x88] sm:$0x3]
    %v254 = vld [vmem:[#allocation2 + $0x90] sm:$0xff]
    %v255 = vld [vmem:[#allocation2 + $0x98] sm:$0xff]
    %v256 = vld [vmem:[#allocation2 + $0xa0] sm:$0x3]
    %v257 = vld [vmem:[#allocation2 + $0xa8] sm:$0xff]
    %v258 = vld [vmem:[#allocation2 + $0xb0] sm:$0xff]
    %v259 = vld [vmem:[#allocation2 + $0xb8] sm:$0x3]
    %v260 = vld [vmem:[#allocation2 + $0xc0] sm:$0xff]
    %v261 = vld [vmem:[#allocation2 + $0xc8] sm:$0xff]
    %v262 = vld [vmem:[#allocation2 + $0xd0] sm:$0x3]
    %v263 = vld [vmem:[#allocation2 + $0xd8] sm:$0xff]
    %v264 = vld [vmem:[#allocation2 + $0xe0] sm:$0xff]
    %v265 = vld [vmem:[#allocation2 + $0xe8] sm:$0x3]
    %v266 = vld [vmem:[#allocation2 + $0xf0] sm:$0xff]
    %v267 = vld [vmem:[#allocation2 + $0xf8] sm:$0xff]
    %v268 = vld [vmem:[#allocation2 + $0x100] sm:$0x3]
    %v269 = vld [vmem:[#allocation2 + $0x108] sm:$0xff]
    %v270 = vld [vmem:[#allocation2 + $0x110] sm:$0xff]
    %v271 = vld [vmem:[#allocation2 + $0x118] sm:$0x3]
    %v272 = vld [vmem:[#allocation2 + $0x120] sm:$0xff]
    %v273 = vld [vmem:[#allocation2 + $0x128] sm:$0xff]
    %v274 = vld [vmem:[#allocation2 + $0x130] sm:$0x3]
    %v275 = vld [vmem:[#allocation2 + $0x138] sm:$0xff]
    %v276 = vld [vmem:[#allocation2 + $0x140] sm:$0xff]
    %v277 = vld [vmem:[#allocation2 + $0x148] sm:$0x3]
    %v278 = vld [vmem:[#allocation2 + $0x150] sm:$0xff]
    %v279 = vld [vmem:[#allocation2 + $0x158] sm:$0xff]
    %v280 = vld [vmem:[#allocation2 + $0x160] sm:$0x3]
    %v281 = vld [vmem:[#allocation2 + $0x168] sm:$0xff]
    %v282 = vld [vmem:[#allocation2 + $0x170] sm:$0xff]
    %v283 = vld [vmem:[#allocation2 + $0x178] sm:$0x3]
    %v284 = vld [vmem:[#allocation2 + $0x180] sm:$0xff]
    %v285 = vld [vmem:[#allocation2 + $0x188] sm:$0xff]
    %v286 = vld [vmem:[#allocation2 + $0x190] sm:$0x3]
    %v287 = vld [vmem:[#allocation2 + $0x198] sm:$0xff]
    %v288 = vld [vmem:[#allocation2 + $0x1a0] sm:$0xff]
    %v289 = vld [vmem:[#allocation2 + $0x1a8] sm:$0x3]
    %v290 = vld [vmem:[#allocation2 + $0x1b0] sm:$0xff]
    %v291 = vld [vmem:[#allocation2 + $0x1b8] sm:$0xff]
    %v292 = vld [vmem:[#allocation2 + $0x1c0] sm:$0x3]
    %v293 = vld [vmem:[#allocation2 + $0x1c8] sm:$0xff]
    %v294 = vld [vmem:[#allocation2 + $0x1d0] sm:$0xff]
    %v295 = vld [vmem:[#allocation2 + $0x1d8] sm:$0x3]
    %v296 = vld [vmem:[#allocation2 + $0x1e0] sm:$0xff]
    %v297 = vld [vmem:[#allocation2 + $0x1e8] sm:$0xff]
    %v298 = vld [vmem:[#allocation2 + $0x1f0] sm:$0x3]
    %v299 = vld [vmem:[#allocation2 + $0x1f8] sm:$0xff]
    %v300 = vld [vmem:[#allocation2 + $0x200] sm:$0xff]
    %v301 = vld [vmem:[#allocation2 + $0x208] sm:$0x3]
    %v302 = vld [vmem:[#allocation2 + $0x210] sm:$0xff]
    %v303 = vld [vmem:[#allocation2 + $0x218] sm:$0xff]
    %v304 = vld [vmem:[#allocation2 + $0x220] sm:$0x3]
    %v305 = vld [vmem:[#allocation2 + $0x228] sm:$0xff]
    %v306 = vld [vmem:[#allocation2 + $0x230] sm:$0xff]
    %v307 = vld [vmem:[#allocation2 + $0x238] sm:$0x3]
    %v308 = vld [vmem:[#allocation2 + $0x240] sm:$0xff]
    %v309 = vld [vmem:[#allocation2 + $0x248] sm:$0xff]
    %v310 = vld [vmem:[#allocation2 + $0x250] sm:$0x3]
    %v311 = vld [vmem:[#allocation2 + $0x258] sm:$0xff]
    %v312 = vld [vmem:[#allocation2 + $0x260] sm:$0xff]
    %v313 = vld [vmem:[#allocation2 + $0x268] sm:$0x3]
    %v314 = vld [vmem:[#allocation2 + $0x270] sm:$0xff]
    %v315 = vld [vmem:[#allocation2 + $0x278] sm:$0xff]
    %v316 = vld [vmem:[#allocation2 + $0x280] sm:$0x3]
    %v317 = vld [vmem:[#allocation2 + $0x288] sm:$0xff]
    %v318 = vld [vmem:[#allocation2 + $0x290] sm:$0xff]
    %v319 = vld [vmem:[#allocation2 + $0x298] sm:$0x3]
    %v320 = vld [vmem:[#allocation2 + $0x2a0] sm:$0xff]
    %v321 = vld [vmem:[#allocation2 + $0x2a8] sm:$0xff]
    %v322 = vld [vmem:[#allocation2 + $0x2b0] sm:$0x3]
    %v323 = vld [vmem:[#allocation2 + $0x2b8] sm:$0xff]
    %v324 = vld [vmem:[#allocation2 + $0x2c0] sm:$0xff]
    %v325 = vld [vmem:[#allocation2 + $0x2c8] sm:$0x3]
    %v326 = vld [vmem:[#allocation2 + $0x2d0] sm:$0xff]
    %v327 = vld [vmem:[#allocation2 + $0x2d8] sm:$0xff]
    %v328 = vld [vmem:[#allocation2 + $0x2e0] sm:$0x3]
    %v329 = vld [vmem:[#allocation2 + $0x2e8] sm:$0xff]
    %v330 = vld [vmem:[#allocation2 + $0x2f0] sm:$0xff]
    %v331 = vld [vmem:[#allocation2 + $0x2f8] sm:$0x3]
    %v332 = vld [vmem:[#allocation2 + $0x300] sm:$0xff]
    %v333 = vld [vmem:[#allocation2 + $0x308] sm:$0xff]
    %v334 = vld [vmem:[#allocation2 + $0x310] sm:$0x3]
    %v335 = vld [vmem:[#allocation2 + $0x318] sm:$0xff]
    %v336 = vld [vmem:[#allocation2 + $0x320] sm:$0xff]
    %v337 = vld [vmem:[#allocation2 + $0x328] sm:$0x3]
    %v338 = vld [vmem:[#allocation2 + $0x330] sm:$0xff]
    %v339 = vld [vmem:[#allocation2 + $0x338] sm:$0xff]
    %v340 = vld [vmem:[#allocation2 + $0x340] sm:$0x3]
    %v341 = vld [vmem:[#allocation2 + $0x348] sm:$0xff]
    %v342 = vld [vmem:[#allocation2 + $0x350] sm:$0xff]
    %v343 = vld [vmem:[#allocation2 + $0x358] sm:$0x3]
    %vm440 = vcmask 1046528
    %v441 = vrot.slane %v236, 1
    %v442 = vrot.slane %v237, 1
    %v443 = vsel %vm440, %v441, %v442
    %v444 = vrot.slane %v238, 1
    %v445 = vsel %vm440, %v442, %v444
    %v446 = vrot.slane %v239, 1
    %v447 = vrot.slane %v240, 1
    %v448 = vsel %vm440, %v446, %v447
    %v449 = vrot.slane %v241, 1
    %v450 = vsel %vm440, %v447, %v449
    %v451 = vrot.slane %v242, 1
    %v452 = vrot.slane %v243, 1
    %v453 = vsel %vm440, %v451, %v452
    %v454 = vrot.slane %v244, 1
    %v455 = vsel %vm440, %v452, %v454
    %v456 = vrot.slane %v245, 1
    %v457 = vrot.slane %v246, 1
    %v458 = vsel %vm440, %v456, %v457
    %v459 = vrot.slane %v247, 1
    %v460 = vsel %vm440, %v457, %v459
    %v461 = vrot.slane %v248, 1
    %v462 = vrot.slane %v249, 1
    %v463 = vsel %vm440, %v461, %v462
    %v464 = vrot.slane %v250, 1
    %v465 = vsel %vm440, %v462, %v464
    %v466 = vrot.slane %v251, 1
    %v467 = vrot.slane %v252, 1
    %v468 = vsel %vm440, %v466, %v467
    %v469 = vrot.slane %v253, 1
    %v470 = vsel %vm440, %v467, %v469
    %v471 = vrot.slane %v254, 1
    %v472 = vrot.slane %v255, 1
    %v473 = vsel %vm440, %v471, %v472
    %v474 = vrot.slane %v256, 1
    %v475 = vsel %vm440, %v472, %v474
    %v476 = vrot.slane %v257, 1
    %v477 = vrot.slane %v258, 1
    %v478 = vsel %vm440, %v476, %v477
    %v479 = vrot.slane %v259, 1
    %v480 = vsel %vm440, %v477, %v479
    %v481 = vrot.slane %v260, 1
    %v482 = vrot.slane %v261, 1
    %v483 = vsel %vm440, %v481, %v482
    %v484 = vrot.slane %v262, 1
    %v485 = vsel %vm440, %v482, %v484
    %v486 = vrot.slane %v263, 1
    %v487 = vrot.slane %v264, 1
    %v488 = vsel %vm440, %v486, %v487
    %v489 = vrot.slane %v265, 1
    %v490 = vsel %vm440, %v487, %v489
    %v491 = vrot.slane %v266, 1
    %v492 = vrot.slane %v267, 1
    %v493 = vsel %vm440, %v491, %v492
    %v494 = vrot.slane %v268, 1
    %v495 = vsel %vm440, %v492, %v494
    %v496 = vrot.slane %v269, 1
    %v497 = vrot.slane %v270, 1
    %v498 = vsel %vm440, %v496, %v497
    %v499 = vrot.slane %v271, 1
    %v500 = vsel %vm440, %v497, %v499
    %v501 = vrot.slane %v272, 1
    %v502 = vrot.slane %v273, 1
    %v503 = vsel %vm440, %v501, %v502
    %v504 = vrot.slane %v274, 1
    %v505 = vsel %vm440, %v502, %v504
    %v506 = vrot.slane %v275, 1
    %v507 = vrot.slane %v276, 1
    %v508 = vsel %vm440, %v506, %v507
    %v509 = vrot.slane %v277, 1
    %v510 = vsel %vm440, %v507, %v509
    %v511 = vrot.slane %v278, 1
    %v512 = vrot.slane %v279, 1
    %v513 = vsel %vm440, %v511, %v512
    %v514 = vrot.slane %v280, 1
    %v515 = vsel %vm440, %v512, %v514
    %v516 = vrot.slane %v281, 1
    %v517 = vrot.slane %v282, 1
    %v518 = vsel %vm440, %v516, %v517
    %v519 = vrot.slane %v283, 1
    %v520 = vsel %vm440, %v517, %v519
    %v521 = vrot.slane %v290, 1
    %v522 = vrot.slane %v291, 1
    %v523 = vsel %vm440, %v521, %v522
    %v524 = vrot.slane %v292, 1
    %v525 = vsel %vm440, %v522, %v524
    %v526 = vrot.slane %v293, 1
    %v527 = vrot.slane %v294, 1
    %v528 = vsel %vm440, %v526, %v527
    %v529 = vrot.slane %v295, 1
    %v530 = vsel %vm440, %v527, %v529
    %v531 = vrot.slane %v296, 1
    %v532 = vrot.slane %v297, 1
    %v533 = vsel %vm440, %v531, %v532
    %v534 = vrot.slane %v298, 1
    %v535 = vsel %vm440, %v532, %v534
    %v536 = vrot.slane %v299, 1
    %v537 = vrot.slane %v300, 1
    %v538 = vsel %vm440, %v536, %v537
    %v539 = vrot.slane %v301, 1
    %v540 = vsel %vm440, %v537, %v539
    %v541 = vrot.slane %v302, 1
    %v542 = vrot.slane %v303, 1
    %v543 = vsel %vm440, %v541, %v542
    %v544 = vrot.slane %v304, 1
    %v545 = vsel %vm440, %v542, %v544
    %v546 = vrot.slane %v305, 1
    %v547 = vrot.slane %v306, 1
    %v548 = vsel %vm440, %v546, %v547
    %v549 = vrot.slane %v307, 1
    %v550 = vsel %vm440, %v547, %v549
    %v551 = vrot.slane %v308, 1
    %v552 = vrot.slane %v309, 1
    %v553 = vsel %vm440, %v551, %v552
    %v554 = vrot.slane %v310, 1
    %v555 = vsel %vm440, %v552, %v554
    %v556 = vrot.slane %v311, 1
    %v557 = vrot.slane %v312, 1
    %v558 = vsel %vm440, %v556, %v557
    %v559 = vrot.slane %v313, 1
    %v560 = vsel %vm440, %v557, %v559
    %v561 = vrot.slane %v314, 1
    %v562 = vrot.slane %v315, 1
    %v563 = vsel %vm440, %v561, %v562
    %v564 = vrot.slane %v316, 1
    %v565 = vsel %vm440, %v562, %v564
    %v566 = vrot.slane %v317, 1
    %v567 = vrot.slane %v318, 1
    %v568 = vsel %vm440, %v566, %v567
    %v569 = vrot.slane %v319, 1
    %v570 = vsel %vm440, %v567, %v569
    %v571 = vrot.slane %v320, 1
    %v572 = vrot.slane %v321, 1
    %v573 = vsel %vm440, %v571, %v572
    %v574 = vrot.slane %v322, 1
    %v575 = vsel %vm440, %v572, %v574
    %v576 = vrot.slane %v323, 1
    %v577 = vrot.slane %v324, 1
    %v578 = vsel %vm440, %v576, %v577
    %v579 = vrot.slane %v325, 1
    %v580 = vsel %vm440, %v577, %v579
    %v581 = vrot.slane %v326, 1
    %v582 = vrot.slane %v327, 1
    %v583 = vsel %vm440, %v581, %v582
    %v584 = vrot.slane %v328, 1
    %v585 = vsel %vm440, %v582, %v584
    %v586 = vrot.slane %v329, 1
    %v587 = vrot.slane %v330, 1
    %v588 = vsel %vm440, %v586, %v587
    %v589 = vrot.slane %v331, 1
    %v590 = vsel %vm440, %v587, %v589
    %v591 = vrot.slane %v332, 1
    %v592 = vrot.slane %v333, 1
    %v593 = vsel %vm440, %v591, %v592
    %v594 = vrot.slane %v334, 1
    %v595 = vsel %vm440, %v592, %v594
    %v596 = vrot.slane %v335, 1
    %v597 = vrot.slane %v336, 1
    %v598 = vsel %vm440, %v596, %v597
    %v599 = vrot.slane %v337, 1
    %v600 = vsel %vm440, %v597, %v599
    %601 = vrot.lane.b32.xlu0 %v443, 4
    %v602 = vpop.permute.xlu0 %601
    %603 = vrot.lane.b32.xlu0 %v445, 4
    %v604 = vpop.permute.xlu0 %603
    %605 = vrot.lane.b32.xlu0 %v448, 4
    %v606 = vpop.permute.xlu0 %605
    %607 = vrot.lane.b32.xlu0 %v450, 4
    %v608 = vpop.permute.xlu0 %607
    %609 = vrot.lane.b32.xlu0 %v453, 4
    %v610 = vpop.permute.xlu0 %609
    %611 = vrot.lane.b32.xlu0 %v455, 4
    %v612 = vpop.permute.xlu0 %611
    %613 = vrot.lane.b32.xlu0 %v458, 4
    %v614 = vpop.permute.xlu0 %613
    %615 = vrot.lane.b32.xlu0 %v460, 4
    %v616 = vpop.permute.xlu0 %615
    %617 = vrot.lane.b32.xlu0 %v463, 4
    %v618 = vpop.permute.xlu0 %617
    %619 = vrot.lane.b32.xlu0 %v465, 4
    %v620 = vpop.permute.xlu0 %619
    %621 = vrot.lane.b32.xlu0 %v468, 4
    %v622 = vpop.permute.xlu0 %621
    %623 = vrot.lane.b32.xlu0 %v470, 4
    %v624 = vpop.permute.xlu0 %623
    %625 = vrot.lane.b32.xlu0 %v473, 4
    %v626 = vpop.permute.xlu0 %625
    %627 = vrot.lane.b32.xlu0 %v475, 4
    %v628 = vpop.permute.xlu0 %627
    %629 = vrot.lane.b32.xlu0 %v478, 4
    %v630 = vpop.permute.xlu0 %629
    %631 = vrot.lane.b32.xlu0 %v480, 4
    %v632 = vpop.permute.xlu0 %631
    %633 = vrot.lane.b32.xlu0 %v483, 4
    %v634 = vpop.permute.xlu0 %633
    %635 = vrot.lane.b32.xlu0 %v485, 4
    %v636 = vpop.permute.xlu0 %635
    %637 = vrot.lane.b32.xlu0 %v488, 4
    %v638 = vpop.permute.xlu0 %637
    %639 = vrot.lane.b32.xlu0 %v490, 4
    %v640 = vpop.permute.xlu0 %639
    %641 = vrot.lane.b32.xlu0 %v493, 4
    %v642 = vpop.permute.xlu0 %641
    %643 = vrot.lane.b32.xlu0 %v495, 4
    %v644 = vpop.permute.xlu0 %643
    %645 = vrot.lane.b32.xlu0 %v498, 4
    %v646 = vpop.permute.xlu0 %645
    %647 = vrot.lane.b32.xlu0 %v500, 4
    %v648 = vpop.permute.xlu0 %647
    %649 = vrot.lane.b32.xlu0 %v503, 4
    %v650 = vpop.permute.xlu0 %649
    %651 = vrot.lane.b32.xlu0 %v505, 4
    %v652 = vpop.permute.xlu0 %651
    %653 = vrot.lane.b32.xlu0 %v508, 4
    %v654 = vpop.permute.xlu0 %653
    %655 = vrot.lane.b32.xlu0 %v510, 4
    %v656 = vpop.permute.xlu0 %655
    %657 = vrot.lane.b32.xlu0 %v513, 4
    %v658 = vpop.permute.xlu0 %657
    %659 = vrot.lane.b32.xlu0 %v515, 4
    %v660 = vpop.permute.xlu0 %659
    %661 = vrot.lane.b32.xlu0 %v518, 4
    %v662 = vpop.permute.xlu0 %661
    %663 = vrot.lane.b32.xlu0 %v520, 4
    %v664 = vpop.permute.xlu0 %663
    %665 = vrot.lane.b32.xlu0 %v523, 4
    %v666 = vpop.permute.xlu0 %665
    %667 = vrot.lane.b32.xlu0 %v525, 4
    %v668 = vpop.permute.xlu0 %667
    %669 = vrot.lane.b32.xlu0 %v528, 4
    %v670 = vpop.permute.xlu0 %669
    %671 = vrot.lane.b32.xlu0 %v530, 4
    %v672 = vpop.permute.xlu0 %671
    %673 = vrot.lane.b32.xlu0 %v533, 4
    %v674 = vpop.permute.xlu0 %673
    %675 = vrot.lane.b32.xlu0 %v535, 4
    %v676 = vpop.permute.xlu0 %675
    %677 = vrot.lane.b32.xlu0 %v538, 4
    %v678 = vpop.permute.xlu0 %677
    %679 = vrot.lane.b32.xlu0 %v540, 4
    %v680 = vpop.permute.xlu0 %679
    %681 = vrot.lane.b32.xlu0 %v543, 4
    %v682 = vpop.permute.xlu0 %681
    %683 = vrot.lane.b32.xlu0 %v545, 4
    %v684 = vpop.permute.xlu0 %683
    %685 = vrot.lane.b32.xlu0 %v548, 4
    %v686 = vpop.permute.xlu0 %685
    %687 = vrot.lane.b32.xlu0 %v550, 4
    %v688 = vpop.permute.xlu0 %687
    %689 = vrot.lane.b32.xlu0 %v553, 4
    %v690 = vpop.permute.xlu0 %689
    %691 = vrot.lane.b32.xlu0 %v555, 4
    %v692 = vpop.permute.xlu0 %691
    %693 = vrot.lane.b32.xlu0 %v558, 4
    %v694 = vpop.permute.xlu0 %693
    %695 = vrot.lane.b32.xlu0 %v560, 4
    %v696 = vpop.permute.xlu0 %695
    %697 = vrot.lane.b32.xlu0 %v563, 4
    %v698 = vpop.permute.xlu0 %697
    %699 = vrot.lane.b32.xlu0 %v565, 4
    %v700 = vpop.permute.xlu0 %699
    %701 = vrot.lane.b32.xlu0 %v568, 4
    %v702 = vpop.permute.xlu0 %701
    %703 = vrot.lane.b32.xlu0 %v570, 4
    %v704 = vpop.permute.xlu0 %703
    %705 = vrot.lane.b32.xlu0 %v573, 4
    %v706 = vpop.permute.xlu0 %705
    %707 = vrot.lane.b32.xlu0 %v575, 4
    %v708 = vpop.permute.xlu0 %707
    %709 = vrot.lane.b32.xlu0 %v578, 4
    %v710 = vpop.permute.xlu0 %709
    %711 = vrot.lane.b32.xlu0 %v580, 4
    %v712 = vpop.permute.xlu0 %711
    %713 = vrot.lane.b32.xlu0 %v583, 4
    %v714 = vpop.permute.xlu0 %713
    %715 = vrot.lane.b32.xlu0 %v585, 4
    %v716 = vpop.permute.xlu0 %715
    %717 = vrot.lane.b32.xlu0 %v588, 4
    %v718 = vpop.permute.xlu0 %717
    %719 = vrot.lane.b32.xlu0 %v590, 4
    %v720 = vpop.permute.xlu0 %719
    %721 = vrot.lane.b32.xlu0 %v593, 4
    %v722 = vpop.permute.xlu0 %721
    %723 = vrot.lane.b32.xlu0 %v595, 4
    %v724 = vpop.permute.xlu0 %723
    %725 = vrot.lane.b32.xlu0 %v598, 4
    %v726 = vpop.permute.xlu0 %725
    %727 = vrot.lane.b32.xlu0 %v600, 4
    %v728 = vpop.permute.xlu0 %727
    %vm793 = vcmask 1045504
    %v794 = vrot.slane %v236, 2
    %v795 = vrot.slane %v237, 2
    %v796 = vsel %vm793, %v794, %v795
    %v797 = vrot.slane %v238, 2
    %v798 = vsel %vm793, %v795, %v797
    %v799 = vrot.slane %v239, 2
    %v800 = vrot.slane %v240, 2
    %v801 = vsel %vm793, %v799, %v800
    %v802 = vrot.slane %v241, 2
    %v803 = vsel %vm793, %v800, %v802
    %v804 = vrot.slane %v242, 2
    %v805 = vrot.slane %v243, 2
    %v806 = vsel %vm793, %v804, %v805
    %v807 = vrot.slane %v244, 2
    %v808 = vsel %vm793, %v805, %v807
    %v809 = vrot.slane %v245, 2
    %v810 = vrot.slane %v246, 2
    %v811 = vsel %vm793, %v809, %v810
    %v812 = vrot.slane %v247, 2
    %v813 = vsel %vm793, %v810, %v812
    %v814 = vrot.slane %v248, 2
    %v815 = vrot.slane %v249, 2
    %v816 = vsel %vm793, %v814, %v815
    %v817 = vrot.slane %v250, 2
    %v818 = vsel %vm793, %v815, %v817
    %v819 = vrot.slane %v251, 2
    %v820 = vrot.slane %v252, 2
    %v821 = vsel %vm793, %v819, %v820
    %v822 = vrot.slane %v253, 2
    %v823 = vsel %vm793, %v820, %v822
    %v824 = vrot.slane %v254, 2
    %v825 = vrot.slane %v255, 2
    %v826 = vsel %vm793, %v824, %v825
    %v827 = vrot.slane %v256, 2
    %v828 = vsel %vm793, %v825, %v827
    %v829 = vrot.slane %v257, 2
    %v830 = vrot.slane %v258, 2
    %v831 = vsel %vm793, %v829, %v830
    %v832 = vrot.slane %v259, 2
    %v833 = vsel %vm793, %v830, %v832
    %v834 = vrot.slane %v260, 2
    %v835 = vrot.slane %v261, 2
    %v836 = vsel %vm793, %v834, %v835
    %v837 = vrot.slane %v262, 2
    %v838 = vsel %vm793, %v835, %v837
    %v839 = vrot.slane %v263, 2
    %v840 = vrot.slane %v264, 2
    %v841 = vsel %vm793, %v839, %v840
    %v842 = vrot.slane %v265, 2
    %v843 = vsel %vm793, %v840, %v842
    %v844 = vrot.slane %v266, 2
    %v845 = vrot.slane %v267, 2
    %v846 = vsel %vm793, %v844, %v845
    %v847 = vrot.slane %v268, 2
    %v848 = vsel %vm793, %v845, %v847
    %v849 = vrot.slane %v269, 2
    %v850 = vrot.slane %v270, 2
    %v851 = vsel %vm793, %v849, %v850
    %v852 = vrot.slane %v271, 2
    %v853 = vsel %vm793, %v850, %v852
    %v854 = vrot.slane %v272, 2
    %v855 = vrot.slane %v273, 2
    %v856 = vsel %vm793, %v854, %v855
    %v857 = vrot.slane %v274, 2
    %v858 = vsel %vm793, %v855, %v857
    %v859 = vrot.slane %v275, 2
    %v860 = vrot.slane %v276, 2
    %v861 = vsel %vm793, %v859, %v860
    %v862 = vrot.slane %v277, 2
    %v863 = vsel %vm793, %v860, %v862
    %v864 = vrot.slane %v278, 2
    %v865 = vrot.slane %v279, 2
    %v866 = vsel %vm793, %v864, %v865
    %v867 = vrot.slane %v280, 2
    %v868 = vsel %vm793, %v865, %v867
    %v869 = vrot.slane %v281, 2
    %v870 = vrot.slane %v282, 2
    %v871 = vsel %vm793, %v869, %v870
    %v872 = vrot.slane %v283, 2
    %v873 = vsel %vm793, %v870, %v872
    %v874 = vrot.slane %v290, 2
    %v875 = vrot.slane %v291, 2
    %v876 = vsel %vm793, %v874, %v875
    %v877 = vrot.slane %v292, 2
    %v878 = vsel %vm793, %v875, %v877
    %v879 = vrot.slane %v293, 2
    %v880 = vrot.slane %v294, 2
    %v881 = vsel %vm793, %v879, %v880
    %v882 = vrot.slane %v295, 2
    %v883 = vsel %vm793, %v880, %v882
    %v884 = vrot.slane %v296, 2
    %v885 = vrot.slane %v297, 2
    %v886 = vsel %vm793, %v884, %v885
    %v887 = vrot.slane %v298, 2
    %v888 = vsel %vm793, %v885, %v887
    %v889 = vrot.slane %v299, 2
    %v890 = vrot.slane %v300, 2
    %v891 = vsel %vm793, %v889, %v890
    %v892 = vrot.slane %v301, 2
    %v893 = vsel %vm793, %v890, %v892
    %v894 = vrot.slane %v302, 2
    %v895 = vrot.slane %v303, 2
    %v896 = vsel %vm793, %v894, %v895
    %v897 = vrot.slane %v304, 2
    %v898 = vsel %vm793, %v895, %v897
    %v899 = vrot.slane %v305, 2
    %v900 = vrot.slane %v306, 2
    %v901 = vsel %vm793, %v899, %v900
    %v902 = vrot.slane %v307, 2
    %v903 = vsel %vm793, %v900, %v902
    %v904 = vrot.slane %v308, 2
    %v905 = vrot.slane %v309, 2
    %v906 = vsel %vm793, %v904, %v905
    %v907 = vrot.slane %v310, 2
    %v908 = vsel %vm793, %v905, %v907
    %v909 = vrot.slane %v311, 2
    %v910 = vrot.slane %v312, 2
    %v911 = vsel %vm793, %v909, %v910
    %v912 = vrot.slane %v313, 2
    %v913 = vsel %vm793, %v910, %v912
    %v914 = vrot.slane %v314, 2
    %v915 = vrot.slane %v315, 2
    %v916 = vsel %vm793, %v914, %v915
    %v917 = vrot.slane %v316, 2
    %v918 = vsel %vm793, %v915, %v917
    %v919 = vrot.slane %v317, 2
    %v920 = vrot.slane %v318, 2
    %v921 = vsel %vm793, %v919, %v920
    %v922 = vrot.slane %v319, 2
    %v923 = vsel %vm793, %v920, %v922
    %v924 = vrot.slane %v320, 2
    %v925 = vrot.slane %v321, 2
    %v926 = vsel %vm793, %v924, %v925
    %v927 = vrot.slane %v322, 2
    %v928 = vsel %vm793, %v925, %v927
    %v929 = vrot.slane %v323, 2
    %v930 = vrot.slane %v324, 2
    %v931 = vsel %vm793, %v929, %v930
    %v932 = vrot.slane %v325, 2
    %v933 = vsel %vm793, %v930, %v932
    %v934 = vrot.slane %v326, 2
    %v935 = vrot.slane %v327, 2
    %v936 = vsel %vm793, %v934, %v935
    %v937 = vrot.slane %v328, 2
    %v938 = vsel %vm793, %v935, %v937
    %v939 = vrot.slane %v329, 2
    %v940 = vrot.slane %v330, 2
    %v941 = vsel %vm793, %v939, %v940
    %v942 = vrot.slane %v331, 2
    %v943 = vsel %vm793, %v940, %v942
    %v944 = vrot.slane %v332, 2
    %v945 = vrot.slane %v333, 2
    %v946 = vsel %vm793, %v944, %v945
    %v947 = vrot.slane %v334, 2
    %v948 = vsel %vm793, %v945, %v947
    %v949 = vrot.slane %v335, 2
    %v950 = vrot.slane %v336, 2
    %v951 = vsel %vm793, %v949, %v950
    %v952 = vrot.slane %v337, 2
    %v953 = vsel %vm793, %v950, %v952
    %954 = vrot.lane.b32.xlu0 %v796, 8
    %v955 = vpop.permute.xlu0 %954
    %956 = vrot.lane.b32.xlu0 %v798, 8
    %v957 = vpop.permute.xlu0 %956
    %958 = vrot.lane.b32.xlu0 %v801, 8
    %v959 = vpop.permute.xlu0 %958
    %960 = vrot.lane.b32.xlu0 %v803, 8
    %v961 = vpop.permute.xlu0 %960
    %962 = vrot.lane.b32.xlu0 %v806, 8
    %v963 = vpop.permute.xlu0 %962
    %964 = vrot.lane.b32.xlu0 %v808, 8
    %v965 = vpop.permute.xlu0 %964
    %966 = vrot.lane.b32.xlu0 %v811, 8
    %v967 = vpop.permute.xlu0 %966
    %968 = vrot.lane.b32.xlu0 %v813, 8
    %v969 = vpop.permute.xlu0 %968
    %970 = vrot.lane.b32.xlu0 %v816, 8
    %v971 = vpop.permute.xlu0 %970
    %972 = vrot.lane.b32.xlu0 %v818, 8
    %v973 = vpop.permute.xlu0 %972
    %974 = vrot.lane.b32.xlu0 %v821, 8
    %v975 = vpop.permute.xlu0 %974
    %976 = vrot.lane.b32.xlu0 %v823, 8
    %v977 = vpop.permute.xlu0 %976
    %978 = vrot.lane.b32.xlu0 %v826, 8
    %v979 = vpop.permute.xlu0 %978
    %980 = vrot.lane.b32.xlu0 %v828, 8
    %v981 = vpop.permute.xlu0 %980
    %982 = vrot.lane.b32.xlu0 %v831, 8
    %v983 = vpop.permute.xlu0 %982
    %984 = vrot.lane.b32.xlu0 %v833, 8
    %v985 = vpop.permute.xlu0 %984
    %986 = vrot.lane.b32.xlu0 %v836, 8
    %v987 = vpop.permute.xlu0 %986
    %988 = vrot.lane.b32.xlu0 %v838, 8
    %v989 = vpop.permute.xlu0 %988
    %990 = vrot.lane.b32.xlu0 %v841, 8
    %v991 = vpop.permute.xlu0 %990
    %992 = vrot.lane.b32.xlu0 %v843, 8
    %v993 = vpop.permute.xlu0 %992
    %994 = vrot.lane.b32.xlu0 %v846, 8
    %v995 = vpop.permute.xlu0 %994
    %996 = vrot.lane.b32.xlu0 %v848, 8
    %v997 = vpop.permute.xlu0 %996
    %998 = vrot.lane.b32.xlu0 %v851, 8
    %v999 = vpop.permute.xlu0 %998
    %1000 = vrot.lane.b32.xlu0 %v853, 8
    %v1001 = vpop.permute.xlu0 %1000
    %1002 = vrot.lane.b32.xlu0 %v856, 8
    %v1003 = vpop.permute.xlu0 %1002
    %1004 = vrot.lane.b32.xlu0 %v858, 8
    %v1005 = vpop.permute.xlu0 %1004
    %1006 = vrot.lane.b32.xlu0 %v861, 8
    %v1007 = vpop.permute.xlu0 %1006
    %1008 = vrot.lane.b32.xlu0 %v863, 8
    %v1009 = vpop.permute.xlu0 %1008
    %1010 = vrot.lane.b32.xlu0 %v866, 8
    %v1011 = vpop.permute.xlu0 %1010
    %1012 = vrot.lane.b32.xlu0 %v868, 8
    %v1013 = vpop.permute.xlu0 %1012
    %1014 = vrot.lane.b32.xlu0 %v871, 8
    %v1015 = vpop.permute.xlu0 %1014
    %1016 = vrot.lane.b32.xlu0 %v873, 8
    %v1017 = vpop.permute.xlu0 %1016
    %1018 = vrot.lane.b32.xlu0 %v876, 8
    %v1019 = vpop.permute.xlu0 %1018
    %1020 = vrot.lane.b32.xlu0 %v878, 8
    %v1021 = vpop.permute.xlu0 %1020
    %1022 = vrot.lane.b32.xlu0 %v881, 8
    %v1023 = vpop.permute.xlu0 %1022
    %1024 = vrot.lane.b32.xlu0 %v883, 8
    %v1025 = vpop.permute.xlu0 %1024
    %1026 = vrot.lane.b32.xlu0 %v886, 8
    %v1027 = vpop.permute.xlu0 %1026
    %1028 = vrot.lane.b32.xlu0 %v888, 8
    %v1029 = vpop.permute.xlu0 %1028
    %1030 = vrot.lane.b32.xlu0 %v891, 8
    %v1031 = vpop.permute.xlu0 %1030
    %1032 = vrot.lane.b32.xlu0 %v893, 8
    %v1033 = vpop.permute.xlu0 %1032
    %1034 = vrot.lane.b32.xlu0 %v896, 8
    %v1035 = vpop.permute.xlu0 %1034
    %1036 = vrot.lane.b32.xlu0 %v898, 8
    %v1037 = vpop.permute.xlu0 %1036
    %1038 = vrot.lane.b32.xlu0 %v901, 8
    %v1039 = vpop.permute.xlu0 %1038
    %1040 = vrot.lane.b32.xlu0 %v903, 8
    %v1041 = vpop.permute.xlu0 %1040
    %1042 = vrot.lane.b32.xlu0 %v906, 8
    %v1043 = vpop.permute.xlu0 %1042
    %1044 = vrot.lane.b32.xlu0 %v908, 8
    %v1045 = vpop.permute.xlu0 %1044
    %1046 = vrot.lane.b32.xlu0 %v911, 8
    %v1047 = vpop.permute.xlu0 %1046
    %1048 = vrot.lane.b32.xlu0 %v913, 8
    %v1049 = vpop.permute.xlu0 %1048
    %1050 = vrot.lane.b32.xlu0 %v916, 8
    %v1051 = vpop.permute.xlu0 %1050
    %1052 = vrot.lane.b32.xlu0 %v918, 8
    %v1053 = vpop.permute.xlu0 %1052
    %1054 = vrot.lane.b32.xlu0 %v921, 8
    %v1055 = vpop.permute.xlu0 %1054
    %1056 = vrot.lane.b32.xlu0 %v923, 8
    %v1057 = vpop.permute.xlu0 %1056
    %1058 = vrot.lane.b32.xlu0 %v926, 8
    %v1059 = vpop.permute.xlu0 %1058
    %1060 = vrot.lane.b32.xlu0 %v928, 8
    %v1061 = vpop.permute.xlu0 %1060
    %1062 = vrot.lane.b32.xlu0 %v931, 8
    %v1063 = vpop.permute.xlu0 %1062
    %1064 = vrot.lane.b32.xlu0 %v933, 8
    %v1065 = vpop.permute.xlu0 %1064
    %1066 = vrot.lane.b32.xlu0 %v936, 8
    %v1067 = vpop.permute.xlu0 %1066
    %1068 = vrot.lane.b32.xlu0 %v938, 8
    %v1069 = vpop.permute.xlu0 %1068
    %1070 = vrot.lane.b32.xlu0 %v941, 8
    %v1071 = vpop.permute.xlu0 %1070
    %1072 = vrot.lane.b32.xlu0 %v943, 8
    %v1073 = vpop.permute.xlu0 %1072
    %1074 = vrot.lane.b32.xlu0 %v946, 8
    %v1075 = vpop.permute.xlu0 %1074
    %1076 = vrot.lane.b32.xlu0 %v948, 8
    %v1077 = vpop.permute.xlu0 %1076
    %1078 = vrot.lane.b32.xlu0 %v951, 8
    %v1079 = vpop.permute.xlu0 %1078
    %1080 = vrot.lane.b32.xlu0 %v953, 8
    %v1081 = vpop.permute.xlu0 %1080
    %1150 = vrot.lane.b32.xlu0 %v239, 12
    %v1151 = vpop.permute.xlu0 %1150
    %1152 = vrot.lane.b32.xlu0 %v240, 12
    %v1153 = vpop.permute.xlu0 %1152
    %1154 = vrot.lane.b32.xlu0 %v242, 12
    %v1155 = vpop.permute.xlu0 %1154
    %1156 = vrot.lane.b32.xlu0 %v243, 12
    %v1157 = vpop.permute.xlu0 %1156
    %1158 = vrot.lane.b32.xlu0 %v245, 12
    %v1159 = vpop.permute.xlu0 %1158
    %1160 = vrot.lane.b32.xlu0 %v246, 12
    %v1161 = vpop.permute.xlu0 %1160
    %1162 = vrot.lane.b32.xlu0 %v248, 12
    %v1163 = vpop.permute.xlu0 %1162
    %1164 = vrot.lane.b32.xlu0 %v249, 12
    %v1165 = vpop.permute.xlu0 %1164
    %1166 = vrot.lane.b32.xlu0 %v251, 12
    %v1167 = vpop.permute.xlu0 %1166
    %1168 = vrot.lane.b32.xlu0 %v252, 12
    %v1169 = vpop.permute.xlu0 %1168
    %1170 = vrot.lane.b32.xlu0 %v254, 12
    %v1171 = vpop.permute.xlu0 %1170
    %1172 = vrot.lane.b32.xlu0 %v255, 12
    %v1173 = vpop.permute.xlu0 %1172
    %1174 = vrot.lane.b32.xlu0 %v257, 12
    %v1175 = vpop.permute.xlu0 %1174
    %1176 = vrot.lane.b32.xlu0 %v258, 12
    %v1177 = vpop.permute.xlu0 %1176
    %1178 = vrot.lane.b32.xlu0 %v260, 12
    %v1179 = vpop.permute.xlu0 %1178
    %1180 = vrot.lane.b32.xlu0 %v261, 12
    %v1181 = vpop.permute.xlu0 %1180
    %1182 = vrot.lane.b32.xlu0 %v263, 12
    %v1183 = vpop.permute.xlu0 %1182
    %1184 = vrot.lane.b32.xlu0 %v264, 12
    %v1185 = vpop.permute.xlu0 %1184
    %1186 = vrot.lane.b32.xlu0 %v266, 12
    %v1187 = vpop.permute.xlu0 %1186
    %1188 = vrot.lane.b32.xlu0 %v267, 12
    %v1189 = vpop.permute.xlu0 %1188
    %1190 = vrot.lane.b32.xlu0 %v269, 12
    %v1191 = vpop.permute.xlu0 %1190
    %1192 = vrot.lane.b32.xlu0 %v270, 12
    %v1193 = vpop.permute.xlu0 %1192
    %1194 = vrot.lane.b32.xlu0 %v272, 12
    %v1195 = vpop.permute.xlu0 %1194
    %1196 = vrot.lane.b32.xlu0 %v273, 12
    %v1197 = vpop.permute.xlu0 %1196
    %1198 = vrot.lane.b32.xlu0 %v275, 12
    %v1199 = vpop.permute.xlu0 %1198
    %1200 = vrot.lane.b32.xlu0 %v276, 12
    %v1201 = vpop.permute.xlu0 %1200
    %1202 = vrot.lane.b32.xlu0 %v278, 12
    %v1203 = vpop.permute.xlu0 %1202
    %1204 = vrot.lane.b32.xlu0 %v279, 12
    %v1205 = vpop.permute.xlu0 %1204
    %1206 = vrot.lane.b32.xlu0 %v281, 12
    %v1207 = vpop.permute.xlu0 %1206
    %1208 = vrot.lane.b32.xlu0 %v282, 12
    %v1209 = vpop.permute.xlu0 %1208
    %1210 = vrot.lane.b32.xlu0 %v284, 12
    %v1211 = vpop.permute.xlu0 %1210
    %1212 = vrot.lane.b32.xlu0 %v285, 12
    %v1213 = vpop.permute.xlu0 %1212
    %1214 = vrot.lane.b32.xlu0 %v293, 12
    %v1215 = vpop.permute.xlu0 %1214
    %1216 = vrot.lane.b32.xlu0 %v294, 12
    %v1217 = vpop.permute.xlu0 %1216
    %1218 = vrot.lane.b32.xlu0 %v296, 12
    %v1219 = vpop.permute.xlu0 %1218
    %1220 = vrot.lane.b32.xlu0 %v297, 12
    %v1221 = vpop.permute.xlu0 %1220
    %1222 = vrot.lane.b32.xlu0 %v299, 12
    %v1223 = vpop.permute.xlu0 %1222
    %1224 = vrot.lane.b32.xlu0 %v300, 12
    %v1225 = vpop.permute.xlu0 %1224
    %1226 = vrot.lane.b32.xlu0 %v302, 12
    %v1227 = vpop.permute.xlu0 %1226
    %1228 = vrot.lane.b32.xlu0 %v303, 12
    %v1229 = vpop.permute.xlu0 %1228
    %1230 = vrot.lane.b32.xlu0 %v305, 12
    %v1231 = vpop.permute.xlu0 %1230
    %1232 = vrot.lane.b32.xlu0 %v306, 12
    %v1233 = vpop.permute.xlu0 %1232
    %1234 = vrot.lane.b32.xlu0 %v308, 12
    %v1235 = vpop.permute.xlu0 %1234
    %1236 = vrot.lane.b32.xlu0 %v309, 12
    %v1237 = vpop.permute.xlu0 %1236
    %1238 = vrot.lane.b32.xlu0 %v311, 12
    %v1239 = vpop.permute.xlu0 %1238
    %1240 = vrot.lane.b32.xlu0 %v312, 12
    %v1241 = vpop.permute.xlu0 %1240
    %1242 = vrot.lane.b32.xlu0 %v314, 12
    %v1243 = vpop.permute.xlu0 %1242
    %1244 = vrot.lane.b32.xlu0 %v315, 12
    %v1245 = vpop.permute.xlu0 %1244
    %1246 = vrot.lane.b32.xlu0 %v317, 12
    %v1247 = vpop.permute.xlu0 %1246
    %1248 = vrot.lane.b32.xlu0 %v318, 12
    %v1249 = vpop.permute.xlu0 %1248
    %1250 = vrot.lane.b32.xlu0 %v320, 12
    %v1251 = vpop.permute.xlu0 %1250
    %1252 = vrot.lane.b32.xlu0 %v321, 12
    %v1253 = vpop.permute.xlu0 %1252
    %1254 = vrot.lane.b32.xlu0 %v323, 12
    %v1255 = vpop.permute.xlu0 %1254
    %1256 = vrot.lane.b32.xlu0 %v324, 12
    %v1257 = vpop.permute.xlu0 %1256
    %1258 = vrot.lane.b32.xlu0 %v326, 12
    %v1259 = vpop.permute.xlu0 %1258
    %1260 = vrot.lane.b32.xlu0 %v327, 12
    %v1261 = vpop.permute.xlu0 %1260
    %1262 = vrot.lane.b32.xlu0 %v329, 12
    %v1263 = vpop.permute.xlu0 %1262
    %1264 = vrot.lane.b32.xlu0 %v330, 12
    %v1265 = vpop.permute.xlu0 %1264
    %1266 = vrot.lane.b32.xlu0 %v332, 12
    %v1267 = vpop.permute.xlu0 %1266
    %1268 = vrot.lane.b32.xlu0 %v333, 12
    %v1269 = vpop.permute.xlu0 %1268
    %1270 = vrot.lane.b32.xlu0 %v335, 12
    %v1271 = vpop.permute.xlu0 %1270
    %1272 = vrot.lane.b32.xlu0 %v336, 12
    %v1273 = vpop.permute.xlu0 %1272
    %1274 = vrot.lane.b32.xlu0 %v338, 12
    %v1275 = vpop.permute.xlu0 %1274
    %1276 = vrot.lane.b32.xlu0 %v339, 12
    %v1277 = vpop.permute.xlu0 %1276
    %v1344 = vrot.slane %v284, 1
    %v1345 = vrot.slane %v285, 1
    %v1346 = vsel %vm440, %v1344, %v1345
    %v1347 = vrot.slane %v286, 1
    %v1348 = vsel %vm440, %v1345, %v1347
    %v1349 = vrot.slane %v338, 1
    %v1350 = vrot.slane %v339, 1
    %v1351 = vsel %vm440, %v1349, %v1350
    %v1352 = vrot.slane %v340, 1
    %v1353 = vsel %vm440, %v1350, %v1352
    %1354 = vrot.lane.b32.xlu0 %v448, 16
    %v1355 = vpop.permute.xlu0 %1354
    %1356 = vrot.lane.b32.xlu0 %v450, 16
    %v1357 = vpop.permute.xlu0 %1356
    %1358 = vrot.lane.b32.xlu0 %v453, 16
    %v1359 = vpop.permute.xlu0 %1358
    %1360 = vrot.lane.b32.xlu0 %v455, 16
    %v1361 = vpop.permute.xlu0 %1360
    %1362 = vrot.lane.b32.xlu0 %v458, 16
    %v1363 = vpop.permute.xlu0 %1362
    %1364 = vrot.lane.b32.xlu0 %v460, 16
    %v1365 = vpop.permute.xlu0 %1364
    %1366 = vrot.lane.b32.xlu0 %v463, 16
    %v1367 = vpop.permute.xlu0 %1366
    %1368 = vrot.lane.b32.xlu0 %v465, 16
    %v1369 = vpop.permute.xlu0 %1368
    %1370 = vrot.lane.b32.xlu0 %v468, 16
    %v1371 = vpop.permute.xlu0 %1370
    %1372 = vrot.lane.b32.xlu0 %v470, 16
    %v1373 = vpop.permute.xlu0 %1372
    %1374 = vrot.lane.b32.xlu0 %v473, 16
    %v1375 = vpop.permute.xlu0 %1374
    %1376 = vrot.lane.b32.xlu0 %v475, 16
    %v1377 = vpop.permute.xlu0 %1376
    %1378 = vrot.lane.b32.xlu0 %v478, 16
    %v1379 = vpop.permute.xlu0 %1378
    %1380 = vrot.lane.b32.xlu0 %v480, 16
    %v1381 = vpop.permute.xlu0 %1380
    %1382 = vrot.lane.b32.xlu0 %v483, 16
    %v1383 = vpop.permute.xlu0 %1382
    %1384 = vrot.lane.b32.xlu0 %v485, 16
    %v1385 = vpop.permute.xlu0 %1384
    %1386 = vrot.lane.b32.xlu0 %v488, 16
    %v1387 = vpop.permute.xlu0 %1386
    %1388 = vrot.lane.b32.xlu0 %v490, 16
    %v1389 = vpop.permute.xlu0 %1388
    %1390 = vrot.lane.b32.xlu0 %v493, 16
    %v1391 = vpop.permute.xlu0 %1390
    %1392 = vrot.lane.b32.xlu0 %v495, 16
    %v1393 = vpop.permute.xlu0 %1392
    %1394 = vrot.lane.b32.xlu0 %v498, 16
    %v1395 = vpop.permute.xlu0 %1394
    %1396 = vrot.lane.b32.xlu0 %v500, 16
    %v1397 = vpop.permute.xlu0 %1396
    %1398 = vrot.lane.b32.xlu0 %v503, 16
    %v1399 = vpop.permute.xlu0 %1398
    %1400 = vrot.lane.b32.xlu0 %v505, 16
    %v1401 = vpop.permute.xlu0 %1400
    %1402 = vrot.lane.b32.xlu0 %v508, 16
    %v1403 = vpop.permute.xlu0 %1402
    %1404 = vrot.lane.b32.xlu0 %v510, 16
    %v1405 = vpop.permute.xlu0 %1404
    %1406 = vrot.lane.b32.xlu0 %v513, 16
    %v1407 = vpop.permute.xlu0 %1406
    %1408 = vrot.lane.b32.xlu0 %v515, 16
    %v1409 = vpop.permute.xlu0 %1408
    %1410 = vrot.lane.b32.xlu0 %v518, 16
    %v1411 = vpop.permute.xlu0 %1410
    %1412 = vrot.lane.b32.xlu0 %v520, 16
    %v1413 = vpop.permute.xlu0 %1412
    %1414 = vrot.lane.b32.xlu0 %v1346, 16
    %v1415 = vpop.permute.xlu0 %1414
    %1416 = vrot.lane.b32.xlu0 %v1348, 16
    %v1417 = vpop.permute.xlu0 %1416
    %1418 = vrot.lane.b32.xlu0 %v528, 16
    %v1419 = vpop.permute.xlu0 %1418
    %1420 = vrot.lane.b32.xlu0 %v530, 16
    %v1421 = vpop.permute.xlu0 %1420
    %1422 = vrot.lane.b32.xlu0 %v533, 16
    %v1423 = vpop.permute.xlu0 %1422
    %1424 = vrot.lane.b32.xlu0 %v535, 16
    %v1425 = vpop.permute.xlu0 %1424
    %1426 = vrot.lane.b32.xlu0 %v538, 16
    %v1427 = vpop.permute.xlu0 %1426
    %1428 = vrot.lane.b32.xlu0 %v540, 16
    %v1429 = vpop.permute.xlu0 %1428
    %1430 = vrot.lane.b32.xlu0 %v543, 16
    %v1431 = vpop.permute.xlu0 %1430
    %1432 = vrot.lane.b32.xlu0 %v545, 16
    %v1433 = vpop.permute.xlu0 %1432
    %1434 = vrot.lane.b32.xlu0 %v548, 16
    %v1435 = vpop.permute.xlu0 %1434
    %1436 = vrot.lane.b32.xlu0 %v550, 16
    %v1437 = vpop.permute.xlu0 %1436
    %1438 = vrot.lane.b32.xlu0 %v553, 16
    %v1439 = vpop.permute.xlu0 %1438
    %1440 = vrot.lane.b32.xlu0 %v555, 16
    %v1441 = vpop.permute.xlu0 %1440
    %1442 = vrot.lane.b32.xlu0 %v558, 16
    %v1443 = vpop.permute.xlu0 %1442
    %1444 = vrot.lane.b32.xlu0 %v560, 16
    %v1445 = vpop.permute.xlu0 %1444
    %1446 = vrot.lane.b32.xlu0 %v563, 16
    %v1447 = vpop.permute.xlu0 %1446
    %1448 = vrot.lane.b32.xlu0 %v565, 16
    %v1449 = vpop.permute.xlu0 %1448
    %1450 = vrot.lane.b32.xlu0 %v568, 16
    %v1451 = vpop.permute.xlu0 %1450
    %1452 = vrot.lane.b32.xlu0 %v570, 16
    %v1453 = vpop.permute.xlu0 %1452
    %1454 = vrot.lane.b32.xlu0 %v573, 16
    %v1455 = vpop.permute.xlu0 %1454
    %1456 = vrot.lane.b32.xlu0 %v575, 16
    %v1457 = vpop.permute.xlu0 %1456
    %1458 = vrot.lane.b32.xlu0 %v578, 16
    %v1459 = vpop.permute.xlu0 %1458
    %1460 = vrot.lane.b32.xlu0 %v580, 16
    %v1461 = vpop.permute.xlu0 %1460
    %1462 = vrot.lane.b32.xlu0 %v583, 16
    %v1463 = vpop.permute.xlu0 %1462
    %1464 = vrot.lane.b32.xlu0 %v585, 16
    %v1465 = vpop.permute.xlu0 %1464
    %1466 = vrot.lane.b32.xlu0 %v588, 16
    %v1467 = vpop.permute.xlu0 %1466
    %1468 = vrot.lane.b32.xlu0 %v590, 16
    %v1469 = vpop.permute.xlu0 %1468
    %1470 = vrot.lane.b32.xlu0 %v593, 16
    %v1471 = vpop.permute.xlu0 %1470
    %1472 = vrot.lane.b32.xlu0 %v595, 16
    %v1473 = vpop.permute.xlu0 %1472
    %1474 = vrot.lane.b32.xlu0 %v598, 16
    %v1475 = vpop.permute.xlu0 %1474
    %1476 = vrot.lane.b32.xlu0 %v600, 16
    %v1477 = vpop.permute.xlu0 %1476
    %1478 = vrot.lane.b32.xlu0 %v1351, 16
    %v1479 = vpop.permute.xlu0 %1478
    %1480 = vrot.lane.b32.xlu0 %v1353, 16
    %v1481 = vpop.permute.xlu0 %1480
    %v1546 = vrot.slane %v284, 2
    %v1547 = vrot.slane %v285, 2
    %v1548 = vsel %vm793, %v1546, %v1547
    %v1549 = vrot.slane %v286, 2
    %v1550 = vsel %vm793, %v1547, %v1549
    %v1551 = vrot.slane %v338, 2
    %v1552 = vrot.slane %v339, 2
    %v1553 = vsel %vm793, %v1551, %v1552
    %v1554 = vrot.slane %v340, 2
    %v1555 = vsel %vm793, %v1552, %v1554
    %1556 = vrot.lane.b32.xlu0 %v801, 20
    %v1557 = vpop.permute.xlu0 %1556
    %1558 = vrot.lane.b32.xlu0 %v803, 20
    %v1559 = vpop.permute.xlu0 %1558
    %1560 = vrot.lane.b32.xlu0 %v806, 20
    %v1561 = vpop.permute.xlu0 %1560
    %1562 = vrot.lane.b32.xlu0 %v808, 20
    %v1563 = vpop.permute.xlu0 %1562
    %1564 = vrot.lane.b32.xlu0 %v811, 20
    %v1565 = vpop.permute.xlu0 %1564
    %1566 = vrot.lane.b32.xlu0 %v813, 20
    %v1567 = vpop.permute.xlu0 %1566
    %1568 = vrot.lane.b32.xlu0 %v816, 20
    %v1569 = vpop.permute.xlu0 %1568
    %1570 = vrot.lane.b32.xlu0 %v818, 20
    %v1571 = vpop.permute.xlu0 %1570
    %1572 = vrot.lane.b32.xlu0 %v821, 20
    %v1573 = vpop.permute.xlu0 %1572
    %1574 = vrot.lane.b32.xlu0 %v823, 20
    %v1575 = vpop.permute.xlu0 %1574
    %1576 = vrot.lane.b32.xlu0 %v826, 20
    %v1577 = vpop.permute.xlu0 %1576
    %1578 = vrot.lane.b32.xlu0 %v828, 20
    %v1579 = vpop.permute.xlu0 %1578
    %1580 = vrot.lane.b32.xlu0 %v831, 20
    %v1581 = vpop.permute.xlu0 %1580
    %1582 = vrot.lane.b32.xlu0 %v833, 20
    %v1583 = vpop.permute.xlu0 %1582
    %1584 = vrot.lane.b32.xlu0 %v836, 20
    %v1585 = vpop.permute.xlu0 %1584
    %1586 = vrot.lane.b32.xlu0 %v838, 20
    %v1587 = vpop.permute.xlu0 %1586
    %1588 = vrot.lane.b32.xlu0 %v841, 20
    %v1589 = vpop.permute.xlu0 %1588
    %1590 = vrot.lane.b32.xlu0 %v843, 20
    %v1591 = vpop.permute.xlu0 %1590
    %1592 = vrot.lane.b32.xlu0 %v846, 20
    %v1593 = vpop.permute.xlu0 %1592
    %1594 = vrot.lane.b32.xlu0 %v848, 20
    %v1595 = vpop.permute.xlu0 %1594
    %1596 = vrot.lane.b32.xlu0 %v851, 20
    %v1597 = vpop.permute.xlu0 %1596
    %1598 = vrot.lane.b32.xlu0 %v853, 20
    %v1599 = vpop.permute.xlu0 %1598
    %1600 = vrot.lane.b32.xlu0 %v856, 20
    %v1601 = vpop.permute.xlu0 %1600
    %1602 = vrot.lane.b32.xlu0 %v858, 20
    %v1603 = vpop.permute.xlu0 %1602
    %1604 = vrot.lane.b32.xlu0 %v861, 20
    %v1605 = vpop.permute.xlu0 %1604
    %1606 = vrot.lane.b32.xlu0 %v863, 20
    %v1607 = vpop.permute.xlu0 %1606
    %1608 = vrot.lane.b32.xlu0 %v866, 20
    %v1609 = vpop.permute.xlu0 %1608
    %1610 = vrot.lane.b32.xlu0 %v868, 20
    %v1611 = vpop.permute.xlu0 %1610
    %1612 = vrot.lane.b32.xlu0 %v871, 20
    %v1613 = vpop.permute.xlu0 %1612
    %1614 = vrot.lane.b32.xlu0 %v873, 20
    %v1615 = vpop.permute.xlu0 %1614
    %1616 = vrot.lane.b32.xlu0 %v1548, 20
    %v1617 = vpop.permute.xlu0 %1616
    %1618 = vrot.lane.b32.xlu0 %v1550, 20
    %v1619 = vpop.permute.xlu0 %1618
    %1620 = vrot.lane.b32.xlu0 %v881, 20
    %v1621 = vpop.permute.xlu0 %1620
    %1622 = vrot.lane.b32.xlu0 %v883, 20
    %v1623 = vpop.permute.xlu0 %1622
    %1624 = vrot.lane.b32.xlu0 %v886, 20
    %v1625 = vpop.permute.xlu0 %1624
    %1626 = vrot.lane.b32.xlu0 %v888, 20
    %v1627 = vpop.permute.xlu0 %1626
    %1628 = vrot.lane.b32.xlu0 %v891, 20
    %v1629 = vpop.permute.xlu0 %1628
    %1630 = vrot.lane.b32.xlu0 %v893, 20
    %v1631 = vpop.permute.xlu0 %1630
    %1632 = vrot.lane.b32.xlu0 %v896, 20
    %v1633 = vpop.permute.xlu0 %1632
    %1634 = vrot.lane.b32.xlu0 %v898, 20
    %v1635 = vpop.permute.xlu0 %1634
    %1636 = vrot.lane.b32.xlu0 %v901, 20
    %v1637 = vpop.permute.xlu0 %1636
    %1638 = vrot.lane.b32.xlu0 %v903, 20
    %v1639 = vpop.permute.xlu0 %1638
    %1640 = vrot.lane.b32.xlu0 %v906, 20
    %v1641 = vpop.permute.xlu0 %1640
    %1642 = vrot.lane.b32.xlu0 %v908, 20
    %v1643 = vpop.permute.xlu0 %1642
    %1644 = vrot.lane.b32.xlu0 %v911, 20
    %v1645 = vpop.permute.xlu0 %1644
    %1646 = vrot.lane.b32.xlu0 %v913, 20
    %v1647 = vpop.permute.xlu0 %1646
    %1648 = vrot.lane.b32.xlu0 %v916, 20
    %v1649 = vpop.permute.xlu0 %1648
    %1650 = vrot.lane.b32.xlu0 %v918, 20
    %v1651 = vpop.permute.xlu0 %1650
    %1652 = vrot.lane.b32.xlu0 %v921, 20
    %v1653 = vpop.permute.xlu0 %1652
    %1654 = vrot.lane.b32.xlu0 %v923, 20
    %v1655 = vpop.permute.xlu0 %1654
    %1656 = vrot.lane.b32.xlu0 %v926, 20
    %v1657 = vpop.permute.xlu0 %1656
    %1658 = vrot.lane.b32.xlu0 %v928, 20
    %v1659 = vpop.permute.xlu0 %1658
    %1660 = vrot.lane.b32.xlu0 %v931, 20
    %v1661 = vpop.permute.xlu0 %1660
    %1662 = vrot.lane.b32.xlu0 %v933, 20
    %v1663 = vpop.permute.xlu0 %1662
    %1664 = vrot.lane.b32.xlu0 %v936, 20
    %v1665 = vpop.permute.xlu0 %1664
    %1666 = vrot.lane.b32.xlu0 %v938, 20
    %v1667 = vpop.permute.xlu0 %1666
    %1668 = vrot.lane.b32.xlu0 %v941, 20
    %v1669 = vpop.permute.xlu0 %1668
    %1670 = vrot.lane.b32.xlu0 %v943, 20
    %v1671 = vpop.permute.xlu0 %1670
    %1672 = vrot.lane.b32.xlu0 %v946, 20
    %v1673 = vpop.permute.xlu0 %1672
    %1674 = vrot.lane.b32.xlu0 %v948, 20
    %v1675 = vpop.permute.xlu0 %1674
    %1676 = vrot.lane.b32.xlu0 %v951, 20
    %v1677 = vpop.permute.xlu0 %1676
    %1678 = vrot.lane.b32.xlu0 %v953, 20
    %v1679 = vpop.permute.xlu0 %1678
    %1680 = vrot.lane.b32.xlu0 %v1553, 20
    %v1681 = vpop.permute.xlu0 %1680
    %1682 = vrot.lane.b32.xlu0 %v1555, 20
    %v1683 = vpop.permute.xlu0 %1682
    %1752 = vrot.lane.b32.xlu0 %v242, 24
    %v1753 = vpop.permute.xlu0 %1752
    %1754 = vrot.lane.b32.xlu0 %v243, 24
    %v1755 = vpop.permute.xlu0 %1754
    %1756 = vrot.lane.b32.xlu0 %v245, 24
    %v1757 = vpop.permute.xlu0 %1756
    %1758 = vrot.lane.b32.xlu0 %v246, 24
    %v1759 = vpop.permute.xlu0 %1758
    %1760 = vrot.lane.b32.xlu0 %v248, 24
    %v1761 = vpop.permute.xlu0 %1760
    %1762 = vrot.lane.b32.xlu0 %v249, 24
    %v1763 = vpop.permute.xlu0 %1762
    %1764 = vrot.lane.b32.xlu0 %v251, 24
    %v1765 = vpop.permute.xlu0 %1764
    %1766 = vrot.lane.b32.xlu0 %v252, 24
    %v1767 = vpop.permute.xlu0 %1766
    %1768 = vrot.lane.b32.xlu0 %v254, 24
    %v1769 = vpop.permute.xlu0 %1768
    %1770 = vrot.lane.b32.xlu0 %v255, 24
    %v1771 = vpop.permute.xlu0 %1770
    %1772 = vrot.lane.b32.xlu0 %v257, 24
    %v1773 = vpop.permute.xlu0 %1772
    %1774 = vrot.lane.b32.xlu0 %v258, 24
    %v1775 = vpop.permute.xlu0 %1774
    %1776 = vrot.lane.b32.xlu0 %v260, 24
    %v1777 = vpop.permute.xlu0 %1776
    %1778 = vrot.lane.b32.xlu0 %v261, 24
    %v1779 = vpop.permute.xlu0 %1778
    %1780 = vrot.lane.b32.xlu0 %v263, 24
    %v1781 = vpop.permute.xlu0 %1780
    %1782 = vrot.lane.b32.xlu0 %v264, 24
    %v1783 = vpop.permute.xlu0 %1782
    %1784 = vrot.lane.b32.xlu0 %v266, 24
    %v1785 = vpop.permute.xlu0 %1784
    %1786 = vrot.lane.b32.xlu0 %v267, 24
    %v1787 = vpop.permute.xlu0 %1786
    %1788 = vrot.lane.b32.xlu0 %v269, 24
    %v1789 = vpop.permute.xlu0 %1788
    %1790 = vrot.lane.b32.xlu0 %v270, 24
    %v1791 = vpop.permute.xlu0 %1790
    %1792 = vrot.lane.b32.xlu0 %v272, 24
    %v1793 = vpop.permute.xlu0 %1792
    %1794 = vrot.lane.b32.xlu0 %v273, 24
    %v1795 = vpop.permute.xlu0 %1794
    %1796 = vrot.lane.b32.xlu0 %v275, 24
    %v1797 = vpop.permute.xlu0 %1796
    %1798 = vrot.lane.b32.xlu0 %v276, 24
    %v1799 = vpop.permute.xlu0 %1798
    %1800 = vrot.lane.b32.xlu0 %v278, 24
    %v1801 = vpop.permute.xlu0 %1800
    %1802 = vrot.lane.b32.xlu0 %v279, 24
    %v1803 = vpop.permute.xlu0 %1802
    %1804 = vrot.lane.b32.xlu0 %v281, 24
    %v1805 = vpop.permute.xlu0 %1804
    %1806 = vrot.lane.b32.xlu0 %v282, 24
    %v1807 = vpop.permute.xlu0 %1806
    %1808 = vrot.lane.b32.xlu0 %v284, 24
    %v1809 = vpop.permute.xlu0 %1808
    %1810 = vrot.lane.b32.xlu0 %v285, 24
    %v1811 = vpop.permute.xlu0 %1810
    %1812 = vrot.lane.b32.xlu0 %v287, 24
    %v1813 = vpop.permute.xlu0 %1812
    %1814 = vrot.lane.b32.xlu0 %v288, 24
    %v1815 = vpop.permute.xlu0 %1814
    %1816 = vrot.lane.b32.xlu0 %v296, 24
    %v1817 = vpop.permute.xlu0 %1816
    %1818 = vrot.lane.b32.xlu0 %v297, 24
    %v1819 = vpop.permute.xlu0 %1818
    %1820 = vrot.lane.b32.xlu0 %v299, 24
    %v1821 = vpop.permute.xlu0 %1820
    %1822 = vrot.lane.b32.xlu0 %v300, 24
    %v1823 = vpop.permute.xlu0 %1822
    %1824 = vrot.lane.b32.xlu0 %v302, 24
    %v1825 = vpop.permute.xlu0 %1824
    %1826 = vrot.lane.b32.xlu0 %v303, 24
    %v1827 = vpop.permute.xlu0 %1826
    %1828 = vrot.lane.b32.xlu0 %v305, 24
    %v1829 = vpop.permute.xlu0 %1828
    %1830 = vrot.lane.b32.xlu0 %v306, 24
    %v1831 = vpop.permute.xlu0 %1830
    %1832 = vrot.lane.b32.xlu0 %v308, 24
    %v1833 = vpop.permute.xlu0 %1832
    %1834 = vrot.lane.b32.xlu0 %v309, 24
    %v1835 = vpop.permute.xlu0 %1834
    %1836 = vrot.lane.b32.xlu0 %v311, 24
    %v1837 = vpop.permute.xlu0 %1836
    %1838 = vrot.lane.b32.xlu0 %v312, 24
    %v1839 = vpop.permute.xlu0 %1838
    %1840 = vrot.lane.b32.xlu0 %v314, 24
    %v1841 = vpop.permute.xlu0 %1840
    %1842 = vrot.lane.b32.xlu0 %v315, 24
    %v1843 = vpop.permute.xlu0 %1842
    %1844 = vrot.lane.b32.xlu0 %v317, 24
    %v1845 = vpop.permute.xlu0 %1844
    %1846 = vrot.lane.b32.xlu0 %v318, 24
    %v1847 = vpop.permute.xlu0 %1846
    %1848 = vrot.lane.b32.xlu0 %v320, 24
    %v1849 = vpop.permute.xlu0 %1848
    %1850 = vrot.lane.b32.xlu0 %v321, 24
    %v1851 = vpop.permute.xlu0 %1850
    %1852 = vrot.lane.b32.xlu0 %v323, 24
    %v1853 = vpop.permute.xlu0 %1852
    %1854 = vrot.lane.b32.xlu0 %v324, 24
    %v1855 = vpop.permute.xlu0 %1854
    %1856 = vrot.lane.b32.xlu0 %v326, 24
    %v1857 = vpop.permute.xlu0 %1856
    %1858 = vrot.lane.b32.xlu0 %v327, 24
    %v1859 = vpop.permute.xlu0 %1858
    %1860 = vrot.lane.b32.xlu0 %v329, 24
    %v1861 = vpop.permute.xlu0 %1860
    %1862 = vrot.lane.b32.xlu0 %v330, 24
    %v1863 = vpop.permute.xlu0 %1862
    %1864 = vrot.lane.b32.xlu0 %v332, 24
    %v1865 = vpop.permute.xlu0 %1864
    %1866 = vrot.lane.b32.xlu0 %v333, 24
    %v1867 = vpop.permute.xlu0 %1866
    %1868 = vrot.lane.b32.xlu0 %v335, 24
    %v1869 = vpop.permute.xlu0 %1868
    %1870 = vrot.lane.b32.xlu0 %v336, 24
    %v1871 = vpop.permute.xlu0 %1870
    %1872 = vrot.lane.b32.xlu0 %v338, 24
    %v1873 = vpop.permute.xlu0 %1872
    %1874 = vrot.lane.b32.xlu0 %v339, 24
    %v1875 = vpop.permute.xlu0 %1874
    %1876 = vrot.lane.b32.xlu0 %v341, 24
    %v1877 = vpop.permute.xlu0 %1876
    %1878 = vrot.lane.b32.xlu0 %v342, 24
    %v1879 = vpop.permute.xlu0 %1878
    %v1946 = vrot.slane %v287, 1
    %v1947 = vrot.slane %v288, 1
    %v1948 = vsel %vm440, %v1946, %v1947
    %v1949 = vrot.slane %v289, 1
    %v1950 = vsel %vm440, %v1947, %v1949
    %v1951 = vrot.slane %v341, 1
    %v1952 = vrot.slane %v342, 1
    %v1953 = vsel %vm440, %v1951, %v1952
    %v1954 = vrot.slane %v343, 1
    %v1955 = vsel %vm440, %v1952, %v1954
    %1956 = vrot.lane.b32.xlu0 %v453, 28
    %v1957 = vpop.permute.xlu0 %1956
    %1958 = vrot.lane.b32.xlu0 %v455, 28
    %v1959 = vpop.permute.xlu0 %1958
    %1960 = vrot.lane.b32.xlu0 %v458, 28
    %v1961 = vpop.permute.xlu0 %1960
    %1962 = vrot.lane.b32.xlu0 %v460, 28
    %v1963 = vpop.permute.xlu0 %1962
    %1964 = vrot.lane.b32.xlu0 %v463, 28
    %v1965 = vpop.permute.xlu0 %1964
    %1966 = vrot.lane.b32.xlu0 %v465, 28
    %v1967 = vpop.permute.xlu0 %1966
    %1968 = vrot.lane.b32.xlu0 %v468, 28
    %v1969 = vpop.permute.xlu0 %1968
    %1970 = vrot.lane.b32.xlu0 %v470, 28
    %v1971 = vpop.permute.xlu0 %1970
    %1972 = vrot.lane.b32.xlu0 %v473, 28
    %v1973 = vpop.permute.xlu0 %1972
    %1974 = vrot.lane.b32.xlu0 %v475, 28
    %v1975 = vpop.permute.xlu0 %1974
    %1976 = vrot.lane.b32.xlu0 %v478, 28
    %v1977 = vpop.permute.xlu0 %1976
    %1978 = vrot.lane.b32.xlu0 %v480, 28
    %v1979 = vpop.permute.xlu0 %1978
    %1980 = vrot.lane.b32.xlu0 %v483, 28
    %v1981 = vpop.permute.xlu0 %1980
    %1982 = vrot.lane.b32.xlu0 %v485, 28
    %v1983 = vpop.permute.xlu0 %1982
    %1984 = vrot.lane.b32.xlu0 %v488, 28
    %v1985 = vpop.permute.xlu0 %1984
    %1986 = vrot.lane.b32.xlu0 %v490, 28
    %v1987 = vpop.permute.xlu0 %1986
    %1988 = vrot.lane.b32.xlu0 %v493, 28
    %v1989 = vpop.permute.xlu0 %1988
    %1990 = vrot.lane.b32.xlu0 %v495, 28
    %v1991 = vpop.permute.xlu0 %1990
    %1992 = vrot.lane.b32.xlu0 %v498, 28
    %v1993 = vpop.permute.xlu0 %1992
    %1994 = vrot.lane.b32.xlu0 %v500, 28
    %v1995 = vpop.permute.xlu0 %1994
    %1996 = vrot.lane.b32.xlu0 %v503, 28
    %v1997 = vpop.permute.xlu0 %1996
    %1998 = vrot.lane.b32.xlu0 %v505, 28
    %v1999 = vpop.permute.xlu0 %1998
    %2000 = vrot.lane.b32.xlu0 %v508, 28
    %v2001 = vpop.permute.xlu0 %2000
    %2002 = vrot.lane.b32.xlu0 %v510, 28
    %v2003 = vpop.permute.xlu0 %2002
    %2004 = vrot.lane.b32.xlu0 %v513, 28
    %v2005 = vpop.permute.xlu0 %2004
    %2006 = vrot.lane.b32.xlu0 %v515, 28
    %v2007 = vpop.permute.xlu0 %2006
    %2008 = vrot.lane.b32.xlu0 %v518, 28
    %v2009 = vpop.permute.xlu0 %2008
    %2010 = vrot.lane.b32.xlu0 %v520, 28
    %v2011 = vpop.permute.xlu0 %2010
    %2012 = vrot.lane.b32.xlu0 %v1346, 28
    %v2013 = vpop.permute.xlu0 %2012
    %2014 = vrot.lane.b32.xlu0 %v1348, 28
    %v2015 = vpop.permute.xlu0 %2014
    %2016 = vrot.lane.b32.xlu0 %v1948, 28
    %v2017 = vpop.permute.xlu0 %2016
    %2018 = vrot.lane.b32.xlu0 %v1950, 28
    %v2019 = vpop.permute.xlu0 %2018
    %2020 = vrot.lane.b32.xlu0 %v533, 28
    %v2021 = vpop.permute.xlu0 %2020
    %2022 = vrot.lane.b32.xlu0 %v535, 28
    %v2023 = vpop.permute.xlu0 %2022
    %2024 = vrot.lane.b32.xlu0 %v538, 28
    %v2025 = vpop.permute.xlu0 %2024
    %2026 = vrot.lane.b32.xlu0 %v540, 28
    %v2027 = vpop.permute.xlu0 %2026
    %2028 = vrot.lane.b32.xlu0 %v543, 28
    %v2029 = vpop.permute.xlu0 %2028
    %2030 = vrot.lane.b32.xlu0 %v545, 28
    %v2031 = vpop.permute.xlu0 %2030
    %2032 = vrot.lane.b32.xlu0 %v548, 28
    %v2033 = vpop.permute.xlu0 %2032
    %2034 = vrot.lane.b32.xlu0 %v550, 28
    %v2035 = vpop.permute.xlu0 %2034
    %2036 = vrot.lane.b32.xlu0 %v553, 28
    %v2037 = vpop.permute.xlu0 %2036
    %2038 = vrot.lane.b32.xlu0 %v555, 28
    %v2039 = vpop.permute.xlu0 %2038
    %2040 = vrot.lane.b32.xlu0 %v558, 28
    %v2041 = vpop.permute.xlu0 %2040
    %2042 = vrot.lane.b32.xlu0 %v560, 28
    %v2043 = vpop.permute.xlu0 %2042
    %2044 = vrot.lane.b32.xlu0 %v563, 28
    %v2045 = vpop.permute.xlu0 %2044
    %2046 = vrot.lane.b32.xlu0 %v565, 28
    %v2047 = vpop.permute.xlu0 %2046
    %2048 = vrot.lane.b32.xlu0 %v568, 28
    %v2049 = vpop.permute.xlu0 %2048
    %2050 = vrot.lane.b32.xlu0 %v570, 28
    %v2051 = vpop.permute.xlu0 %2050
    %2052 = vrot.lane.b32.xlu0 %v573, 28
    %v2053 = vpop.permute.xlu0 %2052
    %2054 = vrot.lane.b32.xlu0 %v575, 28
    %v2055 = vpop.permute.xlu0 %2054
    %2056 = vrot.lane.b32.xlu0 %v578, 28
    %v2057 = vpop.permute.xlu0 %2056
    %2058 = vrot.lane.b32.xlu0 %v580, 28
    %v2059 = vpop.permute.xlu0 %2058
    %2060 = vrot.lane.b32.xlu0 %v583, 28
    %v2061 = vpop.permute.xlu0 %2060
    %2062 = vrot.lane.b32.xlu0 %v585, 28
    %v2063 = vpop.permute.xlu0 %2062
    %2064 = vrot.lane.b32.xlu0 %v588, 28
    %v2065 = vpop.permute.xlu0 %2064
    %2066 = vrot.lane.b32.xlu0 %v590, 28
    %v2067 = vpop.permute.xlu0 %2066
    %2068 = vrot.lane.b32.xlu0 %v593, 28
    %v2069 = vpop.permute.xlu0 %2068
    %2070 = vrot.lane.b32.xlu0 %v595, 28
    %v2071 = vpop.permute.xlu0 %2070
    %2072 = vrot.lane.b32.xlu0 %v598, 28
    %v2073 = vpop.permute.xlu0 %2072
    %2074 = vrot.lane.b32.xlu0 %v600, 28
    %v2075 = vpop.permute.xlu0 %2074
    %2076 = vrot.lane.b32.xlu0 %v1351, 28
    %v2077 = vpop.permute.xlu0 %2076
    %2078 = vrot.lane.b32.xlu0 %v1353, 28
    %v2079 = vpop.permute.xlu0 %2078
    %2080 = vrot.lane.b32.xlu0 %v1953, 28
    %v2081 = vpop.permute.xlu0 %2080
    %2082 = vrot.lane.b32.xlu0 %v1955, 28
    %v2083 = vpop.permute.xlu0 %2082
    %v2148 = vrot.slane %v287, 2
    %v2149 = vrot.slane %v288, 2
    %v2150 = vsel %vm793, %v2148, %v2149
    %v2151 = vrot.slane %v289, 2
    %v2152 = vsel %vm793, %v2149, %v2151
    %v2153 = vrot.slane %v341, 2
    %v2154 = vrot.slane %v342, 2
    %v2155 = vsel %vm793, %v2153, %v2154
    %v2156 = vrot.slane %v343, 2
    %v2157 = vsel %vm793, %v2154, %v2156
    %2158 = vrot.lane.b32.xlu0 %v806, 32
    %v2159 = vpop.permute.xlu0 %2158
    %2160 = vrot.lane.b32.xlu0 %v808, 32
    %v2161 = vpop.permute.xlu0 %2160
    %2162 = vrot.lane.b32.xlu0 %v811, 32
    %v2163 = vpop.permute.xlu0 %2162
    %2164 = vrot.lane.b32.xlu0 %v813, 32
    %v2165 = vpop.permute.xlu0 %2164
    %2166 = vrot.lane.b32.xlu0 %v816, 32
    %v2167 = vpop.permute.xlu0 %2166
    %2168 = vrot.lane.b32.xlu0 %v818, 32
    %v2169 = vpop.permute.xlu0 %2168
    %2170 = vrot.lane.b32.xlu0 %v821, 32
    %v2171 = vpop.permute.xlu0 %2170
    %2172 = vrot.lane.b32.xlu0 %v823, 32
    %v2173 = vpop.permute.xlu0 %2172
    %2174 = vrot.lane.b32.xlu0 %v826, 32
    %v2175 = vpop.permute.xlu0 %2174
    %2176 = vrot.lane.b32.xlu0 %v828, 32
    %v2177 = vpop.permute.xlu0 %2176
    %2178 = vrot.lane.b32.xlu0 %v831, 32
    %v2179 = vpop.permute.xlu0 %2178
    %2180 = vrot.lane.b32.xlu0 %v833, 32
    %v2181 = vpop.permute.xlu0 %2180
    %2182 = vrot.lane.b32.xlu0 %v836, 32
    %v2183 = vpop.permute.xlu0 %2182
    %2184 = vrot.lane.b32.xlu0 %v838, 32
    %v2185 = vpop.permute.xlu0 %2184
    %2186 = vrot.lane.b32.xlu0 %v841, 32
    %v2187 = vpop.permute.xlu0 %2186
    %2188 = vrot.lane.b32.xlu0 %v843, 32
    %v2189 = vpop.permute.xlu0 %2188
    %2190 = vrot.lane.b32.xlu0 %v846, 32
    %v2191 = vpop.permute.xlu0 %2190
    %2192 = vrot.lane.b32.xlu0 %v848, 32
    %v2193 = vpop.permute.xlu0 %2192
    %2194 = vrot.lane.b32.xlu0 %v851, 32
    %v2195 = vpop.permute.xlu0 %2194
    %2196 = vrot.lane.b32.xlu0 %v853, 32
    %v2197 = vpop.permute.xlu0 %2196
    %2198 = vrot.lane.b32.xlu0 %v856, 32
    %v2199 = vpop.permute.xlu0 %2198
    %2200 = vrot.lane.b32.xlu0 %v858, 32
    %v2201 = vpop.permute.xlu0 %2200
    %2202 = vrot.lane.b32.xlu0 %v861, 32
    %v2203 = vpop.permute.xlu0 %2202
    %2204 = vrot.lane.b32.xlu0 %v863, 32
    %v2205 = vpop.permute.xlu0 %2204
    %2206 = vrot.lane.b32.xlu0 %v866, 32
    %v2207 = vpop.permute.xlu0 %2206
    %2208 = vrot.lane.b32.xlu0 %v868, 32
    %v2209 = vpop.permute.xlu0 %2208
    %2210 = vrot.lane.b32.xlu0 %v871, 32
    %v2211 = vpop.permute.xlu0 %2210
    %2212 = vrot.lane.b32.xlu0 %v873, 32
    %v2213 = vpop.permute.xlu0 %2212
    %2214 = vrot.lane.b32.xlu0 %v1548, 32
    %v2215 = vpop.permute.xlu0 %2214
    %2216 = vrot.lane.b32.xlu0 %v1550, 32
    %v2217 = vpop.permute.xlu0 %2216
    %2218 = vrot.lane.b32.xlu0 %v2150, 32
    %v2219 = vpop.permute.xlu0 %2218
    %2220 = vrot.lane.b32.xlu0 %v2152, 32
    %v2221 = vpop.permute.xlu0 %2220
    %2222 = vrot.lane.b32.xlu0 %v886, 32
    %v2223 = vpop.permute.xlu0 %2222
    %2224 = vrot.lane.b32.xlu0 %v888, 32
    %v2225 = vpop.permute.xlu0 %2224
    %2226 = vrot.lane.b32.xlu0 %v891, 32
    %v2227 = vpop.permute.xlu0 %2226
    %2228 = vrot.lane.b32.xlu0 %v893, 32
    %v2229 = vpop.permute.xlu0 %2228
    %2230 = vrot.lane.b32.xlu0 %v896, 32
    %v2231 = vpop.permute.xlu0 %2230
    %2232 = vrot.lane.b32.xlu0 %v898, 32
    %v2233 = vpop.permute.xlu0 %2232
    %2234 = vrot.lane.b32.xlu0 %v901, 32
    %v2235 = vpop.permute.xlu0 %2234
    %2236 = vrot.lane.b32.xlu0 %v903, 32
    %v2237 = vpop.permute.xlu0 %2236
    %2238 = vrot.lane.b32.xlu0 %v906, 32
    %v2239 = vpop.permute.xlu0 %2238
    %2240 = vrot.lane.b32.xlu0 %v908, 32
    %v2241 = vpop.permute.xlu0 %2240
    %2242 = vrot.lane.b32.xlu0 %v911, 32
    %v2243 = vpop.permute.xlu0 %2242
    %2244 = vrot.lane.b32.xlu0 %v913, 32
    %v2245 = vpop.permute.xlu0 %2244
    %2246 = vrot.lane.b32.xlu0 %v916, 32
    %v2247 = vpop.permute.xlu0 %2246
    %2248 = vrot.lane.b32.xlu0 %v918, 32
    %v2249 = vpop.permute.xlu0 %2248
    %2250 = vrot.lane.b32.xlu0 %v921, 32
    %v2251 = vpop.permute.xlu0 %2250
    %2252 = vrot.lane.b32.xlu0 %v923, 32
    %v2253 = vpop.permute.xlu0 %2252
    %2254 = vrot.lane.b32.xlu0 %v926, 32
    %v2255 = vpop.permute.xlu0 %2254
    %2256 = vrot.lane.b32.xlu0 %v928, 32
    %v2257 = vpop.permute.xlu0 %2256
    %2258 = vrot.lane.b32.xlu0 %v931, 32
    %v2259 = vpop.permute.xlu0 %2258
    %2260 = vrot.lane.b32.xlu0 %v933, 32
    %v2261 = vpop.permute.xlu0 %2260
    %2262 = vrot.lane.b32.xlu0 %v936, 32
    %v2263 = vpop.permute.xlu0 %2262
    %2264 = vrot.lane.b32.xlu0 %v938, 32
    %v2265 = vpop.permute.xlu0 %2264
    %2266 = vrot.lane.b32.xlu0 %v941, 32
    %v2267 = vpop.permute.xlu0 %2266
    %2268 = vrot.lane.b32.xlu0 %v943, 32
    %v2269 = vpop.permute.xlu0 %2268
    %2270 = vrot.lane.b32.xlu0 %v946, 32
    %v2271 = vpop.permute.xlu0 %2270
    %2272 = vrot.lane.b32.xlu0 %v948, 32
    %v2273 = vpop.permute.xlu0 %2272
    %2274 = vrot.lane.b32.xlu0 %v951, 32
    %v2275 = vpop.permute.xlu0 %2274
    %2276 = vrot.lane.b32.xlu0 %v953, 32
    %v2277 = vpop.permute.xlu0 %2276
    %2278 = vrot.lane.b32.xlu0 %v1553, 32
    %v2279 = vpop.permute.xlu0 %2278
    %2280 = vrot.lane.b32.xlu0 %v1555, 32
    %v2281 = vpop.permute.xlu0 %2280
    %2282 = vrot.lane.b32.xlu0 %v2155, 32
    %v2283 = vpop.permute.xlu0 %2282
    %2284 = vrot.lane.b32.xlu0 %v2157, 32
    %v2285 = vpop.permute.xlu0 %2284
    %v2350 = vsel %vm91, %v236, %v602
    %v2351 = vsel %vm91, %v237, %v604
    %v2352 = vsel %vm91, %v239, %v606
    %v2353 = vsel %vm91, %v240, %v608
    %v2354 = vsel %vm91, %v242, %v610
    %v2355 = vsel %vm91, %v243, %v612
    %v2356 = vsel %vm91, %v245, %v614
    %v2357 = vsel %vm91, %v246, %v616
    %v2358 = vsel %vm91, %v248, %v618
    %v2359 = vsel %vm91, %v249, %v620
    %v2360 = vsel %vm91, %v251, %v622
    %v2361 = vsel %vm91, %v252, %v624
    %v2362 = vsel %vm91, %v254, %v626
    %v2363 = vsel %vm91, %v255, %v628
    %v2364 = vsel %vm91, %v257, %v630
    %v2365 = vsel %vm91, %v258, %v632
    %v2366 = vsel %vm91, %v260, %v634
    %v2367 = vsel %vm91, %v261, %v636
    %v2368 = vsel %vm91, %v263, %v638
    %v2369 = vsel %vm91, %v264, %v640
    %v2370 = vsel %vm91, %v266, %v642
    %v2371 = vsel %vm91, %v267, %v644
    %v2372 = vsel %vm91, %v269, %v646
    %v2373 = vsel %vm91, %v270, %v648
    %v2374 = vsel %vm91, %v272, %v650
    %v2375 = vsel %vm91, %v273, %v652
    %v2376 = vsel %vm91, %v275, %v654
    %v2377 = vsel %vm91, %v276, %v656
    %v2378 = vsel %vm91, %v278, %v658
    %v2379 = vsel %vm91, %v279, %v660
    %v2380 = vsel %vm91, %v281, %v662
    %v2381 = vsel %vm91, %v282, %v664
    %v2382 = vsel %vm91, %v290, %v666
    %v2383 = vsel %vm91, %v291, %v668
    %v2384 = vsel %vm91, %v293, %v670
    %v2385 = vsel %vm91, %v294, %v672
    %v2386 = vsel %vm91, %v296, %v674
    %v2387 = vsel %vm91, %v297, %v676
    %v2388 = vsel %vm91, %v299, %v678
    %v2389 = vsel %vm91, %v300, %v680
    %v2390 = vsel %vm91, %v302, %v682
    %v2391 = vsel %vm91, %v303, %v684
    %v2392 = vsel %vm91, %v305, %v686
    %v2393 = vsel %vm91, %v306, %v688
    %v2394 = vsel %vm91, %v308, %v690
    %v2395 = vsel %vm91, %v309, %v692
    %v2396 = vsel %vm91, %v311, %v694
    %v2397 = vsel %vm91, %v312, %v696
    %v2398 = vsel %vm91, %v314, %v698
    %v2399 = vsel %vm91, %v315, %v700
    %v2400 = vsel %vm91, %v317, %v702
    %v2401 = vsel %vm91, %v318, %v704
    %v2402 = vsel %vm91, %v320, %v706
    %v2403 = vsel %vm91, %v321, %v708
    %v2404 = vsel %vm91, %v323, %v710
    %v2405 = vsel %vm91, %v324, %v712
    %v2406 = vsel %vm91, %v326, %v714
    %v2407 = vsel %vm91, %v327, %v716
    %v2408 = vsel %vm91, %v329, %v718
    %v2409 = vsel %vm91, %v330, %v720
    %v2410 = vsel %vm91, %v332, %v722
    %v2411 = vsel %vm91, %v333, %v724
    %v2412 = vsel %vm91, %v335, %v726
    %v2413 = vsel %vm91, %v336, %v728
    %vm2414 = vcmask 64512
    %v2415 = vsel %vm2414, %v2350, %v955
    %v2416 = vsel %vm2414, %v2351, %v957
    %v2417 = vsel %vm2414, %v2352, %v959
    %v2418 = vsel %vm2414, %v2353, %v961
    %v2419 = vsel %vm2414, %v2354, %v963
    %v2420 = vsel %vm2414, %v2355, %v965
    %v2421 = vsel %vm2414, %v2356, %v967
    %v2422 = vsel %vm2414, %v2357, %v969
    %v2423 = vsel %vm2414, %v2358, %v971
    %v2424 = vsel %vm2414, %v2359, %v973
    %v2425 = vsel %vm2414, %v2360, %v975
    %v2426 = vsel %vm2414, %v2361, %v977
    %v2427 = vsel %vm2414, %v2362, %v979
    %v2428 = vsel %vm2414, %v2363, %v981
    %v2429 = vsel %vm2414, %v2364, %v983
    %v2430 = vsel %vm2414, %v2365, %v985
    %v2431 = vsel %vm2414, %v2366, %v987
    %v2432 = vsel %vm2414, %v2367, %v989
    %v2433 = vsel %vm2414, %v2368, %v991
    %v2434 = vsel %vm2414, %v2369, %v993
    %v2435 = vsel %vm2414, %v2370, %v995
    %v2436 = vsel %vm2414, %v2371, %v997
    %v2437 = vsel %vm2414, %v2372, %v999
    %v2438 = vsel %vm2414, %v2373, %v1001
    %v2439 = vsel %vm2414, %v2374, %v1003
    %v2440 = vsel %vm2414, %v2375, %v1005
    %v2441 = vsel %vm2414, %v2376, %v1007
    %v2442 = vsel %vm2414, %v2377, %v1009
    %v2443 = vsel %vm2414, %v2378, %v1011
    %v2444 = vsel %vm2414, %v2379, %v1013
    %v2445 = vsel %vm2414, %v2380, %v1015
    %v2446 = vsel %vm2414, %v2381, %v1017
    %v2447 = vsel %vm2414, %v2382, %v1019
    %v2448 = vsel %vm2414, %v2383, %v1021
    %v2449 = vsel %vm2414, %v2384, %v1023
    %v2450 = vsel %vm2414, %v2385, %v1025
    %v2451 = vsel %vm2414, %v2386, %v1027
    %v2452 = vsel %vm2414, %v2387, %v1029
    %v2453 = vsel %vm2414, %v2388, %v1031
    %v2454 = vsel %vm2414, %v2389, %v1033
    %v2455 = vsel %vm2414, %v2390, %v1035
    %v2456 = vsel %vm2414, %v2391, %v1037
    %v2457 = vsel %vm2414, %v2392, %v1039
    %v2458 = vsel %vm2414, %v2393, %v1041
    %v2459 = vsel %vm2414, %v2394, %v1043
    %v2460 = vsel %vm2414, %v2395, %v1045
    %v2461 = vsel %vm2414, %v2396, %v1047
    %v2462 = vsel %vm2414, %v2397, %v1049
    %v2463 = vsel %vm2414, %v2398, %v1051
    %v2464 = vsel %vm2414, %v2399, %v1053
    %v2465 = vsel %vm2414, %v2400, %v1055
    %v2466 = vsel %vm2414, %v2401, %v1057
    %v2467 = vsel %vm2414, %v2402, %v1059
    %v2468 = vsel %vm2414, %v2403, %v1061
    %v2469 = vsel %vm2414, %v2404, %v1063
    %v2470 = vsel %vm2414, %v2405, %v1065
    %v2471 = vsel %vm2414, %v2406, %v1067
    %v2472 = vsel %vm2414, %v2407, %v1069
    %v2473 = vsel %vm2414, %v2408, %v1071
    %v2474 = vsel %vm2414, %v2409, %v1073
    %v2475 = vsel %vm2414, %v2410, %v1075
    %v2476 = vsel %vm2414, %v2411, %v1077
    %v2477 = vsel %vm2414, %v2412, %v1079
    %v2478 = vsel %vm2414, %v2413, %v1081
    %vm2479 = vcmask 97280
    %v2480 = vsel %vm2479, %v2415, %v1151
    %v2481 = vsel %vm2479, %v2416, %v1153
    %v2482 = vsel %vm2479, %v2417, %v1155
    %v2483 = vsel %vm2479, %v2418, %v1157
    %v2484 = vsel %vm2479, %v2419, %v1159
    %v2485 = vsel %vm2479, %v2420, %v1161
    %v2486 = vsel %vm2479, %v2421, %v1163
    %v2487 = vsel %vm2479, %v2422, %v1165
    %v2488 = vsel %vm2479, %v2423, %v1167
    %v2489 = vsel %vm2479, %v2424, %v1169
    %v2490 = vsel %vm2479, %v2425, %v1171
    %v2491 = vsel %vm2479, %v2426, %v1173
    %v2492 = vsel %vm2479, %v2427, %v1175
    %v2493 = vsel %vm2479, %v2428, %v1177
    %v2494 = vsel %vm2479, %v2429, %v1179
    %v2495 = vsel %vm2479, %v2430, %v1181
    %v2496 = vsel %vm2479, %v2431, %v1183
    %v2497 = vsel %vm2479, %v2432, %v1185
    %v2498 = vsel %vm2479, %v2433, %v1187
    %v2499 = vsel %vm2479, %v2434, %v1189
    %v2500 = vsel %vm2479, %v2435, %v1191
    %v2501 = vsel %vm2479, %v2436, %v1193
    %v2502 = vsel %vm2479, %v2437, %v1195
    %v2503 = vsel %vm2479, %v2438, %v1197
    %v2504 = vsel %vm2479, %v2439, %v1199
    %v2505 = vsel %vm2479, %v2440, %v1201
    %v2506 = vsel %vm2479, %v2441, %v1203
    %v2507 = vsel %vm2479, %v2442, %v1205
    %v2508 = vsel %vm2479, %v2443, %v1207
    %v2509 = vsel %vm2479, %v2444, %v1209
    %v2510 = vsel %vm2479, %v2445, %v1211
    %v2511 = vsel %vm2479, %v2446, %v1213
    %v2512 = vsel %vm2479, %v2447, %v1215
    %v2513 = vsel %vm2479, %v2448, %v1217
    %v2514 = vsel %vm2479, %v2449, %v1219
    %v2515 = vsel %vm2479, %v2450, %v1221
    %v2516 = vsel %vm2479, %v2451, %v1223
    %v2517 = vsel %vm2479, %v2452, %v1225
    %v2518 = vsel %vm2479, %v2453, %v1227
    %v2519 = vsel %vm2479, %v2454, %v1229
    %v2520 = vsel %vm2479, %v2455, %v1231
    %v2521 = vsel %vm2479, %v2456, %v1233
    %v2522 = vsel %vm2479, %v2457, %v1235
    %v2523 = vsel %vm2479, %v2458, %v1237
    %v2524 = vsel %vm2479, %v2459, %v1239
    %v2525 = vsel %vm2479, %v2460, %v1241
    %v2526 = vsel %vm2479, %v2461, %v1243
    %v2527 = vsel %vm2479, %v2462, %v1245
    %v2528 = vsel %vm2479, %v2463, %v1247
    %v2529 = vsel %vm2479, %v2464, %v1249
    %v2530 = vsel %vm2479, %v2465, %v1251
    %v2531 = vsel %vm2479, %v2466, %v1253
    %v2532 = vsel %vm2479, %v2467, %v1255
    %v2533 = vsel %vm2479, %v2468, %v1257
    %v2534 = vsel %vm2479, %v2469, %v1259
    %v2535 = vsel %vm2479, %v2470, %v1261
    %v2536 = vsel %vm2479, %v2471, %v1263
    %v2537 = vsel %vm2479, %v2472, %v1265
    %v2538 = vsel %vm2479, %v2473, %v1267
    %v2539 = vsel %vm2479, %v2474, %v1269
    %v2540 = vsel %vm2479, %v2475, %v1271
    %v2541 = vsel %vm2479, %v2476, %v1273
    %v2542 = vsel %vm2479, %v2477, %v1275
    %v2543 = vsel %vm2479, %v2478, %v1277
    %vm2544 = vcmask 130048
    %v2545 = vsel %vm2544, %v2480, %v1355
    %v2546 = vsel %vm2544, %v2481, %v1357
    %v2547 = vsel %vm2544, %v2482, %v1359
    %v2548 = vsel %vm2544, %v2483, %v1361
    %v2549 = vsel %vm2544, %v2484, %v1363
    %v2550 = vsel %vm2544, %v2485, %v1365
    %v2551 = vsel %vm2544, %v2486, %v1367
    %v2552 = vsel %vm2544, %v2487, %v1369
    %v2553 = vsel %vm2544, %v2488, %v1371
    %v2554 = vsel %vm2544, %v2489, %v1373
    %v2555 = vsel %vm2544, %v2490, %v1375
    %v2556 = vsel %vm2544, %v2491, %v1377
    %v2557 = vsel %vm2544, %v2492, %v1379
    %v2558 = vsel %vm2544, %v2493, %v1381
    %v2559 = vsel %vm2544, %v2494, %v1383
    %v2560 = vsel %vm2544, %v2495, %v1385
    %v2561 = vsel %vm2544, %v2496, %v1387
    %v2562 = vsel %vm2544, %v2497, %v1389
    %v2563 = vsel %vm2544, %v2498, %v1391
    %v2564 = vsel %vm2544, %v2499, %v1393
    %v2565 = vsel %vm2544, %v2500, %v1395
    %v2566 = vsel %vm2544, %v2501, %v1397
    %v2567 = vsel %vm2544, %v2502, %v1399
    %v2568 = vsel %vm2544, %v2503, %v1401
    %v2569 = vsel %vm2544, %v2504, %v1403
    %v2570 = vsel %vm2544, %v2505, %v1405
    %v2571 = vsel %vm2544, %v2506, %v1407
    %v2572 = vsel %vm2544, %v2507, %v1409
    %v2573 = vsel %vm2544, %v2508, %v1411
    %v2574 = vsel %vm2544, %v2509, %v1413
    %v2575 = vsel %vm2544, %v2510, %v1415
    %v2576 = vsel %vm2544, %v2511, %v1417
    %v2577 = vsel %vm2544, %v2512, %v1419
    %v2578 = vsel %vm2544, %v2513, %v1421
    %v2579 = vsel %vm2544, %v2514, %v1423
    %v2580 = vsel %vm2544, %v2515, %v1425
    %v2581 = vsel %vm2544, %v2516, %v1427
    %v2582 = vsel %vm2544, %v2517, %v1429
    %v2583 = vsel %vm2544, %v2518, %v1431
    %v2584 = vsel %vm2544, %v2519, %v1433
    %v2585 = vsel %vm2544, %v2520, %v1435
    %v2586 = vsel %vm2544, %v2521, %v1437
    %v2587 = vsel %vm2544, %v2522, %v1439
    %v2588 = vsel %vm2544, %v2523, %v1441
    %v2589 = vsel %vm2544, %v2524, %v1443
    %v2590 = vsel %vm2544, %v2525, %v1445
    %v2591 = vsel %vm2544, %v2526, %v1447
    %v2592 = vsel %vm2544, %v2527, %v1449
    %v2593 = vsel %vm2544, %v2528, %v1451
    %v2594 = vsel %vm2544, %v2529, %v1453
    %v2595 = vsel %vm2544, %v2530, %v1455
    %v2596 = vsel %vm2544, %v2531, %v1457
    %v2597 = vsel %vm2544, %v2532, %v1459
    %v2598 = vsel %vm2544, %v2533, %v1461
    %v2599 = vsel %vm2544, %v2534, %v1463
    %v2600 = vsel %vm2544, %v2535, %v1465
    %v2601 = vsel %vm2544, %v2536, %v1467
    %v2602 = vsel %vm2544, %v2537, %v1469
    %v2603 = vsel %vm2544, %v2538, %v1471
    %v2604 = vsel %vm2544, %v2539, %v1473
    %v2605 = vsel %vm2544, %v2540, %v1475
    %v2606 = vsel %vm2544, %v2541, %v1477
    %v2607 = vsel %vm2544, %v2542, %v1479
    %v2608 = vsel %vm2544, %v2543, %v1481
    %vm2609 = vcmask 162816
    %v2610 = vsel %vm2609, %v2545, %v1557
    %v2611 = vsel %vm2609, %v2546, %v1559
    %v2612 = vsel %vm2609, %v2547, %v1561
    %v2613 = vsel %vm2609, %v2548, %v1563
    %v2614 = vsel %vm2609, %v2549, %v1565
    %v2615 = vsel %vm2609, %v2550, %v1567
    %v2616 = vsel %vm2609, %v2551, %v1569
    %v2617 = vsel %vm2609, %v2552, %v1571
    %v2618 = vsel %vm2609, %v2553, %v1573
    %v2619 = vsel %vm2609, %v2554, %v1575
    %v2620 = vsel %vm2609, %v2555, %v1577
    %v2621 = vsel %vm2609, %v2556, %v1579
    %v2622 = vsel %vm2609, %v2557, %v1581
    %v2623 = vsel %vm2609, %v2558, %v1583
    %v2624 = vsel %vm2609, %v2559, %v1585
    %v2625 = vsel %vm2609, %v2560, %v1587
    %v2626 = vsel %vm2609, %v2561, %v1589
    %v2627 = vsel %vm2609, %v2562, %v1591
    %v2628 = vsel %vm2609, %v2563, %v1593
    %v2629 = vsel %vm2609, %v2564, %v1595
    %v2630 = vsel %vm2609, %v2565, %v1597
    %v2631 = vsel %vm2609, %v2566, %v1599
    %v2632 = vsel %vm2609, %v2567, %v1601
    %v2633 = vsel %vm2609, %v2568, %v1603
    %v2634 = vsel %vm2609, %v2569, %v1605
    %v2635 = vsel %vm2609, %v2570, %v1607
    %v2636 = vsel %vm2609, %v2571, %v1609
    %v2637 = vsel %vm2609, %v2572, %v1611
    %v2638 = vsel %vm2609, %v2573, %v1613
    %v2639 = vsel %vm2609, %v2574, %v1615
    %v2640 = vsel %vm2609, %v2575, %v1617
    %v2641 = vsel %vm2609, %v2576, %v1619
    %v2642 = vsel %vm2609, %v2577, %v1621
    %v2643 = vsel %vm2609, %v2578, %v1623
    %v2644 = vsel %vm2609, %v2579, %v1625
    %v2645 = vsel %vm2609, %v2580, %v1627
    %v2646 = vsel %vm2609, %v2581, %v1629
    %v2647 = vsel %vm2609, %v2582, %v1631
    %v2648 = vsel %vm2609, %v2583, %v1633
    %v2649 = vsel %vm2609, %v2584, %v1635
    %v2650 = vsel %vm2609, %v2585, %v1637
    %v2651 = vsel %vm2609, %v2586, %v1639
    %v2652 = vsel %vm2609, %v2587, %v1641
    %v2653 = vsel %vm2609, %v2588, %v1643
    %v2654 = vsel %vm2609, %v2589, %v1645
    %v2655 = vsel %vm2609, %v2590, %v1647
    %v2656 = vsel %vm2609, %v2591, %v1649
    %v2657 = vsel %vm2609, %v2592, %v1651
    %v2658 = vsel %vm2609, %v2593, %v1653
    %v2659 = vsel %vm2609, %v2594, %v1655
    %v2660 = vsel %vm2609, %v2595, %v1657
    %v2661 = vsel %vm2609, %v2596, %v1659
    %v2662 = vsel %vm2609, %v2597, %v1661
    %v2663 = vsel %vm2609, %v2598, %v1663
    %v2664 = vsel %vm2609, %v2599, %v1665
    %v2665 = vsel %vm2609, %v2600, %v1667
    %v2666 = vsel %vm2609, %v2601, %v1669
    %v2667 = vsel %vm2609, %v2602, %v1671
    %v2668 = vsel %vm2609, %v2603, %v1673
    %v2669 = vsel %vm2609, %v2604, %v1675
    %v2670 = vsel %vm2609, %v2605, %v1677
    %v2671 = vsel %vm2609, %v2606, %v1679
    %v2672 = vsel %vm2609, %v2607, %v1681
    %v2673 = vsel %vm2609, %v2608, %v1683
    %vm2674 = vcmask 195584
    %v2675 = vsel %vm2674, %v2610, %v1753
    %v2676 = vsel %vm2674, %v2611, %v1755
    %v2677 = vsel %vm2674, %v2612, %v1757
    %v2678 = vsel %vm2674, %v2613, %v1759
    %v2679 = vsel %vm2674, %v2614, %v1761
    %v2680 = vsel %vm2674, %v2615, %v1763
    %v2681 = vsel %vm2674, %v2616, %v1765
    %v2682 = vsel %vm2674, %v2617, %v1767
    %v2683 = vsel %vm2674, %v2618, %v1769
    %v2684 = vsel %vm2674, %v2619, %v1771
    %v2685 = vsel %vm2674, %v2620, %v1773
    %v2686 = vsel %vm2674, %v2621, %v1775
    %v2687 = vsel %vm2674, %v2622, %v1777
    %v2688 = vsel %vm2674, %v2623, %v1779
    %v2689 = vsel %vm2674, %v2624, %v1781
    %v2690 = vsel %vm2674, %v2625, %v1783
    %v2691 = vsel %vm2674, %v2626, %v1785
    %v2692 = vsel %vm2674, %v2627, %v1787
    %v2693 = vsel %vm2674, %v2628, %v1789
    %v2694 = vsel %vm2674, %v2629, %v1791
    %v2695 = vsel %vm2674, %v2630, %v1793
    %v2696 = vsel %vm2674, %v2631, %v1795
    %v2697 = vsel %vm2674, %v2632, %v1797
    %v2698 = vsel %vm2674, %v2633, %v1799
    %v2699 = vsel %vm2674, %v2634, %v1801
    %v2700 = vsel %vm2674, %v2635, %v1803
    %v2701 = vsel %vm2674, %v2636, %v1805
    %v2702 = vsel %vm2674, %v2637, %v1807
    %v2703 = vsel %vm2674, %v2638, %v1809
    %v2704 = vsel %vm2674, %v2639, %v1811
    %v2705 = vsel %vm2674, %v2640, %v1813
    %v2706 = vsel %vm2674, %v2641, %v1815
    %v2707 = vsel %vm2674, %v2642, %v1817
    %v2708 = vsel %vm2674, %v2643, %v1819
    %v2709 = vsel %vm2674, %v2644, %v1821
    %v2710 = vsel %vm2674, %v2645, %v1823
    %v2711 = vsel %vm2674, %v2646, %v1825
    %v2712 = vsel %vm2674, %v2647, %v1827
    %v2713 = vsel %vm2674, %v2648, %v1829
    %v2714 = vsel %vm2674, %v2649, %v1831
    %v2715 = vsel %vm2674, %v2650, %v1833
    %v2716 = vsel %vm2674, %v2651, %v1835
    %v2717 = vsel %vm2674, %v2652, %v1837
    %v2718 = vsel %vm2674, %v2653, %v1839
    %v2719 = vsel %vm2674, %v2654, %v1841
    %v2720 = vsel %vm2674, %v2655, %v1843
    %v2721 = vsel %vm2674, %v2656, %v1845
    %v2722 = vsel %vm2674, %v2657, %v1847
    %v2723 = vsel %vm2674, %v2658, %v1849
    %v2724 = vsel %vm2674, %v2659, %v1851
    %v2725 = vsel %vm2674, %v2660, %v1853
    %v2726 = vsel %vm2674, %v2661, %v1855
    %v2727 = vsel %vm2674, %v2662, %v1857
    %v2728 = vsel %vm2674, %v2663, %v1859
    %v2729 = vsel %vm2674, %v2664, %v1861
    %v2730 = vsel %vm2674, %v2665, %v1863
    %v2731 = vsel %vm2674, %v2666, %v1865
    %v2732 = vsel %vm2674, %v2667, %v1867
    %v2733 = vsel %vm2674, %v2668, %v1869
    %v2734 = vsel %vm2674, %v2669, %v1871
    %v2735 = vsel %vm2674, %v2670, %v1873
    %v2736 = vsel %vm2674, %v2671, %v1875
    %v2737 = vsel %vm2674, %v2672, %v1877
    %v2738 = vsel %vm2674, %v2673, %v1879
    %vm2739 = vcmask 228352
    %v2740 = vsel %vm2739, %v2675, %v1957
    %v2741 = vsel %vm2739, %v2676, %v1959
    %v2742 = vsel %vm2739, %v2677, %v1961
    %v2743 = vsel %vm2739, %v2678, %v1963
    %v2744 = vsel %vm2739, %v2679, %v1965
    %v2745 = vsel %vm2739, %v2680, %v1967
    %v2746 = vsel %vm2739, %v2681, %v1969
    %v2747 = vsel %vm2739, %v2682, %v1971
    %v2748 = vsel %vm2739, %v2683, %v1973
    %v2749 = vsel %vm2739, %v2684, %v1975
    %v2750 = vsel %vm2739, %v2685, %v1977
    %v2751 = vsel %vm2739, %v2686, %v1979
    %v2752 = vsel %vm2739, %v2687, %v1981
    %v2753 = vsel %vm2739, %v2688, %v1983
    %v2754 = vsel %vm2739, %v2689, %v1985
    %v2755 = vsel %vm2739, %v2690, %v1987
    %v2756 = vsel %vm2739, %v2691, %v1989
    %v2757 = vsel %vm2739, %v2692, %v1991
    %v2758 = vsel %vm2739, %v2693, %v1993
    %v2759 = vsel %vm2739, %v2694, %v1995
    %v2760 = vsel %vm2739, %v2695, %v1997
    %v2761 = vsel %vm2739, %v2696, %v1999
    %v2762 = vsel %vm2739, %v2697, %v2001
    %v2763 = vsel %vm2739, %v2698, %v2003
    %v2764 = vsel %vm2739, %v2699, %v2005
    %v2765 = vsel %vm2739, %v2700, %v2007
    %v2766 = vsel %vm2739, %v2701, %v2009
    %v2767 = vsel %vm2739, %v2702, %v2011
    %v2768 = vsel %vm2739, %v2703, %v2013
    %v2769 = vsel %vm2739, %v2704, %v2015
    %v2770 = vsel %vm2739, %v2705, %v2017
    %v2771 = vsel %vm2739, %v2706, %v2019
    %v2772 = vsel %vm2739, %v2707, %v2021
    %v2773 = vsel %vm2739, %v2708, %v2023
    %v2774 = vsel %vm2739, %v2709, %v2025
    %v2775 = vsel %vm2739, %v2710, %v2027
    %v2776 = vsel %vm2739, %v2711, %v2029
    %v2777 = vsel %vm2739, %v2712, %v2031
    %v2778 = vsel %vm2739, %v2713, %v2033
    %v2779 = vsel %vm2739, %v2714, %v2035
    %v2780 = vsel %vm2739, %v2715, %v2037
    %v2781 = vsel %vm2739, %v2716, %v2039
    %v2782 = vsel %vm2739, %v2717, %v2041
    %v2783 = vsel %vm2739, %v2718, %v2043
    %v2784 = vsel %vm2739, %v2719, %v2045
    %v2785 = vsel %vm2739, %v2720, %v2047
    %v2786 = vsel %vm2739, %v2721, %v2049
    %v2787 = vsel %vm2739, %v2722, %v2051
    %v2788 = vsel %vm2739, %v2723, %v2053
    %v2789 = vsel %vm2739, %v2724, %v2055
    %v2790 = vsel %vm2739, %v2725, %v2057
    %v2791 = vsel %vm2739, %v2726, %v2059
    %v2792 = vsel %vm2739, %v2727, %v2061
    %v2793 = vsel %vm2739, %v2728, %v2063
    %v2794 = vsel %vm2739, %v2729, %v2065
    %v2795 = vsel %vm2739, %v2730, %v2067
    %v2796 = vsel %vm2739, %v2731, %v2069
    %v2797 = vsel %vm2739, %v2732, %v2071
    %v2798 = vsel %vm2739, %v2733, %v2073
    %v2799 = vsel %vm2739, %v2734, %v2075
    %v2800 = vsel %vm2739, %v2735, %v2077
    %v2801 = vsel %vm2739, %v2736, %v2079
    %v2802 = vsel %vm2739, %v2737, %v2081
    %v2803 = vsel %vm2739, %v2738, %v2083
    %vm2804 = vcmask 261120
    %v2805 = vsel %vm2804, %v2740, %v2159
    %v2806 = vsel %vm2804, %v2741, %v2161
    %v2807 = vsel %vm2804, %v2742, %v2163
    %v2808 = vsel %vm2804, %v2743, %v2165
    %v2809 = vsel %vm2804, %v2744, %v2167
    %v2810 = vsel %vm2804, %v2745, %v2169
    %v2811 = vsel %vm2804, %v2746, %v2171
    %v2812 = vsel %vm2804, %v2747, %v2173
    %v2813 = vsel %vm2804, %v2748, %v2175
    %v2814 = vsel %vm2804, %v2749, %v2177
    %v2815 = vsel %vm2804, %v2750, %v2179
    %v2816 = vsel %vm2804, %v2751, %v2181
    %v2817 = vsel %vm2804, %v2752, %v2183
    %v2818 = vsel %vm2804, %v2753, %v2185
    %v2819 = vsel %vm2804, %v2754, %v2187
    %v2820 = vsel %vm2804, %v2755, %v2189
    %v2821 = vsel %vm2804, %v2756, %v2191
    %v2822 = vsel %vm2804, %v2757, %v2193
    %v2823 = vsel %vm2804, %v2758, %v2195
    %v2824 = vsel %vm2804, %v2759, %v2197
    %v2825 = vsel %vm2804, %v2760, %v2199
    %v2826 = vsel %vm2804, %v2761, %v2201
    %v2827 = vsel %vm2804, %v2762, %v2203
    %v2828 = vsel %vm2804, %v2763, %v2205
    %v2829 = vsel %vm2804, %v2764, %v2207
    %v2830 = vsel %vm2804, %v2765, %v2209
    %v2831 = vsel %vm2804, %v2766, %v2211
    %v2832 = vsel %vm2804, %v2767, %v2213
    %v2833 = vsel %vm2804, %v2768, %v2215
    %v2834 = vsel %vm2804, %v2769, %v2217
    %v2835 = vsel %vm2804, %v2770, %v2219
    %v2836 = vsel %vm2804, %v2771, %v2221
    %v2837 = vsel %vm2804, %v2772, %v2223
    %v2838 = vsel %vm2804, %v2773, %v2225
    %v2839 = vsel %vm2804, %v2774, %v2227
    %v2840 = vsel %vm2804, %v2775, %v2229
    %v2841 = vsel %vm2804, %v2776, %v2231
    %v2842 = vsel %vm2804, %v2777, %v2233
    %v2843 = vsel %vm2804, %v2778, %v2235
    %v2844 = vsel %vm2804, %v2779, %v2237
    %v2845 = vsel %vm2804, %v2780, %v2239
    %v2846 = vsel %vm2804, %v2781, %v2241
    %v2847 = vsel %vm2804, %v2782, %v2243
    %v2848 = vsel %vm2804, %v2783, %v2245
    %v2849 = vsel %vm2804, %v2784, %v2247
    %v2850 = vsel %vm2804, %v2785, %v2249
    %v2851 = vsel %vm2804, %v2786, %v2251
    %v2852 = vsel %vm2804, %v2787, %v2253
    %v2853 = vsel %vm2804, %v2788, %v2255
    %v2854 = vsel %vm2804, %v2789, %v2257
    %v2855 = vsel %vm2804, %v2790, %v2259
    %v2856 = vsel %vm2804, %v2791, %v2261
    %v2857 = vsel %vm2804, %v2792, %v2263
    %v2858 = vsel %vm2804, %v2793, %v2265
    %v2859 = vsel %vm2804, %v2794, %v2267
    %v2860 = vsel %vm2804, %v2795, %v2269
    %v2861 = vsel %vm2804, %v2796, %v2271
    %v2862 = vsel %vm2804, %v2797, %v2273
    %v2863 = vsel %vm2804, %v2798, %v2275
    %v2864 = vsel %vm2804, %v2799, %v2277
    %v2865 = vsel %vm2804, %v2800, %v2279
    %v2866 = vsel %vm2804, %v2801, %v2281
    %v2867 = vsel %vm2804, %v2802, %v2283
    %v2868 = vsel %vm2804, %v2803, %v2285
    %v2869 = vld [vmem:[%s1] sm:$0xff]
    %v2870 = vld [vmem:[%s1 + $0x8] sm:$0xff]
    %v2871 = vld [vmem:[%s1 + $0x10] sm:$0xff]
    %v2872 = vld [vmem:[%s1 + $0x18] sm:$0xff]
    %v2873 = vld [vmem:[%s1 + $0x20] sm:$0xf]
    %vm2874 = vcmask 293888
    %v2876 = vsel %vm2874, %v2805, 0
    %v2879 = vsel %vm2874, %v2806, 0
    %v2882 = vsel %vm2874, %v2807, 0
    %v2885 = vsel %vm2874, %v2808, 0
    %v2888 = vsel %vm2874, %v2809, 0
    %v2891 = vsel %vm2874, %v2810, 0
    %v2894 = vsel %vm2874, %v2811, 0
    %v2897 = vsel %vm2874, %v2812, 0
    %v2900 = vsel %vm2874, %v2813, 0
    %v2903 = vsel %vm2874, %v2814, 0
    %v2906 = vsel %vm2874, %v2815, 0
    %v2909 = vsel %vm2874, %v2816, 0
    %v2912 = vsel %vm2874, %v2817, 0
    %v2915 = vsel %vm2874, %v2818, 0
    %v2918 = vsel %vm2874, %v2819, 0
    %v2921 = vsel %vm2874, %v2820, 0
    %v2924 = vsel %vm2874, %v2821, 0
    %v2927 = vsel %vm2874, %v2822, 0
    %v2930 = vsel %vm2874, %v2823, 0
    %v2933 = vsel %vm2874, %v2824, 0
    %v2936 = vsel %vm2874, %v2825, 0
    %v2939 = vsel %vm2874, %v2826, 0
    %v2942 = vsel %vm2874, %v2827, 0
    %v2945 = vsel %vm2874, %v2828, 0
    %v2948 = vsel %vm2874, %v2829, 0
    %v2951 = vsel %vm2874, %v2830, 0
    %v2954 = vsel %vm2874, %v2831, 0
    %v2957 = vsel %vm2874, %v2832, 0
    %v2960 = vsel %vm2874, %v2833, 0
    %v2963 = vsel %vm2874, %v2834, 0
    %v2966 = vsel %vm2874, %v2835, 0
    %v2969 = vsel %vm2874, %v2836, 0
    %v2972 = vsel %vm2874, %v2837, 0
    %v2975 = vsel %vm2874, %v2838, 0
    %v2978 = vsel %vm2874, %v2839, 0
    %v2981 = vsel %vm2874, %v2840, 0
    %v2984 = vsel %vm2874, %v2841, 0
    %v2987 = vsel %vm2874, %v2842, 0
    %v2990 = vsel %vm2874, %v2843, 0
    %v2993 = vsel %vm2874, %v2844, 0
    %v2996 = vsel %vm2874, %v2845, 0
    %v2999 = vsel %vm2874, %v2846, 0
    %v3002 = vsel %vm2874, %v2847, 0
    %v3005 = vsel %vm2874, %v2848, 0
    %v3008 = vsel %vm2874, %v2849, 0
    %v3011 = vsel %vm2874, %v2850, 0
    %v3014 = vsel %vm2874, %v2851, 0
    %v3017 = vsel %vm2874, %v2852, 0
    %v3020 = vsel %vm2874, %v2853, 0
    %v3023 = vsel %vm2874, %v2854, 0
    %v3026 = vsel %vm2874, %v2855, 0
    %v3029 = vsel %vm2874, %v2856, 0
    %v3032 = vsel %vm2874, %v2857, 0
    %v3035 = vsel %vm2874, %v2858, 0
    %v3038 = vsel %vm2874, %v2859, 0
    %v3041 = vsel %vm2874, %v2860, 0
    %v3044 = vsel %vm2874, %v2861, 0
    %v3047 = vsel %vm2874, %v2862, 0
    %v3050 = vsel %vm2874, %v2863, 0
    %v3053 = vsel %vm2874, %v2864, 0
    %v3056 = vsel %vm2874, %v2865, 0
    %v3059 = vsel %vm2874, %v2866, 0
    %v3062 = vsel %vm2874, %v2867, 0
    %v3065 = vsel %vm2874, %v2868, 0
    %vm3067 = vcmask 1043456
    %v3069 = vsel %vm3067, %v2873, 0
    %3071 = vmatprep.subr.mxu0 0.0
    %3072 = vmatpush1.msra.mxu0 0.0
    %3073 = vmatprep.subr.mxu0 0.0
    %3074 = vmatpush1.msra.mxu0 0.0
    %3075 = vmatprep.subr.mxu0 0.0
    %3076 = vmatpush1.msra.mxu0 0.0
    %3077 = vmatprep.subr.mxu0 0.0
    %3078 = vmatpush1.msra.mxu0 0.0
    %3079 = vmatprep.subr.mxu0 0.0
    %3080 = vmatpush1.msra.mxu0 0.0
    %3081 = vmatprep.subr.mxu0 0.0
    %3082 = vmatpush1.msra.mxu0 0.0
    %3083 = vmatprep.subr.mxu0 0.0
    %3084 = vmatpush1.msra.mxu0 0.0
    %3085 = vmatprep.subr.mxu0 0.0
    %3086 = vmatpush1.msra.mxu0 0.0
    %3087 = vmatprep.subr.mxu0 0.0
    %3088 = vmatpush1.msra.mxu0 0.0
    %3089 = vmatprep.subr.mxu0 0.0
    %3090 = vmatpush1.msra.mxu0 0.0
    %3091 = vmatprep.subr.mxu0 0.0
    %3092 = vmatpush1.msra.mxu0 0.0
    %3093 = vmatprep.subr.mxu0 0.0
    %3094 = vmatpush1.msra.mxu0 %v3069
    %3095 = vmatprep.subr.mxu0 0.0
    %3096 = vmatpush1.msra.mxu0 %v2872
    %3097 = vmatprep.subr.mxu0 0.0
    %3098 = vmatpush1.msra.mxu0 %v2871
    %3099 = vmatprep.subr.mxu0 0.0
    %3100 = vmatpush1.msra.mxu0 %v2870
    %3101 = vmatprep.subr.mxu0 0.0
    %3102 = vmatpush1.msra.mxu0 %v2869
    %3103 = vmatprep.subr.mxu0 0.0
    %3104 = vmatpush2.msra.mxu0 0.0
    %3105 = vmatprep.subr.mxu0 0.0
    %3106 = vmatpush2.msra.mxu0 0.0
    %3107 = vmatprep.subr.mxu0 0.0
    %3108 = vmatpush2.msra.mxu0 0.0
    %3109 = vmatprep.subr.mxu0 0.0
    %3110 = vmatpush2.msra.mxu0 0.0
    %3111 = vmatprep.subr.mxu0 0.0
    %3112 = vmatpush2.msra.mxu0 0.0
    %3113 = vmatprep.subr.mxu0 0.0
    %3114 = vmatpush2.msra.mxu0 0.0
    %3115 = vmatprep.subr.mxu0 0.0
    %3116 = vmatpush2.msra.mxu0 0.0
    %3117 = vmatprep.subr.mxu0 0.0
    %3118 = vmatpush2.msra.mxu0 0.0
    %3119 = vmatprep.subr.mxu0 0.0
    %3120 = vmatpush2.msra.mxu0 0.0
    %3121 = vmatprep.subr.mxu0 0.0
    %3122 = vmatpush2.msra.mxu0 0.0
    %3123 = vmatprep.subr.mxu0 0.0
    %3124 = vmatpush2.msra.mxu0 0.0
    %3125 = vmatprep.subr.mxu0 0.0
    %3126 = vmatpush2.msra.mxu0 0.0
    %3127 = vmatprep.subr.mxu0 0.0
    %3128 = vmatpush2.msra.mxu0 0.0
    %3129 = vmatprep.subr.mxu0 0.0
    %3130 = vmatpush2.msra.mxu0 0.0
    %3131 = vmatprep.subr.mxu0 0.0
    %3132 = vmatpush2.msra.mxu0 0.0
    %3133 = vmatprep.subr.mxu0 0.0
    %3134 = vmatpush2.msra.mxu0 0.0
    %3135 = vmatprep.mubr.f32.mxu0 0.0
    %3136 = vmatmul.mubr.f32.gmra.mxu0 %v2876
    %v3137 = vpop.f32.mrf.mxu0
    %v3138 = vadd.f32 0.0, %v3137
    %v3139 = vpop.f32.mrf.mxu0
    %3140 = vmatprep.mubr.f32.mxu0 0.0
    %3141 = vmatmul.mubr.f32.gmra.mxu0 %v2879
    %v3142 = vpop.f32.mrf.mxu0
    %v3143 = vadd.f32 0.0, %v3142
    %v3144 = vpop.f32.mrf.mxu0
    %3145 = vmatprep.mubr.f32.mxu0 0.0
    %3146 = vmatmul.mubr.f32.gmra.mxu0 %v2882
    %v3147 = vpop.f32.mrf.mxu0
    %v3148 = vadd.f32 0.0, %v3147
    %v3149 = vpop.f32.mrf.mxu0
    %3150 = vmatprep.mubr.f32.mxu0 0.0
    %3151 = vmatmul.mubr.f32.gmra.mxu0 %v2885
    %v3152 = vpop.f32.mrf.mxu0
    %v3153 = vadd.f32 0.0, %v3152
    %v3154 = vpop.f32.mrf.mxu0
    %3155 = vmatprep.mubr.f32.mxu0 0.0
    %3156 = vmatmul.mubr.f32.gmra.mxu0 %v2888
    %v3157 = vpop.f32.mrf.mxu0
    %v3158 = vadd.f32 0.0, %v3157
    %v3159 = vpop.f32.mrf.mxu0
    %3160 = vmatprep.mubr.f32.mxu0 0.0
    %3161 = vmatmul.mubr.f32.gmra.mxu0 %v2891
    %v3162 = vpop.f32.mrf.mxu0
    %v3163 = vadd.f32 0.0, %v3162
    %v3164 = vpop.f32.mrf.mxu0
    %3165 = vmatprep.mubr.f32.mxu0 0.0
    %3166 = vmatmul.mubr.f32.gmra.mxu0 %v2894
    %v3167 = vpop.f32.mrf.mxu0
    %v3168 = vadd.f32 0.0, %v3167
    %v3169 = vpop.f32.mrf.mxu0
    %3170 = vmatprep.mubr.f32.mxu0 0.0
    %3171 = vmatmul.mubr.f32.gmra.mxu0 %v2897
    %v3172 = vpop.f32.mrf.mxu0
    %v3173 = vadd.f32 0.0, %v3172
    %v3174 = vpop.f32.mrf.mxu0
    %3175 = vmatprep.mubr.f32.mxu0 0.0
    %3176 = vmatmul.mubr.f32.gmra.mxu0 %v2900
    %v3177 = vpop.f32.mrf.mxu0
    %v3178 = vadd.f32 0.0, %v3177
    %v3179 = vpop.f32.mrf.mxu0
    %3180 = vmatprep.mubr.f32.mxu0 0.0
    %3181 = vmatmul.mubr.f32.gmra.mxu0 %v2903
    %v3182 = vpop.f32.mrf.mxu0
    %v3183 = vadd.f32 0.0, %v3182
    %v3184 = vpop.f32.mrf.mxu0
    %3185 = vmatprep.mubr.f32.mxu0 0.0
    %3186 = vmatmul.mubr.f32.gmra.mxu0 %v2906
    %v3187 = vpop.f32.mrf.mxu0
    %v3188 = vadd.f32 0.0, %v3187
    %v3189 = vpop.f32.mrf.mxu0
    %3190 = vmatprep.mubr.f32.mxu0 0.0
    %3191 = vmatmul.mubr.f32.gmra.mxu0 %v2909
    %v3192 = vpop.f32.mrf.mxu0
    %v3193 = vadd.f32 0.0, %v3192
    %v3194 = vpop.f32.mrf.mxu0
    %3195 = vmatprep.mubr.f32.mxu0 0.0
    %3196 = vmatmul.mubr.f32.gmra.mxu0 %v2912
    %v3197 = vpop.f32.mrf.mxu0
    %v3198 = vadd.f32 0.0, %v3197
    %v3199 = vpop.f32.mrf.mxu0
    %3200 = vmatprep.mubr.f32.mxu0 0.0
    %3201 = vmatmul.mubr.f32.gmra.mxu0 %v2915
    %v3202 = vpop.f32.mrf.mxu0
    %v3203 = vadd.f32 0.0, %v3202
    %v3204 = vpop.f32.mrf.mxu0
    %3205 = vmatprep.mubr.f32.mxu0 0.0
    %3206 = vmatmul.mubr.f32.gmra.mxu0 %v2918
    %v3207 = vpop.f32.mrf.mxu0
    %v3208 = vadd.f32 0.0, %v3207
    %v3209 = vpop.f32.mrf.mxu0
    %3210 = vmatprep.mubr.f32.mxu0 0.0
    %3211 = vmatmul.mubr.f32.gmra.mxu0 %v2921
    %v3212 = vpop.f32.mrf.mxu0
    %v3213 = vadd.f32 0.0, %v3212
    %v3214 = vpop.f32.mrf.mxu0
    %3215 = vmatprep.mubr.f32.mxu0 0.0
    %3216 = vmatmul.mubr.f32.gmra.mxu0 %v2924
    %v3217 = vpop.f32.mrf.mxu0
    %v3218 = vadd.f32 0.0, %v3217
    %v3219 = vpop.f32.mrf.mxu0
    %3220 = vmatprep.mubr.f32.mxu0 0.0
    %3221 = vmatmul.mubr.f32.gmra.mxu0 %v2927
    %v3222 = vpop.f32.mrf.mxu0
    %v3223 = vadd.f32 0.0, %v3222
    %v3224 = vpop.f32.mrf.mxu0
    %3225 = vmatprep.mubr.f32.mxu0 0.0
    %3226 = vmatmul.mubr.f32.gmra.mxu0 %v2930
    %v3227 = vpop.f32.mrf.mxu0
    %v3228 = vadd.f32 0.0, %v3227
    %v3229 = vpop.f32.mrf.mxu0
    %3230 = vmatprep.mubr.f32.mxu0 0.0
    %3231 = vmatmul.mubr.f32.gmra.mxu0 %v2933
    %v3232 = vpop.f32.mrf.mxu0
    %v3233 = vadd.f32 0.0, %v3232
    %v3234 = vpop.f32.mrf.mxu0
    %3235 = vmatprep.mubr.f32.mxu0 0.0
    %3236 = vmatmul.mubr.f32.gmra.mxu0 %v2936
    %v3237 = vpop.f32.mrf.mxu0
    %v3238 = vadd.f32 0.0, %v3237
    %v3239 = vpop.f32.mrf.mxu0
    %3240 = vmatprep.mubr.f32.mxu0 0.0
    %3241 = vmatmul.mubr.f32.gmra.mxu0 %v2939
    %v3242 = vpop.f32.mrf.mxu0
    %v3243 = vadd.f32 0.0, %v3242
    %v3244 = vpop.f32.mrf.mxu0
    %3245 = vmatprep.mubr.f32.mxu0 0.0
    %3246 = vmatmul.mubr.f32.gmra.mxu0 %v2942
    %v3247 = vpop.f32.mrf.mxu0
    %v3248 = vadd.f32 0.0, %v3247
    %v3249 = vpop.f32.mrf.mxu0
    %3250 = vmatprep.mubr.f32.mxu0 0.0
    %3251 = vmatmul.mubr.f32.gmra.mxu0 %v2945
    %v3252 = vpop.f32.mrf.mxu0
    %v3253 = vadd.f32 0.0, %v3252
    %v3254 = vpop.f32.mrf.mxu0
    %3255 = vmatprep.mubr.f32.mxu0 0.0
    %3256 = vmatmul.mubr.f32.gmra.mxu0 %v2948
    %v3257 = vpop.f32.mrf.mxu0
    %v3258 = vadd.f32 0.0, %v3257
    %v3259 = vpop.f32.mrf.mxu0
    %3260 = vmatprep.mubr.f32.mxu0 0.0
    %3261 = vmatmul.mubr.f32.gmra.mxu0 %v2951
    %v3262 = vpop.f32.mrf.mxu0
    %v3263 = vadd.f32 0.0, %v3262
    %v3264 = vpop.f32.mrf.mxu0
    %3265 = vmatprep.mubr.f32.mxu0 0.0
    %3266 = vmatmul.mubr.f32.gmra.mxu0 %v2954
    %v3267 = vpop.f32.mrf.mxu0
    %v3268 = vadd.f32 0.0, %v3267
    %v3269 = vpop.f32.mrf.mxu0
    %3270 = vmatprep.mubr.f32.mxu0 0.0
    %3271 = vmatmul.mubr.f32.gmra.mxu0 %v2957
    %v3272 = vpop.f32.mrf.mxu0
    %v3273 = vadd.f32 0.0, %v3272
    %v3274 = vpop.f32.mrf.mxu0
    %3275 = vmatprep.mubr.f32.mxu0 0.0
    %3276 = vmatmul.mubr.f32.gmra.mxu0 %v2960
    %v3277 = vpop.f32.mrf.mxu0
    %v3278 = vadd.f32 0.0, %v3277
    %v3279 = vpop.f32.mrf.mxu0
    %3280 = vmatprep.mubr.f32.mxu0 0.0
    %3281 = vmatmul.mubr.f32.gmra.mxu0 %v2963
    %v3282 = vpop.f32.mrf.mxu0
    %v3283 = vadd.f32 0.0, %v3282
    %v3284 = vpop.f32.mrf.mxu0
    %3285 = vmatprep.mubr.f32.mxu0 0.0
    %3286 = vmatmul.mubr.f32.gmra.mxu0 %v2966
    %v3287 = vpop.f32.mrf.mxu0
    %v3288 = vadd.f32 0.0, %v3287
    %v3289 = vpop.f32.mrf.mxu0
    %3290 = vmatprep.mubr.f32.mxu0 0.0
    %3291 = vmatmul.mubr.f32.gmra.mxu0 %v2969
    %v3292 = vpop.f32.mrf.mxu0
    %v3293 = vadd.f32 0.0, %v3292
    %v3294 = vpop.f32.mrf.mxu0
    %3295 = vmatprep.mubr.f32.mxu0 0.0
    %3296 = vmatmul.mubr.f32.gmra.mxu0 %v2972
    %v3297 = vpop.f32.mrf.mxu0
    %v3298 = vadd.f32 0.0, %v3297
    %v3299 = vpop.f32.mrf.mxu0
    %3300 = vmatprep.mubr.f32.mxu0 0.0
    %3301 = vmatmul.mubr.f32.gmra.mxu0 %v2975
    %v3302 = vpop.f32.mrf.mxu0
    %v3303 = vadd.f32 0.0, %v3302
    %v3304 = vpop.f32.mrf.mxu0
    %3305 = vmatprep.mubr.f32.mxu0 0.0
    %3306 = vmatmul.mubr.f32.gmra.mxu0 %v2978
    %v3307 = vpop.f32.mrf.mxu0
    %v3308 = vadd.f32 0.0, %v3307
    %v3309 = vpop.f32.mrf.mxu0
    %3310 = vmatprep.mubr.f32.mxu0 0.0
    %3311 = vmatmul.mubr.f32.gmra.mxu0 %v2981
    %v3312 = vpop.f32.mrf.mxu0
    %v3313 = vadd.f32 0.0, %v3312
    %v3314 = vpop.f32.mrf.mxu0
    %3315 = vmatprep.mubr.f32.mxu0 0.0
    %3316 = vmatmul.mubr.f32.gmra.mxu0 %v2984
    %v3317 = vpop.f32.mrf.mxu0
    %v3318 = vadd.f32 0.0, %v3317
    %v3319 = vpop.f32.mrf.mxu0
    %3320 = vmatprep.mubr.f32.mxu0 0.0
    %3321 = vmatmul.mubr.f32.gmra.mxu0 %v2987
    %v3322 = vpop.f32.mrf.mxu0
    %v3323 = vadd.f32 0.0, %v3322
    %v3324 = vpop.f32.mrf.mxu0
    %3325 = vmatprep.mubr.f32.mxu0 0.0
    %3326 = vmatmul.mubr.f32.gmra.mxu0 %v2990
    %v3327 = vpop.f32.mrf.mxu0
    %v3328 = vadd.f32 0.0, %v3327
    %v3329 = vpop.f32.mrf.mxu0
    %3330 = vmatprep.mubr.f32.mxu0 0.0
    %3331 = vmatmul.mubr.f32.gmra.mxu0 %v2993
    %v3332 = vpop.f32.mrf.mxu0
    %v3333 = vadd.f32 0.0, %v3332
    %v3334 = vpop.f32.mrf.mxu0
    %3335 = vmatprep.mubr.f32.mxu0 0.0
    %3336 = vmatmul.mubr.f32.gmra.mxu0 %v2996
    %v3337 = vpop.f32.mrf.mxu0
    %v3338 = vadd.f32 0.0, %v3337
    %v3339 = vpop.f32.mrf.mxu0
    %3340 = vmatprep.mubr.f32.mxu0 0.0
    %3341 = vmatmul.mubr.f32.gmra.mxu0 %v2999
    %v3342 = vpop.f32.mrf.mxu0
    %v3343 = vadd.f32 0.0, %v3342
    %v3344 = vpop.f32.mrf.mxu0
    %3345 = vmatprep.mubr.f32.mxu0 0.0
    %3346 = vmatmul.mubr.f32.gmra.mxu0 %v3002
    %v3347 = vpop.f32.mrf.mxu0
    %v3348 = vadd.f32 0.0, %v3347
    %v3349 = vpop.f32.mrf.mxu0
    %3350 = vmatprep.mubr.f32.mxu0 0.0
    %3351 = vmatmul.mubr.f32.gmra.mxu0 %v3005
    %v3352 = vpop.f32.mrf.mxu0
    %v3353 = vadd.f32 0.0, %v3352
    %v3354 = vpop.f32.mrf.mxu0
    %3355 = vmatprep.mubr.f32.mxu0 0.0
    %3356 = vmatmul.mubr.f32.gmra.mxu0 %v3008
    %v3357 = vpop.f32.mrf.mxu0
    %v3358 = vadd.f32 0.0, %v3357
    %v3359 = vpop.f32.mrf.mxu0
    %3360 = vmatprep.mubr.f32.mxu0 0.0
    %3361 = vmatmul.mubr.f32.gmra.mxu0 %v3011
    %v3362 = vpop.f32.mrf.mxu0
    %v3363 = vadd.f32 0.0, %v3362
    %v3364 = vpop.f32.mrf.mxu0
    %3365 = vmatprep.mubr.f32.mxu0 0.0
    %3366 = vmatmul.mubr.f32.gmra.mxu0 %v3014
    %v3367 = vpop.f32.mrf.mxu0
    %v3368 = vadd.f32 0.0, %v3367
    %v3369 = vpop.f32.mrf.mxu0
    %3370 = vmatprep.mubr.f32.mxu0 0.0
    %3371 = vmatmul.mubr.f32.gmra.mxu0 %v3017
    %v3372 = vpop.f32.mrf.mxu0
    %v3373 = vadd.f32 0.0, %v3372
    %v3374 = vpop.f32.mrf.mxu0
    %3375 = vmatprep.mubr.f32.mxu0 0.0
    %3376 = vmatmul.mubr.f32.gmra.mxu0 %v3020
    %v3377 = vpop.f32.mrf.mxu0
    %v3378 = vadd.f32 0.0, %v3377
    %v3379 = vpop.f32.mrf.mxu0
    %3380 = vmatprep.mubr.f32.mxu0 0.0
    %3381 = vmatmul.mubr.f32.gmra.mxu0 %v3023
    %v3382 = vpop.f32.mrf.mxu0
    %v3383 = vadd.f32 0.0, %v3382
    %v3384 = vpop.f32.mrf.mxu0
    %3385 = vmatprep.mubr.f32.mxu0 0.0
    %3386 = vmatmul.mubr.f32.gmra.mxu0 %v3026
    %v3387 = vpop.f32.mrf.mxu0
    %v3388 = vadd.f32 0.0, %v3387
    %v3389 = vpop.f32.mrf.mxu0
    %3390 = vmatprep.mubr.f32.mxu0 0.0
    %3391 = vmatmul.mubr.f32.gmra.mxu0 %v3029
    %v3392 = vpop.f32.mrf.mxu0
    %v3393 = vadd.f32 0.0, %v3392
    %v3394 = vpop.f32.mrf.mxu0
    %3395 = vmatprep.mubr.f32.mxu0 0.0
    %3396 = vmatmul.mubr.f32.gmra.mxu0 %v3032
    %v3397 = vpop.f32.mrf.mxu0
    %v3398 = vadd.f32 0.0, %v3397
    %v3399 = vpop.f32.mrf.mxu0
    %3400 = vmatprep.mubr.f32.mxu0 0.0
    %3401 = vmatmul.mubr.f32.gmra.mxu0 %v3035
    %v3402 = vpop.f32.mrf.mxu0
    %v3403 = vadd.f32 0.0, %v3402
    %v3404 = vpop.f32.mrf.mxu0
    %3405 = vmatprep.mubr.f32.mxu0 0.0
    %3406 = vmatmul.mubr.f32.gmra.mxu0 %v3038
    %v3407 = vpop.f32.mrf.mxu0
    %v3408 = vadd.f32 0.0, %v3407
    %v3409 = vpop.f32.mrf.mxu0
    %3410 = vmatprep.mubr.f32.mxu0 0.0
    %3411 = vmatmul.mubr.f32.gmra.mxu0 %v3041
    %v3412 = vpop.f32.mrf.mxu0
    %v3413 = vadd.f32 0.0, %v3412
    %v3414 = vpop.f32.mrf.mxu0
    %3415 = vmatprep.mubr.f32.mxu0 0.0
    %3416 = vmatmul.mubr.f32.gmra.mxu0 %v3044
    %v3417 = vpop.f32.mrf.mxu0
    %v3418 = vadd.f32 0.0, %v3417
    %v3419 = vpop.f32.mrf.mxu0
    %3420 = vmatprep.mubr.f32.mxu0 0.0
    %3421 = vmatmul.mubr.f32.gmra.mxu0 %v3047
    %v3422 = vpop.f32.mrf.mxu0
    %v3423 = vadd.f32 0.0, %v3422
    %v3424 = vpop.f32.mrf.mxu0
    %3425 = vmatprep.mubr.f32.mxu0 0.0
    %3426 = vmatmul.mubr.f32.gmra.mxu0 %v3050
    %v3427 = vpop.f32.mrf.mxu0
    %v3428 = vadd.f32 0.0, %v3427
    %v3429 = vpop.f32.mrf.mxu0
    %3430 = vmatprep.mubr.f32.mxu0 0.0
    %3431 = vmatmul.mubr.f32.gmra.mxu0 %v3053
    %v3432 = vpop.f32.mrf.mxu0
    %v3433 = vadd.f32 0.0, %v3432
    %v3434 = vpop.f32.mrf.mxu0
    %3435 = vmatprep.mubr.f32.mxu0 0.0
    %3436 = vmatmul.mubr.f32.gmra.mxu0 %v3056
    %v3437 = vpop.f32.mrf.mxu0
    %v3438 = vadd.f32 0.0, %v3437
    %v3439 = vpop.f32.mrf.mxu0
    %3440 = vmatprep.mubr.f32.mxu0 0.0
    %3441 = vmatmul.mubr.f32.gmra.mxu0 %v3059
    %v3442 = vpop.f32.mrf.mxu0
    %v3443 = vadd.f32 0.0, %v3442
    %v3444 = vpop.f32.mrf.mxu0
    %3445 = vmatprep.mubr.f32.mxu0 0.0
    %3446 = vmatmul.mubr.f32.gmra.mxu0 %v3062
    %v3447 = vpop.f32.mrf.mxu0
    %v3448 = vadd.f32 0.0, %v3447
    %v3449 = vpop.f32.mrf.mxu0
    %3450 = vmatprep.mubr.f32.mxu0 0.0
    %3451 = vmatmul.mubr.f32.gmra.mxu0 %v3065
    %v3452 = vpop.f32.mrf.mxu0
    %v3453 = vadd.f32 0.0, %v3452
    %v3454 = vpop.f32.mrf.mxu0
    %3455 = vdwg.mxu0
    %v3456 = vld [vmem:[%s2] sm:$0x1]
    %v3457 = vld [vmem:[%s3] sm:$0x1]
    %v3458 = vsel %vm2414, %v3138, 0.0
    %v3459 = vsel %vm2414, %v3143, 0.0
    %v3460 = vadd.f32 %v3458, %v3459
    %v3461 = vsel %vm2414, %v3148, 0.0
    %v3462 = vadd.f32 %v3460, %v3461
    %v3463 = vsel %vm2414, %v3153, 0.0
    %v3464 = vadd.f32 %v3462, %v3463
    %v3465 = vsel %vm2414, %v3158, 0.0
    %v3466 = vadd.f32 %v3464, %v3465
    %v3467 = vsel %vm2414, %v3163, 0.0
    %v3468 = vadd.f32 %v3466, %v3467
    %v3469 = vsel %vm2414, %v3168, 0.0
    %v3470 = vadd.f32 %v3468, %v3469
    %v3471 = vsel %vm2414, %v3173, 0.0
    %v3472 = vadd.f32 %v3470, %v3471
    %v3473 = vsel %vm2414, %v3178, 0.0
    %v3474 = vadd.f32 %v3472, %v3473
    %v3475 = vsel %vm2414, %v3183, 0.0
    %v3476 = vadd.f32 %v3474, %v3475
    %v3477 = vsel %vm2414, %v3188, 0.0
    %v3478 = vadd.f32 %v3476, %v3477
    %v3479 = vsel %vm2414, %v3193, 0.0
    %v3480 = vadd.f32 %v3478, %v3479
    %v3481 = vsel %vm2414, %v3198, 0.0
    %v3482 = vadd.f32 %v3480, %v3481
    %v3483 = vsel %vm2414, %v3203, 0.0
    %v3484 = vadd.f32 %v3482, %v3483
    %v3485 = vsel %vm2414, %v3208, 0.0
    %v3486 = vadd.f32 %v3484, %v3485
    %v3487 = vsel %vm2414, %v3213, 0.0
    %v3488 = vadd.f32 %v3486, %v3487
    %v3489 = vsel %vm2414, %v3218, 0.0
    %v3490 = vadd.f32 %v3488, %v3489
    %v3491 = vsel %vm2414, %v3223, 0.0
    %v3492 = vadd.f32 %v3490, %v3491
    %v3493 = vsel %vm2414, %v3228, 0.0
    %v3494 = vadd.f32 %v3492, %v3493
    %v3495 = vsel %vm2414, %v3233, 0.0
    %v3496 = vadd.f32 %v3494, %v3495
    %v3497 = vsel %vm2414, %v3238, 0.0
    %v3498 = vadd.f32 %v3496, %v3497
    %v3499 = vsel %vm2414, %v3243, 0.0
    %v3500 = vadd.f32 %v3498, %v3499
    %v3501 = vsel %vm2414, %v3248, 0.0
    %v3502 = vadd.f32 %v3500, %v3501
    %v3503 = vsel %vm2414, %v3253, 0.0
    %v3504 = vadd.f32 %v3502, %v3503
    %v3505 = vsel %vm2414, %v3258, 0.0
    %v3506 = vadd.f32 %v3504, %v3505
    %v3507 = vsel %vm2414, %v3263, 0.0
    %v3508 = vadd.f32 %v3506, %v3507
    %v3509 = vsel %vm2414, %v3268, 0.0
    %v3510 = vadd.f32 %v3508, %v3509
    %v3511 = vsel %vm2414, %v3273, 0.0
    %v3512 = vadd.f32 %v3510, %v3511
    %v3513 = vsel %vm2414, %v3278, 0.0
    %v3514 = vadd.f32 %v3512, %v3513
    %v3515 = vsel %vm2414, %v3283, 0.0
    %v3516 = vadd.f32 %v3514, %v3515
    %v3517 = vsel %vm2414, %v3288, 0.0
    %v3518 = vadd.f32 %v3516, %v3517
    %v3519 = vsel %vm2414, %v3293, 0.0
    %v3520 = vadd.f32 %v3518, %v3519
    %v3521 = vsel %vm2414, %v3298, 0.0
    %v3522 = vadd.f32 %v3520, %v3521
    %v3523 = vsel %vm2414, %v3303, 0.0
    %v3524 = vadd.f32 %v3522, %v3523
    %v3525 = vsel %vm2414, %v3308, 0.0
    %v3526 = vadd.f32 %v3524, %v3525
    %v3527 = vsel %vm2414, %v3313, 0.0
    %v3528 = vadd.f32 %v3526, %v3527
    %v3529 = vsel %vm2414, %v3318, 0.0
    %v3530 = vadd.f32 %v3528, %v3529
    %v3531 = vsel %vm2414, %v3323, 0.0
    %v3532 = vadd.f32 %v3530, %v3531
    %v3533 = vsel %vm2414, %v3328, 0.0
    %v3534 = vadd.f32 %v3532, %v3533
    %v3535 = vsel %vm2414, %v3333, 0.0
    %v3536 = vadd.f32 %v3534, %v3535
    %v3537 = vsel %vm2414, %v3338, 0.0
    %v3538 = vadd.f32 %v3536, %v3537
    %v3539 = vsel %vm2414, %v3343, 0.0
    %v3540 = vadd.f32 %v3538, %v3539
    %v3541 = vsel %vm2414, %v3348, 0.0
    %v3542 = vadd.f32 %v3540, %v3541
    %v3543 = vsel %vm2414, %v3353, 0.0
    %v3544 = vadd.f32 %v3542, %v3543
    %v3545 = vsel %vm2414, %v3358, 0.0
    %v3546 = vadd.f32 %v3544, %v3545
    %v3547 = vsel %vm2414, %v3363, 0.0
    %v3548 = vadd.f32 %v3546, %v3547
    %v3549 = vsel %vm2414, %v3368, 0.0
    %v3550 = vadd.f32 %v3548, %v3549
    %v3551 = vsel %vm2414, %v3373, 0.0
    %v3552 = vadd.f32 %v3550, %v3551
    %v3553 = vsel %vm2414, %v3378, 0.0
    %v3554 = vadd.f32 %v3552, %v3553
    %v3555 = vsel %vm2414, %v3383, 0.0
    %v3556 = vadd.f32 %v3554, %v3555
    %v3557 = vsel %vm2414, %v3388, 0.0
    %v3558 = vadd.f32 %v3556, %v3557
    %v3559 = vsel %vm2414, %v3393, 0.0
    %v3560 = vadd.f32 %v3558, %v3559
    %v3561 = vsel %vm2414, %v3398, 0.0
    %v3562 = vadd.f32 %v3560, %v3561
    %v3563 = vsel %vm2414, %v3403, 0.0
    %v3564 = vadd.f32 %v3562, %v3563
    %v3565 = vsel %vm2414, %v3408, 0.0
    %v3566 = vadd.f32 %v3564, %v3565
    %v3567 = vsel %vm2414, %v3413, 0.0
    %v3568 = vadd.f32 %v3566, %v3567
    %v3569 = vsel %vm2414, %v3418, 0.0
    %v3570 = vadd.f32 %v3568, %v3569
    %v3571 = vsel %vm2414, %v3423, 0.0
    %v3572 = vadd.f32 %v3570, %v3571
    %v3573 = vsel %vm2414, %v3428, 0.0
    %v3574 = vadd.f32 %v3572, %v3573
    %v3575 = vsel %vm2414, %v3433, 0.0
    %v3576 = vadd.f32 %v3574, %v3575
    %v3577 = vsel %vm2414, %v3438, 0.0
    %v3578 = vadd.f32 %v3576, %v3577
    %v3579 = vsel %vm2414, %v3443, 0.0
    %v3580 = vadd.f32 %v3578, %v3579
    %v3581 = vsel %vm2414, %v3448, 0.0
    %v3582 = vadd.f32 %v3580, %v3581
    %v3583 = vsel %vm2414, %v3453, 0.0
    %v3584 = vadd.f32 %v3582, %v3583
    %v3585 = vrot.slane %v3584, 4
    %v3586 = vadd.f32 %v3584, %v3585
    %v3587 = vrot.slane %v3586, 2
    %v3588 = vadd.f32 %v3586, %v3587
    %v3589 = vrot.slane %v3588, 1
    %v3590 = vadd.f32 %v3588, %v3589
    %v3591 = vrcp.pop 512.0
    %v3592 = vmul.f32 %v3590, %v3591
    %v3593 = vsub.f32 %v3138, %v3592
    %v3594 = vsub.f32 %v3143, %v3592
    %v3595 = vsub.f32 %v3148, %v3592
    %v3596 = vsub.f32 %v3153, %v3592
    %v3597 = vsub.f32 %v3158, %v3592
    %v3598 = vsub.f32 %v3163, %v3592
    %v3599 = vsub.f32 %v3168, %v3592
    %v3600 = vsub.f32 %v3173, %v3592
    %v3601 = vsub.f32 %v3178, %v3592
    %v3602 = vsub.f32 %v3183, %v3592
    %v3603 = vsub.f32 %v3188, %v3592
    %v3604 = vsub.f32 %v3193, %v3592
    %v3605 = vsub.f32 %v3198, %v3592
    %v3606 = vsub.f32 %v3203, %v3592
    %v3607 = vsub.f32 %v3208, %v3592
    %v3608 = vsub.f32 %v3213, %v3592
    %v3609 = vsub.f32 %v3218, %v3592
    %v3610 = vsub.f32 %v3223, %v3592
    %v3611 = vsub.f32 %v3228, %v3592
    %v3612 = vsub.f32 %v3233, %v3592
    %v3613 = vsub.f32 %v3238, %v3592
    %v3614 = vsub.f32 %v3243, %v3592
    %v3615 = vsub.f32 %v3248, %v3592
    %v3616 = vsub.f32 %v3253, %v3592
    %v3617 = vsub.f32 %v3258, %v3592
    %v3618 = vsub.f32 %v3263, %v3592
    %v3619 = vsub.f32 %v3268, %v3592
    %v3620 = vsub.f32 %v3273, %v3592
    %v3621 = vsub.f32 %v3278, %v3592
    %v3622 = vsub.f32 %v3283, %v3592
    %v3623 = vsub.f32 %v3288, %v3592
    %v3624 = vsub.f32 %v3293, %v3592
    %v3625 = vsub.f32 %v3298, %v3592
    %v3626 = vsub.f32 %v3303, %v3592
    %v3627 = vsub.f32 %v3308, %v3592
    %v3628 = vsub.f32 %v3313, %v3592
    %v3629 = vsub.f32 %v3318, %v3592
    %v3630 = vsub.f32 %v3323, %v3592
    %v3631 = vsub.f32 %v3328, %v3592
    %v3632 = vsub.f32 %v3333, %v3592
    %v3633 = vsub.f32 %v3338, %v3592
    %v3634 = vsub.f32 %v3343, %v3592
    %v3635 = vsub.f32 %v3348, %v3592
    %v3636 = vsub.f32 %v3353, %v3592
    %v3637 = vsub.f32 %v3358, %v3592
    %v3638 = vsub.f32 %v3363, %v3592
    %v3639 = vsub.f32 %v3368, %v3592
    %v3640 = vsub.f32 %v3373, %v3592
    %v3641 = vsub.f32 %v3378, %v3592
    %v3642 = vsub.f32 %v3383, %v3592
    %v3643 = vsub.f32 %v3388, %v3592
    %v3644 = vsub.f32 %v3393, %v3592
    %v3645 = vsub.f32 %v3398, %v3592
    %v3646 = vsub.f32 %v3403, %v3592
    %v3647 = vsub.f32 %v3408, %v3592
    %v3648 = vsub.f32 %v3413, %v3592
    %v3649 = vsub.f32 %v3418, %v3592
    %v3650 = vsub.f32 %v3423, %v3592
    %v3651 = vsub.f32 %v3428, %v3592
    %v3652 = vsub.f32 %v3433, %v3592
    %v3653 = vsub.f32 %v3438, %v3592
    %v3654 = vsub.f32 %v3443, %v3592
    %v3655 = vsub.f32 %v3448, %v3592
    %v3656 = vsub.f32 %v3453, %v3592
    %v3657 = vmul.f32 %v3593, %v3593
    %v3658 = vmul.f32 %v3594, %v3594
    %v3659 = vmul.f32 %v3595, %v3595
    %v3660 = vmul.f32 %v3596, %v3596
    %v3661 = vmul.f32 %v3597, %v3597
    %v3662 = vmul.f32 %v3598, %v3598
    %v3663 = vmul.f32 %v3599, %v3599
    %v3664 = vmul.f32 %v3600, %v3600
    %v3665 = vmul.f32 %v3601, %v3601
    %v3666 = vmul.f32 %v3602, %v3602
    %v3667 = vmul.f32 %v3603, %v3603
    %v3668 = vmul.f32 %v3604, %v3604
    %v3669 = vmul.f32 %v3605, %v3605
    %v3670 = vmul.f32 %v3606, %v3606
    %v3671 = vmul.f32 %v3607, %v3607
    %v3672 = vmul.f32 %v3608, %v3608
    %v3673 = vmul.f32 %v3609, %v3609
    %v3674 = vmul.f32 %v3610, %v3610
    %v3675 = vmul.f32 %v3611, %v3611
    %v3676 = vmul.f32 %v3612, %v3612
    %v3677 = vmul.f32 %v3613, %v3613
    %v3678 = vmul.f32 %v3614, %v3614
    %v3679 = vmul.f32 %v3615, %v3615
    %v3680 = vmul.f32 %v3616, %v3616
    %v3681 = vmul.f32 %v3617, %v3617
    %v3682 = vmul.f32 %v3618, %v3618
    %v3683 = vmul.f32 %v3619, %v3619
    %v3684 = vmul.f32 %v3620, %v3620
    %v3685 = vmul.f32 %v3621, %v3621
    %v3686 = vmul.f32 %v3622, %v3622
    %v3687 = vmul.f32 %v3623, %v3623
    %v3688 = vmul.f32 %v3624, %v3624
    %v3689 = vmul.f32 %v3625, %v3625
    %v3690 = vmul.f32 %v3626, %v3626
    %v3691 = vmul.f32 %v3627, %v3627
    %v3692 = vmul.f32 %v3628, %v3628
    %v3693 = vmul.f32 %v3629, %v3629
    %v3694 = vmul.f32 %v3630, %v3630
    %v3695 = vmul.f32 %v3631, %v3631
    %v3696 = vmul.f32 %v3632, %v3632
    %v3697 = vmul.f32 %v3633, %v3633
    %v3698 = vmul.f32 %v3634, %v3634
    %v3699 = vmul.f32 %v3635, %v3635
    %v3700 = vmul.f32 %v3636, %v3636
    %v3701 = vmul.f32 %v3637, %v3637
    %v3702 = vmul.f32 %v3638, %v3638
    %v3703 = vmul.f32 %v3639, %v3639
    %v3704 = vmul.f32 %v3640, %v3640
    %v3705 = vmul.f32 %v3641, %v3641
    %v3706 = vmul.f32 %v3642, %v3642
    %v3707 = vmul.f32 %v3643, %v3643
    %v3708 = vmul.f32 %v3644, %v3644
    %v3709 = vmul.f32 %v3645, %v3645
    %v3710 = vmul.f32 %v3646, %v3646
    %v3711 = vmul.f32 %v3647, %v3647
    %v3712 = vmul.f32 %v3648, %v3648
    %v3713 = vmul.f32 %v3649, %v3649
    %v3714 = vmul.f32 %v3650, %v3650
    %v3715 = vmul.f32 %v3651, %v3651
    %v3716 = vmul.f32 %v3652, %v3652
    %v3717 = vmul.f32 %v3653, %v3653
    %v3718 = vmul.f32 %v3654, %v3654
    %v3719 = vmul.f32 %v3655, %v3655
    %v3720 = vmul.f32 %v3656, %v3656
    %v3721 = vsel %vm2414, %v3657, 0.0
    %v3722 = vsel %vm2414, %v3658, 0.0
    %v3723 = vadd.f32 %v3721, %v3722
    %v3724 = vsel %vm2414, %v3659, 0.0
    %v3725 = vadd.f32 %v3723, %v3724
    %v3726 = vsel %vm2414, %v3660, 0.0
    %v3727 = vadd.f32 %v3725, %v3726
    %v3728 = vsel %vm2414, %v3661, 0.0
    %v3729 = vadd.f32 %v3727, %v3728
    %v3730 = vsel %vm2414, %v3662, 0.0
    %v3731 = vadd.f32 %v3729, %v3730
    %v3732 = vsel %vm2414, %v3663, 0.0
    %v3733 = vadd.f32 %v3731, %v3732
    %v3734 = vsel %vm2414, %v3664, 0.0
    %v3735 = vadd.f32 %v3733, %v3734
    %v3736 = vsel %vm2414, %v3665, 0.0
    %v3737 = vadd.f32 %v3735, %v3736
    %v3738 = vsel %vm2414, %v3666, 0.0
    %v3739 = vadd.f32 %v3737, %v3738
    %v3740 = vsel %vm2414, %v3667, 0.0
    %v3741 = vadd.f32 %v3739, %v3740
    %v3742 = vsel %vm2414, %v3668, 0.0
    %v3743 = vadd.f32 %v3741, %v3742
    %v3744 = vsel %vm2414, %v3669, 0.0
    %v3745 = vadd.f32 %v3743, %v3744
    %v3746 = vsel %vm2414, %v3670, 0.0
    %v3747 = vadd.f32 %v3745, %v3746
    %v3748 = vsel %vm2414, %v3671, 0.0
    %v3749 = vadd.f32 %v3747, %v3748
    %v3750 = vsel %vm2414, %v3672, 0.0
    %v3751 = vadd.f32 %v3749, %v3750
    %v3752 = vsel %vm2414, %v3673, 0.0
    %v3753 = vadd.f32 %v3751, %v3752
    %v3754 = vsel %vm2414, %v3674, 0.0
    %v3755 = vadd.f32 %v3753, %v3754
    %v3756 = vsel %vm2414, %v3675, 0.0
    %v3757 = vadd.f32 %v3755, %v3756
    %v3758 = vsel %vm2414, %v3676, 0.0
    %v3759 = vadd.f32 %v3757, %v3758
    %v3760 = vsel %vm2414, %v3677, 0.0
    %v3761 = vadd.f32 %v3759, %v3760
    %v3762 = vsel %vm2414, %v3678, 0.0
    %v3763 = vadd.f32 %v3761, %v3762
    %v3764 = vsel %vm2414, %v3679, 0.0
    %v3765 = vadd.f32 %v3763, %v3764
    %v3766 = vsel %vm2414, %v3680, 0.0
    %v3767 = vadd.f32 %v3765, %v3766
    %v3768 = vsel %vm2414, %v3681, 0.0
    %v3769 = vadd.f32 %v3767, %v3768
    %v3770 = vsel %vm2414, %v3682, 0.0
    %v3771 = vadd.f32 %v3769, %v3770
    %v3772 = vsel %vm2414, %v3683, 0.0
    %v3773 = vadd.f32 %v3771, %v3772
    %v3774 = vsel %vm2414, %v3684, 0.0
    %v3775 = vadd.f32 %v3773, %v3774
    %v3776 = vsel %vm2414, %v3685, 0.0
    %v3777 = vadd.f32 %v3775, %v3776
    %v3778 = vsel %vm2414, %v3686, 0.0
    %v3779 = vadd.f32 %v3777, %v3778
    %v3780 = vsel %vm2414, %v3687, 0.0
    %v3781 = vadd.f32 %v3779, %v3780
    %v3782 = vsel %vm2414, %v3688, 0.0
    %v3783 = vadd.f32 %v3781, %v3782
    %v3784 = vsel %vm2414, %v3689, 0.0
    %v3785 = vadd.f32 %v3783, %v3784
    %v3786 = vsel %vm2414, %v3690, 0.0
    %v3787 = vadd.f32 %v3785, %v3786
    %v3788 = vsel %vm2414, %v3691, 0.0
    %v3789 = vadd.f32 %v3787, %v3788
    %v3790 = vsel %vm2414, %v3692, 0.0
    %v3791 = vadd.f32 %v3789, %v3790
    %v3792 = vsel %vm2414, %v3693, 0.0
    %v3793 = vadd.f32 %v3791, %v3792
    %v3794 = vsel %vm2414, %v3694, 0.0
    %v3795 = vadd.f32 %v3793, %v3794
    %v3796 = vsel %vm2414, %v3695, 0.0
    %v3797 = vadd.f32 %v3795, %v3796
    %v3798 = vsel %vm2414, %v3696, 0.0
    %v3799 = vadd.f32 %v3797, %v3798
    %v3800 = vsel %vm2414, %v3697, 0.0
    %v3801 = vadd.f32 %v3799, %v3800
    %v3802 = vsel %vm2414, %v3698, 0.0
    %v3803 = vadd.f32 %v3801, %v3802
    %v3804 = vsel %vm2414, %v3699, 0.0
    %v3805 = vadd.f32 %v3803, %v3804
    %v3806 = vsel %vm2414, %v3700, 0.0
    %v3807 = vadd.f32 %v3805, %v3806
    %v3808 = vsel %vm2414, %v3701, 0.0
    %v3809 = vadd.f32 %v3807, %v3808
    %v3810 = vsel %vm2414, %v3702, 0.0
    %v3811 = vadd.f32 %v3809, %v3810
    %v3812 = vsel %vm2414, %v3703, 0.0
    %v3813 = vadd.f32 %v3811, %v3812
    %v3814 = vsel %vm2414, %v3704, 0.0
    %v3815 = vadd.f32 %v3813, %v3814
    %v3816 = vsel %vm2414, %v3705, 0.0
    %v3817 = vadd.f32 %v3815, %v3816
    %v3818 = vsel %vm2414, %v3706, 0.0
    %v3819 = vadd.f32 %v3817, %v3818
    %v3820 = vsel %vm2414, %v3707, 0.0
    %v3821 = vadd.f32 %v3819, %v3820
    %v3822 = vsel %vm2414, %v3708, 0.0
    %v3823 = vadd.f32 %v3821, %v3822
    %v3824 = vsel %vm2414, %v3709, 0.0
    %v3825 = vadd.f32 %v3823, %v3824
    %v3826 = vsel %vm2414, %v3710, 0.0
    %v3827 = vadd.f32 %v3825, %v3826
    %v3828 = vsel %vm2414, %v3711, 0.0
    %v3829 = vadd.f32 %v3827, %v3828
    %v3830 = vsel %vm2414, %v3712, 0.0
    %v3831 = vadd.f32 %v3829, %v3830
    %v3832 = vsel %vm2414, %v3713, 0.0
    %v3833 = vadd.f32 %v3831, %v3832
    %v3834 = vsel %vm2414, %v3714, 0.0
    %v3835 = vadd.f32 %v3833, %v3834
    %v3836 = vsel %vm2414, %v3715, 0.0
    %v3837 = vadd.f32 %v3835, %v3836
    %v3838 = vsel %vm2414, %v3716, 0.0
    %v3839 = vadd.f32 %v3837, %v3838
    %v3840 = vsel %vm2414, %v3717, 0.0
    %v3841 = vadd.f32 %v3839, %v3840
    %v3842 = vsel %vm2414, %v3718, 0.0
    %v3843 = vadd.f32 %v3841, %v3842
    %v3844 = vsel %vm2414, %v3719, 0.0
    %v3845 = vadd.f32 %v3843, %v3844
    %v3846 = vsel %vm2414, %v3720, 0.0
    %v3847 = vadd.f32 %v3845, %v3846
    %v3848 = vrot.slane %v3847, 4
    %v3849 = vadd.f32 %v3847, %v3848
    %v3850 = vrot.slane %v3849, 2
    %v3851 = vadd.f32 %v3849, %v3850
    %v3852 = vrot.slane %v3851, 1
    %v3853 = vadd.f32 %v3851, %v3852
    %v3854 = vmul.f32 %v3853, %v3591
    %v3855 = vadd.f32 %v3854, 1e-05
    %v3856 = vrsqrt.pop %v3855
    %v3857 = vmul.f32 %v3456, %v3856
    %v3858 = vmul.f32 %v3592, %v3857
    %v3859 = vsub.f32 %v3457, %v3858
    %v3861 = vlaneseq
    %v3862 = vshrl.u32 %v3861, 7
    %v3863 = vsub.s32 0, %v3862
    %v3864 = vrot.slane %v3857, %v3863
    %v3866 = vmul.f32 %v3138, %v3864
    %v3867 = vmul.f32 %v3143, %v3864
    %v3868 = vmul.f32 %v3148, %v3864
    %v3869 = vmul.f32 %v3153, %v3864
    %v3870 = vmul.f32 %v3158, %v3864
    %v3871 = vmul.f32 %v3163, %v3864
    %v3872 = vmul.f32 %v3168, %v3864
    %v3873 = vmul.f32 %v3173, %v3864
    %v3874 = vmul.f32 %v3178, %v3864
    %v3875 = vmul.f32 %v3183, %v3864
    %v3876 = vmul.f32 %v3188, %v3864
    %v3877 = vmul.f32 %v3193, %v3864
    %v3878 = vmul.f32 %v3198, %v3864
    %v3879 = vmul.f32 %v3203, %v3864
    %v3880 = vmul.f32 %v3208, %v3864
    %v3881 = vmul.f32 %v3213, %v3864
    %v3882 = vmul.f32 %v3218, %v3864
    %v3883 = vmul.f32 %v3223, %v3864
    %v3884 = vmul.f32 %v3228, %v3864
    %v3885 = vmul.f32 %v3233, %v3864
    %v3886 = vmul.f32 %v3238, %v3864
    %v3887 = vmul.f32 %v3243, %v3864
    %v3888 = vmul.f32 %v3248, %v3864
    %v3889 = vmul.f32 %v3253, %v3864
    %v3890 = vmul.f32 %v3258, %v3864
    %v3891 = vmul.f32 %v3263, %v3864
    %v3892 = vmul.f32 %v3268, %v3864
    %v3893 = vmul.f32 %v3273, %v3864
    %v3894 = vmul.f32 %v3278, %v3864
    %v3895 = vmul.f32 %v3283, %v3864
    %v3896 = vmul.f32 %v3288, %v3864
    %v3897 = vmul.f32 %v3293, %v3864
    %v3898 = vmul.f32 %v3298, %v3864
    %v3899 = vmul.f32 %v3303, %v3864
    %v3900 = vmul.f32 %v3308, %v3864
    %v3901 = vmul.f32 %v3313, %v3864
    %v3902 = vmul.f32 %v3318, %v3864
    %v3903 = vmul.f32 %v3323, %v3864
    %v3904 = vmul.f32 %v3328, %v3864
    %v3905 = vmul.f32 %v3333, %v3864
    %v3906 = vmul.f32 %v3338, %v3864
    %v3907 = vmul.f32 %v3343, %v3864
    %v3908 = vmul.f32 %v3348, %v3864
    %v3909 = vmul.f32 %v3353, %v3864
    %v3910 = vmul.f32 %v3358, %v3864
    %v3911 = vmul.f32 %v3363, %v3864
    %v3912 = vmul.f32 %v3368, %v3864
    %v3913 = vmul.f32 %v3373, %v3864
    %v3914 = vmul.f32 %v3378, %v3864
    %v3915 = vmul.f32 %v3383, %v3864
    %v3916 = vmul.f32 %v3388, %v3864
    %v3917 = vmul.f32 %v3393, %v3864
    %v3918 = vmul.f32 %v3398, %v3864
    %v3919 = vmul.f32 %v3403, %v3864
    %v3920 = vmul.f32 %v3408, %v3864
    %v3921 = vmul.f32 %v3413, %v3864
    %v3922 = vmul.f32 %v3418, %v3864
    %v3923 = vmul.f32 %v3423, %v3864
    %v3924 = vmul.f32 %v3428, %v3864
    %v3925 = vmul.f32 %v3433, %v3864
    %v3926 = vmul.f32 %v3438, %v3864
    %v3927 = vmul.f32 %v3443, %v3864
    %v3928 = vmul.f32 %v3448, %v3864
    %v3929 = vmul.f32 %v3453, %v3864
    %v3931 = vlaneseq
    %v3932 = vshrl.u32 %v3931, 7
    %v3933 = vsub.s32 0, %v3932
    %v3934 = vrot.slane %v3859, %v3933
    %v3936 = vadd.f32 %v3866, %v3934
    %v3937 = vadd.f32 %v3867, %v3934
    %v3938 = vadd.f32 %v3868, %v3934
    %v3939 = vadd.f32 %v3869, %v3934
    %v3940 = vadd.f32 %v3870, %v3934
    %v3941 = vadd.f32 %v3871, %v3934
    %v3942 = vadd.f32 %v3872, %v3934
    %v3943 = vadd.f32 %v3873, %v3934
    %v3944 = vadd.f32 %v3874, %v3934
    %v3945 = vadd.f32 %v3875, %v3934
    %v3946 = vadd.f32 %v3876, %v3934
    %v3947 = vadd.f32 %v3877, %v3934
    %v3948 = vadd.f32 %v3878, %v3934
    %v3949 = vadd.f32 %v3879, %v3934
    %v3950 = vadd.f32 %v3880, %v3934
    %v3951 = vadd.f32 %v3881, %v3934
    %v3952 = vadd.f32 %v3882, %v3934
    %v3953 = vadd.f32 %v3883, %v3934
    %v3954 = vadd.f32 %v3884, %v3934
    %v3955 = vadd.f32 %v3885, %v3934
    %v3956 = vadd.f32 %v3886, %v3934
    %v3957 = vadd.f32 %v3887, %v3934
    %v3958 = vadd.f32 %v3888, %v3934
    %v3959 = vadd.f32 %v3889, %v3934
    %v3960 = vadd.f32 %v3890, %v3934
    %v3961 = vadd.f32 %v3891, %v3934
    %v3962 = vadd.f32 %v3892, %v3934
    %v3963 = vadd.f32 %v3893, %v3934
    %v3964 = vadd.f32 %v3894, %v3934
    %v3965 = vadd.f32 %v3895, %v3934
    %v3966 = vadd.f32 %v3896, %v3934
    %v3967 = vadd.f32 %v3897, %v3934
    %v3968 = vadd.f32 %v3898, %v3934
    %v3969 = vadd.f32 %v3899, %v3934
    %v3970 = vadd.f32 %v3900, %v3934
    %v3971 = vadd.f32 %v3901, %v3934
    %v3972 = vadd.f32 %v3902, %v3934
    %v3973 = vadd.f32 %v3903, %v3934
    %v3974 = vadd.f32 %v3904, %v3934
    %v3975 = vadd.f32 %v3905, %v3934
    %v3976 = vadd.f32 %v3906, %v3934
    %v3977 = vadd.f32 %v3907, %v3934
    %v3978 = vadd.f32 %v3908, %v3934
    %v3979 = vadd.f32 %v3909, %v3934
    %v3980 = vadd.f32 %v3910, %v3934
    %v3981 = vadd.f32 %v3911, %v3934
    %v3982 = vadd.f32 %v3912, %v3934
    %v3983 = vadd.f32 %v3913, %v3934
    %v3984 = vadd.f32 %v3914, %v3934
    %v3985 = vadd.f32 %v3915, %v3934
    %v3986 = vadd.f32 %v3916, %v3934
    %v3987 = vadd.f32 %v3917, %v3934
    %v3988 = vadd.f32 %v3918, %v3934
    %v3989 = vadd.f32 %v3919, %v3934
    %v3990 = vadd.f32 %v3920, %v3934
    %v3991 = vadd.f32 %v3921, %v3934
    %v3992 = vadd.f32 %v3922, %v3934
    %v3993 = vadd.f32 %v3923, %v3934
    %v3994 = vadd.f32 %v3924, %v3934
    %v3995 = vadd.f32 %v3925, %v3934
    %v3996 = vadd.f32 %v3926, %v3934
    %v3997 = vadd.f32 %v3927, %v3934
    %v3998 = vadd.f32 %v3928, %v3934
    %v3999 = vadd.f32 %v3929, %v3934
    %v4000 = vmax.f32 %v3936, 0.0
    %v4001 = vmax.f32 %v3937, 0.0
    %v4002 = vmax.f32 %v3938, 0.0
    %v4003 = vmax.f32 %v3939, 0.0
    %v4004 = vmax.f32 %v3940, 0.0
    %v4005 = vmax.f32 %v3941, 0.0
    %v4006 = vmax.f32 %v3942, 0.0
    %v4007 = vmax.f32 %v3943, 0.0
    %v4008 = vmax.f32 %v3944, 0.0
    %v4009 = vmax.f32 %v3945, 0.0
    %v4010 = vmax.f32 %v3946, 0.0
    %v4011 = vmax.f32 %v3947, 0.0
    %v4012 = vmax.f32 %v3948, 0.0
    %v4013 = vmax.f32 %v3949, 0.0
    %v4014 = vmax.f32 %v3950, 0.0
    %v4015 = vmax.f32 %v3951, 0.0
    %v4016 = vmax.f32 %v3952, 0.0
    %v4017 = vmax.f32 %v3953, 0.0
    %v4018 = vmax.f32 %v3954, 0.0
    %v4019 = vmax.f32 %v3955, 0.0
    %v4020 = vmax.f32 %v3956, 0.0
    %v4021 = vmax.f32 %v3957, 0.0
    %v4022 = vmax.f32 %v3958, 0.0
    %v4023 = vmax.f32 %v3959, 0.0
    %v4024 = vmax.f32 %v3960, 0.0
    %v4025 = vmax.f32 %v3961, 0.0
    %v4026 = vmax.f32 %v3962, 0.0
    %v4027 = vmax.f32 %v3963, 0.0
    %v4028 = vmax.f32 %v3964, 0.0
    %v4029 = vmax.f32 %v3965, 0.0
    %v4030 = vmax.f32 %v3966, 0.0
    %v4031 = vmax.f32 %v3967, 0.0
    %v4032 = vmax.f32 %v3968, 0.0
    %v4033 = vmax.f32 %v3969, 0.0
    %v4034 = vmax.f32 %v3970, 0.0
    %v4035 = vmax.f32 %v3971, 0.0
    %v4036 = vmax.f32 %v3972, 0.0
    %v4037 = vmax.f32 %v3973, 0.0
    %v4038 = vmax.f32 %v3974, 0.0
    %v4039 = vmax.f32 %v3975, 0.0
    %v4040 = vmax.f32 %v3976, 0.0
    %v4041 = vmax.f32 %v3977, 0.0
    %v4042 = vmax.f32 %v3978, 0.0
    %v4043 = vmax.f32 %v3979, 0.0
    %v4044 = vmax.f32 %v3980, 0.0
    %v4045 = vmax.f32 %v3981, 0.0
    %v4046 = vmax.f32 %v3982, 0.0
    %v4047 = vmax.f32 %v3983, 0.0
    %v4048 = vmax.f32 %v3984, 0.0
    %v4049 = vmax.f32 %v3985, 0.0
    %v4050 = vmax.f32 %v3986, 0.0
    %v4051 = vmax.f32 %v3987, 0.0
    %v4052 = vmax.f32 %v3988, 0.0
    %v4053 = vmax.f32 %v3989, 0.0
    %v4054 = vmax.f32 %v3990, 0.0
    %v4055 = vmax.f32 %v3991, 0.0
    %v4056 = vmax.f32 %v3992, 0.0
    %v4057 = vmax.f32 %v3993, 0.0
    %v4058 = vmax.f32 %v3994, 0.0
    %v4059 = vmax.f32 %v3995, 0.0
    %v4060 = vmax.f32 %v3996, 0.0
    %v4061 = vmax.f32 %v3997, 0.0
    %v4062 = vmax.f32 %v3998, 0.0
    %v4063 = vmax.f32 %v3999, 0.0
    %4064 = vst.msk [vmem:[#allocation3] sm:$0xff] %vm2414, 0.0
    %4065 = vst.msk [vmem:[#allocation3 + $0x8] sm:$0xff] %vm2414, 0.0
    %vm4066 = vcmask 58368
    %4067 = vst.msk [vmem:[#allocation3 + $0x10] sm:$0x3] %vm4066, 0.0
    %4068 = vst.msk [vmem:[#allocation3 + $0x1b0] sm:$0xff] %vm2414, 0.0
    %4069 = vst.msk [vmem:[#allocation3 + $0x1b8] sm:$0xff] %vm2414, 0.0
    %4070 = vst.msk [vmem:[#allocation3 + $0x1c0] sm:$0x3] %vm4066, 0.0
    %s4071 = scalar_lea.vmem [#allocation3], 408
    %4072 = vst.msk [vmem:[%s4071] sm:$0xff] %vm2414, 0.0
    %4073 = vst.msk [vmem:[%s4071 + $0x8] sm:$0xff] %vm2414, 0.0
    %4074 = vst.msk [vmem:[%s4071 + $0x10] sm:$0x3] %vm4066, 0.0
    %4075 = vst.msk [vmem:[%s4071 + $0x1b0] sm:$0xff] %vm2414, 0.0
    %4076 = vst.msk [vmem:[%s4071 + $0x1b8] sm:$0xff] %vm2414, 0.0
    %4077 = vst.msk [vmem:[%s4071 + $0x1c0] sm:$0x3] %vm4066, 0.0
    %s4078 = scalar_lea.vmem [#allocation3], 24
    %vm4079 = vcmask 57344
    %4080 = vst.msk [vmem:[%s4078] sm:$0x1] %vm4079, 0.0
    %4081 = vst.msk [vmem:[%s4078 + $0x18] sm:$0x1] %vm4079, 0.0
    %4082 = vst.msk [vmem:[%s4078 + $0x30] sm:$0x1] %vm4079, 0.0
    %4083 = vst.msk [vmem:[%s4078 + $0x48] sm:$0x1] %vm4079, 0.0
    %4084 = vst.msk [vmem:[%s4078 + $0x60] sm:$0x1] %vm4079, 0.0
    %4085 = vst.msk [vmem:[%s4078 + $0x78] sm:$0x1] %vm4079, 0.0
    %4086 = vst.msk [vmem:[%s4078 + $0x90] sm:$0x1] %vm4079, 0.0
    %4087 = vst.msk [vmem:[%s4078 + $0xa8] sm:$0x1] %vm4079, 0.0
    %4088 = vst.msk [vmem:[%s4078 + $0xc0] sm:$0x1] %vm4079, 0.0
    %4089 = vst.msk [vmem:[%s4078 + $0xd8] sm:$0x1] %vm4079, 0.0
    %4090 = vst.msk [vmem:[%s4078 + $0xf0] sm:$0x1] %vm4079, 0.0
    %4091 = vst.msk [vmem:[%s4078 + $0x108] sm:$0x1] %vm4079, 0.0
    %4092 = vst.msk [vmem:[%s4078 + $0x120] sm:$0x1] %vm4079, 0.0
    %4093 = vst.msk [vmem:[%s4078 + $0x138] sm:$0x1] %vm4079, 0.0
    %4094 = vst.msk [vmem:[%s4078 + $0x150] sm:$0x1] %vm4079, 0.0
    %4095 = vst.msk [vmem:[%s4078 + $0x168] sm:$0x1] %vm4079, 0.0
    %4096 = vst.msk [vmem:[%s4078 + $0x1b0] sm:$0x1] %vm4079, 0.0
    %4097 = vst.msk [vmem:[%s4078 + $0x1c8] sm:$0x1] %vm4079, 0.0
    %4098 = vst.msk [vmem:[%s4078 + $0x1e0] sm:$0x1] %vm4079, 0.0
    %4099 = vst.msk [vmem:[%s4078 + $0x1f8] sm:$0x1] %vm4079, 0.0
    %4100 = vst.msk [vmem:[%s4078 + $0x210] sm:$0x1] %vm4079, 0.0
    %4101 = vst.msk [vmem:[%s4078 + $0x228] sm:$0x1] %vm4079, 0.0
    %4102 = vst.msk [vmem:[%s4078 + $0x240] sm:$0x1] %vm4079, 0.0
    %4103 = vst.msk [vmem:[%s4078 + $0x258] sm:$0x1] %vm4079, 0.0
    %4104 = vst.msk [vmem:[%s4078 + $0x270] sm:$0x1] %vm4079, 0.0
    %4105 = vst.msk [vmem:[%s4078 + $0x288] sm:$0x1] %vm4079, 0.0
    %4106 = vst.msk [vmem:[%s4078 + $0x2a0] sm:$0x1] %vm4079, 0.0
    %4107 = vst.msk [vmem:[%s4078 + $0x2b8] sm:$0x1] %vm4079, 0.0
    %4108 = vst.msk [vmem:[%s4078 + $0x2d0] sm:$0x1] %vm4079, 0.0
    %4109 = vst.msk [vmem:[%s4078 + $0x2e8] sm:$0x1] %vm4079, 0.0
    %4110 = vst.msk [vmem:[%s4078 + $0x300] sm:$0x1] %vm4079, 0.0
    %4111 = vst.msk [vmem:[%s4078 + $0x318] sm:$0x1] %vm4079, 0.0
    %4112 = vst.msk [vmem:[%s4078 + $0x11] sm:$0x1] %vm4079, 0.0
    %4113 = vst.msk [vmem:[%s4078 + $0x29] sm:$0x1] %vm4079, 0.0
    %4114 = vst.msk [vmem:[%s4078 + $0x41] sm:$0x1] %vm4079, 0.0
    %4115 = vst.msk [vmem:[%s4078 + $0x59] sm:$0x1] %vm4079, 0.0
    %4116 = vst.msk [vmem:[%s4078 + $0x71] sm:$0x1] %vm4079, 0.0
    %4117 = vst.msk [vmem:[%s4078 + $0x89] sm:$0x1] %vm4079, 0.0
    %4118 = vst.msk [vmem:[%s4078 + $0xa1] sm:$0x1] %vm4079, 0.0
    %4119 = vst.msk [vmem:[%s4078 + $0xb9] sm:$0x1] %vm4079, 0.0
    %4120 = vst.msk [vmem:[%s4078 + $0xd1] sm:$0x1] %vm4079, 0.0
    %4121 = vst.msk [vmem:[%s4078 + $0xe9] sm:$0x1] %vm4079, 0.0
    %4122 = vst.msk [vmem:[%s4078 + $0x101] sm:$0x1] %vm4079, 0.0
    %4123 = vst.msk [vmem:[%s4078 + $0x119] sm:$0x1] %vm4079, 0.0
    %4124 = vst.msk [vmem:[%s4078 + $0x131] sm:$0x1] %vm4079, 0.0
    %4125 = vst.msk [vmem:[%s4078 + $0x149] sm:$0x1] %vm4079, 0.0
    %4126 = vst.msk [vmem:[%s4078 + $0x161] sm:$0x1] %vm4079, 0.0
    %4127 = vst.msk [vmem:[%s4078 + $0x179] sm:$0x1] %vm4079, 0.0
    %4128 = vst.msk [vmem:[%s4078 + $0x1c1] sm:$0x1] %vm4079, 0.0
    %4129 = vst.msk [vmem:[%s4078 + $0x1d9] sm:$0x1] %vm4079, 0.0
    %4130 = vst.msk [vmem:[%s4078 + $0x1f1] sm:$0x1] %vm4079, 0.0
    %4131 = vst.msk [vmem:[%s4078 + $0x209] sm:$0x1] %vm4079, 0.0
    %4132 = vst.msk [vmem:[%s4078 + $0x221] sm:$0x1] %vm4079, 0.0
    %4133 = vst.msk [vmem:[%s4078 + $0x239] sm:$0x1] %vm4079, 0.0
    %4134 = vst.msk [vmem:[%s4078 + $0x251] sm:$0x1] %vm4079, 0.0
    %4135 = vst.msk [vmem:[%s4078 + $0x269] sm:$0x1] %vm4079, 0.0
    %4136 = vst.msk [vmem:[%s4078 + $0x281] sm:$0x1] %vm4079, 0.0
    %4137 = vst.msk [vmem:[%s4078 + $0x299] sm:$0x1] %vm4079, 0.0
    %4138 = vst.msk [vmem:[%s4078 + $0x2b1] sm:$0x1] %vm4079, 0.0
    %4139 = vst.msk [vmem:[%s4078 + $0x2c9] sm:$0x1] %vm4079, 0.0
    %4140 = vst.msk [vmem:[%s4078 + $0x2e1] sm:$0x1] %vm4079, 0.0
    %4141 = vst.msk [vmem:[%s4078 + $0x2f9] sm:$0x1] %vm4079, 0.0
    %4142 = vst.msk [vmem:[%s4078 + $0x311] sm:$0x1] %vm4079, 0.0
    %4143 = vst.msk [vmem:[%s4078 + $0x329] sm:$0x1] %vm4079, 0.0
    %4144 = vst.msk [vmem:[%s4078 + $0x1] sm:$0xff] %vm2414, %v4000
    %4145 = vst.msk [vmem:[%s4078 + $0x9] sm:$0xff] %vm2414, %v4001
    %4146 = vst.msk [vmem:[%s4078 + $0x19] sm:$0xff] %vm2414, %v4002
    %4147 = vst.msk [vmem:[%s4078 + $0x21] sm:$0xff] %vm2414, %v4003
    %4148 = vst.msk [vmem:[%s4078 + $0x31] sm:$0xff] %vm2414, %v4004
    %4149 = vst.msk [vmem:[%s4078 + $0x39] sm:$0xff] %vm2414, %v4005
    %4150 = vst.msk [vmem:[%s4078 + $0x49] sm:$0xff] %vm2414, %v4006
    %4151 = vst.msk [vmem:[%s4078 + $0x51] sm:$0xff] %vm2414, %v4007
    %4152 = vst.msk [vmem:[%s4078 + $0x61] sm:$0xff] %vm2414, %v4008
    %4153 = vst.msk [vmem:[%s4078 + $0x69] sm:$0xff] %vm2414, %v4009
    %4154 = vst.msk [vmem:[%s4078 + $0x79] sm:$0xff] %vm2414, %v4010
    %4155 = vst.msk [vmem:[%s4078 + $0x81] sm:$0xff] %vm2414, %v4011
    %4156 = vst.msk [vmem:[%s4078 + $0x91] sm:$0xff] %vm2414, %v4012
    %4157 = vst.msk [vmem:[%s4078 + $0x99] sm:$0xff] %vm2414, %v4013
    %4158 = vst.msk [vmem:[%s4078 + $0xa9] sm:$0xff] %vm2414, %v4014
    %4159 = vst.msk [vmem:[%s4078 + $0xb1] sm:$0xff] %vm2414, %v4015
    %4160 = vst.msk [vmem:[%s4078 + $0xc1] sm:$0xff] %vm2414, %v4016
    %4161 = vst.msk [vmem:[%s4078 + $0xc9] sm:$0xff] %vm2414, %v4017
    %4162 = vst.msk [vmem:[%s4078 + $0xd9] sm:$0xff] %vm2414, %v4018
    %4163 = vst.msk [vmem:[%s4078 + $0xe1] sm:$0xff] %vm2414, %v4019
    %4164 = vst.msk [vmem:[%s4078 + $0xf1] sm:$0xff] %vm2414, %v4020
    %4165 = vst.msk [vmem:[%s4078 + $0xf9] sm:$0xff] %vm2414, %v4021
    %4166 = vst.msk [vmem:[%s4078 + $0x109] sm:$0xff] %vm2414, %v4022
    %4167 = vst.msk [vmem:[%s4078 + $0x111] sm:$0xff] %vm2414, %v4023
    %4168 = vst.msk [vmem:[%s4078 + $0x121] sm:$0xff] %vm2414, %v4024
    %4169 = vst.msk [vmem:[%s4078 + $0x129] sm:$0xff] %vm2414, %v4025
    %4170 = vst.msk [vmem:[%s4078 + $0x139] sm:$0xff] %vm2414, %v4026
    %4171 = vst.msk [vmem:[%s4078 + $0x141] sm:$0xff] %vm2414, %v4027
    %4172 = vst.msk [vmem:[%s4078 + $0x151] sm:$0xff] %vm2414, %v4028
    %4173 = vst.msk [vmem:[%s4078 + $0x159] sm:$0xff] %vm2414, %v4029
    %4174 = vst.msk [vmem:[%s4078 + $0x169] sm:$0xff] %vm2414, %v4030
    %4175 = vst.msk [vmem:[%s4078 + $0x171] sm:$0xff] %vm2414, %v4031
    %4176 = vst.msk [vmem:[%s4078 + $0x1b1] sm:$0xff] %vm2414, %v4032
    %4177 = vst.msk [vmem:[%s4078 + $0x1b9] sm:$0xff] %vm2414, %v4033
    %4178 = vst.msk [vmem:[%s4078 + $0x1c9] sm:$0xff] %vm2414, %v4034
    %4179 = vst.msk [vmem:[%s4078 + $0x1d1] sm:$0xff] %vm2414, %v4035
    %4180 = vst.msk [vmem:[%s4078 + $0x1e1] sm:$0xff] %vm2414, %v4036
    %4181 = vst.msk [vmem:[%s4078 + $0x1e9] sm:$0xff] %vm2414, %v4037
    %4182 = vst.msk [vmem:[%s4078 + $0x1f9] sm:$0xff] %vm2414, %v4038
    %4183 = vst.msk [vmem:[%s4078 + $0x201] sm:$0xff] %vm2414, %v4039
    %4184 = vst.msk [vmem:[%s4078 + $0x211] sm:$0xff] %vm2414, %v4040
    %4185 = vst.msk [vmem:[%s4078 + $0x219] sm:$0xff] %vm2414, %v4041
    %4186 = vst.msk [vmem:[%s4078 + $0x229] sm:$0xff] %vm2414, %v4042
    %4187 = vst.msk [vmem:[%s4078 + $0x231] sm:$0xff] %vm2414, %v4043
    %4188 = vst.msk [vmem:[%s4078 + $0x241] sm:$0xff] %vm2414, %v4044
    %4189 = vst.msk [vmem:[%s4078 + $0x249] sm:$0xff] %vm2414, %v4045
    %4190 = vst.msk [vmem:[%s4078 + $0x259] sm:$0xff] %vm2414, %v4046
    %4191 = vst.msk [vmem:[%s4078 + $0x261] sm:$0xff] %vm2414, %v4047
    %4192 = vst.msk [vmem:[%s4078 + $0x271] sm:$0xff] %vm2414, %v4048
    %4193 = vst.msk [vmem:[%s4078 + $0x279] sm:$0xff] %vm2414, %v4049
    %4194 = vst.msk [vmem:[%s4078 + $0x289] sm:$0xff] %vm2414, %v4050
    %4195 = vst.msk [vmem:[%s4078 + $0x291] sm:$0xff] %vm2414, %v4051
    %4196 = vst.msk [vmem:[%s4078 + $0x2a1] sm:$0xff] %vm2414, %v4052
    %4197 = vst.msk [vmem:[%s4078 + $0x2a9] sm:$0xff] %vm2414, %v4053
    %4198 = vst.msk [vmem:[%s4078 + $0x2b9] sm:$0xff] %vm2414, %v4054
    %4199 = vst.msk [vmem:[%s4078 + $0x2c1] sm:$0xff] %vm2414, %v4055
    %4200 = vst.msk [vmem:[%s4078 + $0x2d1] sm:$0xff] %vm2414, %v4056
    %4201 = vst.msk [vmem:[%s4078 + $0x2d9] sm:$0xff] %vm2414, %v4057
    %4202 = vst.msk [vmem:[%s4078 + $0x2e9] sm:$0xff] %vm2414, %v4058
    %4203 = vst.msk [vmem:[%s4078 + $0x2f1] sm:$0xff] %vm2414, %v4059
    %4204 = vst.msk [vmem:[%s4078 + $0x301] sm:$0xff] %vm2414, %v4060
    %4205 = vst.msk [vmem:[%s4078 + $0x309] sm:$0xff] %vm2414, %v4061
    %4206 = vst.msk [vmem:[%s4078 + $0x319] sm:$0xff] %vm2414, %v4062
    %4207 = vst.msk [vmem:[%s4078 + $0x321] sm:$0xff] %vm2414, %v4063
    %v4208 = vld [vmem:[#allocation3] sm:$0xff]
    %v4209 = vld [vmem:[#allocation3 + $0x8] sm:$0xff]
    %v4210 = vld [vmem:[#allocation3 + $0x10] sm:$0x3]
    %v4211 = vld [vmem:[#allocation3 + $0x18] sm:$0xff]
    %v4212 = vld [vmem:[#allocation3 + $0x20] sm:$0xff]
    %v4213 = vld [vmem:[#allocation3 + $0x28] sm:$0x3]
    %v4214 = vld [vmem:[#allocation3 + $0x30] sm:$0xff]
    %v4215 = vld [vmem:[#allocation3 + $0x38] sm:$0xff]
    %v4216 = vld [vmem:[#allocation3 + $0x40] sm:$0x3]
    %v4217 = vld [vmem:[#allocation3 + $0x48] sm:$0xff]
    %v4218 = vld [vmem:[#allocation3 + $0x50] sm:$0xff]
    %v4219 = vld [vmem:[#allocation3 + $0x58] sm:$0x3]
    %v4220 = vld [vmem:[#allocation3 + $0x60] sm:$0xff]
    %v4221 = vld [vmem:[#allocation3 + $0x68] sm:$0xff]
    %v4222 = vld [vmem:[#allocation3 + $0x70] sm:$0x3]
    %v4223 = vld [vmem:[#allocation3 + $0x78] sm:$0xff]
    %v4224 = vld [vmem:[#allocation3 + $0x80] sm:$0xff]
    %v4225 = vld [vmem:[#allocation3 + $0x88] sm:$0x3]
    %v4226 = vld [vmem:[#allocation3 + $0x90] sm:$0xff]
    %v4227 = vld [vmem:[#allocation3 + $0x98] sm:$0xff]
    %v4228 = vld [vmem:[#allocation3 + $0xa0] sm:$0x3]
    %v4229 = vld [vmem:[#allocation3 + $0xa8] sm:$0xff]
    %v4230 = vld [vmem:[#allocation3 + $0xb0] sm:$0xff]
    %v4231 = vld [vmem:[#allocation3 + $0xb8] sm:$0x3]
    %v4232 = vld [vmem:[#allocation3 + $0xc0] sm:$0xff]
    %v4233 = vld [vmem:[#allocation3 + $0xc8] sm:$0xff]
    %v4234 = vld [vmem:[#allocation3 + $0xd0] sm:$0x3]
    %v4235 = vld [vmem:[#allocation3 + $0xd8] sm:$0xff]
    %v4236 = vld [vmem:[#allocation3 + $0xe0] sm:$0xff]
    %v4237 = vld [vmem:[#allocation3 + $0xe8] sm:$0x3]
    %v4238 = vld [vmem:[#allocation3 + $0xf0] sm:$0xff]
    %v4239 = vld [vmem:[#allocation3 + $0xf8] sm:$0xff]
    %v4240 = vld [vmem:[#allocation3 + $0x100] sm:$0x3]
    %v4241 = vld [vmem:[#allocation3 + $0x108] sm:$0xff]
    %v4242 = vld [vmem:[#allocation3 + $0x110] sm:$0xff]
    %v4243 = vld [vmem:[#allocation3 + $0x118] sm:$0x3]
    %v4244 = vld [vmem:[#allocation3 + $0x120] sm:$0xff]
    %v4245 = vld [vmem:[#allocation3 + $0x128] sm:$0xff]
    %v4246 = vld [vmem:[#allocation3 + $0x130] sm:$0x3]
    %v4247 = vld [vmem:[#allocation3 + $0x138] sm:$0xff]
    %v4248 = vld [vmem:[#allocation3 + $0x140] sm:$0xff]
    %v4249 = vld [vmem:[#allocation3 + $0x148] sm:$0x3]
    %v4250 = vld [vmem:[#allocation3 + $0x150] sm:$0xff]
    %v4251 = vld [vmem:[#allocation3 + $0x158] sm:$0xff]
    %v4252 = vld [vmem:[#allocation3 + $0x160] sm:$0x3]
    %v4253 = vld [vmem:[#allocation3 + $0x168] sm:$0xff]
    %v4254 = vld [vmem:[#allocation3 + $0x170] sm:$0xff]
    %v4255 = vld [vmem:[#allocation3 + $0x178] sm:$0x3]
    %v4256 = vld [vmem:[#allocation3 + $0x180] sm:$0xff]
    %v4257 = vld [vmem:[#allocation3 + $0x188] sm:$0xff]
    %v4258 = vld [vmem:[#allocation3 + $0x190] sm:$0x3]
    %v4259 = vld [vmem:[#allocation3 + $0x198] sm:$0xff]
    %v4260 = vld [vmem:[#allocation3 + $0x1a0] sm:$0xff]
    %v4261 = vld [vmem:[#allocation3 + $0x1a8] sm:$0x3]
    %v4262 = vld [vmem:[#allocation3 + $0x1b0] sm:$0xff]
    %v4263 = vld [vmem:[#allocation3 + $0x1b8] sm:$0xff]
    %v4264 = vld [vmem:[#allocation3 + $0x1c0] sm:$0x3]
    %v4265 = vld [vmem:[#allocation3 + $0x1c8] sm:$0xff]
    %v4266 = vld [vmem:[#allocation3 + $0x1d0] sm:$0xff]
    %v4267 = vld [vmem:[#allocation3 + $0x1d8] sm:$0x3]
    %v4268 = vld [vmem:[#allocation3 + $0x1e0] sm:$0xff]
    %v4269 = vld [vmem:[#allocation3 + $0x1e8] sm:$0xff]
    %v4270 = vld [vmem:[#allocation3 + $0x1f0] sm:$0x3]
    %v4271 = vld [vmem:[#allocation3 + $0x1f8] sm:$0xff]
    %v4272 = vld [vmem:[#allocation3 + $0x200] sm:$0xff]
    %v4273 = vld [vmem:[#allocation3 + $0x208] sm:$0x3]
    %v4274 = vld [vmem:[#allocation3 + $0x210] sm:$0xff]
    %v4275 = vld [vmem:[#allocation3 + $0x218] sm:$0xff]
    %v4276 = vld [vmem:[#allocation3 + $0x220] sm:$0x3]
    %v4277 = vld [vmem:[#allocation3 + $0x228] sm:$0xff]
    %v4278 = vld [vmem:[#allocation3 + $0x230] sm:$0xff]
    %v4279 = vld [vmem:[#allocation3 + $0x238] sm:$0x3]
    %v4280 = vld [vmem:[#allocation3 + $0x240] sm:$0xff]
    %v4281 = vld [vmem:[#allocation3 + $0x248] sm:$0xff]
    %v4282 = vld [vmem:[#allocation3 + $0x250] sm:$0x3]
    %v4283 = vld [vmem:[#allocation3 + $0x258] sm:$0xff]
    %v4284 = vld [vmem:[#allocation3 + $0x260] sm:$0xff]
    %v4285 = vld [vmem:[#allocation3 + $0x268] sm:$0x3]
    %v4286 = vld [vmem:[#allocation3 + $0x270] sm:$0xff]
    %v4287 = vld [vmem:[#allocation3 + $0x278] sm:$0xff]
    %v4288 = vld [vmem:[#allocation3 + $0x280] sm:$0x3]
    %v4289 = vld [vmem:[#allocation3 + $0x288] sm:$0xff]
    %v4290 = vld [vmem:[#allocation3 + $0x290] sm:$0xff]
    %v4291 = vld [vmem:[#allocation3 + $0x298] sm:$0x3]
    %v4292 = vld [vmem:[#allocation3 + $0x2a0] sm:$0xff]
    %v4293 = vld [vmem:[#allocation3 + $0x2a8] sm:$0xff]
    %v4294 = vld [vmem:[#allocation3 + $0x2b0] sm:$0x3]
    %v4295 = vld [vmem:[#allocation3 + $0x2b8] sm:$0xff]
    %v4296 = vld [vmem:[#allocation3 + $0x2c0] sm:$0xff]
    %v4297 = vld [vmem:[#allocation3 + $0x2c8] sm:$0x3]
    %v4298 = vld [vmem:[#allocation3 + $0x2d0] sm:$0xff]
    %v4299 = vld [vmem:[#allocation3 + $0x2d8] sm:$0xff]
    %v4300 = vld [vmem:[#allocation3 + $0x2e0] sm:$0x3]
    %v4301 = vld [vmem:[#allocation3 + $0x2e8] sm:$0xff]
    %v4302 = vld [vmem:[#allocation3 + $0x2f0] sm:$0xff]
    %v4303 = vld [vmem:[#allocation3 + $0x2f8] sm:$0x3]
    %v4304 = vld [vmem:[#allocation3 + $0x300] sm:$0xff]
    %v4305 = vld [vmem:[#allocation3 + $0x308] sm:$0xff]
    %v4306 = vld [vmem:[#allocation3 + $0x310] sm:$0x3]
    %v4307 = vld [vmem:[#allocation3 + $0x318] sm:$0xff]
    %v4308 = vld [vmem:[#allocation3 + $0x320] sm:$0xff]
    %v4309 = vld [vmem:[#allocation3 + $0x328] sm:$0x3]
    %v4310 = vld [vmem:[#allocation3 + $0x330] sm:$0xff]
    %v4311 = vld [vmem:[#allocation3 + $0x338] sm:$0xff]
    %v4312 = vld [vmem:[#allocation3 + $0x340] sm:$0x3]
    %v4313 = vld [vmem:[#allocation3 + $0x348] sm:$0xff]
    %v4314 = vld [vmem:[#allocation3 + $0x350] sm:$0xff]
    %v4315 = vld [vmem:[#allocation3 + $0x358] sm:$0x3]
    %v4412 = vrot.slane %v4208, 1
    %v4413 = vrot.slane %v4209, 1
    %v4414 = vsel %vm440, %v4412, %v4413
    %v4415 = vrot.slane %v4210, 1
    %v4416 = vsel %vm440, %v4413, %v4415
    %v4417 = vrot.slane %v4211, 1
    %v4418 = vrot.slane %v4212, 1
    %v4419 = vsel %vm440, %v4417, %v4418
    %v4420 = vrot.slane %v4213, 1
    %v4421 = vsel %vm440, %v4418, %v4420
    %v4422 = vrot.slane %v4214, 1
    %v4423 = vrot.slane %v4215, 1
    %v4424 = vsel %vm440, %v4422, %v4423
    %v4425 = vrot.slane %v4216, 1
    %v4426 = vsel %vm440, %v4423, %v4425
    %v4427 = vrot.slane %v4217, 1
    %v4428 = vrot.slane %v4218, 1
    %v4429 = vsel %vm440, %v4427, %v4428
    %v4430 = vrot.slane %v4219, 1
    %v4431 = vsel %vm440, %v4428, %v4430
    %v4432 = vrot.slane %v4220, 1
    %v4433 = vrot.slane %v4221, 1
    %v4434 = vsel %vm440, %v4432, %v4433
    %v4435 = vrot.slane %v4222, 1
    %v4436 = vsel %vm440, %v4433, %v4435
    %v4437 = vrot.slane %v4223, 1
    %v4438 = vrot.slane %v4224, 1
    %v4439 = vsel %vm440, %v4437, %v4438
    %v4440 = vrot.slane %v4225, 1
    %v4441 = vsel %vm440, %v4438, %v4440
    %v4442 = vrot.slane %v4226, 1
    %v4443 = vrot.slane %v4227, 1
    %v4444 = vsel %vm440, %v4442, %v4443
    %v4445 = vrot.slane %v4228, 1
    %v4446 = vsel %vm440, %v4443, %v4445
    %v4447 = vrot.slane %v4229, 1
    %v4448 = vrot.slane %v4230, 1
    %v4449 = vsel %vm440, %v4447, %v4448
    %v4450 = vrot.slane %v4231, 1
    %v4451 = vsel %vm440, %v4448, %v4450
    %v4452 = vrot.slane %v4232, 1
    %v4453 = vrot.slane %v4233, 1
    %v4454 = vsel %vm440, %v4452, %v4453
    %v4455 = vrot.slane %v4234, 1
    %v4456 = vsel %vm440, %v4453, %v4455
    %v4457 = vrot.slane %v4235, 1
    %v4458 = vrot.slane %v4236, 1
    %v4459 = vsel %vm440, %v4457, %v4458
    %v4460 = vrot.slane %v4237, 1
    %v4461 = vsel %vm440, %v4458, %v4460
    %v4462 = vrot.slane %v4238, 1
    %v4463 = vrot.slane %v4239, 1
    %v4464 = vsel %vm440, %v4462, %v4463
    %v4465 = vrot.slane %v4240, 1
    %v4466 = vsel %vm440, %v4463, %v4465
    %v4467 = vrot.slane %v4241, 1
    %v4468 = vrot.slane %v4242, 1
    %v4469 = vsel %vm440, %v4467, %v4468
    %v4470 = vrot.slane %v4243, 1
    %v4471 = vsel %vm440, %v4468, %v4470
    %v4472 = vrot.slane %v4244, 1
    %v4473 = vrot.slane %v4245, 1
    %v4474 = vsel %vm440, %v4472, %v4473
    %v4475 = vrot.slane %v4246, 1
    %v4476 = vsel %vm440, %v4473, %v4475
    %v4477 = vrot.slane %v4247, 1
    %v4478 = vrot.slane %v4248, 1
    %v4479 = vsel %vm440, %v4477, %v4478
    %v4480 = vrot.slane %v4249, 1
    %v4481 = vsel %vm440, %v4478, %v4480
    %v4482 = vrot.slane %v4250, 1
    %v4483 = vrot.slane %v4251, 1
    %v4484 = vsel %vm440, %v4482, %v4483
    %v4485 = vrot.slane %v4252, 1
    %v4486 = vsel %vm440, %v4483, %v4485
    %v4487 = vrot.slane %v4253, 1
    %v4488 = vrot.slane %v4254, 1
    %v4489 = vsel %vm440, %v4487, %v4488
    %v4490 = vrot.slane %v4255, 1
    %v4491 = vsel %vm440, %v4488, %v4490
    %v4492 = vrot.slane %v4262, 1
    %v4493 = vrot.slane %v4263, 1
    %v4494 = vsel %vm440, %v4492, %v4493
    %v4495 = vrot.slane %v4264, 1
    %v4496 = vsel %vm440, %v4493, %v4495
    %v4497 = vrot.slane %v4265, 1
    %v4498 = vrot.slane %v4266, 1
    %v4499 = vsel %vm440, %v4497, %v4498
    %v4500 = vrot.slane %v4267, 1
    %v4501 = vsel %vm440, %v4498, %v4500
    %v4502 = vrot.slane %v4268, 1
    %v4503 = vrot.slane %v4269, 1
    %v4504 = vsel %vm440, %v4502, %v4503
    %v4505 = vrot.slane %v4270, 1
    %v4506 = vsel %vm440, %v4503, %v4505
    %v4507 = vrot.slane %v4271, 1
    %v4508 = vrot.slane %v4272, 1
    %v4509 = vsel %vm440, %v4507, %v4508
    %v4510 = vrot.slane %v4273, 1
    %v4511 = vsel %vm440, %v4508, %v4510
    %v4512 = vrot.slane %v4274, 1
    %v4513 = vrot.slane %v4275, 1
    %v4514 = vsel %vm440, %v4512, %v4513
    %v4515 = vrot.slane %v4276, 1
    %v4516 = vsel %vm440, %v4513, %v4515
    %v4517 = vrot.slane %v4277, 1
    %v4518 = vrot.slane %v4278, 1
    %v4519 = vsel %vm440, %v4517, %v4518
    %v4520 = vrot.slane %v4279, 1
    %v4521 = vsel %vm440, %v4518, %v4520
    %v4522 = vrot.slane %v4280, 1
    %v4523 = vrot.slane %v4281, 1
    %v4524 = vsel %vm440, %v4522, %v4523
    %v4525 = vrot.slane %v4282, 1
    %v4526 = vsel %vm440, %v4523, %v4525
    %v4527 = vrot.slane %v4283, 1
    %v4528 = vrot.slane %v4284, 1
    %v4529 = vsel %vm440, %v4527, %v4528
    %v4530 = vrot.slane %v4285, 1
    %v4531 = vsel %vm440, %v4528, %v4530
    %v4532 = vrot.slane %v4286, 1
    %v4533 = vrot.slane %v4287, 1
    %v4534 = vsel %vm440, %v4532, %v4533
    %v4535 = vrot.slane %v4288, 1
    %v4536 = vsel %vm440, %v4533, %v4535
    %v4537 = vrot.slane %v4289, 1
    %v4538 = vrot.slane %v4290, 1
    %v4539 = vsel %vm440, %v4537, %v4538
    %v4540 = vrot.slane %v4291, 1
    %v4541 = vsel %vm440, %v4538, %v4540
    %v4542 = vrot.slane %v4292, 1
    %v4543 = vrot.slane %v4293, 1
    %v4544 = vsel %vm440, %v4542, %v4543
    %v4545 = vrot.slane %v4294, 1
    %v4546 = vsel %vm440, %v4543, %v4545
    %v4547 = vrot.slane %v4295, 1
    %v4548 = vrot.slane %v4296, 1
    %v4549 = vsel %vm440, %v4547, %v4548
    %v4550 = vrot.slane %v4297, 1
    %v4551 = vsel %vm440, %v4548, %v4550
    %v4552 = vrot.slane %v4298, 1
    %v4553 = vrot.slane %v4299, 1
    %v4554 = vsel %vm440, %v4552, %v4553
    %v4555 = vrot.slane %v4300, 1
    %v4556 = vsel %vm440, %v4553, %v4555
    %v4557 = vrot.slane %v4301, 1
    %v4558 = vrot.slane %v4302, 1
    %v4559 = vsel %vm440, %v4557, %v4558
    %v4560 = vrot.slane %v4303, 1
    %v4561 = vsel %vm440, %v4558, %v4560
    %v4562 = vrot.slane %v4304, 1
    %v4563 = vrot.slane %v4305, 1
    %v4564 = vsel %vm440, %v4562, %v4563
    %v4565 = vrot.slane %v4306, 1
    %v4566 = vsel %vm440, %v4563, %v4565
    %v4567 = vrot.slane %v4307, 1
    %v4568 = vrot.slane %v4308, 1
    %v4569 = vsel %vm440, %v4567, %v4568
    %v4570 = vrot.slane %v4309, 1
    %v4571 = vsel %vm440, %v4568, %v4570
    %4572 = vrot.lane.b32.xlu0 %v4414, 8
    %v4573 = vpop.permute.xlu0 %4572
    %4574 = vrot.lane.b32.xlu0 %v4416, 8
    %v4575 = vpop.permute.xlu0 %4574
    %4576 = vrot.lane.b32.xlu0 %v4419, 8
    %v4577 = vpop.permute.xlu0 %4576
    %4578 = vrot.lane.b32.xlu0 %v4421, 8
    %v4579 = vpop.permute.xlu0 %4578
    %4580 = vrot.lane.b32.xlu0 %v4424, 8
    %v4581 = vpop.permute.xlu0 %4580
    %4582 = vrot.lane.b32.xlu0 %v4426, 8
    %v4583 = vpop.permute.xlu0 %4582
    %4584 = vrot.lane.b32.xlu0 %v4429, 8
    %v4585 = vpop.permute.xlu0 %4584
    %4586 = vrot.lane.b32.xlu0 %v4431, 8
    %v4587 = vpop.permute.xlu0 %4586
    %4588 = vrot.lane.b32.xlu0 %v4434, 8
    %v4589 = vpop.permute.xlu0 %4588
    %4590 = vrot.lane.b32.xlu0 %v4436, 8
    %v4591 = vpop.permute.xlu0 %4590
    %4592 = vrot.lane.b32.xlu0 %v4439, 8
    %v4593 = vpop.permute.xlu0 %4592
    %4594 = vrot.lane.b32.xlu0 %v4441, 8
    %v4595 = vpop.permute.xlu0 %4594
    %4596 = vrot.lane.b32.xlu0 %v4444, 8
    %v4597 = vpop.permute.xlu0 %4596
    %4598 = vrot.lane.b32.xlu0 %v4446, 8
    %v4599 = vpop.permute.xlu0 %4598
    %4600 = vrot.lane.b32.xlu0 %v4449, 8
    %v4601 = vpop.permute.xlu0 %4600
    %4602 = vrot.lane.b32.xlu0 %v4451, 8
    %v4603 = vpop.permute.xlu0 %4602
    %4604 = vrot.lane.b32.xlu0 %v4454, 8
    %v4605 = vpop.permute.xlu0 %4604
    %4606 = vrot.lane.b32.xlu0 %v4456, 8
    %v4607 = vpop.permute.xlu0 %4606
    %4608 = vrot.lane.b32.xlu0 %v4459, 8
    %v4609 = vpop.permute.xlu0 %4608
    %4610 = vrot.lane.b32.xlu0 %v4461, 8
    %v4611 = vpop.permute.xlu0 %4610
    %4612 = vrot.lane.b32.xlu0 %v4464, 8
    %v4613 = vpop.permute.xlu0 %4612
    %4614 = vrot.lane.b32.xlu0 %v4466, 8
    %v4615 = vpop.permute.xlu0 %4614
    %4616 = vrot.lane.b32.xlu0 %v4469, 8
    %v4617 = vpop.permute.xlu0 %4616
    %4618 = vrot.lane.b32.xlu0 %v4471, 8
    %v4619 = vpop.permute.xlu0 %4618
    %4620 = vrot.lane.b32.xlu0 %v4474, 8
    %v4621 = vpop.permute.xlu0 %4620
    %4622 = vrot.lane.b32.xlu0 %v4476, 8
    %v4623 = vpop.permute.xlu0 %4622
    %4624 = vrot.lane.b32.xlu0 %v4479, 8
    %v4625 = vpop.permute.xlu0 %4624
    %4626 = vrot.lane.b32.xlu0 %v4481, 8
    %v4627 = vpop.permute.xlu0 %4626
    %4628 = vrot.lane.b32.xlu0 %v4484, 8
    %v4629 = vpop.permute.xlu0 %4628
    %4630 = vrot.lane.b32.xlu0 %v4486, 8
    %v4631 = vpop.permute.xlu0 %4630
    %4632 = vrot.lane.b32.xlu0 %v4489, 8
    %v4633 = vpop.permute.xlu0 %4632
    %4634 = vrot.lane.b32.xlu0 %v4491, 8
    %v4635 = vpop.permute.xlu0 %4634
    %4636 = vrot.lane.b32.xlu0 %v4494, 8
    %v4637 = vpop.permute.xlu0 %4636
    %4638 = vrot.lane.b32.xlu0 %v4496, 8
    %v4639 = vpop.permute.xlu0 %4638
    %4640 = vrot.lane.b32.xlu0 %v4499, 8
    %v4641 = vpop.permute.xlu0 %4640
    %4642 = vrot.lane.b32.xlu0 %v4501, 8
    %v4643 = vpop.permute.xlu0 %4642
    %4644 = vrot.lane.b32.xlu0 %v4504, 8
    %v4645 = vpop.permute.xlu0 %4644
    %4646 = vrot.lane.b32.xlu0 %v4506, 8
    %v4647 = vpop.permute.xlu0 %4646
    %4648 = vrot.lane.b32.xlu0 %v4509, 8
    %v4649 = vpop.permute.xlu0 %4648
    %4650 = vrot.lane.b32.xlu0 %v4511, 8
    %v4651 = vpop.permute.xlu0 %4650
    %4652 = vrot.lane.b32.xlu0 %v4514, 8
    %v4653 = vpop.permute.xlu0 %4652
    %4654 = vrot.lane.b32.xlu0 %v4516, 8
    %v4655 = vpop.permute.xlu0 %4654
    %4656 = vrot.lane.b32.xlu0 %v4519, 8
    %v4657 = vpop.permute.xlu0 %4656
    %4658 = vrot.lane.b32.xlu0 %v4521, 8
    %v4659 = vpop.permute.xlu0 %4658
    %4660 = vrot.lane.b32.xlu0 %v4524, 8
    %v4661 = vpop.permute.xlu0 %4660
    %4662 = vrot.lane.b32.xlu0 %v4526, 8
    %v4663 = vpop.permute.xlu0 %4662
    %4664 = vrot.lane.b32.xlu0 %v4529, 8
    %v4665 = vpop.permute.xlu0 %4664
    %4666 = vrot.lane.b32.xlu0 %v4531, 8
    %v4667 = vpop.permute.xlu0 %4666
    %4668 = vrot.lane.b32.xlu0 %v4534, 8
    %v4669 = vpop.permute.xlu0 %4668
    %4670 = vrot.lane.b32.xlu0 %v4536, 8
    %v4671 = vpop.permute.xlu0 %4670
    %4672 = vrot.lane.b32.xlu0 %v4539, 8
    %v4673 = vpop.permute.xlu0 %4672
    %4674 = vrot.lane.b32.xlu0 %v4541, 8
    %v4675 = vpop.permute.xlu0 %4674
    %4676 = vrot.lane.b32.xlu0 %v4544, 8
    %v4677 = vpop.permute.xlu0 %4676
    %4678 = vrot.lane.b32.xlu0 %v4546, 8
    %v4679 = vpop.permute.xlu0 %4678
    %4680 = vrot.lane.b32.xlu0 %v4549, 8
    %v4681 = vpop.permute.xlu0 %4680
    %4682 = vrot.lane.b32.xlu0 %v4551, 8
    %v4683 = vpop.permute.xlu0 %4682
    %4684 = vrot.lane.b32.xlu0 %v4554, 8
    %v4685 = vpop.permute.xlu0 %4684
    %4686 = vrot.lane.b32.xlu0 %v4556, 8
    %v4687 = vpop.permute.xlu0 %4686
    %4688 = vrot.lane.b32.xlu0 %v4559, 8
    %v4689 = vpop.permute.xlu0 %4688
    %4690 = vrot.lane.b32.xlu0 %v4561, 8
    %v4691 = vpop.permute.xlu0 %4690
    %4692 = vrot.lane.b32.xlu0 %v4564, 8
    %v4693 = vpop.permute.xlu0 %4692
    %4694 = vrot.lane.b32.xlu0 %v4566, 8
    %v4695 = vpop.permute.xlu0 %4694
    %4696 = vrot.lane.b32.xlu0 %v4569, 8
    %v4697 = vpop.permute.xlu0 %4696
    %4698 = vrot.lane.b32.xlu0 %v4571, 8
    %v4699 = vpop.permute.xlu0 %4698
    %v4764 = vrot.slane %v4208, 2
    %v4765 = vrot.slane %v4209, 2
    %v4766 = vsel %vm793, %v4764, %v4765
    %v4767 = vrot.slane %v4210, 2
    %v4768 = vsel %vm793, %v4765, %v4767
    %v4769 = vrot.slane %v4211, 2
    %v4770 = vrot.slane %v4212, 2
    %v4771 = vsel %vm793, %v4769, %v4770
    %v4772 = vrot.slane %v4213, 2
    %v4773 = vsel %vm793, %v4770, %v4772
    %v4774 = vrot.slane %v4214, 2
    %v4775 = vrot.slane %v4215, 2
    %v4776 = vsel %vm793, %v4774, %v4775
    %v4777 = vrot.slane %v4216, 2
    %v4778 = vsel %vm793, %v4775, %v4777
    %v4779 = vrot.slane %v4217, 2
    %v4780 = vrot.slane %v4218, 2
    %v4781 = vsel %vm793, %v4779, %v4780
    %v4782 = vrot.slane %v4219, 2
    %v4783 = vsel %vm793, %v4780, %v4782
    %v4784 = vrot.slane %v4220, 2
    %v4785 = vrot.slane %v4221, 2
    %v4786 = vsel %vm793, %v4784, %v4785
    %v4787 = vrot.slane %v4222, 2
    %v4788 = vsel %vm793, %v4785, %v4787
    %v4789 = vrot.slane %v4223, 2
    %v4790 = vrot.slane %v4224, 2
    %v4791 = vsel %vm793, %v4789, %v4790
    %v4792 = vrot.slane %v4225, 2
    %v4793 = vsel %vm793, %v4790, %v4792
    %v4794 = vrot.slane %v4226, 2
    %v4795 = vrot.slane %v4227, 2
    %v4796 = vsel %vm793, %v4794, %v4795
    %v4797 = vrot.slane %v4228, 2
    %v4798 = vsel %vm793, %v4795, %v4797
    %v4799 = vrot.slane %v4229, 2
    %v4800 = vrot.slane %v4230, 2
    %v4801 = vsel %vm793, %v4799, %v4800
    %v4802 = vrot.slane %v4231, 2
    %v4803 = vsel %vm793, %v4800, %v4802
    %v4804 = vrot.slane %v4232, 2
    %v4805 = vrot.slane %v4233, 2
    %v4806 = vsel %vm793, %v4804, %v4805
    %v4807 = vrot.slane %v4234, 2
    %v4808 = vsel %vm793, %v4805, %v4807
    %v4809 = vrot.slane %v4235, 2
    %v4810 = vrot.slane %v4236, 2
    %v4811 = vsel %vm793, %v4809, %v4810
    %v4812 = vrot.slane %v4237, 2
    %v4813 = vsel %vm793, %v4810, %v4812
    %v4814 = vrot.slane %v4238, 2
    %v4815 = vrot.slane %v4239, 2
    %v4816 = vsel %vm793, %v4814, %v4815
    %v4817 = vrot.slane %v4240, 2
    %v4818 = vsel %vm793, %v4815, %v4817
    %v4819 = vrot.slane %v4241, 2
    %v4820 = vrot.slane %v4242, 2
    %v4821 = vsel %vm793, %v4819, %v4820
    %v4822 = vrot.slane %v4243, 2
    %v4823 = vsel %vm793, %v4820, %v4822
    %v4824 = vrot.slane %v4244, 2
    %v4825 = vrot.slane %v4245, 2
    %v4826 = vsel %vm793, %v4824, %v4825
    %v4827 = vrot.slane %v4246, 2
    %v4828 = vsel %vm793, %v4825, %v4827
    %v4829 = vrot.slane %v4247, 2
    %v4830 = vrot.slane %v4248, 2
    %v4831 = vsel %vm793, %v4829, %v4830
    %v4832 = vrot.slane %v4249, 2
    %v4833 = vsel %vm793, %v4830, %v4832
    %v4834 = vrot.slane %v4250, 2
    %v4835 = vrot.slane %v4251, 2
    %v4836 = vsel %vm793, %v4834, %v4835
    %v4837 = vrot.slane %v4252, 2
    %v4838 = vsel %vm793, %v4835, %v4837
    %v4839 = vrot.slane %v4253, 2
    %v4840 = vrot.slane %v4254, 2
    %v4841 = vsel %vm793, %v4839, %v4840
    %v4842 = vrot.slane %v4255, 2
    %v4843 = vsel %vm793, %v4840, %v4842
    %v4844 = vrot.slane %v4262, 2
    %v4845 = vrot.slane %v4263, 2
    %v4846 = vsel %vm793, %v4844, %v4845
    %v4847 = vrot.slane %v4264, 2
    %v4848 = vsel %vm793, %v4845, %v4847
    %v4849 = vrot.slane %v4265, 2
    %v4850 = vrot.slane %v4266, 2
    %v4851 = vsel %vm793, %v4849, %v4850
    %v4852 = vrot.slane %v4267, 2
    %v4853 = vsel %vm793, %v4850, %v4852
    %v4854 = vrot.slane %v4268, 2
    %v4855 = vrot.slane %v4269, 2
    %v4856 = vsel %vm793, %v4854, %v4855
    %v4857 = vrot.slane %v4270, 2
    %v4858 = vsel %vm793, %v4855, %v4857
    %v4859 = vrot.slane %v4271, 2
    %v4860 = vrot.slane %v4272, 2
    %v4861 = vsel %vm793, %v4859, %v4860
    %v4862 = vrot.slane %v4273, 2
    %v4863 = vsel %vm793, %v4860, %v4862
    %v4864 = vrot.slane %v4274, 2
    %v4865 = vrot.slane %v4275, 2
    %v4866 = vsel %vm793, %v4864, %v4865
    %v4867 = vrot.slane %v4276, 2
    %v4868 = vsel %vm793, %v4865, %v4867
    %v4869 = vrot.slane %v4277, 2
    %v4870 = vrot.slane %v4278, 2
    %v4871 = vsel %vm793, %v4869, %v4870
    %v4872 = vrot.slane %v4279, 2
    %v4873 = vsel %vm793, %v4870, %v4872
    %v4874 = vrot.slane %v4280, 2
    %v4875 = vrot.slane %v4281, 2
    %v4876 = vsel %vm793, %v4874, %v4875
    %v4877 = vrot.slane %v4282, 2
    %v4878 = vsel %vm793, %v4875, %v4877
    %v4879 = vrot.slane %v4283, 2
    %v4880 = vrot.slane %v4284, 2
    %v4881 = vsel %vm793, %v4879, %v4880
    %v4882 = vrot.slane %v4285, 2
    %v4883 = vsel %vm793, %v4880, %v4882
    %v4884 = vrot.slane %v4286, 2
    %v4885 = vrot.slane %v4287, 2
    %v4886 = vsel %vm793, %v4884, %v4885
    %v4887 = vrot.slane %v4288, 2
    %v4888 = vsel %vm793, %v4885, %v4887
    %v4889 = vrot.slane %v4289, 2
    %v4890 = vrot.slane %v4290, 2
    %v4891 = vsel %vm793, %v4889, %v4890
    %v4892 = vrot.slane %v4291, 2
    %v4893 = vsel %vm793, %v4890, %v4892
    %v4894 = vrot.slane %v4292, 2
    %v4895 = vrot.slane %v4293, 2
    %v4896 = vsel %vm793, %v4894, %v4895
    %v4897 = vrot.slane %v4294, 2
    %v4898 = vsel %vm793, %v4895, %v4897
    %v4899 = vrot.slane %v4295, 2
    %v4900 = vrot.slane %v4296, 2
    %v4901 = vsel %vm793, %v4899, %v4900
    %v4902 = vrot.slane %v4297, 2
    %v4903 = vsel %vm793, %v4900, %v4902
    %v4904 = vrot.slane %v4298, 2
    %v4905 = vrot.slane %v4299, 2
    %v4906 = vsel %vm793, %v4904, %v4905
    %v4907 = vrot.slane %v4300, 2
    %v4908 = vsel %vm793, %v4905, %v4907
    %v4909 = vrot.slane %v4301, 2
    %v4910 = vrot.slane %v4302, 2
    %v4911 = vsel %vm793, %v4909, %v4910
    %v4912 = vrot.slane %v4303, 2
    %v4913 = vsel %vm793, %v4910, %v4912
    %v4914 = vrot.slane %v4304, 2
    %v4915 = vrot.slane %v4305, 2
    %v4916 = vsel %vm793, %v4914, %v4915
    %v4917 = vrot.slane %v4306, 2
    %v4918 = vsel %vm793, %v4915, %v4917
    %v4919 = vrot.slane %v4307, 2
    %v4920 = vrot.slane %v4308, 2
    %v4921 = vsel %vm793, %v4919, %v4920
    %v4922 = vrot.slane %v4309, 2
    %v4923 = vsel %vm793, %v4920, %v4922
    %4924 = vrot.lane.b32.xlu0 %v4766, 16
    %v4925 = vpop.permute.xlu0 %4924
    %4926 = vrot.lane.b32.xlu0 %v4768, 16
    %v4927 = vpop.permute.xlu0 %4926
    %4928 = vrot.lane.b32.xlu0 %v4771, 16
    %v4929 = vpop.permute.xlu0 %4928
    %4930 = vrot.lane.b32.xlu0 %v4773, 16
    %v4931 = vpop.permute.xlu0 %4930
    %4932 = vrot.lane.b32.xlu0 %v4776, 16
    %v4933 = vpop.permute.xlu0 %4932
    %4934 = vrot.lane.b32.xlu0 %v4778, 16
    %v4935 = vpop.permute.xlu0 %4934
    %4936 = vrot.lane.b32.xlu0 %v4781, 16
    %v4937 = vpop.permute.xlu0 %4936
    %4938 = vrot.lane.b32.xlu0 %v4783, 16
    %v4939 = vpop.permute.xlu0 %4938
    %4940 = vrot.lane.b32.xlu0 %v4786, 16
    %v4941 = vpop.permute.xlu0 %4940
    %4942 = vrot.lane.b32.xlu0 %v4788, 16
    %v4943 = vpop.permute.xlu0 %4942
    %4944 = vrot.lane.b32.xlu0 %v4791, 16
    %v4945 = vpop.permute.xlu0 %4944
    %4946 = vrot.lane.b32.xlu0 %v4793, 16
    %v4947 = vpop.permute.xlu0 %4946
    %4948 = vrot.lane.b32.xlu0 %v4796, 16
    %v4949 = vpop.permute.xlu0 %4948
    %4950 = vrot.lane.b32.xlu0 %v4798, 16
    %v4951 = vpop.permute.xlu0 %4950
    %4952 = vrot.lane.b32.xlu0 %v4801, 16
    %v4953 = vpop.permute.xlu0 %4952
    %4954 = vrot.lane.b32.xlu0 %v4803, 16
    %v4955 = vpop.permute.xlu0 %4954
    %4956 = vrot.lane.b32.xlu0 %v4806, 16
    %v4957 = vpop.permute.xlu0 %4956
    %4958 = vrot.lane.b32.xlu0 %v4808, 16
    %v4959 = vpop.permute.xlu0 %4958
    %4960 = vrot.lane.b32.xlu0 %v4811, 16
    %v4961 = vpop.permute.xlu0 %4960
    %4962 = vrot.lane.b32.xlu0 %v4813, 16
    %v4963 = vpop.permute.xlu0 %4962
    %4964 = vrot.lane.b32.xlu0 %v4816, 16
    %v4965 = vpop.permute.xlu0 %4964
    %4966 = vrot.lane.b32.xlu0 %v4818, 16
    %v4967 = vpop.permute.xlu0 %4966
    %4968 = vrot.lane.b32.xlu0 %v4821, 16
    %v4969 = vpop.permute.xlu0 %4968
    %4970 = vrot.lane.b32.xlu0 %v4823, 16
    %v4971 = vpop.permute.xlu0 %4970
    %4972 = vrot.lane.b32.xlu0 %v4826, 16
    %v4973 = vpop.permute.xlu0 %4972
    %4974 = vrot.lane.b32.xlu0 %v4828, 16
    %v4975 = vpop.permute.xlu0 %4974
    %4976 = vrot.lane.b32.xlu0 %v4831, 16
    %v4977 = vpop.permute.xlu0 %4976
    %4978 = vrot.lane.b32.xlu0 %v4833, 16
    %v4979 = vpop.permute.xlu0 %4978
    %4980 = vrot.lane.b32.xlu0 %v4836, 16
    %v4981 = vpop.permute.xlu0 %4980
    %4982 = vrot.lane.b32.xlu0 %v4838, 16
    %v4983 = vpop.permute.xlu0 %4982
    %4984 = vrot.lane.b32.xlu0 %v4841, 16
    %v4985 = vpop.permute.xlu0 %4984
    %4986 = vrot.lane.b32.xlu0 %v4843, 16
    %v4987 = vpop.permute.xlu0 %4986
    %4988 = vrot.lane.b32.xlu0 %v4846, 16
    %v4989 = vpop.permute.xlu0 %4988
    %4990 = vrot.lane.b32.xlu0 %v4848, 16
    %v4991 = vpop.permute.xlu0 %4990
    %4992 = vrot.lane.b32.xlu0 %v4851, 16
    %v4993 = vpop.permute.xlu0 %4992
    %4994 = vrot.lane.b32.xlu0 %v4853, 16
    %v4995 = vpop.permute.xlu0 %4994
    %4996 = vrot.lane.b32.xlu0 %v4856, 16
    %v4997 = vpop.permute.xlu0 %4996
    %4998 = vrot.lane.b32.xlu0 %v4858, 16
    %v4999 = vpop.permute.xlu0 %4998
    %5000 = vrot.lane.b32.xlu0 %v4861, 16
    %v5001 = vpop.permute.xlu0 %5000
    %5002 = vrot.lane.b32.xlu0 %v4863, 16
    %v5003 = vpop.permute.xlu0 %5002
    %5004 = vrot.lane.b32.xlu0 %v4866, 16
    %v5005 = vpop.permute.xlu0 %5004
    %5006 = vrot.lane.b32.xlu0 %v4868, 16
    %v5007 = vpop.permute.xlu0 %5006
    %5008 = vrot.lane.b32.xlu0 %v4871, 16
    %v5009 = vpop.permute.xlu0 %5008
    %5010 = vrot.lane.b32.xlu0 %v4873, 16
    %v5011 = vpop.permute.xlu0 %5010
    %5012 = vrot.lane.b32.xlu0 %v4876, 16
    %v5013 = vpop.permute.xlu0 %5012
    %5014 = vrot.lane.b32.xlu0 %v4878, 16
    %v5015 = vpop.permute.xlu0 %5014
    %5016 = vrot.lane.b32.xlu0 %v4881, 16
    %v5017 = vpop.permute.xlu0 %5016
    %5018 = vrot.lane.b32.xlu0 %v4883, 16
    %v5019 = vpop.permute.xlu0 %5018
    %5020 = vrot.lane.b32.xlu0 %v4886, 16
    %v5021 = vpop.permute.xlu0 %5020
    %5022 = vrot.lane.b32.xlu0 %v4888, 16
    %v5023 = vpop.permute.xlu0 %5022
    %5024 = vrot.lane.b32.xlu0 %v4891, 16
    %v5025 = vpop.permute.xlu0 %5024
    %5026 = vrot.lane.b32.xlu0 %v4893, 16
    %v5027 = vpop.permute.xlu0 %5026
    %5028 = vrot.lane.b32.xlu0 %v4896, 16
    %v5029 = vpop.permute.xlu0 %5028
    %5030 = vrot.lane.b32.xlu0 %v4898, 16
    %v5031 = vpop.permute.xlu0 %5030
    %5032 = vrot.lane.b32.xlu0 %v4901, 16
    %v5033 = vpop.permute.xlu0 %5032
    %5034 = vrot.lane.b32.xlu0 %v4903, 16
    %v5035 = vpop.permute.xlu0 %5034
    %5036 = vrot.lane.b32.xlu0 %v4906, 16
    %v5037 = vpop.permute.xlu0 %5036
    %5038 = vrot.lane.b32.xlu0 %v4908, 16
    %v5039 = vpop.permute.xlu0 %5038
    %5040 = vrot.lane.b32.xlu0 %v4911, 16
    %v5041 = vpop.permute.xlu0 %5040
    %5042 = vrot.lane.b32.xlu0 %v4913, 16
    %v5043 = vpop.permute.xlu0 %5042
    %5044 = vrot.lane.b32.xlu0 %v4916, 16
    %v5045 = vpop.permute.xlu0 %5044
    %5046 = vrot.lane.b32.xlu0 %v4918, 16
    %v5047 = vpop.permute.xlu0 %5046
    %5048 = vrot.lane.b32.xlu0 %v4921, 16
    %v5049 = vpop.permute.xlu0 %5048
    %5050 = vrot.lane.b32.xlu0 %v4923, 16
    %v5051 = vpop.permute.xlu0 %5050
    %5120 = vrot.lane.b32.xlu0 %v4211, 24
    %v5121 = vpop.permute.xlu0 %5120
    %5122 = vrot.lane.b32.xlu0 %v4212, 24
    %v5123 = vpop.permute.xlu0 %5122
    %5124 = vrot.lane.b32.xlu0 %v4214, 24
    %v5125 = vpop.permute.xlu0 %5124
    %5126 = vrot.lane.b32.xlu0 %v4215, 24
    %v5127 = vpop.permute.xlu0 %5126
    %5128 = vrot.lane.b32.xlu0 %v4217, 24
    %v5129 = vpop.permute.xlu0 %5128
    %5130 = vrot.lane.b32.xlu0 %v4218, 24
    %v5131 = vpop.permute.xlu0 %5130
    %5132 = vrot.lane.b32.xlu0 %v4220, 24
    %v5133 = vpop.permute.xlu0 %5132
    %5134 = vrot.lane.b32.xlu0 %v4221, 24
    %v5135 = vpop.permute.xlu0 %5134
    %5136 = vrot.lane.b32.xlu0 %v4223, 24
    %v5137 = vpop.permute.xlu0 %5136
    %5138 = vrot.lane.b32.xlu0 %v4224, 24
    %v5139 = vpop.permute.xlu0 %5138
    %5140 = vrot.lane.b32.xlu0 %v4226, 24
    %v5141 = vpop.permute.xlu0 %5140
    %5142 = vrot.lane.b32.xlu0 %v4227, 24
    %v5143 = vpop.permute.xlu0 %5142
    %5144 = vrot.lane.b32.xlu0 %v4229, 24
    %v5145 = vpop.permute.xlu0 %5144
    %5146 = vrot.lane.b32.xlu0 %v4230, 24
    %v5147 = vpop.permute.xlu0 %5146
    %5148 = vrot.lane.b32.xlu0 %v4232, 24
    %v5149 = vpop.permute.xlu0 %5148
    %5150 = vrot.lane.b32.xlu0 %v4233, 24
    %v5151 = vpop.permute.xlu0 %5150
    %5152 = vrot.lane.b32.xlu0 %v4235, 24
    %v5153 = vpop.permute.xlu0 %5152
    %5154 = vrot.lane.b32.xlu0 %v4236, 24
    %v5155 = vpop.permute.xlu0 %5154
    %5156 = vrot.lane.b32.xlu0 %v4238, 24
    %v5157 = vpop.permute.xlu0 %5156
    %5158 = vrot.lane.b32.xlu0 %v4239, 24
    %v5159 = vpop.permute.xlu0 %5158
    %5160 = vrot.lane.b32.xlu0 %v4241, 24
    %v5161 = vpop.permute.xlu0 %5160
    %5162 = vrot.lane.b32.xlu0 %v4242, 24
    %v5163 = vpop.permute.xlu0 %5162
    %5164 = vrot.lane.b32.xlu0 %v4244, 24
    %v5165 = vpop.permute.xlu0 %5164
    %5166 = vrot.lane.b32.xlu0 %v4245, 24
    %v5167 = vpop.permute.xlu0 %5166
    %5168 = vrot.lane.b32.xlu0 %v4247, 24
    %v5169 = vpop.permute.xlu0 %5168
    %5170 = vrot.lane.b32.xlu0 %v4248, 24
    %v5171 = vpop.permute.xlu0 %5170
    %5172 = vrot.lane.b32.xlu0 %v4250, 24
    %v5173 = vpop.permute.xlu0 %5172
    %5174 = vrot.lane.b32.xlu0 %v4251, 24
    %v5175 = vpop.permute.xlu0 %5174
    %5176 = vrot.lane.b32.xlu0 %v4253, 24
    %v5177 = vpop.permute.xlu0 %5176
    %5178 = vrot.lane.b32.xlu0 %v4254, 24
    %v5179 = vpop.permute.xlu0 %5178
    %5180 = vrot.lane.b32.xlu0 %v4256, 24
    %v5181 = vpop.permute.xlu0 %5180
    %5182 = vrot.lane.b32.xlu0 %v4257, 24
    %v5183 = vpop.permute.xlu0 %5182
    %5184 = vrot.lane.b32.xlu0 %v4265, 24
    %v5185 = vpop.permute.xlu0 %5184
    %5186 = vrot.lane.b32.xlu0 %v4266, 24
    %v5187 = vpop.permute.xlu0 %5186
    %5188 = vrot.lane.b32.xlu0 %v4268, 24
    %v5189 = vpop.permute.xlu0 %5188
    %5190 = vrot.lane.b32.xlu0 %v4269, 24
    %v5191 = vpop.permute.xlu0 %5190
    %5192 = vrot.lane.b32.xlu0 %v4271, 24
    %v5193 = vpop.permute.xlu0 %5192
    %5194 = vrot.lane.b32.xlu0 %v4272, 24
    %v5195 = vpop.permute.xlu0 %5194
    %5196 = vrot.lane.b32.xlu0 %v4274, 24
    %v5197 = vpop.permute.xlu0 %5196
    %5198 = vrot.lane.b32.xlu0 %v4275, 24
    %v5199 = vpop.permute.xlu0 %5198
    %5200 = vrot.lane.b32.xlu0 %v4277, 24
    %v5201 = vpop.permute.xlu0 %5200
    %5202 = vrot.lane.b32.xlu0 %v4278, 24
    %v5203 = vpop.permute.xlu0 %5202
    %5204 = vrot.lane.b32.xlu0 %v4280, 24
    %v5205 = vpop.permute.xlu0 %5204
    %5206 = vrot.lane.b32.xlu0 %v4281, 24
    %v5207 = vpop.permute.xlu0 %5206
    %5208 = vrot.lane.b32.xlu0 %v4283, 24
    %v5209 = vpop.permute.xlu0 %5208
    %5210 = vrot.lane.b32.xlu0 %v4284, 24
    %v5211 = vpop.permute.xlu0 %5210
    %5212 = vrot.lane.b32.xlu0 %v4286, 24
    %v5213 = vpop.permute.xlu0 %5212
    %5214 = vrot.lane.b32.xlu0 %v4287, 24
    %v5215 = vpop.permute.xlu0 %5214
    %5216 = vrot.lane.b32.xlu0 %v4289, 24
    %v5217 = vpop.permute.xlu0 %5216
    %5218 = vrot.lane.b32.xlu0 %v4290, 24
    %v5219 = vpop.permute.xlu0 %5218
    %5220 = vrot.lane.b32.xlu0 %v4292, 24
    %v5221 = vpop.permute.xlu0 %5220
    %5222 = vrot.lane.b32.xlu0 %v4293, 24
    %v5223 = vpop.permute.xlu0 %5222
    %5224 = vrot.lane.b32.xlu0 %v4295, 24
    %v5225 = vpop.permute.xlu0 %5224
    %5226 = vrot.lane.b32.xlu0 %v4296, 24
    %v5227 = vpop.permute.xlu0 %5226
    %5228 = vrot.lane.b32.xlu0 %v4298, 24
    %v5229 = vpop.permute.xlu0 %5228
    %5230 = vrot.lane.b32.xlu0 %v4299, 24
    %v5231 = vpop.permute.xlu0 %5230
    %5232 = vrot.lane.b32.xlu0 %v4301, 24
    %v5233 = vpop.permute.xlu0 %5232
    %5234 = vrot.lane.b32.xlu0 %v4302, 24
    %v5235 = vpop.permute.xlu0 %5234
    %5236 = vrot.lane.b32.xlu0 %v4304, 24
    %v5237 = vpop.permute.xlu0 %5236
    %5238 = vrot.lane.b32.xlu0 %v4305, 24
    %v5239 = vpop.permute.xlu0 %5238
    %5240 = vrot.lane.b32.xlu0 %v4307, 24
    %v5241 = vpop.permute.xlu0 %5240
    %5242 = vrot.lane.b32.xlu0 %v4308, 24
    %v5243 = vpop.permute.xlu0 %5242
    %5244 = vrot.lane.b32.xlu0 %v4310, 24
    %v5245 = vpop.permute.xlu0 %5244
    %5246 = vrot.lane.b32.xlu0 %v4311, 24
    %v5247 = vpop.permute.xlu0 %5246
    %v5314 = vrot.slane %v4256, 1
    %v5315 = vrot.slane %v4257, 1
    %v5316 = vsel %vm440, %v5314, %v5315
    %v5317 = vrot.slane %v4258, 1
    %v5318 = vsel %vm440, %v5315, %v5317
    %v5319 = vrot.slane %v4310, 1
    %v5320 = vrot.slane %v4311, 1
    %v5321 = vsel %vm440, %v5319, %v5320
    %v5322 = vrot.slane %v4312, 1
    %v5323 = vsel %vm440, %v5320, %v5322
    %5324 = vrot.lane.b32.xlu0 %v4419, 32
    %v5325 = vpop.permute.xlu0 %5324
    %5326 = vrot.lane.b32.xlu0 %v4421, 32
    %v5327 = vpop.permute.xlu0 %5326
    %5328 = vrot.lane.b32.xlu0 %v4424, 32
    %v5329 = vpop.permute.xlu0 %5328
    %5330 = vrot.lane.b32.xlu0 %v4426, 32
    %v5331 = vpop.permute.xlu0 %5330
    %5332 = vrot.lane.b32.xlu0 %v4429, 32
    %v5333 = vpop.permute.xlu0 %5332
    %5334 = vrot.lane.b32.xlu0 %v4431, 32
    %v5335 = vpop.permute.xlu0 %5334
    %5336 = vrot.lane.b32.xlu0 %v4434, 32
    %v5337 = vpop.permute.xlu0 %5336
    %5338 = vrot.lane.b32.xlu0 %v4436, 32
    %v5339 = vpop.permute.xlu0 %5338
    %5340 = vrot.lane.b32.xlu0 %v4439, 32
    %v5341 = vpop.permute.xlu0 %5340
    %5342 = vrot.lane.b32.xlu0 %v4441, 32
    %v5343 = vpop.permute.xlu0 %5342
    %5344 = vrot.lane.b32.xlu0 %v4444, 32
    %v5345 = vpop.permute.xlu0 %5344
    %5346 = vrot.lane.b32.xlu0 %v4446, 32
    %v5347 = vpop.permute.xlu0 %5346
    %5348 = vrot.lane.b32.xlu0 %v4449, 32
    %v5349 = vpop.permute.xlu0 %5348
    %5350 = vrot.lane.b32.xlu0 %v4451, 32
    %v5351 = vpop.permute.xlu0 %5350
    %5352 = vrot.lane.b32.xlu0 %v4454, 32
    %v5353 = vpop.permute.xlu0 %5352
    %5354 = vrot.lane.b32.xlu0 %v4456, 32
    %v5355 = vpop.permute.xlu0 %5354
    %5356 = vrot.lane.b32.xlu0 %v4459, 32
    %v5357 = vpop.permute.xlu0 %5356
    %5358 = vrot.lane.b32.xlu0 %v4461, 32
    %v5359 = vpop.permute.xlu0 %5358
    %5360 = vrot.lane.b32.xlu0 %v4464, 32
    %v5361 = vpop.permute.xlu0 %5360
    %5362 = vrot.lane.b32.xlu0 %v4466, 32
    %v5363 = vpop.permute.xlu0 %5362
    %5364 = vrot.lane.b32.xlu0 %v4469, 32
    %v5365 = vpop.permute.xlu0 %5364
    %5366 = vrot.lane.b32.xlu0 %v4471, 32
    %v5367 = vpop.permute.xlu0 %5366
    %5368 = vrot.lane.b32.xlu0 %v4474, 32
    %v5369 = vpop.permute.xlu0 %5368
    %5370 = vrot.lane.b32.xlu0 %v4476, 32
    %v5371 = vpop.permute.xlu0 %5370
    %5372 = vrot.lane.b32.xlu0 %v4479, 32
    %v5373 = vpop.permute.xlu0 %5372
    %5374 = vrot.lane.b32.xlu0 %v4481, 32
    %v5375 = vpop.permute.xlu0 %5374
    %5376 = vrot.lane.b32.xlu0 %v4484, 32
    %v5377 = vpop.permute.xlu0 %5376
    %5378 = vrot.lane.b32.xlu0 %v4486, 32
    %v5379 = vpop.permute.xlu0 %5378
    %5380 = vrot.lane.b32.xlu0 %v4489, 32
    %v5381 = vpop.permute.xlu0 %5380
    %5382 = vrot.lane.b32.xlu0 %v4491, 32
    %v5383 = vpop.permute.xlu0 %5382
    %5384 = vrot.lane.b32.xlu0 %v5316, 32
    %v5385 = vpop.permute.xlu0 %5384
    %5386 = vrot.lane.b32.xlu0 %v5318, 32
    %v5387 = vpop.permute.xlu0 %5386
    %5388 = vrot.lane.b32.xlu0 %v4499, 32
    %v5389 = vpop.permute.xlu0 %5388
    %5390 = vrot.lane.b32.xlu0 %v4501, 32
    %v5391 = vpop.permute.xlu0 %5390
    %5392 = vrot.lane.b32.xlu0 %v4504, 32
    %v5393 = vpop.permute.xlu0 %5392
    %5394 = vrot.lane.b32.xlu0 %v4506, 32
    %v5395 = vpop.permute.xlu0 %5394
    %5396 = vrot.lane.b32.xlu0 %v4509, 32
    %v5397 = vpop.permute.xlu0 %5396
    %5398 = vrot.lane.b32.xlu0 %v4511, 32
    %v5399 = vpop.permute.xlu0 %5398
    %5400 = vrot.lane.b32.xlu0 %v4514, 32
    %v5401 = vpop.permute.xlu0 %5400
    %5402 = vrot.lane.b32.xlu0 %v4516, 32
    %v5403 = vpop.permute.xlu0 %5402
    %5404 = vrot.lane.b32.xlu0 %v4519, 32
    %v5405 = vpop.permute.xlu0 %5404
    %5406 = vrot.lane.b32.xlu0 %v4521, 32
    %v5407 = vpop.permute.xlu0 %5406
    %5408 = vrot.lane.b32.xlu0 %v4524, 32
    %v5409 = vpop.permute.xlu0 %5408
    %5410 = vrot.lane.b32.xlu0 %v4526, 32
    %v5411 = vpop.permute.xlu0 %5410
    %5412 = vrot.lane.b32.xlu0 %v4529, 32
    %v5413 = vpop.permute.xlu0 %5412
    %5414 = vrot.lane.b32.xlu0 %v4531, 32
    %v5415 = vpop.permute.xlu0 %5414
    %5416 = vrot.lane.b32.xlu0 %v4534, 32
    %v5417 = vpop.permute.xlu0 %5416
    %5418 = vrot.lane.b32.xlu0 %v4536, 32
    %v5419 = vpop.permute.xlu0 %5418
    %5420 = vrot.lane.b32.xlu0 %v4539, 32
    %v5421 = vpop.permute.xlu0 %5420
    %5422 = vrot.lane.b32.xlu0 %v4541, 32
    %v5423 = vpop.permute.xlu0 %5422
    %5424 = vrot.lane.b32.xlu0 %v4544, 32
    %v5425 = vpop.permute.xlu0 %5424
    %5426 = vrot.lane.b32.xlu0 %v4546, 32
    %v5427 = vpop.permute.xlu0 %5426
    %5428 = vrot.lane.b32.xlu0 %v4549, 32
    %v5429 = vpop.permute.xlu0 %5428
    %5430 = vrot.lane.b32.xlu0 %v4551, 32
    %v5431 = vpop.permute.xlu0 %5430
    %5432 = vrot.lane.b32.xlu0 %v4554, 32
    %v5433 = vpop.permute.xlu0 %5432
    %5434 = vrot.lane.b32.xlu0 %v4556, 32
    %v5435 = vpop.permute.xlu0 %5434
    %5436 = vrot.lane.b32.xlu0 %v4559, 32
    %v5437 = vpop.permute.xlu0 %5436
    %5438 = vrot.lane.b32.xlu0 %v4561, 32
    %v5439 = vpop.permute.xlu0 %5438
    %5440 = vrot.lane.b32.xlu0 %v4564, 32
    %v5441 = vpop.permute.xlu0 %5440
    %5442 = vrot.lane.b32.xlu0 %v4566, 32
    %v5443 = vpop.permute.xlu0 %5442
    %5444 = vrot.lane.b32.xlu0 %v4569, 32
    %v5445 = vpop.permute.xlu0 %5444
    %5446 = vrot.lane.b32.xlu0 %v4571, 32
    %v5447 = vpop.permute.xlu0 %5446
    %5448 = vrot.lane.b32.xlu0 %v5321, 32
    %v5449 = vpop.permute.xlu0 %5448
    %5450 = vrot.lane.b32.xlu0 %v5323, 32
    %v5451 = vpop.permute.xlu0 %5450
    %v5516 = vrot.slane %v4256, 2
    %v5517 = vrot.slane %v4257, 2
    %v5518 = vsel %vm793, %v5516, %v5517
    %v5519 = vrot.slane %v4258, 2
    %v5520 = vsel %vm793, %v5517, %v5519
    %v5521 = vrot.slane %v4310, 2
    %v5522 = vrot.slane %v4311, 2
    %v5523 = vsel %vm793, %v5521, %v5522
    %v5524 = vrot.slane %v4312, 2
    %v5525 = vsel %vm793, %v5522, %v5524
    %5526 = vrot.lane.b32.xlu0 %v4771, 40
    %v5527 = vpop.permute.xlu0 %5526
    %5528 = vrot.lane.b32.xlu0 %v4773, 40
    %v5529 = vpop.permute.xlu0 %5528
    %5530 = vrot.lane.b32.xlu0 %v4776, 40
    %v5531 = vpop.permute.xlu0 %5530
    %5532 = vrot.lane.b32.xlu0 %v4778, 40
    %v5533 = vpop.permute.xlu0 %5532
    %5534 = vrot.lane.b32.xlu0 %v4781, 40
    %v5535 = vpop.permute.xlu0 %5534
    %5536 = vrot.lane.b32.xlu0 %v4783, 40
    %v5537 = vpop.permute.xlu0 %5536
    %5538 = vrot.lane.b32.xlu0 %v4786, 40
    %v5539 = vpop.permute.xlu0 %5538
    %5540 = vrot.lane.b32.xlu0 %v4788, 40
    %v5541 = vpop.permute.xlu0 %5540
    %5542 = vrot.lane.b32.xlu0 %v4791, 40
    %v5543 = vpop.permute.xlu0 %5542
    %5544 = vrot.lane.b32.xlu0 %v4793, 40
    %v5545 = vpop.permute.xlu0 %5544
    %5546 = vrot.lane.b32.xlu0 %v4796, 40
    %v5547 = vpop.permute.xlu0 %5546
    %5548 = vrot.lane.b32.xlu0 %v4798, 40
    %v5549 = vpop.permute.xlu0 %5548
    %5550 = vrot.lane.b32.xlu0 %v4801, 40
    %v5551 = vpop.permute.xlu0 %5550
    %5552 = vrot.lane.b32.xlu0 %v4803, 40
    %v5553 = vpop.permute.xlu0 %5552
    %5554 = vrot.lane.b32.xlu0 %v4806, 40
    %v5555 = vpop.permute.xlu0 %5554
    %5556 = vrot.lane.b32.xlu0 %v4808, 40
    %v5557 = vpop.permute.xlu0 %5556
    %5558 = vrot.lane.b32.xlu0 %v4811, 40
    %v5559 = vpop.permute.xlu0 %5558
    %5560 = vrot.lane.b32.xlu0 %v4813, 40
    %v5561 = vpop.permute.xlu0 %5560
    %5562 = vrot.lane.b32.xlu0 %v4816, 40
    %v5563 = vpop.permute.xlu0 %5562
    %5564 = vrot.lane.b32.xlu0 %v4818, 40
    %v5565 = vpop.permute.xlu0 %5564
    %5566 = vrot.lane.b32.xlu0 %v4821, 40
    %v5567 = vpop.permute.xlu0 %5566
    %5568 = vrot.lane.b32.xlu0 %v4823, 40
    %v5569 = vpop.permute.xlu0 %5568
    %5570 = vrot.lane.b32.xlu0 %v4826, 40
    %v5571 = vpop.permute.xlu0 %5570
    %5572 = vrot.lane.b32.xlu0 %v4828, 40
    %v5573 = vpop.permute.xlu0 %5572
    %5574 = vrot.lane.b32.xlu0 %v4831, 40
    %v5575 = vpop.permute.xlu0 %5574
    %5576 = vrot.lane.b32.xlu0 %v4833, 40
    %v5577 = vpop.permute.xlu0 %5576
    %5578 = vrot.lane.b32.xlu0 %v4836, 40
    %v5579 = vpop.permute.xlu0 %5578
    %5580 = vrot.lane.b32.xlu0 %v4838, 40
    %v5581 = vpop.permute.xlu0 %5580
    %5582 = vrot.lane.b32.xlu0 %v4841, 40
    %v5583 = vpop.permute.xlu0 %5582
    %5584 = vrot.lane.b32.xlu0 %v4843, 40
    %v5585 = vpop.permute.xlu0 %5584
    %5586 = vrot.lane.b32.xlu0 %v5518, 40
    %v5587 = vpop.permute.xlu0 %5586
    %5588 = vrot.lane.b32.xlu0 %v5520, 40
    %v5589 = vpop.permute.xlu0 %5588
    %5590 = vrot.lane.b32.xlu0 %v4851, 40
    %v5591 = vpop.permute.xlu0 %5590
    %5592 = vrot.lane.b32.xlu0 %v4853, 40
    %v5593 = vpop.permute.xlu0 %5592
    %5594 = vrot.lane.b32.xlu0 %v4856, 40
    %v5595 = vpop.permute.xlu0 %5594
    %5596 = vrot.lane.b32.xlu0 %v4858, 40
    %v5597 = vpop.permute.xlu0 %5596
    %5598 = vrot.lane.b32.xlu0 %v4861, 40
    %v5599 = vpop.permute.xlu0 %5598
    %5600 = vrot.lane.b32.xlu0 %v4863, 40
    %v5601 = vpop.permute.xlu0 %5600
    %5602 = vrot.lane.b32.xlu0 %v4866, 40
    %v5603 = vpop.permute.xlu0 %5602
    %5604 = vrot.lane.b32.xlu0 %v4868, 40
    %v5605 = vpop.permute.xlu0 %5604
    %5606 = vrot.lane.b32.xlu0 %v4871, 40
    %v5607 = vpop.permute.xlu0 %5606
    %5608 = vrot.lane.b32.xlu0 %v4873, 40
    %v5609 = vpop.permute.xlu0 %5608
    %5610 = vrot.lane.b32.xlu0 %v4876, 40
    %v5611 = vpop.permute.xlu0 %5610
    %5612 = vrot.lane.b32.xlu0 %v4878, 40
    %v5613 = vpop.permute.xlu0 %5612
    %5614 = vrot.lane.b32.xlu0 %v4881, 40
    %v5615 = vpop.permute.xlu0 %5614
    %5616 = vrot.lane.b32.xlu0 %v4883, 40
    %v5617 = vpop.permute.xlu0 %5616
    %5618 = vrot.lane.b32.xlu0 %v4886, 40
    %v5619 = vpop.permute.xlu0 %5618
    %5620 = vrot.lane.b32.xlu0 %v4888, 40
    %v5621 = vpop.permute.xlu0 %5620
    %5622 = vrot.lane.b32.xlu0 %v4891, 40
    %v5623 = vpop.permute.xlu0 %5622
    %5624 = vrot.lane.b32.xlu0 %v4893, 40
    %v5625 = vpop.permute.xlu0 %5624
    %5626 = vrot.lane.b32.xlu0 %v4896, 40
    %v5627 = vpop.permute.xlu0 %5626
    %5628 = vrot.lane.b32.xlu0 %v4898, 40
    %v5629 = vpop.permute.xlu0 %5628
    %5630 = vrot.lane.b32.xlu0 %v4901, 40
    %v5631 = vpop.permute.xlu0 %5630
    %5632 = vrot.lane.b32.xlu0 %v4903, 40
    %v5633 = vpop.permute.xlu0 %5632
    %5634 = vrot.lane.b32.xlu0 %v4906, 40
    %v5635 = vpop.permute.xlu0 %5634
    %5636 = vrot.lane.b32.xlu0 %v4908, 40
    %v5637 = vpop.permute.xlu0 %5636
    %5638 = vrot.lane.b32.xlu0 %v4911, 40
    %v5639 = vpop.permute.xlu0 %5638
    %5640 = vrot.lane.b32.xlu0 %v4913, 40
    %v5641 = vpop.permute.xlu0 %5640
    %5642 = vrot.lane.b32.xlu0 %v4916, 40
    %v5643 = vpop.permute.xlu0 %5642
    %5644 = vrot.lane.b32.xlu0 %v4918, 40
    %v5645 = vpop.permute.xlu0 %5644
    %5646 = vrot.lane.b32.xlu0 %v4921, 40
    %v5647 = vpop.permute.xlu0 %5646
    %5648 = vrot.lane.b32.xlu0 %v4923, 40
    %v5649 = vpop.permute.xlu0 %5648
    %5650 = vrot.lane.b32.xlu0 %v5523, 40
    %v5651 = vpop.permute.xlu0 %5650
    %5652 = vrot.lane.b32.xlu0 %v5525, 40
    %v5653 = vpop.permute.xlu0 %5652
    %5722 = vrot.lane.b32.xlu0 %v4214, 48
    %v5723 = vpop.permute.xlu0 %5722
    %5724 = vrot.lane.b32.xlu0 %v4215, 48
    %v5725 = vpop.permute.xlu0 %5724
    %5726 = vrot.lane.b32.xlu0 %v4217, 48
    %v5727 = vpop.permute.xlu0 %5726
    %5728 = vrot.lane.b32.xlu0 %v4218, 48
    %v5729 = vpop.permute.xlu0 %5728
    %5730 = vrot.lane.b32.xlu0 %v4220, 48
    %v5731 = vpop.permute.xlu0 %5730
    %5732 = vrot.lane.b32.xlu0 %v4221, 48
    %v5733 = vpop.permute.xlu0 %5732
    %5734 = vrot.lane.b32.xlu0 %v4223, 48
    %v5735 = vpop.permute.xlu0 %5734
    %5736 = vrot.lane.b32.xlu0 %v4224, 48
    %v5737 = vpop.permute.xlu0 %5736
    %5738 = vrot.lane.b32.xlu0 %v4226, 48
    %v5739 = vpop.permute.xlu0 %5738
    %5740 = vrot.lane.b32.xlu0 %v4227, 48
    %v5741 = vpop.permute.xlu0 %5740
    %5742 = vrot.lane.b32.xlu0 %v4229, 48
    %v5743 = vpop.permute.xlu0 %5742
    %5744 = vrot.lane.b32.xlu0 %v4230, 48
    %v5745 = vpop.permute.xlu0 %5744
    %5746 = vrot.lane.b32.xlu0 %v4232, 48
    %v5747 = vpop.permute.xlu0 %5746
    %5748 = vrot.lane.b32.xlu0 %v4233, 48
    %v5749 = vpop.permute.xlu0 %5748
    %5750 = vrot.lane.b32.xlu0 %v4235, 48
    %v5751 = vpop.permute.xlu0 %5750
    %5752 = vrot.lane.b32.xlu0 %v4236, 48
    %v5753 = vpop.permute.xlu0 %5752
    %5754 = vrot.lane.b32.xlu0 %v4238, 48
    %v5755 = vpop.permute.xlu0 %5754
    %5756 = vrot.lane.b32.xlu0 %v4239, 48
    %v5757 = vpop.permute.xlu0 %5756
    %5758 = vrot.lane.b32.xlu0 %v4241, 48
    %v5759 = vpop.permute.xlu0 %5758
    %5760 = vrot.lane.b32.xlu0 %v4242, 48
    %v5761 = vpop.permute.xlu0 %5760
    %5762 = vrot.lane.b32.xlu0 %v4244, 48
    %v5763 = vpop.permute.xlu0 %5762
    %5764 = vrot.lane.b32.xlu0 %v4245, 48
    %v5765 = vpop.permute.xlu0 %5764
    %5766 = vrot.lane.b32.xlu0 %v4247, 48
    %v5767 = vpop.permute.xlu0 %5766
    %5768 = vrot.lane.b32.xlu0 %v4248, 48
    %v5769 = vpop.permute.xlu0 %5768
    %5770 = vrot.lane.b32.xlu0 %v4250, 48
    %v5771 = vpop.permute.xlu0 %5770
    %5772 = vrot.lane.b32.xlu0 %v4251, 48
    %v5773 = vpop.permute.xlu0 %5772
    %5774 = vrot.lane.b32.xlu0 %v4253, 48
    %v5775 = vpop.permute.xlu0 %5774
    %5776 = vrot.lane.b32.xlu0 %v4254, 48
    %v5777 = vpop.permute.xlu0 %5776
    %5778 = vrot.lane.b32.xlu0 %v4256, 48
    %v5779 = vpop.permute.xlu0 %5778
    %5780 = vrot.lane.b32.xlu0 %v4257, 48
    %v5781 = vpop.permute.xlu0 %5780
    %5782 = vrot.lane.b32.xlu0 %v4259, 48
    %v5783 = vpop.permute.xlu0 %5782
    %5784 = vrot.lane.b32.xlu0 %v4260, 48
    %v5785 = vpop.permute.xlu0 %5784
    %5786 = vrot.lane.b32.xlu0 %v4268, 48
    %v5787 = vpop.permute.xlu0 %5786
    %5788 = vrot.lane.b32.xlu0 %v4269, 48
    %v5789 = vpop.permute.xlu0 %5788
    %5790 = vrot.lane.b32.xlu0 %v4271, 48
    %v5791 = vpop.permute.xlu0 %5790
    %5792 = vrot.lane.b32.xlu0 %v4272, 48
    %v5793 = vpop.permute.xlu0 %5792
    %5794 = vrot.lane.b32.xlu0 %v4274, 48
    %v5795 = vpop.permute.xlu0 %5794
    %5796 = vrot.lane.b32.xlu0 %v4275, 48
    %v5797 = vpop.permute.xlu0 %5796
    %5798 = vrot.lane.b32.xlu0 %v4277, 48
    %v5799 = vpop.permute.xlu0 %5798
    %5800 = vrot.lane.b32.xlu0 %v4278, 48
    %v5801 = vpop.permute.xlu0 %5800
    %5802 = vrot.lane.b32.xlu0 %v4280, 48
    %v5803 = vpop.permute.xlu0 %5802
    %5804 = vrot.lane.b32.xlu0 %v4281, 48
    %v5805 = vpop.permute.xlu0 %5804
    %5806 = vrot.lane.b32.xlu0 %v4283, 48
    %v5807 = vpop.permute.xlu0 %5806
    %5808 = vrot.lane.b32.xlu0 %v4284, 48
    %v5809 = vpop.permute.xlu0 %5808
    %5810 = vrot.lane.b32.xlu0 %v4286, 48
    %v5811 = vpop.permute.xlu0 %5810
    %5812 = vrot.lane.b32.xlu0 %v4287, 48
    %v5813 = vpop.permute.xlu0 %5812
    %5814 = vrot.lane.b32.xlu0 %v4289, 48
    %v5815 = vpop.permute.xlu0 %5814
    %5816 = vrot.lane.b32.xlu0 %v4290, 48
    %v5817 = vpop.permute.xlu0 %5816
    %5818 = vrot.lane.b32.xlu0 %v4292, 48
    %v5819 = vpop.permute.xlu0 %5818
    %5820 = vrot.lane.b32.xlu0 %v4293, 48
    %v5821 = vpop.permute.xlu0 %5820
    %5822 = vrot.lane.b32.xlu0 %v4295, 48
    %v5823 = vpop.permute.xlu0 %5822
    %5824 = vrot.lane.b32.xlu0 %v4296, 48
    %v5825 = vpop.permute.xlu0 %5824
    %5826 = vrot.lane.b32.xlu0 %v4298, 48
    %v5827 = vpop.permute.xlu0 %5826
    %5828 = vrot.lane.b32.xlu0 %v4299, 48
    %v5829 = vpop.permute.xlu0 %5828
    %5830 = vrot.lane.b32.xlu0 %v4301, 48
    %v5831 = vpop.permute.xlu0 %5830
    %5832 = vrot.lane.b32.xlu0 %v4302, 48
    %v5833 = vpop.permute.xlu0 %5832
    %5834 = vrot.lane.b32.xlu0 %v4304, 48
    %v5835 = vpop.permute.xlu0 %5834
    %5836 = vrot.lane.b32.xlu0 %v4305, 48
    %v5837 = vpop.permute.xlu0 %5836
    %5838 = vrot.lane.b32.xlu0 %v4307, 48
    %v5839 = vpop.permute.xlu0 %5838
    %5840 = vrot.lane.b32.xlu0 %v4308, 48
    %v5841 = vpop.permute.xlu0 %5840
    %5842 = vrot.lane.b32.xlu0 %v4310, 48
    %v5843 = vpop.permute.xlu0 %5842
    %5844 = vrot.lane.b32.xlu0 %v4311, 48
    %v5845 = vpop.permute.xlu0 %5844
    %5846 = vrot.lane.b32.xlu0 %v4313, 48
    %v5847 = vpop.permute.xlu0 %5846
    %5848 = vrot.lane.b32.xlu0 %v4314, 48
    %v5849 = vpop.permute.xlu0 %5848
    %v5916 = vrot.slane %v4259, 1
    %v5917 = vrot.slane %v4260, 1
    %v5918 = vsel %vm440, %v5916, %v5917
    %v5919 = vrot.slane %v4261, 1
    %v5920 = vsel %vm440, %v5917, %v5919
    %v5921 = vrot.slane %v4313, 1
    %v5922 = vrot.slane %v4314, 1
    %v5923 = vsel %vm440, %v5921, %v5922
    %v5924 = vrot.slane %v4315, 1
    %v5925 = vsel %vm440, %v5922, %v5924
    %5926 = vrot.lane.b32.xlu0 %v4424, 56
    %v5927 = vpop.permute.xlu0 %5926
    %5928 = vrot.lane.b32.xlu0 %v4426, 56
    %v5929 = vpop.permute.xlu0 %5928
    %5930 = vrot.lane.b32.xlu0 %v4429, 56
    %v5931 = vpop.permute.xlu0 %5930
    %5932 = vrot.lane.b32.xlu0 %v4431, 56
    %v5933 = vpop.permute.xlu0 %5932
    %5934 = vrot.lane.b32.xlu0 %v4434, 56
    %v5935 = vpop.permute.xlu0 %5934
    %5936 = vrot.lane.b32.xlu0 %v4436, 56
    %v5937 = vpop.permute.xlu0 %5936
    %5938 = vrot.lane.b32.xlu0 %v4439, 56
    %v5939 = vpop.permute.xlu0 %5938
    %5940 = vrot.lane.b32.xlu0 %v4441, 56
    %v5941 = vpop.permute.xlu0 %5940
    %5942 = vrot.lane.b32.xlu0 %v4444, 56
    %v5943 = vpop.permute.xlu0 %5942
    %5944 = vrot.lane.b32.xlu0 %v4446, 56
    %v5945 = vpop.permute.xlu0 %5944
    %5946 = vrot.lane.b32.xlu0 %v4449, 56
    %v5947 = vpop.permute.xlu0 %5946
    %5948 = vrot.lane.b32.xlu0 %v4451, 56
    %v5949 = vpop.permute.xlu0 %5948
    %5950 = vrot.lane.b32.xlu0 %v4454, 56
    %v5951 = vpop.permute.xlu0 %5950
    %5952 = vrot.lane.b32.xlu0 %v4456, 56
    %v5953 = vpop.permute.xlu0 %5952
    %5954 = vrot.lane.b32.xlu0 %v4459, 56
    %v5955 = vpop.permute.xlu0 %5954
    %5956 = vrot.lane.b32.xlu0 %v4461, 56
    %v5957 = vpop.permute.xlu0 %5956
    %5958 = vrot.lane.b32.xlu0 %v4464, 56
    %v5959 = vpop.permute.xlu0 %5958
    %5960 = vrot.lane.b32.xlu0 %v4466, 56
    %v5961 = vpop.permute.xlu0 %5960
    %5962 = vrot.lane.b32.xlu0 %v4469, 56
    %v5963 = vpop.permute.xlu0 %5962
    %5964 = vrot.lane.b32.xlu0 %v4471, 56
    %v5965 = vpop.permute.xlu0 %5964
    %5966 = vrot.lane.b32.xlu0 %v4474, 56
    %v5967 = vpop.permute.xlu0 %5966
    %5968 = vrot.lane.b32.xlu0 %v4476, 56
    %v5969 = vpop.permute.xlu0 %5968
    %5970 = vrot.lane.b32.xlu0 %v4479, 56
    %v5971 = vpop.permute.xlu0 %5970
    %5972 = vrot.lane.b32.xlu0 %v4481, 56
    %v5973 = vpop.permute.xlu0 %5972
    %5974 = vrot.lane.b32.xlu0 %v4484, 56
    %v5975 = vpop.permute.xlu0 %5974
    %5976 = vrot.lane.b32.xlu0 %v4486, 56
    %v5977 = vpop.permute.xlu0 %5976
    %5978 = vrot.lane.b32.xlu0 %v4489, 56
    %v5979 = vpop.permute.xlu0 %5978
    %5980 = vrot.lane.b32.xlu0 %v4491, 56
    %v5981 = vpop.permute.xlu0 %5980
    %5982 = vrot.lane.b32.xlu0 %v5316, 56
    %v5983 = vpop.permute.xlu0 %5982
    %5984 = vrot.lane.b32.xlu0 %v5318, 56
    %v5985 = vpop.permute.xlu0 %5984
    %5986 = vrot.lane.b32.xlu0 %v5918, 56
    %v5987 = vpop.permute.xlu0 %5986
    %5988 = vrot.lane.b32.xlu0 %v5920, 56
    %v5989 = vpop.permute.xlu0 %5988
    %5990 = vrot.lane.b32.xlu0 %v4504, 56
    %v5991 = vpop.permute.xlu0 %5990
    %5992 = vrot.lane.b32.xlu0 %v4506, 56
    %v5993 = vpop.permute.xlu0 %5992
    %5994 = vrot.lane.b32.xlu0 %v4509, 56
    %v5995 = vpop.permute.xlu0 %5994
    %5996 = vrot.lane.b32.xlu0 %v4511, 56
    %v5997 = vpop.permute.xlu0 %5996
    %5998 = vrot.lane.b32.xlu0 %v4514, 56
    %v5999 = vpop.permute.xlu0 %5998
    %6000 = vrot.lane.b32.xlu0 %v4516, 56
    %v6001 = vpop.permute.xlu0 %6000
    %6002 = vrot.lane.b32.xlu0 %v4519, 56
    %v6003 = vpop.permute.xlu0 %6002
    %6004 = vrot.lane.b32.xlu0 %v4521, 56
    %v6005 = vpop.permute.xlu0 %6004
    %6006 = vrot.lane.b32.xlu0 %v4524, 56
    %v6007 = vpop.permute.xlu0 %6006
    %6008 = vrot.lane.b32.xlu0 %v4526, 56
    %v6009 = vpop.permute.xlu0 %6008
    %6010 = vrot.lane.b32.xlu0 %v4529, 56
    %v6011 = vpop.permute.xlu0 %6010
    %6012 = vrot.lane.b32.xlu0 %v4531, 56
    %v6013 = vpop.permute.xlu0 %6012
    %6014 = vrot.lane.b32.xlu0 %v4534, 56
    %v6015 = vpop.permute.xlu0 %6014
    %6016 = vrot.lane.b32.xlu0 %v4536, 56
    %v6017 = vpop.permute.xlu0 %6016
    %6018 = vrot.lane.b32.xlu0 %v4539, 56
    %v6019 = vpop.permute.xlu0 %6018
    %6020 = vrot.lane.b32.xlu0 %v4541, 56
    %v6021 = vpop.permute.xlu0 %6020
    %6022 = vrot.lane.b32.xlu0 %v4544, 56
    %v6023 = vpop.permute.xlu0 %6022
    %6024 = vrot.lane.b32.xlu0 %v4546, 56
    %v6025 = vpop.permute.xlu0 %6024
    %6026 = vrot.lane.b32.xlu0 %v4549, 56
    %v6027 = vpop.permute.xlu0 %6026
    %6028 = vrot.lane.b32.xlu0 %v4551, 56
    %v6029 = vpop.permute.xlu0 %6028
    %6030 = vrot.lane.b32.xlu0 %v4554, 56
    %v6031 = vpop.permute.xlu0 %6030
    %6032 = vrot.lane.b32.xlu0 %v4556, 56
    %v6033 = vpop.permute.xlu0 %6032
    %6034 = vrot.lane.b32.xlu0 %v4559, 56
    %v6035 = vpop.permute.xlu0 %6034
    %6036 = vrot.lane.b32.xlu0 %v4561, 56
    %v6037 = vpop.permute.xlu0 %6036
    %6038 = vrot.lane.b32.xlu0 %v4564, 56
    %v6039 = vpop.permute.xlu0 %6038
    %6040 = vrot.lane.b32.xlu0 %v4566, 56
    %v6041 = vpop.permute.xlu0 %6040
    %6042 = vrot.lane.b32.xlu0 %v4569, 56
    %v6043 = vpop.permute.xlu0 %6042
    %6044 = vrot.lane.b32.xlu0 %v4571, 56
    %v6045 = vpop.permute.xlu0 %6044
    %6046 = vrot.lane.b32.xlu0 %v5321, 56
    %v6047 = vpop.permute.xlu0 %6046
    %6048 = vrot.lane.b32.xlu0 %v5323, 56
    %v6049 = vpop.permute.xlu0 %6048
    %6050 = vrot.lane.b32.xlu0 %v5923, 56
    %v6051 = vpop.permute.xlu0 %6050
    %6052 = vrot.lane.b32.xlu0 %v5925, 56
    %v6053 = vpop.permute.xlu0 %6052
    %v6118 = vrot.slane %v4259, 2
    %v6119 = vrot.slane %v4260, 2
    %v6120 = vsel %vm793, %v6118, %v6119
    %v6121 = vrot.slane %v4261, 2
    %v6122 = vsel %vm793, %v6119, %v6121
    %v6123 = vrot.slane %v4313, 2
    %v6124 = vrot.slane %v4314, 2
    %v6125 = vsel %vm793, %v6123, %v6124
    %v6126 = vrot.slane %v4315, 2
    %v6127 = vsel %vm793, %v6124, %v6126
    %6128 = vrot.lane.b32.xlu0 %v4776, 64
    %v6129 = vpop.permute.xlu0 %6128
    %6130 = vrot.lane.b32.xlu0 %v4778, 64
    %v6131 = vpop.permute.xlu0 %6130
    %6132 = vrot.lane.b32.xlu0 %v4781, 64
    %v6133 = vpop.permute.xlu0 %6132
    %6134 = vrot.lane.b32.xlu0 %v4783, 64
    %v6135 = vpop.permute.xlu0 %6134
    %6136 = vrot.lane.b32.xlu0 %v4786, 64
    %v6137 = vpop.permute.xlu0 %6136
    %6138 = vrot.lane.b32.xlu0 %v4788, 64
    %v6139 = vpop.permute.xlu0 %6138
    %6140 = vrot.lane.b32.xlu0 %v4791, 64
    %v6141 = vpop.permute.xlu0 %6140
    %6142 = vrot.lane.b32.xlu0 %v4793, 64
    %v6143 = vpop.permute.xlu0 %6142
    %6144 = vrot.lane.b32.xlu0 %v4796, 64
    %v6145 = vpop.permute.xlu0 %6144
    %6146 = vrot.lane.b32.xlu0 %v4798, 64
    %v6147 = vpop.permute.xlu0 %6146
    %6148 = vrot.lane.b32.xlu0 %v4801, 64
    %v6149 = vpop.permute.xlu0 %6148
    %6150 = vrot.lane.b32.xlu0 %v4803, 64
    %v6151 = vpop.permute.xlu0 %6150
    %6152 = vrot.lane.b32.xlu0 %v4806, 64
    %v6153 = vpop.permute.xlu0 %6152
    %6154 = vrot.lane.b32.xlu0 %v4808, 64
    %v6155 = vpop.permute.xlu0 %6154
    %6156 = vrot.lane.b32.xlu0 %v4811, 64
    %v6157 = vpop.permute.xlu0 %6156
    %6158 = vrot.lane.b32.xlu0 %v4813, 64
    %v6159 = vpop.permute.xlu0 %6158
    %6160 = vrot.lane.b32.xlu0 %v4816, 64
    %v6161 = vpop.permute.xlu0 %6160
    %6162 = vrot.lane.b32.xlu0 %v4818, 64
    %v6163 = vpop.permute.xlu0 %6162
    %6164 = vrot.lane.b32.xlu0 %v4821, 64
    %v6165 = vpop.permute.xlu0 %6164
    %6166 = vrot.lane.b32.xlu0 %v4823, 64
    %v6167 = vpop.permute.xlu0 %6166
    %6168 = vrot.lane.b32.xlu0 %v4826, 64
    %v6169 = vpop.permute.xlu0 %6168
    %6170 = vrot.lane.b32.xlu0 %v4828, 64
    %v6171 = vpop.permute.xlu0 %6170
    %6172 = vrot.lane.b32.xlu0 %v4831, 64
    %v6173 = vpop.permute.xlu0 %6172
    %6174 = vrot.lane.b32.xlu0 %v4833, 64
    %v6175 = vpop.permute.xlu0 %6174
    %6176 = vrot.lane.b32.xlu0 %v4836, 64
    %v6177 = vpop.permute.xlu0 %6176
    %6178 = vrot.lane.b32.xlu0 %v4838, 64
    %v6179 = vpop.permute.xlu0 %6178
    %6180 = vrot.lane.b32.xlu0 %v4841, 64
    %v6181 = vpop.permute.xlu0 %6180
    %6182 = vrot.lane.b32.xlu0 %v4843, 64
    %v6183 = vpop.permute.xlu0 %6182
    %6184 = vrot.lane.b32.xlu0 %v5518, 64
    %v6185 = vpop.permute.xlu0 %6184
    %6186 = vrot.lane.b32.xlu0 %v5520, 64
    %v6187 = vpop.permute.xlu0 %6186
    %6188 = vrot.lane.b32.xlu0 %v6120, 64
    %v6189 = vpop.permute.xlu0 %6188
    %6190 = vrot.lane.b32.xlu0 %v6122, 64
    %v6191 = vpop.permute.xlu0 %6190
    %6192 = vrot.lane.b32.xlu0 %v4856, 64
    %v6193 = vpop.permute.xlu0 %6192
    %6194 = vrot.lane.b32.xlu0 %v4858, 64
    %v6195 = vpop.permute.xlu0 %6194
    %6196 = vrot.lane.b32.xlu0 %v4861, 64
    %v6197 = vpop.permute.xlu0 %6196
    %6198 = vrot.lane.b32.xlu0 %v4863, 64
    %v6199 = vpop.permute.xlu0 %6198
    %6200 = vrot.lane.b32.xlu0 %v4866, 64
    %v6201 = vpop.permute.xlu0 %6200
    %6202 = vrot.lane.b32.xlu0 %v4868, 64
    %v6203 = vpop.permute.xlu0 %6202
    %6204 = vrot.lane.b32.xlu0 %v4871, 64
    %v6205 = vpop.permute.xlu0 %6204
    %6206 = vrot.lane.b32.xlu0 %v4873, 64
    %v6207 = vpop.permute.xlu0 %6206
    %6208 = vrot.lane.b32.xlu0 %v4876, 64
    %v6209 = vpop.permute.xlu0 %6208
    %6210 = vrot.lane.b32.xlu0 %v4878, 64
    %v6211 = vpop.permute.xlu0 %6210
    %6212 = vrot.lane.b32.xlu0 %v4881, 64
    %v6213 = vpop.permute.xlu0 %6212
    %6214 = vrot.lane.b32.xlu0 %v4883, 64
    %v6215 = vpop.permute.xlu0 %6214
    %6216 = vrot.lane.b32.xlu0 %v4886, 64
    %v6217 = vpop.permute.xlu0 %6216
    %6218 = vrot.lane.b32.xlu0 %v4888, 64
    %v6219 = vpop.permute.xlu0 %6218
    %6220 = vrot.lane.b32.xlu0 %v4891, 64
    %v6221 = vpop.permute.xlu0 %6220
    %6222 = vrot.lane.b32.xlu0 %v4893, 64
    %v6223 = vpop.permute.xlu0 %6222
    %6224 = vrot.lane.b32.xlu0 %v4896, 64
    %v6225 = vpop.permute.xlu0 %6224
    %6226 = vrot.lane.b32.xlu0 %v4898, 64
    %v6227 = vpop.permute.xlu0 %6226
    %6228 = vrot.lane.b32.xlu0 %v4901, 64
    %v6229 = vpop.permute.xlu0 %6228
    %6230 = vrot.lane.b32.xlu0 %v4903, 64
    %v6231 = vpop.permute.xlu0 %6230
    %6232 = vrot.lane.b32.xlu0 %v4906, 64
    %v6233 = vpop.permute.xlu0 %6232
    %6234 = vrot.lane.b32.xlu0 %v4908, 64
    %v6235 = vpop.permute.xlu0 %6234
    %6236 = vrot.lane.b32.xlu0 %v4911, 64
    %v6237 = vpop.permute.xlu0 %6236
    %6238 = vrot.lane.b32.xlu0 %v4913, 64
    %v6239 = vpop.permute.xlu0 %6238
    %6240 = vrot.lane.b32.xlu0 %v4916, 64
    %v6241 = vpop.permute.xlu0 %6240
    %6242 = vrot.lane.b32.xlu0 %v4918, 64
    %v6243 = vpop.permute.xlu0 %6242
    %6244 = vrot.lane.b32.xlu0 %v4921, 64
    %v6245 = vpop.permute.xlu0 %6244
    %6246 = vrot.lane.b32.xlu0 %v4923, 64
    %v6247 = vpop.permute.xlu0 %6246
    %6248 = vrot.lane.b32.xlu0 %v5523, 64
    %v6249 = vpop.permute.xlu0 %6248
    %6250 = vrot.lane.b32.xlu0 %v5525, 64
    %v6251 = vpop.permute.xlu0 %6250
    %6252 = vrot.lane.b32.xlu0 %v6125, 64
    %v6253 = vpop.permute.xlu0 %6252
    %6254 = vrot.lane.b32.xlu0 %v6127, 64
    %v6255 = vpop.permute.xlu0 %6254
    %v6320 = vsel %vm2414, %v4208, %v4573
    %v6321 = vsel %vm2414, %v4209, %v4575
    %v6322 = vsel %vm2414, %v4211, %v4577
    %v6323 = vsel %vm2414, %v4212, %v4579
    %v6324 = vsel %vm2414, %v4214, %v4581
    %v6325 = vsel %vm2414, %v4215, %v4583
    %v6326 = vsel %vm2414, %v4217, %v4585
    %v6327 = vsel %vm2414, %v4218, %v4587
    %v6328 = vsel %vm2414, %v4220, %v4589
    %v6329 = vsel %vm2414, %v4221, %v4591
    %v6330 = vsel %vm2414, %v4223, %v4593
    %v6331 = vsel %vm2414, %v4224, %v4595
    %v6332 = vsel %vm2414, %v4226, %v4597
    %v6333 = vsel %vm2414, %v4227, %v4599
    %v6334 = vsel %vm2414, %v4229, %v4601
    %v6335 = vsel %vm2414, %v4230, %v4603
    %v6336 = vsel %vm2414, %v4232, %v4605
    %v6337 = vsel %vm2414, %v4233, %v4607
    %v6338 = vsel %vm2414, %v4235, %v4609
    %v6339 = vsel %vm2414, %v4236, %v4611
    %v6340 = vsel %vm2414, %v4238, %v4613
    %v6341 = vsel %vm2414, %v4239, %v4615
    %v6342 = vsel %vm2414, %v4241, %v4617
    %v6343 = vsel %vm2414, %v4242, %v4619
    %v6344 = vsel %vm2414, %v4244, %v4621
    %v6345 = vsel %vm2414, %v4245, %v4623
    %v6346 = vsel %vm2414, %v4247, %v4625
    %v6347 = vsel %vm2414, %v4248, %v4627
    %v6348 = vsel %vm2414, %v4250, %v4629
    %v6349 = vsel %vm2414, %v4251, %v4631
    %v6350 = vsel %vm2414, %v4253, %v4633
    %v6351 = vsel %vm2414, %v4254, %v4635
    %v6352 = vsel %vm2414, %v4262, %v4637
    %v6353 = vsel %vm2414, %v4263, %v4639
    %v6354 = vsel %vm2414, %v4265, %v4641
    %v6355 = vsel %vm2414, %v4266, %v4643
    %v6356 = vsel %vm2414, %v4268, %v4645
    %v6357 = vsel %vm2414, %v4269, %v4647
    %v6358 = vsel %vm2414, %v4271, %v4649
    %v6359 = vsel %vm2414, %v4272, %v4651
    %v6360 = vsel %vm2414, %v4274, %v4653
    %v6361 = vsel %vm2414, %v4275, %v4655
    %v6362 = vsel %vm2414, %v4277, %v4657
    %v6363 = vsel %vm2414, %v4278, %v4659
    %v6364 = vsel %vm2414, %v4280, %v4661
    %v6365 = vsel %vm2414, %v4281, %v4663
    %v6366 = vsel %vm2414, %v4283, %v4665
    %v6367 = vsel %vm2414, %v4284, %v4667
    %v6368 = vsel %vm2414, %v4286, %v4669
    %v6369 = vsel %vm2414, %v4287, %v4671
    %v6370 = vsel %vm2414, %v4289, %v4673
    %v6371 = vsel %vm2414, %v4290, %v4675
    %v6372 = vsel %vm2414, %v4292, %v4677
    %v6373 = vsel %vm2414, %v4293, %v4679
    %v6374 = vsel %vm2414, %v4295, %v4681
    %v6375 = vsel %vm2414, %v4296, %v4683
    %v6376 = vsel %vm2414, %v4298, %v4685
    %v6377 = vsel %vm2414, %v4299, %v4687
    %v6378 = vsel %vm2414, %v4301, %v4689
    %v6379 = vsel %vm2414, %v4302, %v4691
    %v6380 = vsel %vm2414, %v4304, %v4693
    %v6381 = vsel %vm2414, %v4305, %v4695
    %v6382 = vsel %vm2414, %v4307, %v4697
    %v6383 = vsel %vm2414, %v4308, %v4699
    %v6384 = vsel %vm2544, %v6320, %v4925
    %v6385 = vsel %vm2544, %v6321, %v4927
    %v6386 = vsel %vm2544, %v6322, %v4929
    %v6387 = vsel %vm2544, %v6323, %v4931
    %v6388 = vsel %vm2544, %v6324, %v4933
    %v6389 = vsel %vm2544, %v6325, %v4935
    %v6390 = vsel %vm2544, %v6326, %v4937
    %v6391 = vsel %vm2544, %v6327, %v4939
    %v6392 = vsel %vm2544, %v6328, %v4941
    %v6393 = vsel %vm2544, %v6329, %v4943
    %v6394 = vsel %vm2544, %v6330, %v4945
    %v6395 = vsel %vm2544, %v6331, %v4947
    %v6396 = vsel %vm2544, %v6332, %v4949
    %v6397 = vsel %vm2544, %v6333, %v4951
    %v6398 = vsel %vm2544, %v6334, %v4953
    %v6399 = vsel %vm2544, %v6335, %v4955
    %v6400 = vsel %vm2544, %v6336, %v4957
    %v6401 = vsel %vm2544, %v6337, %v4959
    %v6402 = vsel %vm2544, %v6338, %v4961
    %v6403 = vsel %vm2544, %v6339, %v4963
    %v6404 = vsel %vm2544, %v6340, %v4965
    %v6405 = vsel %vm2544, %v6341, %v4967
    %v6406 = vsel %vm2544, %v6342, %v4969
    %v6407 = vsel %vm2544, %v6343, %v4971
    %v6408 = vsel %vm2544, %v6344, %v4973
    %v6409 = vsel %vm2544, %v6345, %v4975
    %v6410 = vsel %vm2544, %v6346, %v4977
    %v6411 = vsel %vm2544, %v6347, %v4979
    %v6412 = vsel %vm2544, %v6348, %v4981
    %v6413 = vsel %vm2544, %v6349, %v4983
    %v6414 = vsel %vm2544, %v6350, %v4985
    %v6415 = vsel %vm2544, %v6351, %v4987
    %v6416 = vsel %vm2544, %v6352, %v4989
    %v6417 = vsel %vm2544, %v6353, %v4991
    %v6418 = vsel %vm2544, %v6354, %v4993
    %v6419 = vsel %vm2544, %v6355, %v4995
    %v6420 = vsel %vm2544, %v6356, %v4997
    %v6421 = vsel %vm2544, %v6357, %v4999
    %v6422 = vsel %vm2544, %v6358, %v5001
    %v6423 = vsel %vm2544, %v6359, %v5003
    %v6424 = vsel %vm2544, %v6360, %v5005
    %v6425 = vsel %vm2544, %v6361, %v5007
    %v6426 = vsel %vm2544, %v6362, %v5009
    %v6427 = vsel %vm2544, %v6363, %v5011
    %v6428 = vsel %vm2544, %v6364, %v5013
    %v6429 = vsel %vm2544, %v6365, %v5015
    %v6430 = vsel %vm2544, %v6366, %v5017
    %v6431 = vsel %vm2544, %v6367, %v5019
    %v6432 = vsel %vm2544, %v6368, %v5021
    %v6433 = vsel %vm2544, %v6369, %v5023
    %v6434 = vsel %vm2544, %v6370, %v5025
    %v6435 = vsel %vm2544, %v6371, %v5027
    %v6436 = vsel %vm2544, %v6372, %v5029
    %v6437 = vsel %vm2544, %v6373, %v5031
    %v6438 = vsel %vm2544, %v6374, %v5033
    %v6439 = vsel %vm2544, %v6375, %v5035
    %v6440 = vsel %vm2544, %v6376, %v5037
    %v6441 = vsel %vm2544, %v6377, %v5039
    %v6442 = vsel %vm2544, %v6378, %v5041
    %v6443 = vsel %vm2544, %v6379, %v5043
    %v6444 = vsel %vm2544, %v6380, %v5045
    %v6445 = vsel %vm2544, %v6381, %v5047
    %v6446 = vsel %vm2544, %v6382, %v5049
    %v6447 = vsel %vm2544, %v6383, %v5051
    %v6448 = vsel %vm2674, %v6384, %v5121
    %v6449 = vsel %vm2674, %v6385, %v5123
    %v6450 = vsel %vm2674, %v6386, %v5125
    %v6451 = vsel %vm2674, %v6387, %v5127
    %v6452 = vsel %vm2674, %v6388, %v5129
    %v6453 = vsel %vm2674, %v6389, %v5131
    %v6454 = vsel %vm2674, %v6390, %v5133
    %v6455 = vsel %vm2674, %v6391, %v5135
    %v6456 = vsel %vm2674, %v6392, %v5137
    %v6457 = vsel %vm2674, %v6393, %v5139
    %v6458 = vsel %vm2674, %v6394, %v5141
    %v6459 = vsel %vm2674, %v6395, %v5143
    %v6460 = vsel %vm2674, %v6396, %v5145
    %v6461 = vsel %vm2674, %v6397, %v5147
    %v6462 = vsel %vm2674, %v6398, %v5149
    %v6463 = vsel %vm2674, %v6399, %v5151
    %v6464 = vsel %vm2674, %v6400, %v5153
    %v6465 = vsel %vm2674, %v6401, %v5155
    %v6466 = vsel %vm2674, %v6402, %v5157
    %v6467 = vsel %vm2674, %v6403, %v5159
    %v6468 = vsel %vm2674, %v6404, %v5161
    %v6469 = vsel %vm2674, %v6405, %v5163
    %v6470 = vsel %vm2674, %v6406, %v5165
    %v6471 = vsel %vm2674, %v6407, %v5167
    %v6472 = vsel %vm2674, %v6408, %v5169
    %v6473 = vsel %vm2674, %v6409, %v5171
    %v6474 = vsel %vm2674, %v6410, %v5173
    %v6475 = vsel %vm2674, %v6411, %v5175
    %v6476 = vsel %vm2674, %v6412, %v5177
    %v6477 = vsel %vm2674, %v6413, %v5179
    %v6478 = vsel %vm2674, %v6414, %v5181
    %v6479 = vsel %vm2674, %v6415, %v5183
    %v6480 = vsel %vm2674, %v6416, %v5185
    %v6481 = vsel %vm2674, %v6417, %v5187
    %v6482 = vsel %vm2674, %v6418, %v5189
    %v6483 = vsel %vm2674, %v6419, %v5191
    %v6484 = vsel %vm2674, %v6420, %v5193
    %v6485 = vsel %vm2674, %v6421, %v5195
    %v6486 = vsel %vm2674, %v6422, %v5197
    %v6487 = vsel %vm2674, %v6423, %v5199
    %v6488 = vsel %vm2674, %v6424, %v5201
    %v6489 = vsel %vm2674, %v6425, %v5203
    %v6490 = vsel %vm2674, %v6426, %v5205
    %v6491 = vsel %vm2674, %v6427, %v5207
    %v6492 = vsel %vm2674, %v6428, %v5209
    %v6493 = vsel %vm2674, %v6429, %v5211
    %v6494 = vsel %vm2674, %v6430, %v5213
    %v6495 = vsel %vm2674, %v6431, %v5215
    %v6496 = vsel %vm2674, %v6432, %v5217
    %v6497 = vsel %vm2674, %v6433, %v5219
    %v6498 = vsel %vm2674, %v6434, %v5221
    %v6499 = vsel %vm2674, %v6435, %v5223
    %v6500 = vsel %vm2674, %v6436, %v5225
    %v6501 = vsel %vm2674, %v6437, %v5227
    %v6502 = vsel %vm2674, %v6438, %v5229
    %v6503 = vsel %vm2674, %v6439, %v5231
    %v6504 = vsel %vm2674, %v6440, %v5233
    %v6505 = vsel %vm2674, %v6441, %v5235
    %v6506 = vsel %vm2674, %v6442, %v5237
    %v6507 = vsel %vm2674, %v6443, %v5239
    %v6508 = vsel %vm2674, %v6444, %v5241
    %v6509 = vsel %vm2674, %v6445, %v5243
    %v6510 = vsel %vm2674, %v6446, %v5245
    %v6511 = vsel %vm2674, %v6447, %v5247
    %v6512 = vsel %vm2804, %v6448, %v5325
    %v6513 = vsel %vm2804, %v6449, %v5327
    %v6514 = vsel %vm2804, %v6450, %v5329
    %v6515 = vsel %vm2804, %v6451, %v5331
    %v6516 = vsel %vm2804, %v6452, %v5333
    %v6517 = vsel %vm2804, %v6453, %v5335
    %v6518 = vsel %vm2804, %v6454, %v5337
    %v6519 = vsel %vm2804, %v6455, %v5339
    %v6520 = vsel %vm2804, %v6456, %v5341
    %v6521 = vsel %vm2804, %v6457, %v5343
    %v6522 = vsel %vm2804, %v6458, %v5345
    %v6523 = vsel %vm2804, %v6459, %v5347
    %v6524 = vsel %vm2804, %v6460, %v5349
    %v6525 = vsel %vm2804, %v6461, %v5351
    %v6526 = vsel %vm2804, %v6462, %v5353
    %v6527 = vsel %vm2804, %v6463, %v5355
    %v6528 = vsel %vm2804, %v6464, %v5357
    %v6529 = vsel %vm2804, %v6465, %v5359
    %v6530 = vsel %vm2804, %v6466, %v5361
    %v6531 = vsel %vm2804, %v6467, %v5363
    %v6532 = vsel %vm2804, %v6468, %v5365
    %v6533 = vsel %vm2804, %v6469, %v5367
    %v6534 = vsel %vm2804, %v6470, %v5369
    %v6535 = vsel %vm2804, %v6471, %v5371
    %v6536 = vsel %vm2804, %v6472, %v5373
    %v6537 = vsel %vm2804, %v6473, %v5375
    %v6538 = vsel %vm2804, %v6474, %v5377
    %v6539 = vsel %vm2804, %v6475, %v5379
    %v6540 = vsel %vm2804, %v6476, %v5381
    %v6541 = vsel %vm2804, %v6477, %v5383
    %v6542 = vsel %vm2804, %v6478, %v5385
    %v6543 = vsel %vm2804, %v6479, %v5387
    %v6544 = vsel %vm2804, %v6480, %v5389
    %v6545 = vsel %vm2804, %v6481, %v5391
    %v6546 = vsel %vm2804, %v6482, %v5393
    %v6547 = vsel %vm2804, %v6483, %v5395
    %v6548 = vsel %vm2804, %v6484, %v5397
    %v6549 = vsel %vm2804, %v6485, %v5399
    %v6550 = vsel %vm2804, %v6486, %v5401
    %v6551 = vsel %vm2804, %v6487, %v5403
    %v6552 = vsel %vm2804, %v6488, %v5405
    %v6553 = vsel %vm2804, %v6489, %v5407
    %v6554 = vsel %vm2804, %v6490, %v5409
    %v6555 = vsel %vm2804, %v6491, %v5411
    %v6556 = vsel %vm2804, %v6492, %v5413
    %v6557 = vsel %vm2804, %v6493, %v5415
    %v6558 = vsel %vm2804, %v6494, %v5417
    %v6559 = vsel %vm2804, %v6495, %v5419
    %v6560 = vsel %vm2804, %v6496, %v5421
    %v6561 = vsel %vm2804, %v6497, %v5423
    %v6562 = vsel %vm2804, %v6498, %v5425
    %v6563 = vsel %vm2804, %v6499, %v5427
    %v6564 = vsel %vm2804, %v6500, %v5429
    %v6565 = vsel %vm2804, %v6501, %v5431
    %v6566 = vsel %vm2804, %v6502, %v5433
    %v6567 = vsel %vm2804, %v6503, %v5435
    %v6568 = vsel %vm2804, %v6504, %v5437
    %v6569 = vsel %vm2804, %v6505, %v5439
    %v6570 = vsel %vm2804, %v6506, %v5441
    %v6571 = vsel %vm2804, %v6507, %v5443
    %v6572 = vsel %vm2804, %v6508, %v5445
    %v6573 = vsel %vm2804, %v6509, %v5447
    %v6574 = vsel %vm2804, %v6510, %v5449
    %v6575 = vsel %vm2804, %v6511, %v5451
    %vm6576 = vcmask 326656
    %v6577 = vsel %vm6576, %v6512, %v5527
    %v6578 = vsel %vm6576, %v6513, %v5529
    %v6579 = vsel %vm6576, %v6514, %v5531
    %v6580 = vsel %vm6576, %v6515, %v5533
    %v6581 = vsel %vm6576, %v6516, %v5535
    %v6582 = vsel %vm6576, %v6517, %v5537
    %v6583 = vsel %vm6576, %v6518, %v5539
    %v6584 = vsel %vm6576, %v6519, %v5541
    %v6585 = vsel %vm6576, %v6520, %v5543
    %v6586 = vsel %vm6576, %v6521, %v5545
    %v6587 = vsel %vm6576, %v6522, %v5547
    %v6588 = vsel %vm6576, %v6523, %v5549
    %v6589 = vsel %vm6576, %v6524, %v5551
    %v6590 = vsel %vm6576, %v6525, %v5553
    %v6591 = vsel %vm6576, %v6526, %v5555
    %v6592 = vsel %vm6576, %v6527, %v5557
    %v6593 = vsel %vm6576, %v6528, %v5559
    %v6594 = vsel %vm6576, %v6529, %v5561
    %v6595 = vsel %vm6576, %v6530, %v5563
    %v6596 = vsel %vm6576, %v6531, %v5565
    %v6597 = vsel %vm6576, %v6532, %v5567
    %v6598 = vsel %vm6576, %v6533, %v5569
    %v6599 = vsel %vm6576, %v6534, %v5571
    %v6600 = vsel %vm6576, %v6535, %v5573
    %v6601 = vsel %vm6576, %v6536, %v5575
    %v6602 = vsel %vm6576, %v6537, %v5577
    %v6603 = vsel %vm6576, %v6538, %v5579
    %v6604 = vsel %vm6576, %v6539, %v5581
    %v6605 = vsel %vm6576, %v6540, %v5583
    %v6606 = vsel %vm6576, %v6541, %v5585
    %v6607 = vsel %vm6576, %v6542, %v5587
    %v6608 = vsel %vm6576, %v6543, %v5589
    %v6609 = vsel %vm6576, %v6544, %v5591
    %v6610 = vsel %vm6576, %v6545, %v5593
    %v6611 = vsel %vm6576, %v6546, %v5595
    %v6612 = vsel %vm6576, %v6547, %v5597
    %v6613 = vsel %vm6576, %v6548, %v5599
    %v6614 = vsel %vm6576, %v6549, %v5601
    %v6615 = vsel %vm6576, %v6550, %v5603
    %v6616 = vsel %vm6576, %v6551, %v5605
    %v6617 = vsel %vm6576, %v6552, %v5607
    %v6618 = vsel %vm6576, %v6553, %v5609
    %v6619 = vsel %vm6576, %v6554, %v5611
    %v6620 = vsel %vm6576, %v6555, %v5613
    %v6621 = vsel %vm6576, %v6556, %v5615
    %v6622 = vsel %vm6576, %v6557, %v5617
    %v6623 = vsel %vm6576, %v6558, %v5619
    %v6624 = vsel %vm6576, %v6559, %v5621
    %v6625 = vsel %vm6576, %v6560, %v5623
    %v6626 = vsel %vm6576, %v6561, %v5625
    %v6627 = vsel %vm6576, %v6562, %v5627
    %v6628 = vsel %vm6576, %v6563, %v5629
    %v6629 = vsel %vm6576, %v6564, %v5631
    %v6630 = vsel %vm6576, %v6565, %v5633
    %v6631 = vsel %vm6576, %v6566, %v5635
    %v6632 = vsel %vm6576, %v6567, %v5637
    %v6633 = vsel %vm6576, %v6568, %v5639
    %v6634 = vsel %vm6576, %v6569, %v5641
    %v6635 = vsel %vm6576, %v6570, %v5643
    %v6636 = vsel %vm6576, %v6571, %v5645
    %v6637 = vsel %vm6576, %v6572, %v5647
    %v6638 = vsel %vm6576, %v6573, %v5649
    %v6639 = vsel %vm6576, %v6574, %v5651
    %v6640 = vsel %vm6576, %v6575, %v5653
    %vm6641 = vcmask 392192
    %v6642 = vsel %vm6641, %v6577, %v5723
    %v6643 = vsel %vm6641, %v6578, %v5725
    %v6644 = vsel %vm6641, %v6579, %v5727
    %v6645 = vsel %vm6641, %v6580, %v5729
    %v6646 = vsel %vm6641, %v6581, %v5731
    %v6647 = vsel %vm6641, %v6582, %v5733
    %v6648 = vsel %vm6641, %v6583, %v5735
    %v6649 = vsel %vm6641, %v6584, %v5737
    %v6650 = vsel %vm6641, %v6585, %v5739
    %v6651 = vsel %vm6641, %v6586, %v5741
    %v6652 = vsel %vm6641, %v6587, %v5743
    %v6653 = vsel %vm6641, %v6588, %v5745
    %v6654 = vsel %vm6641, %v6589, %v5747
    %v6655 = vsel %vm6641, %v6590, %v5749
    %v6656 = vsel %vm6641, %v6591, %v5751
    %v6657 = vsel %vm6641, %v6592, %v5753
    %v6658 = vsel %vm6641, %v6593, %v5755
    %v6659 = vsel %vm6641, %v6594, %v5757
    %v6660 = vsel %vm6641, %v6595, %v5759
    %v6661 = vsel %vm6641, %v6596, %v5761
    %v6662 = vsel %vm6641, %v6597, %v5763
    %v6663 = vsel %vm6641, %v6598, %v5765
    %v6664 = vsel %vm6641, %v6599, %v5767
    %v6665 = vsel %vm6641, %v6600, %v5769
    %v6666 = vsel %vm6641, %v6601, %v5771
    %v6667 = vsel %vm6641, %v6602, %v5773
    %v6668 = vsel %vm6641, %v6603, %v5775
    %v6669 = vsel %vm6641, %v6604, %v5777
    %v6670 = vsel %vm6641, %v6605, %v5779
    %v6671 = vsel %vm6641, %v6606, %v5781
    %v6672 = vsel %vm6641, %v6607, %v5783
    %v6673 = vsel %vm6641, %v6608, %v5785
    %v6674 = vsel %vm6641, %v6609, %v5787
    %v6675 = vsel %vm6641, %v6610, %v5789
    %v6676 = vsel %vm6641, %v6611, %v5791
    %v6677 = vsel %vm6641, %v6612, %v5793
    %v6678 = vsel %vm6641, %v6613, %v5795
    %v6679 = vsel %vm6641, %v6614, %v5797
    %v6680 = vsel %vm6641, %v6615, %v5799
    %v6681 = vsel %vm6641, %v6616, %v5801
    %v6682 = vsel %vm6641, %v6617, %v5803
    %v6683 = vsel %vm6641, %v6618, %v5805
    %v6684 = vsel %vm6641, %v6619, %v5807
    %v6685 = vsel %vm6641, %v6620, %v5809
    %v6686 = vsel %vm6641, %v6621, %v5811
    %v6687 = vsel %vm6641, %v6622, %v5813
    %v6688 = vsel %vm6641, %v6623, %v5815
    %v6689 = vsel %vm6641, %v6624, %v5817
    %v6690 = vsel %vm6641, %v6625, %v5819
    %v6691 = vsel %vm6641, %v6626, %v5821
    %v6692 = vsel %vm6641, %v6627, %v5823
    %v6693 = vsel %vm6641, %v6628, %v5825
    %v6694 = vsel %vm6641, %v6629, %v5827
    %v6695 = vsel %vm6641, %v6630, %v5829
    %v6696 = vsel %vm6641, %v6631, %v5831
    %v6697 = vsel %vm6641, %v6632, %v5833
    %v6698 = vsel %vm6641, %v6633, %v5835
    %v6699 = vsel %vm6641, %v6634, %v5837
    %v6700 = vsel %vm6641, %v6635, %v5839
    %v6701 = vsel %vm6641, %v6636, %v5841
    %v6702 = vsel %vm6641, %v6637, %v5843
    %v6703 = vsel %vm6641, %v6638, %v5845
    %v6704 = vsel %vm6641, %v6639, %v5847
    %v6705 = vsel %vm6641, %v6640, %v5849
    %vm6706 = vcmask 457728
    %v6707 = vsel %vm6706, %v6642, %v5927
    %v6708 = vsel %vm6706, %v6643, %v5929
    %v6709 = vsel %vm6706, %v6644, %v5931
    %v6710 = vsel %vm6706, %v6645, %v5933
    %v6711 = vsel %vm6706, %v6646, %v5935
    %v6712 = vsel %vm6706, %v6647, %v5937
    %v6713 = vsel %vm6706, %v6648, %v5939
    %v6714 = vsel %vm6706, %v6649, %v5941
    %v6715 = vsel %vm6706, %v6650, %v5943
    %v6716 = vsel %vm6706, %v6651, %v5945
    %v6717 = vsel %vm6706, %v6652, %v5947
    %v6718 = vsel %vm6706, %v6653, %v5949
    %v6719 = vsel %vm6706, %v6654, %v5951
    %v6720 = vsel %vm6706, %v6655, %v5953
    %v6721 = vsel %vm6706, %v6656, %v5955
    %v6722 = vsel %vm6706, %v6657, %v5957
    %v6723 = vsel %vm6706, %v6658, %v5959
    %v6724 = vsel %vm6706, %v6659, %v5961
    %v6725 = vsel %vm6706, %v6660, %v5963
    %v6726 = vsel %vm6706, %v6661, %v5965
    %v6727 = vsel %vm6706, %v6662, %v5967
    %v6728 = vsel %vm6706, %v6663, %v5969
    %v6729 = vsel %vm6706, %v6664, %v5971
    %v6730 = vsel %vm6706, %v6665, %v5973
    %v6731 = vsel %vm6706, %v6666, %v5975
    %v6732 = vsel %vm6706, %v6667, %v5977
    %v6733 = vsel %vm6706, %v6668, %v5979
    %v6734 = vsel %vm6706, %v6669, %v5981
    %v6735 = vsel %vm6706, %v6670, %v5983
    %v6736 = vsel %vm6706, %v6671, %v5985
    %v6737 = vsel %vm6706, %v6672, %v5987
    %v6738 = vsel %vm6706, %v6673, %v5989
    %v6739 = vsel %vm6706, %v6674, %v5991
    %v6740 = vsel %vm6706, %v6675, %v5993
    %v6741 = vsel %vm6706, %v6676, %v5995
    %v6742 = vsel %vm6706, %v6677, %v5997
    %v6743 = vsel %vm6706, %v6678, %v5999
    %v6744 = vsel %vm6706, %v6679, %v6001
    %v6745 = vsel %vm6706, %v6680, %v6003
    %v6746 = vsel %vm6706, %v6681, %v6005
    %v6747 = vsel %vm6706, %v6682, %v6007
    %v6748 = vsel %vm6706, %v6683, %v6009
    %v6749 = vsel %vm6706, %v6684, %v6011
    %v6750 = vsel %vm6706, %v6685, %v6013
    %v6751 = vsel %vm6706, %v6686, %v6015
    %v6752 = vsel %vm6706, %v6687, %v6017
    %v6753 = vsel %vm6706, %v6688, %v6019
    %v6754 = vsel %vm6706, %v6689, %v6021
    %v6755 = vsel %vm6706, %v6690, %v6023
    %v6756 = vsel %vm6706, %v6691, %v6025
    %v6757 = vsel %vm6706, %v6692, %v6027
    %v6758 = vsel %vm6706, %v6693, %v6029
    %v6759 = vsel %vm6706, %v6694, %v6031
    %v6760 = vsel %vm6706, %v6695, %v6033
    %v6761 = vsel %vm6706, %v6696, %v6035
    %v6762 = vsel %vm6706, %v6697, %v6037
    %v6763 = vsel %vm6706, %v6698, %v6039
    %v6764 = vsel %vm6706, %v6699, %v6041
    %v6765 = vsel %vm6706, %v6700, %v6043
    %v6766 = vsel %vm6706, %v6701, %v6045
    %v6767 = vsel %vm6706, %v6702, %v6047
    %v6768 = vsel %vm6706, %v6703, %v6049
    %v6769 = vsel %vm6706, %v6704, %v6051
    %v6770 = vsel %vm6706, %v6705, %v6053
    %vm6771 = vcmask 523264
    %v6772 = vsel %vm6771, %v6707, %v6129
    %v6773 = vsel %vm6771, %v6708, %v6131
    %v6774 = vsel %vm6771, %v6709, %v6133
    %v6775 = vsel %vm6771, %v6710, %v6135
    %v6776 = vsel %vm6771, %v6711, %v6137
    %v6777 = vsel %vm6771, %v6712, %v6139
    %v6778 = vsel %vm6771, %v6713, %v6141
    %v6779 = vsel %vm6771, %v6714, %v6143
    %v6780 = vsel %vm6771, %v6715, %v6145
    %v6781 = vsel %vm6771, %v6716, %v6147
    %v6782 = vsel %vm6771, %v6717, %v6149
    %v6783 = vsel %vm6771, %v6718, %v6151
    %v6784 = vsel %vm6771, %v6719, %v6153
    %v6785 = vsel %vm6771, %v6720, %v6155
    %v6786 = vsel %vm6771, %v6721, %v6157
    %v6787 = vsel %vm6771, %v6722, %v6159
    %v6788 = vsel %vm6771, %v6723, %v6161
    %v6789 = vsel %vm6771, %v6724, %v6163
    %v6790 = vsel %vm6771, %v6725, %v6165
    %v6791 = vsel %vm6771, %v6726, %v6167
    %v6792 = vsel %vm6771, %v6727, %v6169
    %v6793 = vsel %vm6771, %v6728, %v6171
    %v6794 = vsel %vm6771, %v6729, %v6173
    %v6795 = vsel %vm6771, %v6730, %v6175
    %v6796 = vsel %vm6771, %v6731, %v6177
    %v6797 = vsel %vm6771, %v6732, %v6179
    %v6798 = vsel %vm6771, %v6733, %v6181
    %v6799 = vsel %vm6771, %v6734, %v6183
    %v6800 = vsel %vm6771, %v6735, %v6185
    %v6801 = vsel %vm6771, %v6736, %v6187
    %v6802 = vsel %vm6771, %v6737, %v6189
    %v6803 = vsel %vm6771, %v6738, %v6191
    %v6804 = vsel %vm6771, %v6739, %v6193
    %v6805 = vsel %vm6771, %v6740, %v6195
    %v6806 = vsel %vm6771, %v6741, %v6197
    %v6807 = vsel %vm6771, %v6742, %v6199
    %v6808 = vsel %vm6771, %v6743, %v6201
    %v6809 = vsel %vm6771, %v6744, %v6203
    %v6810 = vsel %vm6771, %v6745, %v6205
    %v6811 = vsel %vm6771, %v6746, %v6207
    %v6812 = vsel %vm6771, %v6747, %v6209
    %v6813 = vsel %vm6771, %v6748, %v6211
    %v6814 = vsel %vm6771, %v6749, %v6213
    %v6815 = vsel %vm6771, %v6750, %v6215
    %v6816 = vsel %vm6771, %v6751, %v6217
    %v6817 = vsel %vm6771, %v6752, %v6219
    %v6818 = vsel %vm6771, %v6753, %v6221
    %v6819 = vsel %vm6771, %v6754, %v6223
    %v6820 = vsel %vm6771, %v6755, %v6225
    %v6821 = vsel %vm6771, %v6756, %v6227
    %v6822 = vsel %vm6771, %v6757, %v6229
    %v6823 = vsel %vm6771, %v6758, %v6231
    %v6824 = vsel %vm6771, %v6759, %v6233
    %v6825 = vsel %vm6771, %v6760, %v6235
    %v6826 = vsel %vm6771, %v6761, %v6237
    %v6827 = vsel %vm6771, %v6762, %v6239
    %v6828 = vsel %vm6771, %v6763, %v6241
    %v6829 = vsel %vm6771, %v6764, %v6243
    %v6830 = vsel %vm6771, %v6765, %v6245
    %v6831 = vsel %vm6771, %v6766, %v6247
    %v6832 = vsel %vm6771, %v6767, %v6249
    %v6833 = vsel %vm6771, %v6768, %v6251
    %v6834 = vsel %vm6771, %v6769, %v6253
    %v6835 = vsel %vm6771, %v6770, %v6255
    %v6836 = vld [vmem:[%s4] sm:$0xff]
    %v6837 = vld [vmem:[%s4 + $0x8] sm:$0xff]
    %v6838 = vld [vmem:[%s4 + $0x10] sm:$0xff]
    %v6839 = vld [vmem:[%s4 + $0x18] sm:$0xff]
    %v6840 = vld [vmem:[%s4 + $0x20] sm:$0xff]
    %v6841 = vld [vmem:[%s4 + $0x28] sm:$0xff]
    %v6842 = vld [vmem:[%s4 + $0x30] sm:$0xff]
    %v6843 = vld [vmem:[%s4 + $0x38] sm:$0xff]
    %v6844 = vld [vmem:[%s4 + $0x40] sm:$0xff]
    %vm6845 = vcmask 588800
    %v6847 = vsel %vm6845, %v6772, 0
    %v6850 = vsel %vm6845, %v6773, 0
    %v6853 = vsel %vm6845, %v6774, 0
    %v6856 = vsel %vm6845, %v6775, 0
    %v6859 = vsel %vm6845, %v6776, 0
    %v6862 = vsel %vm6845, %v6777, 0
    %v6865 = vsel %vm6845, %v6778, 0
    %v6868 = vsel %vm6845, %v6779, 0
    %v6871 = vsel %vm6845, %v6780, 0
    %v6874 = vsel %vm6845, %v6781, 0
    %v6877 = vsel %vm6845, %v6782, 0
    %v6880 = vsel %vm6845, %v6783, 0
    %v6883 = vsel %vm6845, %v6784, 0
    %v6886 = vsel %vm6845, %v6785, 0
    %v6889 = vsel %vm6845, %v6786, 0
    %v6892 = vsel %vm6845, %v6787, 0
    %v6895 = vsel %vm6845, %v6788, 0
    %v6898 = vsel %vm6845, %v6789, 0
    %v6901 = vsel %vm6845, %v6790, 0
    %v6904 = vsel %vm6845, %v6791, 0
    %v6907 = vsel %vm6845, %v6792, 0
    %v6910 = vsel %vm6845, %v6793, 0
    %v6913 = vsel %vm6845, %v6794, 0
    %v6916 = vsel %vm6845, %v6795, 0
    %v6919 = vsel %vm6845, %v6796, 0
    %v6922 = vsel %vm6845, %v6797, 0
    %v6925 = vsel %vm6845, %v6798, 0
    %v6928 = vsel %vm6845, %v6799, 0
    %v6931 = vsel %vm6845, %v6800, 0
    %v6934 = vsel %vm6845, %v6801, 0
    %v6937 = vsel %vm6845, %v6802, 0
    %v6940 = vsel %vm6845, %v6803, 0
    %v6943 = vsel %vm6845, %v6804, 0
    %v6946 = vsel %vm6845, %v6805, 0
    %v6949 = vsel %vm6845, %v6806, 0
    %v6952 = vsel %vm6845, %v6807, 0
    %v6955 = vsel %vm6845, %v6808, 0
    %v6958 = vsel %vm6845, %v6809, 0
    %v6961 = vsel %vm6845, %v6810, 0
    %v6964 = vsel %vm6845, %v6811, 0
    %v6967 = vsel %vm6845, %v6812, 0
    %v6970 = vsel %vm6845, %v6813, 0
    %v6973 = vsel %vm6845, %v6814, 0
    %v6976 = vsel %vm6845, %v6815, 0
    %v6979 = vsel %vm6845, %v6816, 0
    %v6982 = vsel %vm6845, %v6817, 0
    %v6985 = vsel %vm6845, %v6818, 0
    %v6988 = vsel %vm6845, %v6819, 0
    %v6991 = vsel %vm6845, %v6820, 0
    %v6994 = vsel %vm6845, %v6821, 0
    %v6997 = vsel %vm6845, %v6822, 0
    %v7000 = vsel %vm6845, %v6823, 0
    %v7003 = vsel %vm6845, %v6824, 0
    %v7006 = vsel %vm6845, %v6825, 0
    %v7009 = vsel %vm6845, %v6826, 0
    %v7012 = vsel %vm6845, %v6827, 0
    %v7015 = vsel %vm6845, %v6828, 0
    %v7018 = vsel %vm6845, %v6829, 0
    %v7021 = vsel %vm6845, %v6830, 0
    %v7024 = vsel %vm6845, %v6831, 0
    %v7027 = vsel %vm6845, %v6832, 0
    %v7030 = vsel %vm6845, %v6833, 0
    %v7033 = vsel %vm6845, %v6834, 0
    %v7036 = vsel %vm6845, %v6835, 0
    %7038 = vmatprep.subr.mxu0 0.0
    %7039 = vmatpush1.msra.mxu0 0.0
    %7040 = vmatprep.subr.mxu0 0.0
    %7041 = vmatpush1.msra.mxu0 0.0
    %7042 = vmatprep.subr.mxu0 0.0
    %7043 = vmatpush1.msra.mxu0 0.0
    %7044 = vmatprep.subr.mxu0 0.0
    %7045 = vmatpush1.msra.mxu0 0.0
    %7046 = vmatprep.subr.mxu0 0.0
    %7047 = vmatpush1.msra.mxu0 0.0
    %7048 = vmatprep.subr.mxu0 0.0
    %7049 = vmatpush1.msra.mxu0 0.0
    %7050 = vmatprep.subr.mxu0 0.0
    %7051 = vmatpush1.msra.mxu0 0.0
    %7052 = vmatprep.subr.mxu0 0.0
    %7053 = vmatpush1.msra.mxu0 %v6844
    %7054 = vmatprep.subr.mxu0 0.0
    %7055 = vmatpush1.msra.mxu0 %v6843
    %7056 = vmatprep.subr.mxu0 0.0
    %7057 = vmatpush1.msra.mxu0 %v6842
    %7058 = vmatprep.subr.mxu0 0.0
    %7059 = vmatpush1.msra.mxu0 %v6841
    %7060 = vmatprep.subr.mxu0 0.0
    %7061 = vmatpush1.msra.mxu0 %v6840
    %7062 = vmatprep.subr.mxu0 0.0
    %7063 = vmatpush1.msra.mxu0 %v6839
    %7064 = vmatprep.subr.mxu0 0.0
    %7065 = vmatpush1.msra.mxu0 %v6838
    %7066 = vmatprep.subr.mxu0 0.0
    %7067 = vmatpush1.msra.mxu0 %v6837
    %7068 = vmatprep.subr.mxu0 0.0
    %7069 = vmatpush1.msra.mxu0 %v6836
    %7070 = vmatprep.subr.mxu0 0.0
    %7071 = vmatpush2.msra.mxu0 0.0
    %7072 = vmatprep.subr.mxu0 0.0
    %7073 = vmatpush2.msra.mxu0 0.0
    %7074 = vmatprep.subr.mxu0 0.0
    %7075 = vmatpush2.msra.mxu0 0.0
    %7076 = vmatprep.subr.mxu0 0.0
    %7077 = vmatpush2.msra.mxu0 0.0
    %7078 = vmatprep.subr.mxu0 0.0
    %7079 = vmatpush2.msra.mxu0 0.0
    %7080 = vmatprep.subr.mxu0 0.0
    %7081 = vmatpush2.msra.mxu0 0.0
    %7082 = vmatprep.subr.mxu0 0.0
    %7083 = vmatpush2.msra.mxu0 0.0
    %7084 = vmatprep.subr.mxu0 0.0
    %7085 = vmatpush2.msra.mxu0 0.0
    %7086 = vmatprep.subr.mxu0 0.0
    %7087 = vmatpush2.msra.mxu0 0.0
    %7088 = vmatprep.subr.mxu0 0.0
    %7089 = vmatpush2.msra.mxu0 0.0
    %7090 = vmatprep.subr.mxu0 0.0
    %7091 = vmatpush2.msra.mxu0 0.0
    %7092 = vmatprep.subr.mxu0 0.0
    %7093 = vmatpush2.msra.mxu0 0.0
    %7094 = vmatprep.subr.mxu0 0.0
    %7095 = vmatpush2.msra.mxu0 0.0
    %7096 = vmatprep.subr.mxu0 0.0
    %7097 = vmatpush2.msra.mxu0 0.0
    %7098 = vmatprep.subr.mxu0 0.0
    %7099 = vmatpush2.msra.mxu0 0.0
    %7100 = vmatprep.subr.mxu0 0.0
    %7101 = vmatpush2.msra.mxu0 0.0
    %7102 = vmatprep.mubr.f32.mxu0 0.0
    %7103 = vmatmul.mubr.f32.gmra.mxu0 %v6847
    %v7104 = vpop.f32.mrf.mxu0
    %v7105 = vadd.f32 0.0, %v7104
    %v7106 = vpop.f32.mrf.mxu0
    %7107 = vmatprep.mubr.f32.mxu0 0.0
    %7108 = vmatmul.mubr.f32.gmra.mxu0 %v6850
    %v7109 = vpop.f32.mrf.mxu0
    %v7110 = vadd.f32 0.0, %v7109
    %v7111 = vpop.f32.mrf.mxu0
    %7112 = vmatprep.mubr.f32.mxu0 0.0
    %7113 = vmatmul.mubr.f32.gmra.mxu0 %v6853
    %v7114 = vpop.f32.mrf.mxu0
    %v7115 = vadd.f32 0.0, %v7114
    %v7116 = vpop.f32.mrf.mxu0
    %7117 = vmatprep.mubr.f32.mxu0 0.0
    %7118 = vmatmul.mubr.f32.gmra.mxu0 %v6856
    %v7119 = vpop.f32.mrf.mxu0
    %v7120 = vadd.f32 0.0, %v7119
    %v7121 = vpop.f32.mrf.mxu0
    %7122 = vmatprep.mubr.f32.mxu0 0.0
    %7123 = vmatmul.mubr.f32.gmra.mxu0 %v6859
    %v7124 = vpop.f32.mrf.mxu0
    %v7125 = vadd.f32 0.0, %v7124
    %v7126 = vpop.f32.mrf.mxu0
    %7127 = vmatprep.mubr.f32.mxu0 0.0
    %7128 = vmatmul.mubr.f32.gmra.mxu0 %v6862
    %v7129 = vpop.f32.mrf.mxu0
    %v7130 = vadd.f32 0.0, %v7129
    %v7131 = vpop.f32.mrf.mxu0
    %7132 = vmatprep.mubr.f32.mxu0 0.0
    %7133 = vmatmul.mubr.f32.gmra.mxu0 %v6865
    %v7134 = vpop.f32.mrf.mxu0
    %v7135 = vadd.f32 0.0, %v7134
    %v7136 = vpop.f32.mrf.mxu0
    %7137 = vmatprep.mubr.f32.mxu0 0.0
    %7138 = vmatmul.mubr.f32.gmra.mxu0 %v6868
    %v7139 = vpop.f32.mrf.mxu0
    %v7140 = vadd.f32 0.0, %v7139
    %v7141 = vpop.f32.mrf.mxu0
    %7142 = vmatprep.mubr.f32.mxu0 0.0
    %7143 = vmatmul.mubr.f32.gmra.mxu0 %v6871
    %v7144 = vpop.f32.mrf.mxu0
    %v7145 = vadd.f32 0.0, %v7144
    %v7146 = vpop.f32.mrf.mxu0
    %7147 = vmatprep.mubr.f32.mxu0 0.0
    %7148 = vmatmul.mubr.f32.gmra.mxu0 %v6874
    %v7149 = vpop.f32.mrf.mxu0
    %v7150 = vadd.f32 0.0, %v7149
    %v7151 = vpop.f32.mrf.mxu0
    %7152 = vmatprep.mubr.f32.mxu0 0.0
    %7153 = vmatmul.mubr.f32.gmra.mxu0 %v6877
    %v7154 = vpop.f32.mrf.mxu0
    %v7155 = vadd.f32 0.0, %v7154
    %v7156 = vpop.f32.mrf.mxu0
    %7157 = vmatprep.mubr.f32.mxu0 0.0
    %7158 = vmatmul.mubr.f32.gmra.mxu0 %v6880
    %v7159 = vpop.f32.mrf.mxu0
    %v7160 = vadd.f32 0.0, %v7159
    %v7161 = vpop.f32.mrf.mxu0
    %7162 = vmatprep.mubr.f32.mxu0 0.0
    %7163 = vmatmul.mubr.f32.gmra.mxu0 %v6883
    %v7164 = vpop.f32.mrf.mxu0
    %v7165 = vadd.f32 0.0, %v7164
    %v7166 = vpop.f32.mrf.mxu0
    %7167 = vmatprep.mubr.f32.mxu0 0.0
    %7168 = vmatmul.mubr.f32.gmra.mxu0 %v6886
    %v7169 = vpop.f32.mrf.mxu0
    %v7170 = vadd.f32 0.0, %v7169
    %v7171 = vpop.f32.mrf.mxu0
    %7172 = vmatprep.mubr.f32.mxu0 0.0
    %7173 = vmatmul.mubr.f32.gmra.mxu0 %v6889
    %v7174 = vpop.f32.mrf.mxu0
    %v7175 = vadd.f32 0.0, %v7174
    %v7176 = vpop.f32.mrf.mxu0
    %7177 = vmatprep.mubr.f32.mxu0 0.0
    %7178 = vmatmul.mubr.f32.gmra.mxu0 %v6892
    %v7179 = vpop.f32.mrf.mxu0
    %v7180 = vadd.f32 0.0, %v7179
    %v7181 = vpop.f32.mrf.mxu0
    %7182 = vmatprep.mubr.f32.mxu0 0.0
    %7183 = vmatmul.mubr.f32.gmra.mxu0 %v6895
    %v7184 = vpop.f32.mrf.mxu0
    %v7185 = vadd.f32 0.0, %v7184
    %v7186 = vpop.f32.mrf.mxu0
    %7187 = vmatprep.mubr.f32.mxu0 0.0
    %7188 = vmatmul.mubr.f32.gmra.mxu0 %v6898
    %v7189 = vpop.f32.mrf.mxu0
    %v7190 = vadd.f32 0.0, %v7189
    %v7191 = vpop.f32.mrf.mxu0
    %7192 = vmatprep.mubr.f32.mxu0 0.0
    %7193 = vmatmul.mubr.f32.gmra.mxu0 %v6901
    %v7194 = vpop.f32.mrf.mxu0
    %v7195 = vadd.f32 0.0, %v7194
    %v7196 = vpop.f32.mrf.mxu0
    %7197 = vmatprep.mubr.f32.mxu0 0.0
    %7198 = vmatmul.mubr.f32.gmra.mxu0 %v6904
    %v7199 = vpop.f32.mrf.mxu0
    %v7200 = vadd.f32 0.0, %v7199
    %v7201 = vpop.f32.mrf.mxu0
    %7202 = vmatprep.mubr.f32.mxu0 0.0
    %7203 = vmatmul.mubr.f32.gmra.mxu0 %v6907
    %v7204 = vpop.f32.mrf.mxu0
    %v7205 = vadd.f32 0.0, %v7204
    %v7206 = vpop.f32.mrf.mxu0
    %7207 = vmatprep.mubr.f32.mxu0 0.0
    %7208 = vmatmul.mubr.f32.gmra.mxu0 %v6910
    %v7209 = vpop.f32.mrf.mxu0
    %v7210 = vadd.f32 0.0, %v7209
    %v7211 = vpop.f32.mrf.mxu0
    %7212 = vmatprep.mubr.f32.mxu0 0.0
    %7213 = vmatmul.mubr.f32.gmra.mxu0 %v6913
    %v7214 = vpop.f32.mrf.mxu0
    %v7215 = vadd.f32 0.0, %v7214
    %v7216 = vpop.f32.mrf.mxu0
    %7217 = vmatprep.mubr.f32.mxu0 0.0
    %7218 = vmatmul.mubr.f32.gmra.mxu0 %v6916
    %v7219 = vpop.f32.mrf.mxu0
    %v7220 = vadd.f32 0.0, %v7219
    %v7221 = vpop.f32.mrf.mxu0
    %7222 = vmatprep.mubr.f32.mxu0 0.0
    %7223 = vmatmul.mubr.f32.gmra.mxu0 %v6919
    %v7224 = vpop.f32.mrf.mxu0
    %v7225 = vadd.f32 0.0, %v7224
    %v7226 = vpop.f32.mrf.mxu0
    %7227 = vmatprep.mubr.f32.mxu0 0.0
    %7228 = vmatmul.mubr.f32.gmra.mxu0 %v6922
    %v7229 = vpop.f32.mrf.mxu0
    %v7230 = vadd.f32 0.0, %v7229
    %v7231 = vpop.f32.mrf.mxu0
    %7232 = vmatprep.mubr.f32.mxu0 0.0
    %7233 = vmatmul.mubr.f32.gmra.mxu0 %v6925
    %v7234 = vpop.f32.mrf.mxu0
    %v7235 = vadd.f32 0.0, %v7234
    %v7236 = vpop.f32.mrf.mxu0
    %7237 = vmatprep.mubr.f32.mxu0 0.0
    %7238 = vmatmul.mubr.f32.gmra.mxu0 %v6928
    %v7239 = vpop.f32.mrf.mxu0
    %v7240 = vadd.f32 0.0, %v7239
    %v7241 = vpop.f32.mrf.mxu0
    %7242 = vmatprep.mubr.f32.mxu0 0.0
    %7243 = vmatmul.mubr.f32.gmra.mxu0 %v6931
    %v7244 = vpop.f32.mrf.mxu0
    %v7245 = vadd.f32 0.0, %v7244
    %v7246 = vpop.f32.mrf.mxu0
    %7247 = vmatprep.mubr.f32.mxu0 0.0
    %7248 = vmatmul.mubr.f32.gmra.mxu0 %v6934
    %v7249 = vpop.f32.mrf.mxu0
    %v7250 = vadd.f32 0.0, %v7249
    %v7251 = vpop.f32.mrf.mxu0
    %7252 = vmatprep.mubr.f32.mxu0 0.0
    %7253 = vmatmul.mubr.f32.gmra.mxu0 %v6937
    %v7254 = vpop.f32.mrf.mxu0
    %v7255 = vadd.f32 0.0, %v7254
    %v7256 = vpop.f32.mrf.mxu0
    %7257 = vmatprep.mubr.f32.mxu0 0.0
    %7258 = vmatmul.mubr.f32.gmra.mxu0 %v6940
    %v7259 = vpop.f32.mrf.mxu0
    %v7260 = vadd.f32 0.0, %v7259
    %v7261 = vpop.f32.mrf.mxu0
    %7262 = vmatprep.mubr.f32.mxu0 0.0
    %7263 = vmatmul.mubr.f32.gmra.mxu0 %v6943
    %v7264 = vpop.f32.mrf.mxu0
    %v7265 = vadd.f32 0.0, %v7264
    %v7266 = vpop.f32.mrf.mxu0
    %7267 = vmatprep.mubr.f32.mxu0 0.0
    %7268 = vmatmul.mubr.f32.gmra.mxu0 %v6946
    %v7269 = vpop.f32.mrf.mxu0
    %v7270 = vadd.f32 0.0, %v7269
    %v7271 = vpop.f32.mrf.mxu0
    %7272 = vmatprep.mubr.f32.mxu0 0.0
    %7273 = vmatmul.mubr.f32.gmra.mxu0 %v6949
    %v7274 = vpop.f32.mrf.mxu0
    %v7275 = vadd.f32 0.0, %v7274
    %v7276 = vpop.f32.mrf.mxu0
    %7277 = vmatprep.mubr.f32.mxu0 0.0
    %7278 = vmatmul.mubr.f32.gmra.mxu0 %v6952
    %v7279 = vpop.f32.mrf.mxu0
    %v7280 = vadd.f32 0.0, %v7279
    %v7281 = vpop.f32.mrf.mxu0
    %7282 = vmatprep.mubr.f32.mxu0 0.0
    %7283 = vmatmul.mubr.f32.gmra.mxu0 %v6955
    %v7284 = vpop.f32.mrf.mxu0
    %v7285 = vadd.f32 0.0, %v7284
    %v7286 = vpop.f32.mrf.mxu0
    %7287 = vmatprep.mubr.f32.mxu0 0.0
    %7288 = vmatmul.mubr.f32.gmra.mxu0 %v6958
    %v7289 = vpop.f32.mrf.mxu0
    %v7290 = vadd.f32 0.0, %v7289
    %v7291 = vpop.f32.mrf.mxu0
    %7292 = vmatprep.mubr.f32.mxu0 0.0
    %7293 = vmatmul.mubr.f32.gmra.mxu0 %v6961
    %v7294 = vpop.f32.mrf.mxu0
    %v7295 = vadd.f32 0.0, %v7294
    %v7296 = vpop.f32.mrf.mxu0
    %7297 = vmatprep.mubr.f32.mxu0 0.0
    %7298 = vmatmul.mubr.f32.gmra.mxu0 %v6964
    %v7299 = vpop.f32.mrf.mxu0
    %v7300 = vadd.f32 0.0, %v7299
    %v7301 = vpop.f32.mrf.mxu0
    %7302 = vmatprep.mubr.f32.mxu0 0.0
    %7303 = vmatmul.mubr.f32.gmra.mxu0 %v6967
    %v7304 = vpop.f32.mrf.mxu0
    %v7305 = vadd.f32 0.0, %v7304
    %v7306 = vpop.f32.mrf.mxu0
    %7307 = vmatprep.mubr.f32.mxu0 0.0
    %7308 = vmatmul.mubr.f32.gmra.mxu0 %v6970
    %v7309 = vpop.f32.mrf.mxu0
    %v7310 = vadd.f32 0.0, %v7309
    %v7311 = vpop.f32.mrf.mxu0
    %7312 = vmatprep.mubr.f32.mxu0 0.0
    %7313 = vmatmul.mubr.f32.gmra.mxu0 %v6973
    %v7314 = vpop.f32.mrf.mxu0
    %v7315 = vadd.f32 0.0, %v7314
    %v7316 = vpop.f32.mrf.mxu0
    %7317 = vmatprep.mubr.f32.mxu0 0.0
    %7318 = vmatmul.mubr.f32.gmra.mxu0 %v6976
    %v7319 = vpop.f32.mrf.mxu0
    %v7320 = vadd.f32 0.0, %v7319
    %v7321 = vpop.f32.mrf.mxu0
    %7322 = vmatprep.mubr.f32.mxu0 0.0
    %7323 = vmatmul.mubr.f32.gmra.mxu0 %v6979
    %v7324 = vpop.f32.mrf.mxu0
    %v7325 = vadd.f32 0.0, %v7324
    %v7326 = vpop.f32.mrf.mxu0
    %7327 = vmatprep.mubr.f32.mxu0 0.0
    %7328 = vmatmul.mubr.f32.gmra.mxu0 %v6982
    %v7329 = vpop.f32.mrf.mxu0
    %v7330 = vadd.f32 0.0, %v7329
    %v7331 = vpop.f32.mrf.mxu0
    %7332 = vmatprep.mubr.f32.mxu0 0.0
    %7333 = vmatmul.mubr.f32.gmra.mxu0 %v6985
    %v7334 = vpop.f32.mrf.mxu0
    %v7335 = vadd.f32 0.0, %v7334
    %v7336 = vpop.f32.mrf.mxu0
    %7337 = vmatprep.mubr.f32.mxu0 0.0
    %7338 = vmatmul.mubr.f32.gmra.mxu0 %v6988
    %v7339 = vpop.f32.mrf.mxu0
    %v7340 = vadd.f32 0.0, %v7339
    %v7341 = vpop.f32.mrf.mxu0
    %7342 = vmatprep.mubr.f32.mxu0 0.0
    %7343 = vmatmul.mubr.f32.gmra.mxu0 %v6991
    %v7344 = vpop.f32.mrf.mxu0
    %v7345 = vadd.f32 0.0, %v7344
    %v7346 = vpop.f32.mrf.mxu0
    %7347 = vmatprep.mubr.f32.mxu0 0.0
    %7348 = vmatmul.mubr.f32.gmra.mxu0 %v6994
    %v7349 = vpop.f32.mrf.mxu0
    %v7350 = vadd.f32 0.0, %v7349
    %v7351 = vpop.f32.mrf.mxu0
    %7352 = vmatprep.mubr.f32.mxu0 0.0
    %7353 = vmatmul.mubr.f32.gmra.mxu0 %v6997
    %v7354 = vpop.f32.mrf.mxu0
    %v7355 = vadd.f32 0.0, %v7354
    %v7356 = vpop.f32.mrf.mxu0
    %7357 = vmatprep.mubr.f32.mxu0 0.0
    %7358 = vmatmul.mubr.f32.gmra.mxu0 %v7000
    %v7359 = vpop.f32.mrf.mxu0
    %v7360 = vadd.f32 0.0, %v7359
    %v7361 = vpop.f32.mrf.mxu0
    %7362 = vmatprep.mubr.f32.mxu0 0.0
    %7363 = vmatmul.mubr.f32.gmra.mxu0 %v7003
    %v7364 = vpop.f32.mrf.mxu0
    %v7365 = vadd.f32 0.0, %v7364
    %v7366 = vpop.f32.mrf.mxu0
    %7367 = vmatprep.mubr.f32.mxu0 0.0
    %7368 = vmatmul.mubr.f32.gmra.mxu0 %v7006
    %v7369 = vpop.f32.mrf.mxu0
    %v7370 = vadd.f32 0.0, %v7369
    %v7371 = vpop.f32.mrf.mxu0
    %7372 = vmatprep.mubr.f32.mxu0 0.0
    %7373 = vmatmul.mubr.f32.gmra.mxu0 %v7009
    %v7374 = vpop.f32.mrf.mxu0
    %v7375 = vadd.f32 0.0, %v7374
    %v7376 = vpop.f32.mrf.mxu0
    %7377 = vmatprep.mubr.f32.mxu0 0.0
    %7378 = vmatmul.mubr.f32.gmra.mxu0 %v7012
    %v7379 = vpop.f32.mrf.mxu0
    %v7380 = vadd.f32 0.0, %v7379
    %v7381 = vpop.f32.mrf.mxu0
    %7382 = vmatprep.mubr.f32.mxu0 0.0
    %7383 = vmatmul.mubr.f32.gmra.mxu0 %v7015
    %v7384 = vpop.f32.mrf.mxu0
    %v7385 = vadd.f32 0.0, %v7384
    %v7386 = vpop.f32.mrf.mxu0
    %7387 = vmatprep.mubr.f32.mxu0 0.0
    %7388 = vmatmul.mubr.f32.gmra.mxu0 %v7018
    %v7389 = vpop.f32.mrf.mxu0
    %v7390 = vadd.f32 0.0, %v7389
    %v7391 = vpop.f32.mrf.mxu0
    %7392 = vmatprep.mubr.f32.mxu0 0.0
    %7393 = vmatmul.mubr.f32.gmra.mxu0 %v7021
    %v7394 = vpop.f32.mrf.mxu0
    %v7395 = vadd.f32 0.0, %v7394
    %v7396 = vpop.f32.mrf.mxu0
    %7397 = vmatprep.mubr.f32.mxu0 0.0
    %7398 = vmatmul.mubr.f32.gmra.mxu0 %v7024
    %v7399 = vpop.f32.mrf.mxu0
    %v7400 = vadd.f32 0.0, %v7399
    %v7401 = vpop.f32.mrf.mxu0
    %7402 = vmatprep.mubr.f32.mxu0 0.0
    %7403 = vmatmul.mubr.f32.gmra.mxu0 %v7027
    %v7404 = vpop.f32.mrf.mxu0
    %v7405 = vadd.f32 0.0, %v7404
    %v7406 = vpop.f32.mrf.mxu0
    %7407 = vmatprep.mubr.f32.mxu0 0.0
    %7408 = vmatmul.mubr.f32.gmra.mxu0 %v7030
    %v7409 = vpop.f32.mrf.mxu0
    %v7410 = vadd.f32 0.0, %v7409
    %v7411 = vpop.f32.mrf.mxu0
    %7412 = vmatprep.mubr.f32.mxu0 0.0
    %7413 = vmatmul.mubr.f32.gmra.mxu0 %v7033
    %v7414 = vpop.f32.mrf.mxu0
    %v7415 = vadd.f32 0.0, %v7414
    %v7416 = vpop.f32.mrf.mxu0
    %7417 = vmatprep.mubr.f32.mxu0 0.0
    %7418 = vmatmul.mubr.f32.gmra.mxu0 %v7036
    %v7419 = vpop.f32.mrf.mxu0
    %v7420 = vadd.f32 0.0, %v7419
    %v7421 = vpop.f32.mrf.mxu0
    %7422 = vdwg.mxu0
    %v7423 = vld [vmem:[%s5] sm:$0x1]
    %v7424 = vld [vmem:[%s6] sm:$0x1]
    %v7425 = vsel %vm2414, %v7105, 0.0
    %v7426 = vsel %vm2414, %v7110, 0.0
    %v7427 = vadd.f32 %v7425, %v7426
    %v7428 = vsel %vm2414, %v7115, 0.0
    %v7429 = vadd.f32 %v7427, %v7428
    %v7430 = vsel %vm2414, %v7120, 0.0
    %v7431 = vadd.f32 %v7429, %v7430
    %v7432 = vsel %vm2414, %v7125, 0.0
    %v7433 = vadd.f32 %v7431, %v7432
    %v7434 = vsel %vm2414, %v7130, 0.0
    %v7435 = vadd.f32 %v7433, %v7434
    %v7436 = vsel %vm2414, %v7135, 0.0
    %v7437 = vadd.f32 %v7435, %v7436
    %v7438 = vsel %vm2414, %v7140, 0.0
    %v7439 = vadd.f32 %v7437, %v7438
    %v7440 = vsel %vm2414, %v7145, 0.0
    %v7441 = vadd.f32 %v7439, %v7440
    %v7442 = vsel %vm2414, %v7150, 0.0
    %v7443 = vadd.f32 %v7441, %v7442
    %v7444 = vsel %vm2414, %v7155, 0.0
    %v7445 = vadd.f32 %v7443, %v7444
    %v7446 = vsel %vm2414, %v7160, 0.0
    %v7447 = vadd.f32 %v7445, %v7446
    %v7448 = vsel %vm2414, %v7165, 0.0
    %v7449 = vadd.f32 %v7447, %v7448
    %v7450 = vsel %vm2414, %v7170, 0.0
    %v7451 = vadd.f32 %v7449, %v7450
    %v7452 = vsel %vm2414, %v7175, 0.0
    %v7453 = vadd.f32 %v7451, %v7452
    %v7454 = vsel %vm2414, %v7180, 0.0
    %v7455 = vadd.f32 %v7453, %v7454
    %v7456 = vsel %vm2414, %v7185, 0.0
    %v7457 = vadd.f32 %v7455, %v7456
    %v7458 = vsel %vm2414, %v7190, 0.0
    %v7459 = vadd.f32 %v7457, %v7458
    %v7460 = vsel %vm2414, %v7195, 0.0
    %v7461 = vadd.f32 %v7459, %v7460
    %v7462 = vsel %vm2414, %v7200, 0.0
    %v7463 = vadd.f32 %v7461, %v7462
    %v7464 = vsel %vm2414, %v7205, 0.0
    %v7465 = vadd.f32 %v7463, %v7464
    %v7466 = vsel %vm2414, %v7210, 0.0
    %v7467 = vadd.f32 %v7465, %v7466
    %v7468 = vsel %vm2414, %v7215, 0.0
    %v7469 = vadd.f32 %v7467, %v7468
    %v7470 = vsel %vm2414, %v7220, 0.0
    %v7471 = vadd.f32 %v7469, %v7470
    %v7472 = vsel %vm2414, %v7225, 0.0
    %v7473 = vadd.f32 %v7471, %v7472
    %v7474 = vsel %vm2414, %v7230, 0.0
    %v7475 = vadd.f32 %v7473, %v7474
    %v7476 = vsel %vm2414, %v7235, 0.0
    %v7477 = vadd.f32 %v7475, %v7476
    %v7478 = vsel %vm2414, %v7240, 0.0
    %v7479 = vadd.f32 %v7477, %v7478
    %v7480 = vsel %vm2414, %v7245, 0.0
    %v7481 = vadd.f32 %v7479, %v7480
    %v7482 = vsel %vm2414, %v7250, 0.0
    %v7483 = vadd.f32 %v7481, %v7482
    %v7484 = vsel %vm2414, %v7255, 0.0
    %v7485 = vadd.f32 %v7483, %v7484
    %v7486 = vsel %vm2414, %v7260, 0.0
    %v7487 = vadd.f32 %v7485, %v7486
    %v7488 = vsel %vm2414, %v7265, 0.0
    %v7489 = vadd.f32 %v7487, %v7488
    %v7490 = vsel %vm2414, %v7270, 0.0
    %v7491 = vadd.f32 %v7489, %v7490
    %v7492 = vsel %vm2414, %v7275, 0.0
    %v7493 = vadd.f32 %v7491, %v7492
    %v7494 = vsel %vm2414, %v7280, 0.0
    %v7495 = vadd.f32 %v7493, %v7494
    %v7496 = vsel %vm2414, %v7285, 0.0
    %v7497 = vadd.f32 %v7495, %v7496
    %v7498 = vsel %vm2414, %v7290, 0.0
    %v7499 = vadd.f32 %v7497, %v7498
    %v7500 = vsel %vm2414, %v7295, 0.0
    %v7501 = vadd.f32 %v7499, %v7500
    %v7502 = vsel %vm2414, %v7300, 0.0
    %v7503 = vadd.f32 %v7501, %v7502
    %v7504 = vsel %vm2414, %v7305, 0.0
    %v7505 = vadd.f32 %v7503, %v7504
    %v7506 = vsel %vm2414, %v7310, 0.0
    %v7507 = vadd.f32 %v7505, %v7506
    %v7508 = vsel %vm2414, %v7315, 0.0
    %v7509 = vadd.f32 %v7507, %v7508
    %v7510 = vsel %vm2414, %v7320, 0.0
    %v7511 = vadd.f32 %v7509, %v7510
    %v7512 = vsel %vm2414, %v7325, 0.0
    %v7513 = vadd.f32 %v7511, %v7512
    %v7514 = vsel %vm2414, %v7330, 0.0
    %v7515 = vadd.f32 %v7513, %v7514
    %v7516 = vsel %vm2414, %v7335, 0.0
    %v7517 = vadd.f32 %v7515, %v7516
    %v7518 = vsel %vm2414, %v7340, 0.0
    %v7519 = vadd.f32 %v7517, %v7518
    %v7520 = vsel %vm2414, %v7345, 0.0
    %v7521 = vadd.f32 %v7519, %v7520
    %v7522 = vsel %vm2414, %v7350, 0.0
    %v7523 = vadd.f32 %v7521, %v7522
    %v7524 = vsel %vm2414, %v7355, 0.0
    %v7525 = vadd.f32 %v7523, %v7524
    %v7526 = vsel %vm2414, %v7360, 0.0
    %v7527 = vadd.f32 %v7525, %v7526
    %v7528 = vsel %vm2414, %v7365, 0.0
    %v7529 = vadd.f32 %v7527, %v7528
    %v7530 = vsel %vm2414, %v7370, 0.0
    %v7531 = vadd.f32 %v7529, %v7530
    %v7532 = vsel %vm2414, %v7375, 0.0
    %v7533 = vadd.f32 %v7531, %v7532
    %v7534 = vsel %vm2414, %v7380, 0.0
    %v7535 = vadd.f32 %v7533, %v7534
    %v7536 = vsel %vm2414, %v7385, 0.0
    %v7537 = vadd.f32 %v7535, %v7536
    %v7538 = vsel %vm2414, %v7390, 0.0
    %v7539 = vadd.f32 %v7537, %v7538
    %v7540 = vsel %vm2414, %v7395, 0.0
    %v7541 = vadd.f32 %v7539, %v7540
    %v7542 = vsel %vm2414, %v7400, 0.0
    %v7543 = vadd.f32 %v7541, %v7542
    %v7544 = vsel %vm2414, %v7405, 0.0
    %v7545 = vadd.f32 %v7543, %v7544
    %v7546 = vsel %vm2414, %v7410, 0.0
    %v7547 = vadd.f32 %v7545, %v7546
    %v7548 = vsel %vm2414, %v7415, 0.0
    %v7549 = vadd.f32 %v7547, %v7548
    %v7550 = vsel %vm2414, %v7420, 0.0
    %v7551 = vadd.f32 %v7549, %v7550
    %v7552 = vrot.slane %v7551, 4
    %v7553 = vadd.f32 %v7551, %v7552
    %v7554 = vrot.slane %v7553, 2
    %v7555 = vadd.f32 %v7553, %v7554
    %v7556 = vrot.slane %v7555, 1
    %v7557 = vadd.f32 %v7555, %v7556
    %v7558 = vmul.f32 %v7557, %v3591
    %v7559 = vsub.f32 %v7105, %v7558
    %v7560 = vsub.f32 %v7110, %v7558
    %v7561 = vsub.f32 %v7115, %v7558
    %v7562 = vsub.f32 %v7120, %v7558
    %v7563 = vsub.f32 %v7125, %v7558
    %v7564 = vsub.f32 %v7130, %v7558
    %v7565 = vsub.f32 %v7135, %v7558
    %v7566 = vsub.f32 %v7140, %v7558
    %v7567 = vsub.f32 %v7145, %v7558
    %v7568 = vsub.f32 %v7150, %v7558
    %v7569 = vsub.f32 %v7155, %v7558
    %v7570 = vsub.f32 %v7160, %v7558
    %v7571 = vsub.f32 %v7165, %v7558
    %v7572 = vsub.f32 %v7170, %v7558
    %v7573 = vsub.f32 %v7175, %v7558
    %v7574 = vsub.f32 %v7180, %v7558
    %v7575 = vsub.f32 %v7185, %v7558
    %v7576 = vsub.f32 %v7190, %v7558
    %v7577 = vsub.f32 %v7195, %v7558
    %v7578 = vsub.f32 %v7200, %v7558
    %v7579 = vsub.f32 %v7205, %v7558
    %v7580 = vsub.f32 %v7210, %v7558
    %v7581 = vsub.f32 %v7215, %v7558
    %v7582 = vsub.f32 %v7220, %v7558
    %v7583 = vsub.f32 %v7225, %v7558
    %v7584 = vsub.f32 %v7230, %v7558
    %v7585 = vsub.f32 %v7235, %v7558
    %v7586 = vsub.f32 %v7240, %v7558
    %v7587 = vsub.f32 %v7245, %v7558
    %v7588 = vsub.f32 %v7250, %v7558
    %v7589 = vsub.f32 %v7255, %v7558
    %v7590 = vsub.f32 %v7260, %v7558
    %v7591 = vsub.f32 %v7265, %v7558
    %v7592 = vsub.f32 %v7270, %v7558
    %v7593 = vsub.f32 %v7275, %v7558
    %v7594 = vsub.f32 %v7280, %v7558
    %v7595 = vsub.f32 %v7285, %v7558
    %v7596 = vsub.f32 %v7290, %v7558
    %v7597 = vsub.f32 %v7295, %v7558
    %v7598 = vsub.f32 %v7300, %v7558
    %v7599 = vsub.f32 %v7305, %v7558
    %v7600 = vsub.f32 %v7310, %v7558
    %v7601 = vsub.f32 %v7315, %v7558
    %v7602 = vsub.f32 %v7320, %v7558
    %v7603 = vsub.f32 %v7325, %v7558
    %v7604 = vsub.f32 %v7330, %v7558
    %v7605 = vsub.f32 %v7335, %v7558
    %v7606 = vsub.f32 %v7340, %v7558
    %v7607 = vsub.f32 %v7345, %v7558
    %v7608 = vsub.f32 %v7350, %v7558
    %v7609 = vsub.f32 %v7355, %v7558
    %v7610 = vsub.f32 %v7360, %v7558
    %v7611 = vsub.f32 %v7365, %v7558
    %v7612 = vsub.f32 %v7370, %v7558
    %v7613 = vsub.f32 %v7375, %v7558
    %v7614 = vsub.f32 %v7380, %v7558
    %v7615 = vsub.f32 %v7385, %v7558
    %v7616 = vsub.f32 %v7390, %v7558
    %v7617 = vsub.f32 %v7395, %v7558
    %v7618 = vsub.f32 %v7400, %v7558
    %v7619 = vsub.f32 %v7405, %v7558
    %v7620 = vsub.f32 %v7410, %v7558
    %v7621 = vsub.f32 %v7415, %v7558
    %v7622 = vsub.f32 %v7420, %v7558
    %v7623 = vmul.f32 %v7559, %v7559
    %v7624 = vmul.f32 %v7560, %v7560
    %v7625 = vmul.f32 %v7561, %v7561
    %v7626 = vmul.f32 %v7562, %v7562
    %v7627 = vmul.f32 %v7563, %v7563
    %v7628 = vmul.f32 %v7564, %v7564
    %v7629 = vmul.f32 %v7565, %v7565
    %v7630 = vmul.f32 %v7566, %v7566
    %v7631 = vmul.f32 %v7567, %v7567
    %v7632 = vmul.f32 %v7568, %v7568
    %v7633 = vmul.f32 %v7569, %v7569
    %v7634 = vmul.f32 %v7570, %v7570
    %v7635 = vmul.f32 %v7571, %v7571
    %v7636 = vmul.f32 %v7572, %v7572
    %v7637 = vmul.f32 %v7573, %v7573
    %v7638 = vmul.f32 %v7574, %v7574
    %v7639 = vmul.f32 %v7575, %v7575
    %v7640 = vmul.f32 %v7576, %v7576
    %v7641 = vmul.f32 %v7577, %v7577
    %v7642 = vmul.f32 %v7578, %v7578
    %v7643 = vmul.f32 %v7579, %v7579
    %v7644 = vmul.f32 %v7580, %v7580
    %v7645 = vmul.f32 %v7581, %v7581
    %v7646 = vmul.f32 %v7582, %v7582
    %v7647 = vmul.f32 %v7583, %v7583
    %v7648 = vmul.f32 %v7584, %v7584
    %v7649 = vmul.f32 %v7585, %v7585
    %v7650 = vmul.f32 %v7586, %v7586
    %v7651 = vmul.f32 %v7587, %v7587
    %v7652 = vmul.f32 %v7588, %v7588
    %v7653 = vmul.f32 %v7589, %v7589
    %v7654 = vmul.f32 %v7590, %v7590
    %v7655 = vmul.f32 %v7591, %v7591
    %v7656 = vmul.f32 %v7592, %v7592
    %v7657 = vmul.f32 %v7593, %v7593
    %v7658 = vmul.f32 %v7594, %v7594
    %v7659 = vmul.f32 %v7595, %v7595
    %v7660 = vmul.f32 %v7596, %v7596
    %v7661 = vmul.f32 %v7597, %v7597
    %v7662 = vmul.f32 %v7598, %v7598
    %v7663 = vmul.f32 %v7599, %v7599
    %v7664 = vmul.f32 %v7600, %v7600
    %v7665 = vmul.f32 %v7601, %v7601
    %v7666 = vmul.f32 %v7602, %v7602
    %v7667 = vmul.f32 %v7603, %v7603
    %v7668 = vmul.f32 %v7604, %v7604
    %v7669 = vmul.f32 %v7605, %v7605
    %v7670 = vmul.f32 %v7606, %v7606
    %v7671 = vmul.f32 %v7607, %v7607
    %v7672 = vmul.f32 %v7608, %v7608
    %v7673 = vmul.f32 %v7609, %v7609
    %v7674 = vmul.f32 %v7610, %v7610
    %v7675 = vmul.f32 %v7611, %v7611
    %v7676 = vmul.f32 %v7612, %v7612
    %v7677 = vmul.f32 %v7613, %v7613
    %v7678 = vmul.f32 %v7614, %v7614
    %v7679 = vmul.f32 %v7615, %v7615
    %v7680 = vmul.f32 %v7616, %v7616
    %v7681 = vmul.f32 %v7617, %v7617
    %v7682 = vmul.f32 %v7618, %v7618
    %v7683 = vmul.f32 %v7619, %v7619
    %v7684 = vmul.f32 %v7620, %v7620
    %v7685 = vmul.f32 %v7621, %v7621
    %v7686 = vmul.f32 %v7622, %v7622
    %v7687 = vsel %vm2414, %v7623, 0.0
    %v7688 = vsel %vm2414, %v7624, 0.0
    %v7689 = vadd.f32 %v7687, %v7688
    %v7690 = vsel %vm2414, %v7625, 0.0
    %v7691 = vadd.f32 %v7689, %v7690
    %v7692 = vsel %vm2414, %v7626, 0.0
    %v7693 = vadd.f32 %v7691, %v7692
    %v7694 = vsel %vm2414, %v7627, 0.0
    %v7695 = vadd.f32 %v7693, %v7694
    %v7696 = vsel %vm2414, %v7628, 0.0
    %v7697 = vadd.f32 %v7695, %v7696
    %v7698 = vsel %vm2414, %v7629, 0.0
    %v7699 = vadd.f32 %v7697, %v7698
    %v7700 = vsel %vm2414, %v7630, 0.0
    %v7701 = vadd.f32 %v7699, %v7700
    %v7702 = vsel %vm2414, %v7631, 0.0
    %v7703 = vadd.f32 %v7701, %v7702
    %v7704 = vsel %vm2414, %v7632, 0.0
    %v7705 = vadd.f32 %v7703, %v7704
    %v7706 = vsel %vm2414, %v7633, 0.0
    %v7707 = vadd.f32 %v7705, %v7706
    %v7708 = vsel %vm2414, %v7634, 0.0
    %v7709 = vadd.f32 %v7707, %v7708
    %v7710 = vsel %vm2414, %v7635, 0.0
    %v7711 = vadd.f32 %v7709, %v7710
    %v7712 = vsel %vm2414, %v7636, 0.0
    %v7713 = vadd.f32 %v7711, %v7712
    %v7714 = vsel %vm2414, %v7637, 0.0
    %v7715 = vadd.f32 %v7713, %v7714
    %v7716 = vsel %vm2414, %v7638, 0.0
    %v7717 = vadd.f32 %v7715, %v7716
    %v7718 = vsel %vm2414, %v7639, 0.0
    %v7719 = vadd.f32 %v7717, %v7718
    %v7720 = vsel %vm2414, %v7640, 0.0
    %v7721 = vadd.f32 %v7719, %v7720
    %v7722 = vsel %vm2414, %v7641, 0.0
    %v7723 = vadd.f32 %v7721, %v7722
    %v7724 = vsel %vm2414, %v7642, 0.0
    %v7725 = vadd.f32 %v7723, %v7724
    %v7726 = vsel %vm2414, %v7643, 0.0
    %v7727 = vadd.f32 %v7725, %v7726
    %v7728 = vsel %vm2414, %v7644, 0.0
    %v7729 = vadd.f32 %v7727, %v7728
    %v7730 = vsel %vm2414, %v7645, 0.0
    %v7731 = vadd.f32 %v7729, %v7730
    %v7732 = vsel %vm2414, %v7646, 0.0
    %v7733 = vadd.f32 %v7731, %v7732
    %v7734 = vsel %vm2414, %v7647, 0.0
    %v7735 = vadd.f32 %v7733, %v7734
    %v7736 = vsel %vm2414, %v7648, 0.0
    %v7737 = vadd.f32 %v7735, %v7736
    %v7738 = vsel %vm2414, %v7649, 0.0
    %v7739 = vadd.f32 %v7737, %v7738
    %v7740 = vsel %vm2414, %v7650, 0.0
    %v7741 = vadd.f32 %v7739, %v7740
    %v7742 = vsel %vm2414, %v7651, 0.0
    %v7743 = vadd.f32 %v7741, %v7742
    %v7744 = vsel %vm2414, %v7652, 0.0
    %v7745 = vadd.f32 %v7743, %v7744
    %v7746 = vsel %vm2414, %v7653, 0.0
    %v7747 = vadd.f32 %v7745, %v7746
    %v7748 = vsel %vm2414, %v7654, 0.0
    %v7749 = vadd.f32 %v7747, %v7748
    %v7750 = vsel %vm2414, %v7655, 0.0
    %v7751 = vadd.f32 %v7749, %v7750
    %v7752 = vsel %vm2414, %v7656, 0.0
    %v7753 = vadd.f32 %v7751, %v7752
    %v7754 = vsel %vm2414, %v7657, 0.0
    %v7755 = vadd.f32 %v7753, %v7754
    %v7756 = vsel %vm2414, %v7658, 0.0
    %v7757 = vadd.f32 %v7755, %v7756
    %v7758 = vsel %vm2414, %v7659, 0.0
    %v7759 = vadd.f32 %v7757, %v7758
    %v7760 = vsel %vm2414, %v7660, 0.0
    %v7761 = vadd.f32 %v7759, %v7760
    %v7762 = vsel %vm2414, %v7661, 0.0
    %v7763 = vadd.f32 %v7761, %v7762
    %v7764 = vsel %vm2414, %v7662, 0.0
    %v7765 = vadd.f32 %v7763, %v7764
    %v7766 = vsel %vm2414, %v7663, 0.0
    %v7767 = vadd.f32 %v7765, %v7766
    %v7768 = vsel %vm2414, %v7664, 0.0
    %v7769 = vadd.f32 %v7767, %v7768
    %v7770 = vsel %vm2414, %v7665, 0.0
    %v7771 = vadd.f32 %v7769, %v7770
    %v7772 = vsel %vm2414, %v7666, 0.0
    %v7773 = vadd.f32 %v7771, %v7772
    %v7774 = vsel %vm2414, %v7667, 0.0
    %v7775 = vadd.f32 %v7773, %v7774
    %v7776 = vsel %vm2414, %v7668, 0.0
    %v7777 = vadd.f32 %v7775, %v7776
    %v7778 = vsel %vm2414, %v7669, 0.0
    %v7779 = vadd.f32 %v7777, %v7778
    %v7780 = vsel %vm2414, %v7670, 0.0
    %v7781 = vadd.f32 %v7779, %v7780
    %v7782 = vsel %vm2414, %v7671, 0.0
    %v7783 = vadd.f32 %v7781, %v7782
    %v7784 = vsel %vm2414, %v7672, 0.0
    %v7785 = vadd.f32 %v7783, %v7784
    %v7786 = vsel %vm2414, %v7673, 0.0
    %v7787 = vadd.f32 %v7785, %v7786
    %v7788 = vsel %vm2414, %v7674, 0.0
    %v7789 = vadd.f32 %v7787, %v7788
    %v7790 = vsel %vm2414, %v7675, 0.0
    %v7791 = vadd.f32 %v7789, %v7790
    %v7792 = vsel %vm2414, %v7676, 0.0
    %v7793 = vadd.f32 %v7791, %v7792
    %v7794 = vsel %vm2414, %v7677, 0.0
    %v7795 = vadd.f32 %v7793, %v7794
    %v7796 = vsel %vm2414, %v7678, 0.0
    %v7797 = vadd.f32 %v7795, %v7796
    %v7798 = vsel %vm2414, %v7679, 0.0
    %v7799 = vadd.f32 %v7797, %v7798
    %v7800 = vsel %vm2414, %v7680, 0.0
    %v7801 = vadd.f32 %v7799, %v7800
    %v7802 = vsel %vm2414, %v7681, 0.0
    %v7803 = vadd.f32 %v7801, %v7802
    %v7804 = vsel %vm2414, %v7682, 0.0
    %v7805 = vadd.f32 %v7803, %v7804
    %v7806 = vsel %vm2414, %v7683, 0.0
    %v7807 = vadd.f32 %v7805, %v7806
    %v7808 = vsel %vm2414, %v7684, 0.0
    %v7809 = vadd.f32 %v7807, %v7808
    %v7810 = vsel %vm2414, %v7685, 0.0
    %v7811 = vadd.f32 %v7809, %v7810
    %v7812 = vsel %vm2414, %v7686, 0.0
    %v7813 = vadd.f32 %v7811, %v7812
    %v7814 = vrot.slane %v7813, 4
    %v7815 = vadd.f32 %v7813, %v7814
    %v7816 = vrot.slane %v7815, 2
    %v7817 = vadd.f32 %v7815, %v7816
    %v7818 = vrot.slane %v7817, 1
    %v7819 = vadd.f32 %v7817, %v7818
    %v7820 = vmul.f32 %v7819, %v3591
    %v7821 = vadd.f32 %v7820, 1e-05
    %v7822 = vrsqrt.pop %v7821
    %v7823 = vmul.f32 %v7423, %v7822
    %v7824 = vmul.f32 %v7558, %v7823
    %v7825 = vsub.f32 %v7424, %v7824
    %v7858 = vrot.slane %v7115, 7
    %vm7859 = vcmask 1041409
    %v7860 = vsel %vm7859, %v7858, %v7105
    %v7861 = vrot.slane %v7125, 6
    %vm7862 = vcmask 1042434
    %v7863 = vsel %vm7862, %v7861, %v7860
    %v7864 = vrot.slane %v7135, 5
    %vm7865 = vcmask 1043459
    %v7866 = vsel %vm7865, %v7864, %v7863
    %v7867 = vrot.slane %v7145, 4
    %vm7868 = vcmask 1044484
    %v7869 = vsel %vm7868, %v7867, %v7866
    %v7870 = vrot.slane %v7155, 3
    %vm7871 = vcmask 1045509
    %v7872 = vsel %vm7871, %v7870, %v7869
    %v7873 = vrot.slane %v7165, 2
    %vm7874 = vcmask 1046534
    %v7875 = vsel %vm7874, %v7873, %v7872
    %v7876 = vrot.slane %v7175, 1
    %vm7877 = vcmask 1047559
    %v7878 = vsel %vm7877, %v7876, %v7875
    %v7879 = vrot.slane %v7195, 7
    %v7880 = vsel %vm7859, %v7879, %v7185
    %v7881 = vrot.slane %v7205, 6
    %v7882 = vsel %vm7862, %v7881, %v7880
    %v7883 = vrot.slane %v7215, 5
    %v7884 = vsel %vm7865, %v7883, %v7882
    %v7885 = vrot.slane %v7225, 4
    %v7886 = vsel %vm7868, %v7885, %v7884
    %v7887 = vrot.slane %v7235, 3
    %v7888 = vsel %vm7871, %v7887, %v7886
    %v7889 = vrot.slane %v7245, 2
    %v7890 = vsel %vm7874, %v7889, %v7888
    %v7891 = vrot.slane %v7255, 1
    %v7892 = vsel %vm7877, %v7891, %v7890
    %v7893 = vrot.slane %v7275, 7
    %v7894 = vsel %vm7859, %v7893, %v7265
    %v7895 = vrot.slane %v7285, 6
    %v7896 = vsel %vm7862, %v7895, %v7894
    %v7897 = vrot.slane %v7295, 5
    %v7898 = vsel %vm7865, %v7897, %v7896
    %v7899 = vrot.slane %v7305, 4
    %v7900 = vsel %vm7868, %v7899, %v7898
    %v7901 = vrot.slane %v7315, 3
    %v7902 = vsel %vm7871, %v7901, %v7900
    %v7903 = vrot.slane %v7325, 2
    %v7904 = vsel %vm7874, %v7903, %v7902
    %v7905 = vrot.slane %v7335, 1
    %v7906 = vsel %vm7877, %v7905, %v7904
    %v7907 = vrot.slane %v7355, 7
    %v7908 = vsel %vm7859, %v7907, %v7345
    %v7909 = vrot.slane %v7365, 6
    %v7910 = vsel %vm7862, %v7909, %v7908
    %v7911 = vrot.slane %v7375, 5
    %v7912 = vsel %vm7865, %v7911, %v7910
    %v7913 = vrot.slane %v7385, 4
    %v7914 = vsel %vm7868, %v7913, %v7912
    %v7915 = vrot.slane %v7395, 3
    %v7916 = vsel %vm7871, %v7915, %v7914
    %v7917 = vrot.slane %v7405, 2
    %v7918 = vsel %vm7874, %v7917, %v7916
    %v7919 = vrot.slane %v7415, 1
    %v7920 = vsel %vm7877, %v7919, %v7918
    %v7925 = vrot.slane %v7105, 1
    %v7926 = vsel %vm7859, %v7115, %v7925
    %v7927 = vrot.slane %v7125, 7
    %v7928 = vsel %vm7862, %v7927, %v7926
    %v7929 = vrot.slane %v7135, 6
    %v7930 = vsel %vm7865, %v7929, %v7928
    %v7931 = vrot.slane %v7145, 5
    %v7932 = vsel %vm7868, %v7931, %v7930
    %v7933 = vrot.slane %v7155, 4
    %v7934 = vsel %vm7871, %v7933, %v7932
    %v7935 = vrot.slane %v7165, 3
    %v7936 = vsel %vm7874, %v7935, %v7934
    %v7937 = vrot.slane %v7175, 2
    %v7938 = vsel %vm7877, %v7937, %v7936
    %v7939 = vrot.slane %v7185, 1
    %v7940 = vsel %vm7859, %v7195, %v7939
    %v7941 = vrot.slane %v7205, 7
    %v7942 = vsel %vm7862, %v7941, %v7940
    %v7943 = vrot.slane %v7215, 6
    %v7944 = vsel %vm7865, %v7943, %v7942
    %v7945 = vrot.slane %v7225, 5
    %v7946 = vsel %vm7868, %v7945, %v7944
    %v7947 = vrot.slane %v7235, 4
    %v7948 = vsel %vm7871, %v7947, %v7946
    %v7949 = vrot.slane %v7245, 3
    %v7950 = vsel %vm7874, %v7949, %v7948
    %v7951 = vrot.slane %v7255, 2
    %v7952 = vsel %vm7877, %v7951, %v7950
    %v7953 = vrot.slane %v7265, 1
    %v7954 = vsel %vm7859, %v7275, %v7953
    %v7955 = vrot.slane %v7285, 7
    %v7956 = vsel %vm7862, %v7955, %v7954
    %v7957 = vrot.slane %v7295, 6
    %v7958 = vsel %vm7865, %v7957, %v7956
    %v7959 = vrot.slane %v7305, 5
    %v7960 = vsel %vm7868, %v7959, %v7958
    %v7961 = vrot.slane %v7315, 4
    %v7962 = vsel %vm7871, %v7961, %v7960
    %v7963 = vrot.slane %v7325, 3
    %v7964 = vsel %vm7874, %v7963, %v7962
    %v7965 = vrot.slane %v7335, 2
    %v7966 = vsel %vm7877, %v7965, %v7964
    %v7967 = vrot.slane %v7345, 1
    %v7968 = vsel %vm7859, %v7355, %v7967
    %v7969 = vrot.slane %v7365, 7
    %v7970 = vsel %vm7862, %v7969, %v7968
    %v7971 = vrot.slane %v7375, 6
    %v7972 = vsel %vm7865, %v7971, %v7970
    %v7973 = vrot.slane %v7385, 5
    %v7974 = vsel %vm7868, %v7973, %v7972
    %v7975 = vrot.slane %v7395, 4
    %v7976 = vsel %vm7871, %v7975, %v7974
    %v7977 = vrot.slane %v7405, 3
    %v7978 = vsel %vm7874, %v7977, %v7976
    %v7979 = vrot.slane %v7415, 2
    %v7980 = vsel %vm7877, %v7979, %v7978
    %7981 = vrot.lane.b32.xlu0 %v7938, 8
    %v7982 = vpop.permute.xlu0 %7981
    %7983 = vrot.lane.b32.xlu0 %v7952, 8
    %v7984 = vpop.permute.xlu0 %7983
    %7985 = vrot.lane.b32.xlu0 %v7966, 8
    %v7986 = vpop.permute.xlu0 %7985
    %7987 = vrot.lane.b32.xlu0 %v7980, 8
    %v7988 = vpop.permute.xlu0 %7987
    %v7993 = vrot.slane %v7105, 2
    %v7994 = vrot.slane %v7115, 1
    %v7995 = vsel %vm7859, %v7994, %v7993
    %v7996 = vsel %vm7862, %v7125, %v7995
    %v7997 = vrot.slane %v7135, 7
    %v7998 = vsel %vm7865, %v7997, %v7996
    %v7999 = vrot.slane %v7145, 6
    %v8000 = vsel %vm7868, %v7999, %v7998
    %v8001 = vrot.slane %v7155, 5
    %v8002 = vsel %vm7871, %v8001, %v8000
    %v8003 = vrot.slane %v7165, 4
    %v8004 = vsel %vm7874, %v8003, %v8002
    %v8005 = vrot.slane %v7175, 3
    %v8006 = vsel %vm7877, %v8005, %v8004
    %v8007 = vrot.slane %v7185, 2
    %v8008 = vrot.slane %v7195, 1
    %v8009 = vsel %vm7859, %v8008, %v8007
    %v8010 = vsel %vm7862, %v7205, %v8009
    %v8011 = vrot.slane %v7215, 7
    %v8012 = vsel %vm7865, %v8011, %v8010
    %v8013 = vrot.slane %v7225, 6
    %v8014 = vsel %vm7868, %v8013, %v8012
    %v8015 = vrot.slane %v7235, 5
    %v8016 = vsel %vm7871, %v8015, %v8014
    %v8017 = vrot.slane %v7245, 4
    %v8018 = vsel %vm7874, %v8017, %v8016
    %v8019 = vrot.slane %v7255, 3
    %v8020 = vsel %vm7877, %v8019, %v8018
    %v8021 = vrot.slane %v7265, 2
    %v8022 = vrot.slane %v7275, 1
    %v8023 = vsel %vm7859, %v8022, %v8021
    %v8024 = vsel %vm7862, %v7285, %v8023
    %v8025 = vrot.slane %v7295, 7
    %v8026 = vsel %vm7865, %v8025, %v8024
    %v8027 = vrot.slane %v7305, 6
    %v8028 = vsel %vm7868, %v8027, %v8026
    %v8029 = vrot.slane %v7315, 5
    %v8030 = vsel %vm7871, %v8029, %v8028
    %v8031 = vrot.slane %v7325, 4
    %v8032 = vsel %vm7874, %v8031, %v8030
    %v8033 = vrot.slane %v7335, 3
    %v8034 = vsel %vm7877, %v8033, %v8032
    %v8035 = vrot.slane %v7345, 2
    %v8036 = vrot.slane %v7355, 1
    %v8037 = vsel %vm7859, %v8036, %v8035
    %v8038 = vsel %vm7862, %v7365, %v8037
    %v8039 = vrot.slane %v7375, 7
    %v8040 = vsel %vm7865, %v8039, %v8038
    %v8041 = vrot.slane %v7385, 6
    %v8042 = vsel %vm7868, %v8041, %v8040
    %v8043 = vrot.slane %v7395, 5
    %v8044 = vsel %vm7871, %v8043, %v8042
    %v8045 = vrot.slane %v7405, 4
    %v8046 = vsel %vm7874, %v8045, %v8044
    %v8047 = vrot.slane %v7415, 3
    %v8048 = vsel %vm7877, %v8047, %v8046
    %8049 = vrot.lane.b32.xlu0 %v8006, 16
    %v8050 = vpop.permute.xlu0 %8049
    %8051 = vrot.lane.b32.xlu0 %v8020, 16
    %v8052 = vpop.permute.xlu0 %8051
    %8053 = vrot.lane.b32.xlu0 %v8034, 16
    %v8054 = vpop.permute.xlu0 %8053
    %8055 = vrot.lane.b32.xlu0 %v8048, 16
    %v8056 = vpop.permute.xlu0 %8055
    %v8061 = vrot.slane %v7105, 3
    %v8062 = vrot.slane %v7115, 2
    %v8063 = vsel %vm7859, %v8062, %v8061
    %v8064 = vrot.slane %v7125, 1
    %v8065 = vsel %vm7862, %v8064, %v8063
    %v8066 = vsel %vm7865, %v7135, %v8065
    %v8067 = vrot.slane %v7145, 7
    %v8068 = vsel %vm7868, %v8067, %v8066
    %v8069 = vrot.slane %v7155, 6
    %v8070 = vsel %vm7871, %v8069, %v8068
    %v8071 = vrot.slane %v7165, 5
    %v8072 = vsel %vm7874, %v8071, %v8070
    %v8073 = vrot.slane %v7175, 4
    %v8074 = vsel %vm7877, %v8073, %v8072
    %v8075 = vrot.slane %v7185, 3
    %v8076 = vrot.slane %v7195, 2
    %v8077 = vsel %vm7859, %v8076, %v8075
    %v8078 = vrot.slane %v7205, 1
    %v8079 = vsel %vm7862, %v8078, %v8077
    %v8080 = vsel %vm7865, %v7215, %v8079
    %v8081 = vrot.slane %v7225, 7
    %v8082 = vsel %vm7868, %v8081, %v8080
    %v8083 = vrot.slane %v7235, 6
    %v8084 = vsel %vm7871, %v8083, %v8082
    %v8085 = vrot.slane %v7245, 5
    %v8086 = vsel %vm7874, %v8085, %v8084
    %v8087 = vrot.slane %v7255, 4
    %v8088 = vsel %vm7877, %v8087, %v8086
    %v8089 = vrot.slane %v7265, 3
    %v8090 = vrot.slane %v7275, 2
    %v8091 = vsel %vm7859, %v8090, %v8089
    %v8092 = vrot.slane %v7285, 1
    %v8093 = vsel %vm7862, %v8092, %v8091
    %v8094 = vsel %vm7865, %v7295, %v8093
    %v8095 = vrot.slane %v7305, 7
    %v8096 = vsel %vm7868, %v8095, %v8094
    %v8097 = vrot.slane %v7315, 6
    %v8098 = vsel %vm7871, %v8097, %v8096
    %v8099 = vrot.slane %v7325, 5
    %v8100 = vsel %vm7874, %v8099, %v8098
    %v8101 = vrot.slane %v7335, 4
    %v8102 = vsel %vm7877, %v8101, %v8100
    %v8103 = vrot.slane %v7345, 3
    %v8104 = vrot.slane %v7355, 2
    %v8105 = vsel %vm7859, %v8104, %v8103
    %v8106 = vrot.slane %v7365, 1
    %v8107 = vsel %vm7862, %v8106, %v8105
    %v8108 = vsel %vm7865, %v7375, %v8107
    %v8109 = vrot.slane %v7385, 7
    %v8110 = vsel %vm7868, %v8109, %v8108
    %v8111 = vrot.slane %v7395, 6
    %v8112 = vsel %vm7871, %v8111, %v8110
    %v8113 = vrot.slane %v7405, 5
    %v8114 = vsel %vm7874, %v8113, %v8112
    %v8115 = vrot.slane %v7415, 4
    %v8116 = vsel %vm7877, %v8115, %v8114
    %8117 = vrot.lane.b32.xlu0 %v8074, 24
    %v8118 = vpop.permute.xlu0 %8117
    %8119 = vrot.lane.b32.xlu0 %v8088, 24
    %v8120 = vpop.permute.xlu0 %8119
    %8121 = vrot.lane.b32.xlu0 %v8102, 24
    %v8122 = vpop.permute.xlu0 %8121
    %8123 = vrot.lane.b32.xlu0 %v8116, 24
    %v8124 = vpop.permute.xlu0 %8123
    %v8129 = vrot.slane %v7105, 4
    %v8130 = vrot.slane %v7115, 3
    %v8131 = vsel %vm7859, %v8130, %v8129
    %v8132 = vrot.slane %v7125, 2
    %v8133 = vsel %vm7862, %v8132, %v8131
    %v8134 = vrot.slane %v7135, 1
    %v8135 = vsel %vm7865, %v8134, %v8133
    %v8136 = vsel %vm7868, %v7145, %v8135
    %v8137 = vrot.slane %v7155, 7
    %v8138 = vsel %vm7871, %v8137, %v8136
    %v8139 = vrot.slane %v7165, 6
    %v8140 = vsel %vm7874, %v8139, %v8138
    %v8141 = vrot.slane %v7175, 5
    %v8142 = vsel %vm7877, %v8141, %v8140
    %v8143 = vrot.slane %v7185, 4
    %v8144 = vrot.slane %v7195, 3
    %v8145 = vsel %vm7859, %v8144, %v8143
    %v8146 = vrot.slane %v7205, 2
    %v8147 = vsel %vm7862, %v8146, %v8145
    %v8148 = vrot.slane %v7215, 1
    %v8149 = vsel %vm7865, %v8148, %v8147
    %v8150 = vsel %vm7868, %v7225, %v8149
    %v8151 = vrot.slane %v7235, 7
    %v8152 = vsel %vm7871, %v8151, %v8150
    %v8153 = vrot.slane %v7245, 6
    %v8154 = vsel %vm7874, %v8153, %v8152
    %v8155 = vrot.slane %v7255, 5
    %v8156 = vsel %vm7877, %v8155, %v8154
    %v8157 = vrot.slane %v7265, 4
    %v8158 = vrot.slane %v7275, 3
    %v8159 = vsel %vm7859, %v8158, %v8157
    %v8160 = vrot.slane %v7285, 2
    %v8161 = vsel %vm7862, %v8160, %v8159
    %v8162 = vrot.slane %v7295, 1
    %v8163 = vsel %vm7865, %v8162, %v8161
    %v8164 = vsel %vm7868, %v7305, %v8163
    %v8165 = vrot.slane %v7315, 7
    %v8166 = vsel %vm7871, %v8165, %v8164
    %v8167 = vrot.slane %v7325, 6
    %v8168 = vsel %vm7874, %v8167, %v8166
    %v8169 = vrot.slane %v7335, 5
    %v8170 = vsel %vm7877, %v8169, %v8168
    %v8171 = vrot.slane %v7345, 4
    %v8172 = vrot.slane %v7355, 3
    %v8173 = vsel %vm7859, %v8172, %v8171
    %v8174 = vrot.slane %v7365, 2
    %v8175 = vsel %vm7862, %v8174, %v8173
    %v8176 = vrot.slane %v7375, 1
    %v8177 = vsel %vm7865, %v8176, %v8175
    %v8178 = vsel %vm7868, %v7385, %v8177
    %v8179 = vrot.slane %v7395, 7
    %v8180 = vsel %vm7871, %v8179, %v8178
    %v8181 = vrot.slane %v7405, 6
    %v8182 = vsel %vm7874, %v8181, %v8180
    %v8183 = vrot.slane %v7415, 5
    %v8184 = vsel %vm7877, %v8183, %v8182
    %8185 = vrot.lane.b32.xlu0 %v8142, 32
    %v8186 = vpop.permute.xlu0 %8185
    %8187 = vrot.lane.b32.xlu0 %v8156, 32
    %v8188 = vpop.permute.xlu0 %8187
    %8189 = vrot.lane.b32.xlu0 %v8170, 32
    %v8190 = vpop.permute.xlu0 %8189
    %8191 = vrot.lane.b32.xlu0 %v8184, 32
    %v8192 = vpop.permute.xlu0 %8191
    %v8197 = vrot.slane %v7105, 5
    %v8198 = vrot.slane %v7115, 4
    %v8199 = vsel %vm7859, %v8198, %v8197
    %v8200 = vrot.slane %v7125, 3
    %v8201 = vsel %vm7862, %v8200, %v8199
    %v8202 = vrot.slane %v7135, 2
    %v8203 = vsel %vm7865, %v8202, %v8201
    %v8204 = vrot.slane %v7145, 1
    %v8205 = vsel %vm7868, %v8204, %v8203
    %v8206 = vsel %vm7871, %v7155, %v8205
    %v8207 = vrot.slane %v7165, 7
    %v8208 = vsel %vm7874, %v8207, %v8206
    %v8209 = vrot.slane %v7175, 6
    %v8210 = vsel %vm7877, %v8209, %v8208
    %v8211 = vrot.slane %v7185, 5
    %v8212 = vrot.slane %v7195, 4
    %v8213 = vsel %vm7859, %v8212, %v8211
    %v8214 = vrot.slane %v7205, 3
    %v8215 = vsel %vm7862, %v8214, %v8213
    %v8216 = vrot.slane %v7215, 2
    %v8217 = vsel %vm7865, %v8216, %v8215
    %v8218 = vrot.slane %v7225, 1
    %v8219 = vsel %vm7868, %v8218, %v8217
    %v8220 = vsel %vm7871, %v7235, %v8219
    %v8221 = vrot.slane %v7245, 7
    %v8222 = vsel %vm7874, %v8221, %v8220
    %v8223 = vrot.slane %v7255, 6
    %v8224 = vsel %vm7877, %v8223, %v8222
    %v8225 = vrot.slane %v7265, 5
    %v8226 = vrot.slane %v7275, 4
    %v8227 = vsel %vm7859, %v8226, %v8225
    %v8228 = vrot.slane %v7285, 3
    %v8229 = vsel %vm7862, %v8228, %v8227
    %v8230 = vrot.slane %v7295, 2
    %v8231 = vsel %vm7865, %v8230, %v8229
    %v8232 = vrot.slane %v7305, 1
    %v8233 = vsel %vm7868, %v8232, %v8231
    %v8234 = vsel %vm7871, %v7315, %v8233
    %v8235 = vrot.slane %v7325, 7
    %v8236 = vsel %vm7874, %v8235, %v8234
    %v8237 = vrot.slane %v7335, 6
    %v8238 = vsel %vm7877, %v8237, %v8236
    %v8239 = vrot.slane %v7345, 5
    %v8240 = vrot.slane %v7355, 4
    %v8241 = vsel %vm7859, %v8240, %v8239
    %v8242 = vrot.slane %v7365, 3
    %v8243 = vsel %vm7862, %v8242, %v8241
    %v8244 = vrot.slane %v7375, 2
    %v8245 = vsel %vm7865, %v8244, %v8243
    %v8246 = vrot.slane %v7385, 1
    %v8247 = vsel %vm7868, %v8246, %v8245
    %v8248 = vsel %vm7871, %v7395, %v8247
    %v8249 = vrot.slane %v7405, 7
    %v8250 = vsel %vm7874, %v8249, %v8248
    %v8251 = vrot.slane %v7415, 6
    %v8252 = vsel %vm7877, %v8251, %v8250
    %8253 = vrot.lane.b32.xlu0 %v8210, 40
    %v8254 = vpop.permute.xlu0 %8253
    %8255 = vrot.lane.b32.xlu0 %v8224, 40
    %v8256 = vpop.permute.xlu0 %8255
    %8257 = vrot.lane.b32.xlu0 %v8238, 40
    %v8258 = vpop.permute.xlu0 %8257
    %8259 = vrot.lane.b32.xlu0 %v8252, 40
    %v8260 = vpop.permute.xlu0 %8259
    %v8265 = vrot.slane %v7105, 6
    %v8266 = vrot.slane %v7115, 5
    %v8267 = vsel %vm7859, %v8266, %v8265
    %v8268 = vrot.slane %v7125, 4
    %v8269 = vsel %vm7862, %v8268, %v8267
    %v8270 = vrot.slane %v7135, 3
    %v8271 = vsel %vm7865, %v8270, %v8269
    %v8272 = vrot.slane %v7145, 2
    %v8273 = vsel %vm7868, %v8272, %v8271
    %v8274 = vrot.slane %v7155, 1
    %v8275 = vsel %vm7871, %v8274, %v8273
    %v8276 = vsel %vm7874, %v7165, %v8275
    %v8277 = vrot.slane %v7175, 7
    %v8278 = vsel %vm7877, %v8277, %v8276
    %v8279 = vrot.slane %v7185, 6
    %v8280 = vrot.slane %v7195, 5
    %v8281 = vsel %vm7859, %v8280, %v8279
    %v8282 = vrot.slane %v7205, 4
    %v8283 = vsel %vm7862, %v8282, %v8281
    %v8284 = vrot.slane %v7215, 3
    %v8285 = vsel %vm7865, %v8284, %v8283
    %v8286 = vrot.slane %v7225, 2
    %v8287 = vsel %vm7868, %v8286, %v8285
    %v8288 = vrot.slane %v7235, 1
    %v8289 = vsel %vm7871, %v8288, %v8287
    %v8290 = vsel %vm7874, %v7245, %v8289
    %v8291 = vrot.slane %v7255, 7
    %v8292 = vsel %vm7877, %v8291, %v8290
    %v8293 = vrot.slane %v7265, 6
    %v8294 = vrot.slane %v7275, 5
    %v8295 = vsel %vm7859, %v8294, %v8293
    %v8296 = vrot.slane %v7285, 4
    %v8297 = vsel %vm7862, %v8296, %v8295
    %v8298 = vrot.slane %v7295, 3
    %v8299 = vsel %vm7865, %v8298, %v8297
    %v8300 = vrot.slane %v7305, 2
    %v8301 = vsel %vm7868, %v8300, %v8299
    %v8302 = vrot.slane %v7315, 1
    %v8303 = vsel %vm7871, %v8302, %v8301
    %v8304 = vsel %vm7874, %v7325, %v8303
    %v8305 = vrot.slane %v7335, 7
    %v8306 = vsel %vm7877, %v8305, %v8304
    %v8307 = vrot.slane %v7345, 6
    %v8308 = vrot.slane %v7355, 5
    %v8309 = vsel %vm7859, %v8308, %v8307
    %v8310 = vrot.slane %v7365, 4
    %v8311 = vsel %vm7862, %v8310, %v8309
    %v8312 = vrot.slane %v7375, 3
    %v8313 = vsel %vm7865, %v8312, %v8311
    %v8314 = vrot.slane %v7385, 2
    %v8315 = vsel %vm7868, %v8314, %v8313
    %v8316 = vrot.slane %v7395, 1
    %v8317 = vsel %vm7871, %v8316, %v8315
    %v8318 = vsel %vm7874, %v7405, %v8317
    %v8319 = vrot.slane %v7415, 7
    %v8320 = vsel %vm7877, %v8319, %v8318
    %8321 = vrot.lane.b32.xlu0 %v8278, 48
    %v8322 = vpop.permute.xlu0 %8321
    %8323 = vrot.lane.b32.xlu0 %v8292, 48
    %v8324 = vpop.permute.xlu0 %8323
    %8325 = vrot.lane.b32.xlu0 %v8306, 48
    %v8326 = vpop.permute.xlu0 %8325
    %8327 = vrot.lane.b32.xlu0 %v8320, 48
    %v8328 = vpop.permute.xlu0 %8327
    %v8333 = vrot.slane %v7105, 7
    %v8334 = vrot.slane %v7115, 6
    %v8335 = vsel %vm7859, %v8334, %v8333
    %v8336 = vrot.slane %v7125, 5
    %v8337 = vsel %vm7862, %v8336, %v8335
    %v8338 = vrot.slane %v7135, 4
    %v8339 = vsel %vm7865, %v8338, %v8337
    %v8340 = vrot.slane %v7145, 3
    %v8341 = vsel %vm7868, %v8340, %v8339
    %v8342 = vrot.slane %v7155, 2
    %v8343 = vsel %vm7871, %v8342, %v8341
    %v8344 = vrot.slane %v7165, 1
    %v8345 = vsel %vm7874, %v8344, %v8343
    %v8346 = vsel %vm7877, %v7175, %v8345
    %v8347 = vrot.slane %v7185, 7
    %v8348 = vrot.slane %v7195, 6
    %v8349 = vsel %vm7859, %v8348, %v8347
    %v8350 = vrot.slane %v7205, 5
    %v8351 = vsel %vm7862, %v8350, %v8349
    %v8352 = vrot.slane %v7215, 4
    %v8353 = vsel %vm7865, %v8352, %v8351
    %v8354 = vrot.slane %v7225, 3
    %v8355 = vsel %vm7868, %v8354, %v8353
    %v8356 = vrot.slane %v7235, 2
    %v8357 = vsel %vm7871, %v8356, %v8355
    %v8358 = vrot.slane %v7245, 1
    %v8359 = vsel %vm7874, %v8358, %v8357
    %v8360 = vsel %vm7877, %v7255, %v8359
    %v8361 = vrot.slane %v7265, 7
    %v8362 = vrot.slane %v7275, 6
    %v8363 = vsel %vm7859, %v8362, %v8361
    %v8364 = vrot.slane %v7285, 5
    %v8365 = vsel %vm7862, %v8364, %v8363
    %v8366 = vrot.slane %v7295, 4
    %v8367 = vsel %vm7865, %v8366, %v8365
    %v8368 = vrot.slane %v7305, 3
    %v8369 = vsel %vm7868, %v8368, %v8367
    %v8370 = vrot.slane %v7315, 2
    %v8371 = vsel %vm7871, %v8370, %v8369
    %v8372 = vrot.slane %v7325, 1
    %v8373 = vsel %vm7874, %v8372, %v8371
    %v8374 = vsel %vm7877, %v7335, %v8373
    %v8375 = vrot.slane %v7345, 7
    %v8376 = vrot.slane %v7355, 6
    %v8377 = vsel %vm7859, %v8376, %v8375
    %v8378 = vrot.slane %v7365, 5
    %v8379 = vsel %vm7862, %v8378, %v8377
    %v8380 = vrot.slane %v7375, 4
    %v8381 = vsel %vm7865, %v8380, %v8379
    %v8382 = vrot.slane %v7385, 3
    %v8383 = vsel %vm7868, %v8382, %v8381
    %v8384 = vrot.slane %v7395, 2
    %v8385 = vsel %vm7871, %v8384, %v8383
    %v8386 = vrot.slane %v7405, 1
    %v8387 = vsel %vm7874, %v8386, %v8385
    %v8388 = vsel %vm7877, %v7415, %v8387
    %8389 = vrot.lane.b32.xlu0 %v8346, 56
    %v8390 = vpop.permute.xlu0 %8389
    %8391 = vrot.lane.b32.xlu0 %v8360, 56
    %v8392 = vpop.permute.xlu0 %8391
    %8393 = vrot.lane.b32.xlu0 %v8374, 56
    %v8394 = vpop.permute.xlu0 %8393
    %8395 = vrot.lane.b32.xlu0 %v8388, 56
    %v8396 = vpop.permute.xlu0 %8395
    %v8433 = vrot.slane %v7120, 7
    %v8434 = vsel %vm7859, %v8433, %v7110
    %v8435 = vrot.slane %v7130, 6
    %v8436 = vsel %vm7862, %v8435, %v8434
    %v8437 = vrot.slane %v7140, 5
    %v8438 = vsel %vm7865, %v8437, %v8436
    %v8439 = vrot.slane %v7150, 4
    %v8440 = vsel %vm7868, %v8439, %v8438
    %v8441 = vrot.slane %v7160, 3
    %v8442 = vsel %vm7871, %v8441, %v8440
    %v8443 = vrot.slane %v7170, 2
    %v8444 = vsel %vm7874, %v8443, %v8442
    %v8445 = vrot.slane %v7180, 1
    %v8446 = vsel %vm7877, %v8445, %v8444
    %v8447 = vrot.slane %v7200, 7
    %v8448 = vsel %vm7859, %v8447, %v7190
    %v8449 = vrot.slane %v7210, 6
    %v8450 = vsel %vm7862, %v8449, %v8448
    %v8451 = vrot.slane %v7220, 5
    %v8452 = vsel %vm7865, %v8451, %v8450
    %v8453 = vrot.slane %v7230, 4
    %v8454 = vsel %vm7868, %v8453, %v8452
    %v8455 = vrot.slane %v7240, 3
    %v8456 = vsel %vm7871, %v8455, %v8454
    %v8457 = vrot.slane %v7250, 2
    %v8458 = vsel %vm7874, %v8457, %v8456
    %v8459 = vrot.slane %v7260, 1
    %v8460 = vsel %vm7877, %v8459, %v8458
    %v8461 = vrot.slane %v7280, 7
    %v8462 = vsel %vm7859, %v8461, %v7270
    %v8463 = vrot.slane %v7290, 6
    %v8464 = vsel %vm7862, %v8463, %v8462
    %v8465 = vrot.slane %v7300, 5
    %v8466 = vsel %vm7865, %v8465, %v8464
    %v8467 = vrot.slane %v7310, 4
    %v8468 = vsel %vm7868, %v8467, %v8466
    %v8469 = vrot.slane %v7320, 3
    %v8470 = vsel %vm7871, %v8469, %v8468
    %v8471 = vrot.slane %v7330, 2
    %v8472 = vsel %vm7874, %v8471, %v8470
    %v8473 = vrot.slane %v7340, 1
    %v8474 = vsel %vm7877, %v8473, %v8472
    %v8475 = vrot.slane %v7360, 7
    %v8476 = vsel %vm7859, %v8475, %v7350
    %v8477 = vrot.slane %v7370, 6
    %v8478 = vsel %vm7862, %v8477, %v8476
    %v8479 = vrot.slane %v7380, 5
    %v8480 = vsel %vm7865, %v8479, %v8478
    %v8481 = vrot.slane %v7390, 4
    %v8482 = vsel %vm7868, %v8481, %v8480
    %v8483 = vrot.slane %v7400, 3
    %v8484 = vsel %vm7871, %v8483, %v8482
    %v8485 = vrot.slane %v7410, 2
    %v8486 = vsel %vm7874, %v8485, %v8484
    %v8487 = vrot.slane %v7420, 1
    %v8488 = vsel %vm7877, %v8487, %v8486
    %8489 = vrot.lane.b32.xlu0 %v8446, 64
    %v8490 = vpop.permute.xlu0 %8489
    %8491 = vrot.lane.b32.xlu0 %v8460, 64
    %v8492 = vpop.permute.xlu0 %8491
    %8493 = vrot.lane.b32.xlu0 %v8474, 64
    %v8494 = vpop.permute.xlu0 %8493
    %8495 = vrot.lane.b32.xlu0 %v8488, 64
    %v8496 = vpop.permute.xlu0 %8495
    %v8501 = vrot.slane %v7110, 1
    %v8502 = vsel %vm7859, %v7120, %v8501
    %v8503 = vrot.slane %v7130, 7
    %v8504 = vsel %vm7862, %v8503, %v8502
    %v8505 = vrot.slane %v7140, 6
    %v8506 = vsel %vm7865, %v8505, %v8504
    %v8507 = vrot.slane %v7150, 5
    %v8508 = vsel %vm7868, %v8507, %v8506
    %v8509 = vrot.slane %v7160, 4
    %v8510 = vsel %vm7871, %v8509, %v8508
    %v8511 = vrot.slane %v7170, 3
    %v8512 = vsel %vm7874, %v8511, %v8510
    %v8513 = vrot.slane %v7180, 2
    %v8514 = vsel %vm7877, %v8513, %v8512
    %v8515 = vrot.slane %v7190, 1
    %v8516 = vsel %vm7859, %v7200, %v8515
    %v8517 = vrot.slane %v7210, 7
    %v8518 = vsel %vm7862, %v8517, %v8516
    %v8519 = vrot.slane %v7220, 6
    %v8520 = vsel %vm7865, %v8519, %v8518
    %v8521 = vrot.slane %v7230, 5
    %v8522 = vsel %vm7868, %v8521, %v8520
    %v8523 = vrot.slane %v7240, 4
    %v8524 = vsel %vm7871, %v8523, %v8522
    %v8525 = vrot.slane %v7250, 3
    %v8526 = vsel %vm7874, %v8525, %v8524
    %v8527 = vrot.slane %v7260, 2
    %v8528 = vsel %vm7877, %v8527, %v8526
    %v8529 = vrot.slane %v7270, 1
    %v8530 = vsel %vm7859, %v7280, %v8529
    %v8531 = vrot.slane %v7290, 7
    %v8532 = vsel %vm7862, %v8531, %v8530
    %v8533 = vrot.slane %v7300, 6
    %v8534 = vsel %vm7865, %v8533, %v8532
    %v8535 = vrot.slane %v7310, 5
    %v8536 = vsel %vm7868, %v8535, %v8534
    %v8537 = vrot.slane %v7320, 4
    %v8538 = vsel %vm7871, %v8537, %v8536
    %v8539 = vrot.slane %v7330, 3
    %v8540 = vsel %vm7874, %v8539, %v8538
    %v8541 = vrot.slane %v7340, 2
    %v8542 = vsel %vm7877, %v8541, %v8540
    %v8543 = vrot.slane %v7350, 1
    %v8544 = vsel %vm7859, %v7360, %v8543
    %v8545 = vrot.slane %v7370, 7
    %v8546 = vsel %vm7862, %v8545, %v8544
    %v8547 = vrot.slane %v7380, 6
    %v8548 = vsel %vm7865, %v8547, %v8546
    %v8549 = vrot.slane %v7390, 5
    %v8550 = vsel %vm7868, %v8549, %v8548
    %v8551 = vrot.slane %v7400, 4
    %v8552 = vsel %vm7871, %v8551, %v8550
    %v8553 = vrot.slane %v7410, 3
    %v8554 = vsel %vm7874, %v8553, %v8552
    %v8555 = vrot.slane %v7420, 2
    %v8556 = vsel %vm7877, %v8555, %v8554
    %8557 = vrot.lane.b32.xlu0 %v8514, 72
    %v8558 = vpop.permute.xlu0 %8557
    %8559 = vrot.lane.b32.xlu0 %v8528, 72
    %v8560 = vpop.permute.xlu0 %8559
    %8561 = vrot.lane.b32.xlu0 %v8542, 72
    %v8562 = vpop.permute.xlu0 %8561
    %8563 = vrot.lane.b32.xlu0 %v8556, 72
    %v8564 = vpop.permute.xlu0 %8563
    %v8569 = vrot.slane %v7110, 2
    %v8570 = vrot.slane %v7120, 1
    %v8571 = vsel %vm7859, %v8570, %v8569
    %v8572 = vsel %vm7862, %v7130, %v8571
    %v8573 = vrot.slane %v7140, 7
    %v8574 = vsel %vm7865, %v8573, %v8572
    %v8575 = vrot.slane %v7150, 6
    %v8576 = vsel %vm7868, %v8575, %v8574
    %v8577 = vrot.slane %v7160, 5
    %v8578 = vsel %vm7871, %v8577, %v8576
    %v8579 = vrot.slane %v7170, 4
    %v8580 = vsel %vm7874, %v8579, %v8578
    %v8581 = vrot.slane %v7180, 3
    %v8582 = vsel %vm7877, %v8581, %v8580
    %v8583 = vrot.slane %v7190, 2
    %v8584 = vrot.slane %v7200, 1
    %v8585 = vsel %vm7859, %v8584, %v8583
    %v8586 = vsel %vm7862, %v7210, %v8585
    %v8587 = vrot.slane %v7220, 7
    %v8588 = vsel %vm7865, %v8587, %v8586
    %v8589 = vrot.slane %v7230, 6
    %v8590 = vsel %vm7868, %v8589, %v8588
    %v8591 = vrot.slane %v7240, 5
    %v8592 = vsel %vm7871, %v8591, %v8590
    %v8593 = vrot.slane %v7250, 4
    %v8594 = vsel %vm7874, %v8593, %v8592
    %v8595 = vrot.slane %v7260, 3
    %v8596 = vsel %vm7877, %v8595, %v8594
    %v8597 = vrot.slane %v7270, 2
    %v8598 = vrot.slane %v7280, 1
    %v8599 = vsel %vm7859, %v8598, %v8597
    %v8600 = vsel %vm7862, %v7290, %v8599
    %v8601 = vrot.slane %v7300, 7
    %v8602 = vsel %vm7865, %v8601, %v8600
    %v8603 = vrot.slane %v7310, 6
    %v8604 = vsel %vm7868, %v8603, %v8602
    %v8605 = vrot.slane %v7320, 5
    %v8606 = vsel %vm7871, %v8605, %v8604
    %v8607 = vrot.slane %v7330, 4
    %v8608 = vsel %vm7874, %v8607, %v8606
    %v8609 = vrot.slane %v7340, 3
    %v8610 = vsel %vm7877, %v8609, %v8608
    %v8611 = vrot.slane %v7350, 2
    %v8612 = vrot.slane %v7360, 1
    %v8613 = vsel %vm7859, %v8612, %v8611
    %v8614 = vsel %vm7862, %v7370, %v8613
    %v8615 = vrot.slane %v7380, 7
    %v8616 = vsel %vm7865, %v8615, %v8614
    %v8617 = vrot.slane %v7390, 6
    %v8618 = vsel %vm7868, %v8617, %v8616
    %v8619 = vrot.slane %v7400, 5
    %v8620 = vsel %vm7871, %v8619, %v8618
    %v8621 = vrot.slane %v7410, 4
    %v8622 = vsel %vm7874, %v8621, %v8620
    %v8623 = vrot.slane %v7420, 3
    %v8624 = vsel %vm7877, %v8623, %v8622
    %8625 = vrot.lane.b32.xlu0 %v8582, 80
    %v8626 = vpop.permute.xlu0 %8625
    %8627 = vrot.lane.b32.xlu0 %v8596, 80
    %v8628 = vpop.permute.xlu0 %8627
    %8629 = vrot.lane.b32.xlu0 %v8610, 80
    %v8630 = vpop.permute.xlu0 %8629
    %8631 = vrot.lane.b32.xlu0 %v8624, 80
    %v8632 = vpop.permute.xlu0 %8631
    %v8637 = vrot.slane %v7110, 3
    %v8638 = vrot.slane %v7120, 2
    %v8639 = vsel %vm7859, %v8638, %v8637
    %v8640 = vrot.slane %v7130, 1
    %v8641 = vsel %vm7862, %v8640, %v8639
    %v8642 = vsel %vm7865, %v7140, %v8641
    %v8643 = vrot.slane %v7150, 7
    %v8644 = vsel %vm7868, %v8643, %v8642
    %v8645 = vrot.slane %v7160, 6
    %v8646 = vsel %vm7871, %v8645, %v8644
    %v8647 = vrot.slane %v7170, 5
    %v8648 = vsel %vm7874, %v8647, %v8646
    %v8649 = vrot.slane %v7180, 4
    %v8650 = vsel %vm7877, %v8649, %v8648
    %v8651 = vrot.slane %v7190, 3
    %v8652 = vrot.slane %v7200, 2
    %v8653 = vsel %vm7859, %v8652, %v8651
    %v8654 = vrot.slane %v7210, 1
    %v8655 = vsel %vm7862, %v8654, %v8653
    %v8656 = vsel %vm7865, %v7220, %v8655
    %v8657 = vrot.slane %v7230, 7
    %v8658 = vsel %vm7868, %v8657, %v8656
    %v8659 = vrot.slane %v7240, 6
    %v8660 = vsel %vm7871, %v8659, %v8658
    %v8661 = vrot.slane %v7250, 5
    %v8662 = vsel %vm7874, %v8661, %v8660
    %v8663 = vrot.slane %v7260, 4
    %v8664 = vsel %vm7877, %v8663, %v8662
    %v8665 = vrot.slane %v7270, 3
    %v8666 = vrot.slane %v7280, 2
    %v8667 = vsel %vm7859, %v8666, %v8665
    %v8668 = vrot.slane %v7290, 1
    %v8669 = vsel %vm7862, %v8668, %v8667
    %v8670 = vsel %vm7865, %v7300, %v8669
    %v8671 = vrot.slane %v7310, 7
    %v8672 = vsel %vm7868, %v8671, %v8670
    %v8673 = vrot.slane %v7320, 6
    %v8674 = vsel %vm7871, %v8673, %v8672
    %v8675 = vrot.slane %v7330, 5
    %v8676 = vsel %vm7874, %v8675, %v8674
    %v8677 = vrot.slane %v7340, 4
    %v8678 = vsel %vm7877, %v8677, %v8676
    %v8679 = vrot.slane %v7350, 3
    %v8680 = vrot.slane %v7360, 2
    %v8681 = vsel %vm7859, %v8680, %v8679
    %v8682 = vrot.slane %v7370, 1
    %v8683 = vsel %vm7862, %v8682, %v8681
    %v8684 = vsel %vm7865, %v7380, %v8683
    %v8685 = vrot.slane %v7390, 7
    %v8686 = vsel %vm7868, %v8685, %v8684
    %v8687 = vrot.slane %v7400, 6
    %v8688 = vsel %vm7871, %v8687, %v8686
    %v8689 = vrot.slane %v7410, 5
    %v8690 = vsel %vm7874, %v8689, %v8688
    %v8691 = vrot.slane %v7420, 4
    %v8692 = vsel %vm7877, %v8691, %v8690
    %8693 = vrot.lane.b32.xlu0 %v8650, 88
    %v8694 = vpop.permute.xlu0 %8693
    %8695 = vrot.lane.b32.xlu0 %v8664, 88
    %v8696 = vpop.permute.xlu0 %8695
    %8697 = vrot.lane.b32.xlu0 %v8678, 88
    %v8698 = vpop.permute.xlu0 %8697
    %8699 = vrot.lane.b32.xlu0 %v8692, 88
    %v8700 = vpop.permute.xlu0 %8699
    %v8705 = vrot.slane %v7110, 4
    %v8706 = vrot.slane %v7120, 3
    %v8707 = vsel %vm7859, %v8706, %v8705
    %v8708 = vrot.slane %v7130, 2
    %v8709 = vsel %vm7862, %v8708, %v8707
    %v8710 = vrot.slane %v7140, 1
    %v8711 = vsel %vm7865, %v8710, %v8709
    %v8712 = vsel %vm7868, %v7150, %v8711
    %v8713 = vrot.slane %v7160, 7
    %v8714 = vsel %vm7871, %v8713, %v8712
    %v8715 = vrot.slane %v7170, 6
    %v8716 = vsel %vm7874, %v8715, %v8714
    %v8717 = vrot.slane %v7180, 5
    %v8718 = vsel %vm7877, %v8717, %v8716
    %v8719 = vrot.slane %v7190, 4
    %v8720 = vrot.slane %v7200, 3
    %v8721 = vsel %vm7859, %v8720, %v8719
    %v8722 = vrot.slane %v7210, 2
    %v8723 = vsel %vm7862, %v8722, %v8721
    %v8724 = vrot.slane %v7220, 1
    %v8725 = vsel %vm7865, %v8724, %v8723
    %v8726 = vsel %vm7868, %v7230, %v8725
    %v8727 = vrot.slane %v7240, 7
    %v8728 = vsel %vm7871, %v8727, %v8726
    %v8729 = vrot.slane %v7250, 6
    %v8730 = vsel %vm7874, %v8729, %v8728
    %v8731 = vrot.slane %v7260, 5
    %v8732 = vsel %vm7877, %v8731, %v8730
    %v8733 = vrot.slane %v7270, 4
    %v8734 = vrot.slane %v7280, 3
    %v8735 = vsel %vm7859, %v8734, %v8733
    %v8736 = vrot.slane %v7290, 2
    %v8737 = vsel %vm7862, %v8736, %v8735
    %v8738 = vrot.slane %v7300, 1
    %v8739 = vsel %vm7865, %v8738, %v8737
    %v8740 = vsel %vm7868, %v7310, %v8739
    %v8741 = vrot.slane %v7320, 7
    %v8742 = vsel %vm7871, %v8741, %v8740
    %v8743 = vrot.slane %v7330, 6
    %v8744 = vsel %vm7874, %v8743, %v8742
    %v8745 = vrot.slane %v7340, 5
    %v8746 = vsel %vm7877, %v8745, %v8744
    %v8747 = vrot.slane %v7350, 4
    %v8748 = vrot.slane %v7360, 3
    %v8749 = vsel %vm7859, %v8748, %v8747
    %v8750 = vrot.slane %v7370, 2
    %v8751 = vsel %vm7862, %v8750, %v8749
    %v8752 = vrot.slane %v7380, 1
    %v8753 = vsel %vm7865, %v8752, %v8751
    %v8754 = vsel %vm7868, %v7390, %v8753
    %v8755 = vrot.slane %v7400, 7
    %v8756 = vsel %vm7871, %v8755, %v8754
    %v8757 = vrot.slane %v7410, 6
    %v8758 = vsel %vm7874, %v8757, %v8756
    %v8759 = vrot.slane %v7420, 5
    %v8760 = vsel %vm7877, %v8759, %v8758
    %8761 = vrot.lane.b32.xlu0 %v8718, 96
    %v8762 = vpop.permute.xlu0 %8761
    %8763 = vrot.lane.b32.xlu0 %v8732, 96
    %v8764 = vpop.permute.xlu0 %8763
    %8765 = vrot.lane.b32.xlu0 %v8746, 96
    %v8766 = vpop.permute.xlu0 %8765
    %8767 = vrot.lane.b32.xlu0 %v8760, 96
    %v8768 = vpop.permute.xlu0 %8767
    %v8773 = vrot.slane %v7110, 5
    %v8774 = vrot.slane %v7120, 4
    %v8775 = vsel %vm7859, %v8774, %v8773
    %v8776 = vrot.slane %v7130, 3
    %v8777 = vsel %vm7862, %v8776, %v8775
    %v8778 = vrot.slane %v7140, 2
    %v8779 = vsel %vm7865, %v8778, %v8777
    %v8780 = vrot.slane %v7150, 1
    %v8781 = vsel %vm7868, %v8780, %v8779
    %v8782 = vsel %vm7871, %v7160, %v8781
    %v8783 = vrot.slane %v7170, 7
    %v8784 = vsel %vm7874, %v8783, %v8782
    %v8785 = vrot.slane %v7180, 6
    %v8786 = vsel %vm7877, %v8785, %v8784
    %v8787 = vrot.slane %v7190, 5
    %v8788 = vrot.slane %v7200, 4
    %v8789 = vsel %vm7859, %v8788, %v8787
    %v8790 = vrot.slane %v7210, 3
    %v8791 = vsel %vm7862, %v8790, %v8789
    %v8792 = vrot.slane %v7220, 2
    %v8793 = vsel %vm7865, %v8792, %v8791
    %v8794 = vrot.slane %v7230, 1
    %v8795 = vsel %vm7868, %v8794, %v8793
    %v8796 = vsel %vm7871, %v7240, %v8795
    %v8797 = vrot.slane %v7250, 7
    %v8798 = vsel %vm7874, %v8797, %v8796
    %v8799 = vrot.slane %v7260, 6
    %v8800 = vsel %vm7877, %v8799, %v8798
    %v8801 = vrot.slane %v7270, 5
    %v8802 = vrot.slane %v7280, 4
    %v8803 = vsel %vm7859, %v8802, %v8801
    %v8804 = vrot.slane %v7290, 3
    %v8805 = vsel %vm7862, %v8804, %v8803
    %v8806 = vrot.slane %v7300, 2
    %v8807 = vsel %vm7865, %v8806, %v8805
    %v8808 = vrot.slane %v7310, 1
    %v8809 = vsel %vm7868, %v8808, %v8807
    %v8810 = vsel %vm7871, %v7320, %v8809
    %v8811 = vrot.slane %v7330, 7
    %v8812 = vsel %vm7874, %v8811, %v8810
    %v8813 = vrot.slane %v7340, 6
    %v8814 = vsel %vm7877, %v8813, %v8812
    %v8815 = vrot.slane %v7350, 5
    %v8816 = vrot.slane %v7360, 4
    %v8817 = vsel %vm7859, %v8816, %v8815
    %v8818 = vrot.slane %v7370, 3
    %v8819 = vsel %vm7862, %v8818, %v8817
    %v8820 = vrot.slane %v7380, 2
    %v8821 = vsel %vm7865, %v8820, %v8819
    %v8822 = vrot.slane %v7390, 1
    %v8823 = vsel %vm7868, %v8822, %v8821
    %v8824 = vsel %vm7871, %v7400, %v8823
    %v8825 = vrot.slane %v7410, 7
    %v8826 = vsel %vm7874, %v8825, %v8824
    %v8827 = vrot.slane %v7420, 6
    %v8828 = vsel %vm7877, %v8827, %v8826
    %8829 = vrot.lane.b32.xlu0 %v8786, 104
    %v8830 = vpop.permute.xlu0 %8829
    %8831 = vrot.lane.b32.xlu0 %v8800, 104
    %v8832 = vpop.permute.xlu0 %8831
    %8833 = vrot.lane.b32.xlu0 %v8814, 104
    %v8834 = vpop.permute.xlu0 %8833
    %8835 = vrot.lane.b32.xlu0 %v8828, 104
    %v8836 = vpop.permute.xlu0 %8835
    %v8841 = vrot.slane %v7110, 6
    %v8842 = vrot.slane %v7120, 5
    %v8843 = vsel %vm7859, %v8842, %v8841
    %v8844 = vrot.slane %v7130, 4
    %v8845 = vsel %vm7862, %v8844, %v8843
    %v8846 = vrot.slane %v7140, 3
    %v8847 = vsel %vm7865, %v8846, %v8845
    %v8848 = vrot.slane %v7150, 2
    %v8849 = vsel %vm7868, %v8848, %v8847
    %v8850 = vrot.slane %v7160, 1
    %v8851 = vsel %vm7871, %v8850, %v8849
    %v8852 = vsel %vm7874, %v7170, %v8851
    %v8853 = vrot.slane %v7180, 7
    %v8854 = vsel %vm7877, %v8853, %v8852
    %v8855 = vrot.slane %v7190, 6
    %v8856 = vrot.slane %v7200, 5
    %v8857 = vsel %vm7859, %v8856, %v8855
    %v8858 = vrot.slane %v7210, 4
    %v8859 = vsel %vm7862, %v8858, %v8857
    %v8860 = vrot.slane %v7220, 3
    %v8861 = vsel %vm7865, %v8860, %v8859
    %v8862 = vrot.slane %v7230, 2
    %v8863 = vsel %vm7868, %v8862, %v8861
    %v8864 = vrot.slane %v7240, 1
    %v8865 = vsel %vm7871, %v8864, %v8863
    %v8866 = vsel %vm7874, %v7250, %v8865
    %v8867 = vrot.slane %v7260, 7
    %v8868 = vsel %vm7877, %v8867, %v8866
    %v8869 = vrot.slane %v7270, 6
    %v8870 = vrot.slane %v7280, 5
    %v8871 = vsel %vm7859, %v8870, %v8869
    %v8872 = vrot.slane %v7290, 4
    %v8873 = vsel %vm7862, %v8872, %v8871
    %v8874 = vrot.slane %v7300, 3
    %v8875 = vsel %vm7865, %v8874, %v8873
    %v8876 = vrot.slane %v7310, 2
    %v8877 = vsel %vm7868, %v8876, %v8875
    %v8878 = vrot.slane %v7320, 1
    %v8879 = vsel %vm7871, %v8878, %v8877
    %v8880 = vsel %vm7874, %v7330, %v8879
    %v8881 = vrot.slane %v7340, 7
    %v8882 = vsel %vm7877, %v8881, %v8880
    %v8883 = vrot.slane %v7350, 6
    %v8884 = vrot.slane %v7360, 5
    %v8885 = vsel %vm7859, %v8884, %v8883
    %v8886 = vrot.slane %v7370, 4
    %v8887 = vsel %vm7862, %v8886, %v8885
    %v8888 = vrot.slane %v7380, 3
    %v8889 = vsel %vm7865, %v8888, %v8887
    %v8890 = vrot.slane %v7390, 2
    %v8891 = vsel %vm7868, %v8890, %v8889
    %v8892 = vrot.slane %v7400, 1
    %v8893 = vsel %vm7871, %v8892, %v8891
    %v8894 = vsel %vm7874, %v7410, %v8893
    %v8895 = vrot.slane %v7420, 7
    %v8896 = vsel %vm7877, %v8895, %v8894
    %8897 = vrot.lane.b32.xlu0 %v8854, 112
    %v8898 = vpop.permute.xlu0 %8897
    %8899 = vrot.lane.b32.xlu0 %v8868, 112
    %v8900 = vpop.permute.xlu0 %8899
    %8901 = vrot.lane.b32.xlu0 %v8882, 112
    %v8902 = vpop.permute.xlu0 %8901
    %8903 = vrot.lane.b32.xlu0 %v8896, 112
    %v8904 = vpop.permute.xlu0 %8903
    %v8909 = vrot.slane %v7110, 7
    %v8910 = vrot.slane %v7120, 6
    %v8911 = vsel %vm7859, %v8910, %v8909
    %v8912 = vrot.slane %v7130, 5
    %v8913 = vsel %vm7862, %v8912, %v8911
    %v8914 = vrot.slane %v7140, 4
    %v8915 = vsel %vm7865, %v8914, %v8913
    %v8916 = vrot.slane %v7150, 3
    %v8917 = vsel %vm7868, %v8916, %v8915
    %v8918 = vrot.slane %v7160, 2
    %v8919 = vsel %vm7871, %v8918, %v8917
    %v8920 = vrot.slane %v7170, 1
    %v8921 = vsel %vm7874, %v8920, %v8919
    %v8922 = vsel %vm7877, %v7180, %v8921
    %v8923 = vrot.slane %v7190, 7
    %v8924 = vrot.slane %v7200, 6
    %v8925 = vsel %vm7859, %v8924, %v8923
    %v8926 = vrot.slane %v7210, 5
    %v8927 = vsel %vm7862, %v8926, %v8925
    %v8928 = vrot.slane %v7220, 4
    %v8929 = vsel %vm7865, %v8928, %v8927
    %v8930 = vrot.slane %v7230, 3
    %v8931 = vsel %vm7868, %v8930, %v8929
    %v8932 = vrot.slane %v7240, 2
    %v8933 = vsel %vm7871, %v8932, %v8931
    %v8934 = vrot.slane %v7250, 1
    %v8935 = vsel %vm7874, %v8934, %v8933
    %v8936 = vsel %vm7877, %v7260, %v8935
    %v8937 = vrot.slane %v7270, 7
    %v8938 = vrot.slane %v7280, 6
    %v8939 = vsel %vm7859, %v8938, %v8937
    %v8940 = vrot.slane %v7290, 5
    %v8941 = vsel %vm7862, %v8940, %v8939
    %v8942 = vrot.slane %v7300, 4
    %v8943 = vsel %vm7865, %v8942, %v8941
    %v8944 = vrot.slane %v7310, 3
    %v8945 = vsel %vm7868, %v8944, %v8943
    %v8946 = vrot.slane %v7320, 2
    %v8947 = vsel %vm7871, %v8946, %v8945
    %v8948 = vrot.slane %v7330, 1
    %v8949 = vsel %vm7874, %v8948, %v8947
    %v8950 = vsel %vm7877, %v7340, %v8949
    %v8951 = vrot.slane %v7350, 7
    %v8952 = vrot.slane %v7360, 6
    %v8953 = vsel %vm7859, %v8952, %v8951
    %v8954 = vrot.slane %v7370, 5
    %v8955 = vsel %vm7862, %v8954, %v8953
    %v8956 = vrot.slane %v7380, 4
    %v8957 = vsel %vm7865, %v8956, %v8955
    %v8958 = vrot.slane %v7390, 3
    %v8959 = vsel %vm7868, %v8958, %v8957
    %v8960 = vrot.slane %v7400, 2
    %v8961 = vsel %vm7871, %v8960, %v8959
    %v8962 = vrot.slane %v7410, 1
    %v8963 = vsel %vm7874, %v8962, %v8961
    %v8964 = vsel %vm7877, %v7420, %v8963
    %8965 = vrot.lane.b32.xlu0 %v8922, 120
    %v8966 = vpop.permute.xlu0 %8965
    %8967 = vrot.lane.b32.xlu0 %v8936, 120
    %v8968 = vpop.permute.xlu0 %8967
    %8969 = vrot.lane.b32.xlu0 %v8950, 120
    %v8970 = vpop.permute.xlu0 %8969
    %8971 = vrot.lane.b32.xlu0 %v8964, 120
    %v8972 = vpop.permute.xlu0 %8971
    %v8977 = vsel %vm2414, %v7878, %v7982
    %v8978 = vsel %vm2414, %v7892, %v7984
    %v8979 = vsel %vm2414, %v7906, %v7986
    %v8980 = vsel %vm2414, %v7920, %v7988
    %v8981 = vsel %vm2544, %v8977, %v8050
    %v8982 = vsel %vm2544, %v8978, %v8052
    %v8983 = vsel %vm2544, %v8979, %v8054
    %v8984 = vsel %vm2544, %v8980, %v8056
    %v8985 = vsel %vm2674, %v8981, %v8118
    %v8986 = vsel %vm2674, %v8982, %v8120
    %v8987 = vsel %vm2674, %v8983, %v8122
    %v8988 = vsel %vm2674, %v8984, %v8124
    %v8989 = vsel %vm2804, %v8985, %v8186
    %v8990 = vsel %vm2804, %v8986, %v8188
    %v8991 = vsel %vm2804, %v8987, %v8190
    %v8992 = vsel %vm2804, %v8988, %v8192
    %v8993 = vsel %vm6576, %v8989, %v8254
    %v8994 = vsel %vm6576, %v8990, %v8256
    %v8995 = vsel %vm6576, %v8991, %v8258
    %v8996 = vsel %vm6576, %v8992, %v8260
    %v8997 = vsel %vm6641, %v8993, %v8322
    %v8998 = vsel %vm6641, %v8994, %v8324
    %v8999 = vsel %vm6641, %v8995, %v8326
    %v9000 = vsel %vm6641, %v8996, %v8328
    %v9001 = vsel %vm6706, %v8997, %v8390
    %v9002 = vsel %vm6706, %v8998, %v8392
    %v9003 = vsel %vm6706, %v8999, %v8394
    %v9004 = vsel %vm6706, %v9000, %v8396
    %v9005 = vsel %vm6771, %v9001, %v8490
    %v9006 = vsel %vm6771, %v9002, %v8492
    %v9007 = vsel %vm6771, %v9003, %v8494
    %v9008 = vsel %vm6771, %v9004, %v8496
    %v9009 = vsel %vm6845, %v9005, %v8558
    %v9010 = vsel %vm6845, %v9006, %v8560
    %v9011 = vsel %vm6845, %v9007, %v8562
    %v9012 = vsel %vm6845, %v9008, %v8564
    %vm9013 = vcmask 654336
    %v9014 = vsel %vm9013, %v9009, %v8626
    %v9015 = vsel %vm9013, %v9010, %v8628
    %v9016 = vsel %vm9013, %v9011, %v8630
    %v9017 = vsel %vm9013, %v9012, %v8632
    %vm9018 = vcmask 719872
    %v9019 = vsel %vm9018, %v9014, %v8694
    %v9020 = vsel %vm9018, %v9015, %v8696
    %v9021 = vsel %vm9018, %v9016, %v8698
    %v9022 = vsel %vm9018, %v9017, %v8700
    %vm9023 = vcmask 785408
    %v9024 = vsel %vm9023, %v9019, %v8762
    %v9025 = vsel %vm9023, %v9020, %v8764
    %v9026 = vsel %vm9023, %v9021, %v8766
    %v9027 = vsel %vm9023, %v9022, %v8768
    %vm9028 = vcmask 850944
    %v9029 = vsel %vm9028, %v9024, %v8830
    %v9030 = vsel %vm9028, %v9025, %v8832
    %v9031 = vsel %vm9028, %v9026, %v8834
    %v9032 = vsel %vm9028, %v9027, %v8836
    %vm9033 = vcmask 916480
    %v9034 = vsel %vm9033, %v9029, %v8898
    %v9035 = vsel %vm9033, %v9030, %v8900
    %v9036 = vsel %vm9033, %v9031, %v8902
    %v9037 = vsel %vm9033, %v9032, %v8904
    %vm9038 = vcmask 982016
    %v9039 = vsel %vm9038, %v9034, %v8966
    %v9040 = vsel %vm9038, %v9035, %v8968
    %v9041 = vsel %vm9038, %v9036, %v8970
    %v9042 = vsel %vm9038, %v9037, %v8972
    %v9044 = vlaneseq
    %v9045 = vshrl.u32 %v9044, 7
    %v9046 = vsub.s32 0, %v9045
    %v9047 = vrot.slane %v7823, %v9046
    %9048 = vrot.lane.b32.xlu0 %v9047, 8
    %v9049 = vpop.permute.xlu0 %9048
    %9051 = vrot.lane.b32.xlu0 %v9047, 16
    %v9052 = vpop.permute.xlu0 %9051
    %9054 = vrot.lane.b32.xlu0 %v9047, 24
    %v9055 = vpop.permute.xlu0 %9054
    %9057 = vrot.lane.b32.xlu0 %v9047, 32
    %v9058 = vpop.permute.xlu0 %9057
    %9060 = vrot.lane.b32.xlu0 %v9047, 40
    %v9061 = vpop.permute.xlu0 %9060
    %9063 = vrot.lane.b32.xlu0 %v9047, 48
    %v9064 = vpop.permute.xlu0 %9063
    %9066 = vrot.lane.b32.xlu0 %v9047, 56
    %v9067 = vpop.permute.xlu0 %9066
    %9069 = vrot.lane.b32.xlu0 %v9047, 64
    %v9070 = vpop.permute.xlu0 %9069
    %9072 = vrot.lane.b32.xlu0 %v9047, 72
    %v9073 = vpop.permute.xlu0 %9072
    %9075 = vrot.lane.b32.xlu0 %v9047, 80
    %v9076 = vpop.permute.xlu0 %9075
    %9078 = vrot.lane.b32.xlu0 %v9047, 88
    %v9079 = vpop.permute.xlu0 %9078
    %9081 = vrot.lane.b32.xlu0 %v9047, 96
    %v9082 = vpop.permute.xlu0 %9081
    %9084 = vrot.lane.b32.xlu0 %v9047, 104
    %v9085 = vpop.permute.xlu0 %9084
    %9087 = vrot.lane.b32.xlu0 %v9047, 112
    %v9088 = vpop.permute.xlu0 %9087
    %9090 = vrot.lane.b32.xlu0 %v9047, 120
    %v9091 = vpop.permute.xlu0 %9090
    %v9093 = vsel %vm2414, %v7823, %v9049
    %v9094 = vsel %vm2544, %v9093, %v9052
    %v9095 = vsel %vm2674, %v9094, %v9055
    %v9096 = vsel %vm2804, %v9095, %v9058
    %v9097 = vsel %vm6576, %v9096, %v9061
    %v9098 = vsel %vm6641, %v9097, %v9064
    %v9099 = vsel %vm6706, %v9098, %v9067
    %v9100 = vsel %vm6771, %v9099, %v9070
    %v9101 = vsel %vm6845, %v9100, %v9073
    %v9102 = vsel %vm9013, %v9101, %v9076
    %v9103 = vsel %vm9018, %v9102, %v9079
    %v9104 = vsel %vm9023, %v9103, %v9082
    %v9105 = vsel %vm9028, %v9104, %v9085
    %v9106 = vsel %vm9033, %v9105, %v9088
    %v9107 = vsel %vm9038, %v9106, %v9091
    %v9109 = vlaneseq
    %v9110 = vshrl.u32 %v9109, 7
    %v9111 = vsub.s32 0, %v9110
    %v9112 = vrot.slane %v7825, %v9111
    %9113 = vrot.lane.b32.xlu0 %v9112, 8
    %v9114 = vpop.permute.xlu0 %9113
    %9116 = vrot.lane.b32.xlu0 %v9112, 16
    %v9117 = vpop.permute.xlu0 %9116
    %9119 = vrot.lane.b32.xlu0 %v9112, 24
    %v9120 = vpop.permute.xlu0 %9119
    %9122 = vrot.lane.b32.xlu0 %v9112, 32
    %v9123 = vpop.permute.xlu0 %9122
    %9125 = vrot.lane.b32.xlu0 %v9112, 40
    %v9126 = vpop.permute.xlu0 %9125
    %9128 = vrot.lane.b32.xlu0 %v9112, 48
    %v9129 = vpop.permute.xlu0 %9128
    %9131 = vrot.lane.b32.xlu0 %v9112, 56
    %v9132 = vpop.permute.xlu0 %9131
    %9134 = vrot.lane.b32.xlu0 %v9112, 64
    %v9135 = vpop.permute.xlu0 %9134
    %9137 = vrot.lane.b32.xlu0 %v9112, 72
    %v9138 = vpop.permute.xlu0 %9137
    %9140 = vrot.lane.b32.xlu0 %v9112, 80
    %v9141 = vpop.permute.xlu0 %9140
    %9143 = vrot.lane.b32.xlu0 %v9112, 88
    %v9144 = vpop.permute.xlu0 %9143
    %9146 = vrot.lane.b32.xlu0 %v9112, 96
    %v9147 = vpop.permute.xlu0 %9146
    %9149 = vrot.lane.b32.xlu0 %v9112, 104
    %v9150 = vpop.permute.xlu0 %9149
    %9152 = vrot.lane.b32.xlu0 %v9112, 112
    %v9153 = vpop.permute.xlu0 %9152
    %9155 = vrot.lane.b32.xlu0 %v9112, 120
    %v9156 = vpop.permute.xlu0 %9155
    %v9158 = vsel %vm2414, %v7825, %v9114
    %v9159 = vsel %vm2544, %v9158, %v9117
    %v9160 = vsel %vm2674, %v9159, %v9120
    %v9161 = vsel %vm2804, %v9160, %v9123
    %v9162 = vsel %vm6576, %v9161, %v9126
    %v9163 = vsel %vm6641, %v9162, %v9129
    %v9164 = vsel %vm6706, %v9163, %v9132
    %v9165 = vsel %vm6771, %v9164, %v9135
    %v9166 = vsel %vm6845, %v9165, %v9138
    %v9167 = vsel %vm9013, %v9166, %v9141
    %v9168 = vsel %vm9018, %v9167, %v9144
    %v9169 = vsel %vm9023, %v9168, %v9147
    %v9170 = vsel %vm9028, %v9169, %v9150
    %v9171 = vsel %vm9033, %v9170, %v9153
    %v9172 = vsel %vm9038, %v9171, %v9156
    %v9173 = vlaneseq
    %v9174 = vshrl.u32 %v9173, 7
    %v9175 = vsub.s32 0, %v9174
    %v9176 = vrot.slane %v9107, %v9175
    %v9177 = vmul.f32 %v9039, %v9176
    %v9178 = vmul.f32 %v9040, %v9176
    %v9179 = vmul.f32 %v9041, %v9176
    %v9180 = vmul.f32 %v9042, %v9176
    %v9181 = vlaneseq
    %v9182 = vshrl.u32 %v9181, 7
    %v9183 = vsub.s32 0, %v9182
    %v9184 = vrot.slane %v9172, %v9183
    %v9185 = vadd.f32 %v9177, %v9184
    %v9186 = vadd.f32 %v9178, %v9184
    %v9187 = vadd.f32 %v9179, %v9184
    %v9188 = vadd.f32 %v9180, %v9184
    %v9189 = vmax.f32 %v9185, 0.0
    %v9190 = vmax.f32 %v9186, 0.0
    %v9191 = vmax.f32 %v9187, 0.0
    %v9192 = vmax.f32 %v9188, 0.0
    %9193 = vst [vmem:[#allocation4] sm:$0xff] %v9189
    %9194 = vst [vmem:[#allocation4 + $0x8] sm:$0xff] %v9190
    %9195 = vst [vmem:[#allocation4 + $0x10] sm:$0xff] %v9191
    %9196 = vst [vmem:[#allocation4 + $0x18] sm:$0xff] %v9192
    // Predicated region
    $region30: #{tpu_custom_call.1} parent=1 // pred_check
      _
    $region31: #{tpu_custom_call.1} parent=1 // pred_check_branch
      %9198 = sbr.rel (0) target = $region33
    $region32: #{tpu_custom_call.1} parent=1 // pred_region
      %s9200 = ssub.s32 512, 512
      %9201 = vsyncadd [#allocation5], %s9200
      %s9202 = sshll.u32 [#allocation4], 4
      %s9203 = int_to_ptr.vmem [resolvable:$true] %s9202
      %9208 = dma.vmem_to_hbm [thread:$0]  %s9203, 512, %s7, [#allocation5], 128, 128, 8
    $region33: #{tpu_custom_call.1} parent=1 // pred_fallthru
      _
    // Predicated region
    $region34: #{tpu_custom_call.1} parent=1 // pred_check
      _
    $region35: #{tpu_custom_call.1} parent=1 // pred_check_branch
      %9210 = sbr.rel (0) target = $region37
    $region36: #{tpu_custom_call.1} parent=1 // pred_region
      %9211 = dma.done [#allocation5], 512
    $region37: #{tpu_custom_call.1} parent=1 // pred_fallthru
      _
    %9212 = vsyncpa [#allocation5], 1

</llo_original>
